<compile_context>
chip_gen: v7x
topology: tpu7x:2x2x1
jax: 0.10.0
libtpu: 0.0.40
codegen_flags: <defaults>
</compile_context>

<pallas_src>
import math
import jax
import jax.numpy as jnp
from jax.experimental import pallas as pl
from jax.experimental.pallas import tpu as pltpu

K = 64            # Config.time_embedding_size (even -> k1 == k2)
K1 = K // 2
K2 = K - K1       # handles odd K too (k2 = k//2 + 1)


def date2vec_kernel(x_ref, w2_ref, b2_ref, wB_ref, wC_ref, d_ref, o_ref):
    x = x_ref[...]                                                   # (tm, 6)

    # sin branch: z2 = x @ W2 + b2  -> sin (EUP)
    z2 = jnp.dot(x, w2_ref[...], preferred_element_type=jnp.float32) + b2_ref[...]
    s = jnp.sin(z2)                                                  # (tm, K2)

    # folded linear path + folded fc3_bot.fc4.fc5 on the sin branch
    out = (jnp.dot(x, wB_ref[...], preferred_element_type=jnp.float32)
           + jnp.dot(s, wC_ref[...], preferred_element_type=jnp.float32)
           + d_ref[...])                                             # (tm, 6)
    o_ref[...] = out


def _fold_params(params):
    """Host-side exact fusion of all purely-linear compositions (eval mode)."""
    (w1, b1), (w2, b2), (w3, b3), (w4, b4), (w5, b5) = params
    w45 = w4 @ w5                                # (K//2, 6)
    b45 = b4 @ w5 + b5                           # (1, 6)
    w3_top, w3_bot = w3[:K1], w3[K1:]            # (K1, K//2), (K2, K//2)
    B = w1 @ w3_top @ w45                        # (6, 6)
    C = w3_bot @ w45                             # (K2, 6)
    d = (b1 @ w3_top + b3) @ w45 + b45           # (1, 6)
    return w2, b2, B, C, d


def date2vec_forward(x, params, *, tm=512):
    """Date2Vec forward. x: (N, 6) float32. tm: batch tile (multiple of 8)."""
    N, F = x.shape
    assert F == 6
    assert tm % 8 == 0, "batch tile must be sublane-aligned"

    flat_params = _fold_params(params)           # w2, b2, B, C, d

    n_tiles = pl.cdiv(N, tm)
    N_pad = n_tiles * tm
    x_p = x if N_pad == N else jnp.pad(x, ((0, N_pad - N), (0, 0)))

    # Tiny folded params: fully resident, same block every grid step.
    param_specs = [pl.BlockSpec(p.shape, lambda i: (0, 0)) for p in flat_params]

    out = pl.pallas_call(
        date2vec_kernel,
        out_shape=jax.ShapeDtypeStruct((N_pad, 6), jnp.float32),
        grid_spec=pltpu.PrefetchScalarGridSpec(
            num_scalar_prefetch=0,
            grid=(n_tiles,),
            in_specs=[pl.BlockSpec((tm, F), lambda i: (i, 0))] + param_specs,
            out_specs=pl.BlockSpec((tm, 6), lambda i: (i, 0)),
        ),
        compiler_params=pltpu.CompilerParams(
            dimension_semantics=("parallel",)),
    )(x_p, *flat_params)

    return out[:N] if N_pad != N else out


def init_linear(key, fan_in, fan_out):
    """PyTorch-style nn.Linear init: U(-1/sqrt(fan_in), 1/sqrt(fan_in)).
    Weight returned pre-transposed to (fan_in, fan_out); bias as (1, fan_out)."""
    kw, kb = jax.random.split(key)
    bound = 1.0 / math.sqrt(fan_in)
    w = jax.random.uniform(kw, (fan_in, fan_out), jnp.float32, -bound, bound)
    b = jax.random.uniform(kb, (1, fan_out), jnp.float32, -bound, bound)
    return w, b


def reference_forward(x, params):
    """Un-fused pure-JAX reference matching the PyTorch module (eval mode)."""
    (w1, b1), (w2, b2), (w3, b3), (w4, b4), (w5, b5) = params
    out1 = x @ w1 + b1
    out2 = jnp.sin(x @ w2 + b2)                  # Dropout(0.3) = identity (eval)
    out = jnp.concatenate([out1, out2], axis=1)
    out = out @ w3 + b3                          # Dropout(0.3) = identity (eval)
    out = out @ w4 + b4
    out = out @ w5 + b5
    return out


if __name__ == "__main__":
    key = jax.random.PRNGKey(0)
    k_x, k1, k2, k3, k4, k5 = jax.random.split(key, 6)

    N = 1024                      # 2 grid steps at tm=512
    x = jax.random.normal(k_x, (N, 6), jnp.float32)

    params = (
        init_linear(k1, 6, K1),          # fc1
        init_linear(k2, 6, K2),          # fc2
        init_linear(k3, K, K // 2),      # fc3
        init_linear(k4, K // 2, 6),      # fc4
        init_linear(k5, 6, 6),           # fc5
    )

    out = date2vec_forward(x, params, tm=512)
    out = jax.block_until_ready(out)

    ref = reference_forward(x, params)
    assert out.shape == (N, 6)
    assert jnp.allclose(out, ref, atol=2e-4, rtol=2e-4), "mismatch vs reference"

    print("KERNEL_OK")
</pallas_src>

<mosaic_0001>
module attributes {stable_mosaic.version = 11 : i64} {
  func.func @date2vec_kernel(%arg0: i32, %arg1: memref<512x6xf32, #tpu.memory_space<vmem>>, %arg2: memref<6x32xf32, #tpu.memory_space<vmem>>, %arg3: memref<1x32xf32, #tpu.memory_space<vmem>>, %arg4: memref<6x6xf32, #tpu.memory_space<vmem>>, %arg5: memref<32x6xf32, #tpu.memory_space<vmem>>, %arg6: memref<1x6xf32, #tpu.memory_space<vmem>>, %arg7: memref<512x6xf32, #tpu.memory_space<vmem>>) attributes {dimension_semantics = [#tpu.dimension_semantics<parallel>], iteration_bounds = array<i64: 2>, scalar_prefetch = 0 : i64, scratch_operands = 0 : i64, tpu.core_type = #tpu.core_type<tc>, window_params = [{transform_indices = @transform_0, window_bounds = array<i64: 512, 6>}, {pipeline_mode = #tpu.pipeline_mode<synchronous>, transform_indices = @transform_1, window_bounds = array<i64: 6, 32>}, {pipeline_mode = #tpu.pipeline_mode<synchronous>, transform_indices = @transform_2, window_bounds = array<i64: 1, 32>}, {pipeline_mode = #tpu.pipeline_mode<synchronous>, transform_indices = @transform_3, window_bounds = array<i64: 6, 6>}, {pipeline_mode = #tpu.pipeline_mode<synchronous>, transform_indices = @transform_4, window_bounds = array<i64: 32, 6>}, {pipeline_mode = #tpu.pipeline_mode<synchronous>, transform_indices = @transform_5, window_bounds = array<i64: 1, 6>}, {transform_indices = @transform_6, window_bounds = array<i64: 512, 6>}]} {
    %c0 = arith.constant 0 : index
    %c0_0 = arith.constant 0 : index
    %0 = vector.load %arg1[%c0, %c0_0] : memref<512x6xf32, #tpu.memory_space<vmem>>, vector<512x6xf32>
    %c0_1 = arith.constant 0 : index
    %c0_2 = arith.constant 0 : index
    %1 = vector.load %arg2[%c0_1, %c0_2] : memref<6x32xf32, #tpu.memory_space<vmem>>, vector<6x32xf32>
    %cst = arith.constant dense<0.000000e+00> : vector<512x32xf32>
    %2 = tpu.matmul %0, %1, %cst {dimension_numbers = #tpu.dot_dimension_numbers<[1], [0], [0], [1], [0, 0, 1, 1], [], []>} : vector<512x6xf32>, vector<6x32xf32>, vector<512x32xf32> -> vector<512x32xf32>
    %c0_3 = arith.constant 0 : index
    %c0_4 = arith.constant 0 : index
    %3 = vector.load %arg3[%c0_3, %c0_4] : memref<1x32xf32, #tpu.memory_space<vmem>>, vector<1x32xf32>
    %4 = vector.broadcast %3 : vector<1x32xf32> to vector<512x32xf32>
    %5 = arith.addf %2, %4 : vector<512x32xf32>
    %6 = math.sin %5 : vector<512x32xf32>
    %c0_5 = arith.constant 0 : index
    %c0_6 = arith.constant 0 : index
    %7 = vector.load %arg4[%c0_5, %c0_6] : memref<6x6xf32, #tpu.memory_space<vmem>>, vector<6x6xf32>
    %cst_7 = arith.constant dense<0.000000e+00> : vector<512x6xf32>
    %8 = tpu.matmul %0, %7, %cst_7 {dimension_numbers = #tpu.dot_dimension_numbers<[1], [0], [0], [1], [0, 0, 1, 1], [], []>} : vector<512x6xf32>, vector<6x6xf32>, vector<512x6xf32> -> vector<512x6xf32>
    %c0_8 = arith.constant 0 : index
    %c0_9 = arith.constant 0 : index
    %9 = vector.load %arg5[%c0_8, %c0_9] : memref<32x6xf32, #tpu.memory_space<vmem>>, vector<32x6xf32>
    %cst_10 = arith.constant dense<0.000000e+00> : vector<512x6xf32>
    %10 = tpu.matmul %6, %9, %cst_10 {dimension_numbers = #tpu.dot_dimension_numbers<[1], [0], [0], [1], [0, 0, 1, 1], [], []>} : vector<512x32xf32>, vector<32x6xf32>, vector<512x6xf32> -> vector<512x6xf32>
    %11 = arith.addf %8, %10 : vector<512x6xf32>
    %c0_11 = arith.constant 0 : index
    %c0_12 = arith.constant 0 : index
    %12 = vector.load %arg6[%c0_11, %c0_12] : memref<1x6xf32, #tpu.memory_space<vmem>>, vector<1x6xf32>
    %13 = vector.broadcast %12 : vector<1x6xf32> to vector<512x6xf32>
    %14 = arith.addf %11, %13 : vector<512x6xf32>
    %c0_13 = arith.constant 0 : index
    %c0_14 = arith.constant 0 : index
    %15 = vector.load %arg7[%c0_13, %c0_14] : memref<512x6xf32, #tpu.memory_space<vmem>>, vector<512x6xf32>
    tpu.vector_store %arg7[%c0_13, %c0_14], %14 {strides = array<i32>} : memref<512x6xf32, #tpu.memory_space<vmem>>, vector<512x6xf32>,
    return
  }
  func.func @transform_0(%arg0: i32) -> (i32, i32) {
    %c0_i32 = arith.constant 0 : i32
    %c0_i32_0 = arith.constant 0 : i32
    return %arg0, %c0_i32 : i32, i32
  }
  func.func @transform_1(%arg0: i32) -> (i32, i32) {
    %c0_i32 = arith.constant 0 : i32
    %c0_i32_0 = arith.constant 0 : i32
    %c0_i32_1 = arith.constant 0 : i32
    return %c0_i32, %c0_i32_0 : i32, i32
  }
  func.func @transform_2(%arg0: i32) -> (i32, i32) {
    %c0_i32 = arith.constant 0 : i32
    %c0_i32_0 = arith.constant 0 : i32
    %c0_i32_1 = arith.constant 0 : i32
    return %c0_i32, %c0_i32_0 : i32, i32
  }
  func.func @transform_3(%arg0: i32) -> (i32, i32) {
    %c0_i32 = arith.constant 0 : i32
    %c0_i32_0 = arith.constant 0 : i32
    %c0_i32_1 = arith.constant 0 : i32
    return %c0_i32, %c0_i32_0 : i32, i32
  }
  func.func @transform_4(%arg0: i32) -> (i32, i32) {
    %c0_i32 = arith.constant 0 : i32
    %c0_i32_0 = arith.constant 0 : i32
    %c0_i32_1 = arith.constant 0 : i32
    return %c0_i32, %c0_i32_0 : i32, i32
  }
  func.func @transform_5(%arg0: i32) -> (i32, i32) {
    %c0_i32 = arith.constant 0 : i32
    %c0_i32_0 = arith.constant 0 : i32
    %c0_i32_1 = arith.constant 0 : i32
    return %c0_i32, %c0_i32_0 : i32, i32
  }
  func.func @transform_6(%arg0: i32) -> (i32, i32) {
    %c0_i32 = arith.constant 0 : i32
    %c0_i32_0 = arith.constant 0 : i32
    return %arg0, %c0_i32 : i32, i32
  }
}

</mosaic_0001>

<llo_original>
// kernel: tpu_custom_call.1
$region0: #{tpu_custom_call.1}
  #allocation0 [shape = 'u32[]', space=smem, size = 0x4, offset = 0x4, fixed_abs, tag = 'smem constant byte address 0x4 - core index']
  #allocation1 [shape = 'u32[144,128]{1,0:T(1,128)}', space=vmem, size = 0x12000, scoped, tag = 'internal scratch']
  %s0 = inlined_call_operand.vmem [shape: f32[1024,6], index: 0, kind: input, shape index: {}]
  %s1 = inlined_call_operand.vmem [shape: f32[6,32], index: 1, kind: input, shape index: {}]
  %s2 = inlined_call_operand.vmem [shape: f32[1,32], index: 2, kind: input, shape index: {}]
  %s3 = inlined_call_operand.vmem [shape: f32[6,6], index: 3, kind: input, shape index: {}]
  %s4 = inlined_call_operand.vmem [shape: f32[32,6], index: 4, kind: input, shape index: {}]
  %s5 = inlined_call_operand.vmem [shape: f32[1,6], index: 5, kind: input, shape index: {}]
  %s6 = inlined_call_operand.vmem [shape: f32[1024,6], index: 6, kind: output, shape index: {}]
  %s7 = sld [smem:[#allocation0]]
  $region57: #{tpu_custom_call.1} parent=0
    _
  %s9 = ssub.s32 1, %s7
  %s10 = scalar_select 0, %s9, %s7
  loop: start=0, step=1, limit=4
  $region2: #{tpu_custom_call.1} parent=0 // loop_pre_header
    _
  $region3: #{tpu_custom_call.1} parent=0 // loop_header
    %s12 = sphi 0, %s16
    %p13 = scmp.ge.s32.totalorder %s12, 4
    %s22 = sphi 0, %s24
    %s25 = sphi 0, %s22
    %s26 = sphi 0, %s25
    %s42 = sphi 0, %s26
    %s46 = sphi 0, %s46
    %s48 = sphi 0, %s46
    %s49 = sphi 0, %s48
    %s63 = sphi 0, %s49
    %s67 = sphi 0, %s67
    %s69 = sphi 0, %s67
    %s70 = sphi 0, %s69
    %s84 = sphi 0, %s70
    %s88 = sphi 0, %s88
    %s90 = sphi 0, %s88
    %s91 = sphi 0, %s90
    %s105 = sphi 0, %s91
    %s109 = sphi 0, %s109
    %s111 = sphi 0, %s109
    %s112 = sphi 0, %s111
    %s126 = sphi 0, %s112
    %s130 = sphi 0, %s130
    %s132 = sphi 0, %s130
    %s133 = sphi 0, %s132
    %s147 = sphi 0, %s133
    %s153 = sphi 0, %s155
    %s156 = sphi 0, %s153
    %s157 = sphi 0, %s156
    %s173 = sphi 0, %s157
  $region4: #{tpu_custom_call.1} parent=0 // loop_header_branch
    %15 = sbr.rel (%p13) target = $region8
  $region5: #{tpu_custom_call.1} parent=0 // loop_body
    %s17 = ssub.s32 %s12, 1
    %s18 = ssub.s32 %s12, 2
    %s19 = sadd.s32 %s12, 1
    %s20 = ssub.s32 %s12, %s19
    %p21 = scmp.eq.s32.totalorder %s20, 0
    %s23 = sadd.s32 %s22, 1
    %s24 = scalar_select %p21, %s22, %s23
    %p27 = pneg %p21
    %p28 = scmp.eq.s32.totalorder %s12, 1
    %p29 = por %p27, %p28
    %p30 = scmp.ne.s32.totalorder %s22, %s25
    %p31 = scmp.eq.s32.totalorder %s12, 0
    %p32 = por %p30, %p31
    %p33 = scmp.ne.s32.totalorder %s22, %s25
    %p34 = scmp.eq.s32.totalorder %s17, 1
    %p35 = por %p33, %p34
    %p36 = scmp.ne.s32.totalorder %s25, %s26
    %p37 = scmp.eq.s32.totalorder %s17, 0
    %p38 = por %p36, %p37
    %p39 = scmp.ne.s32.totalorder %s25, %s26
    %p40 = scmp.eq.s32.totalorder %s18, 1
    %p41 = por %p39, %p40
    %p43 = scmp.ne.s32.totalorder %s26, %s42
    %p44 = scmp.eq.s32.totalorder %s18, 0
    %p45 = por %p43, %p44
    %s47 = sadd.s32 %s46, 1
    %p50 = scmp.eq.s32.totalorder %s12, 1
    %p51 = scmp.ne.s32.totalorder %s46, %s48
    %p52 = scmp.eq.s32.totalorder %s12, 0
    %p53 = por %p51, %p52
    %p54 = scmp.ne.s32.totalorder %s46, %s48
    %p55 = scmp.eq.s32.totalorder %s17, 1
    %p56 = por %p54, %p55
    %p57 = scmp.ne.s32.totalorder %s48, %s49
    %p58 = scmp.eq.s32.totalorder %s17, 0
    %p59 = por %p57, %p58
    %p60 = scmp.ne.s32.totalorder %s48, %s49
    %p61 = scmp.eq.s32.totalorder %s18, 1
    %p62 = por %p60, %p61
    %p64 = scmp.ne.s32.totalorder %s49, %s63
    %p65 = scmp.eq.s32.totalorder %s18, 0
    %p66 = por %p64, %p65
    %s68 = sadd.s32 %s67, 1
    %p71 = scmp.eq.s32.totalorder %s12, 1
    %p72 = scmp.ne.s32.totalorder %s67, %s69
    %p73 = scmp.eq.s32.totalorder %s12, 0
    %p74 = por %p72, %p73
    %p75 = scmp.ne.s32.totalorder %s67, %s69
    %p76 = scmp.eq.s32.totalorder %s17, 1
    %p77 = por %p75, %p76
    %p78 = scmp.ne.s32.totalorder %s69, %s70
    %p79 = scmp.eq.s32.totalorder %s17, 0
    %p80 = por %p78, %p79
    %p81 = scmp.ne.s32.totalorder %s69, %s70
    %p82 = scmp.eq.s32.totalorder %s18, 1
    %p83 = por %p81, %p82
    %p85 = scmp.ne.s32.totalorder %s70, %s84
    %p86 = scmp.eq.s32.totalorder %s18, 0
    %p87 = por %p85, %p86
    %s89 = sadd.s32 %s88, 1
    %p92 = scmp.eq.s32.totalorder %s12, 1
    %p93 = scmp.ne.s32.totalorder %s88, %s90
    %p94 = scmp.eq.s32.totalorder %s12, 0
    %p95 = por %p93, %p94
    %p96 = scmp.ne.s32.totalorder %s88, %s90
    %p97 = scmp.eq.s32.totalorder %s17, 1
    %p98 = por %p96, %p97
    %p99 = scmp.ne.s32.totalorder %s90, %s91
    %p100 = scmp.eq.s32.totalorder %s17, 0
    %p101 = por %p99, %p100
    %p102 = scmp.ne.s32.totalorder %s90, %s91
    %p103 = scmp.eq.s32.totalorder %s18, 1
    %p104 = por %p102, %p103
    %p106 = scmp.ne.s32.totalorder %s91, %s105
    %p107 = scmp.eq.s32.totalorder %s18, 0
    %p108 = por %p106, %p107
    %s110 = sadd.s32 %s109, 1
    %p113 = scmp.eq.s32.totalorder %s12, 1
    %p114 = scmp.ne.s32.totalorder %s109, %s111
    %p115 = scmp.eq.s32.totalorder %s12, 0
    %p116 = por %p114, %p115
    %p117 = scmp.ne.s32.totalorder %s109, %s111
    %p118 = scmp.eq.s32.totalorder %s17, 1
    %p119 = por %p117, %p118
    %p120 = scmp.ne.s32.totalorder %s111, %s112
    %p121 = scmp.eq.s32.totalorder %s17, 0
    %p122 = por %p120, %p121
    %p123 = scmp.ne.s32.totalorder %s111, %s112
    %p124 = scmp.eq.s32.totalorder %s18, 1
    %p125 = por %p123, %p124
    %p127 = scmp.ne.s32.totalorder %s112, %s126
    %p128 = scmp.eq.s32.totalorder %s18, 0
    %p129 = por %p127, %p128
    %s131 = sadd.s32 %s130, 1
    %p134 = scmp.eq.s32.totalorder %s12, 1
    %p135 = scmp.ne.s32.totalorder %s130, %s132
    %p136 = scmp.eq.s32.totalorder %s12, 0
    %p137 = por %p135, %p136
    %p138 = scmp.ne.s32.totalorder %s130, %s132
    %p139 = scmp.eq.s32.totalorder %s17, 1
    %p140 = por %p138, %p139
    %p141 = scmp.ne.s32.totalorder %s132, %s133
    %p142 = scmp.eq.s32.totalorder %s17, 0
    %p143 = por %p141, %p142
    %p144 = scmp.ne.s32.totalorder %s132, %s133
    %p145 = scmp.eq.s32.totalorder %s18, 1
    %p146 = por %p144, %p145
    %p148 = scmp.ne.s32.totalorder %s133, %s147
    %p149 = scmp.eq.s32.totalorder %s18, 0
    %p150 = por %p148, %p149
    %s151 = ssub.s32 %s12, %s19
    %p152 = scmp.eq.s32.totalorder %s151, 0
    %s154 = sadd.s32 %s153, 1
    %s155 = scalar_select %p152, %s153, %s154
    %p158 = pneg %p152
    %p159 = scmp.eq.s32.totalorder %s12, 1
    %p160 = por %p158, %p159
    %p161 = scmp.ne.s32.totalorder %s153, %s156
    %p162 = scmp.eq.s32.totalorder %s12, 0
    %p163 = por %p161, %p162
    %p164 = scmp.ne.s32.totalorder %s153, %s156
    %p165 = scmp.eq.s32.totalorder %s17, 1
    %p166 = por %p164, %p165
    %p167 = scmp.ne.s32.totalorder %s156, %s157
    %p168 = scmp.eq.s32.totalorder %s17, 0
    %p169 = por %p167, %p168
    %p170 = scmp.ne.s32.totalorder %s156, %s157
    %p171 = scmp.eq.s32.totalorder %s18, 1
    %p172 = por %p170, %p171
    %p174 = scmp.ne.s32.totalorder %s157, %s173
    %p175 = scmp.eq.s32.totalorder %s18, 0
    %p176 = por %p174, %p175
    %p177 = scmp.le.s32.totalorder 1, %s12
    %p178 = scmp.lt.s32.totalorder %s12, 3
    %p179 = pnand %p177, %p178
    %p180 = pneg %p179
    // Predicated region
    $region9: #{tpu_custom_call.1} parent=5 // pred_check
      _
    $region10: #{tpu_custom_call.1} parent=5 // pred_check_branch
      %182 = sbr.rel (%p179) target = $region12
    $region11: #{tpu_custom_call.1} parent=5 // pred_region
      %s183 = ssub.s32 %s12, 1
      // Predicated region
      $region13: #{tpu_custom_call.1} parent=11 // pred_check
        %p184 = pneg %p59
      $region14: #{tpu_custom_call.1} parent=11 // pred_check_branch
        %186 = sbr.rel (%p184) target = $region16
      $region15: #{tpu_custom_call.1} parent=11 // pred_region
        _
      $region16: #{tpu_custom_call.1} parent=11 // pred_fallthru
        _
      // Predicated region
      $region17: #{tpu_custom_call.1} parent=11 // pred_check
        %p187 = pneg %p80
      $region18: #{tpu_custom_call.1} parent=11 // pred_check_branch
        %189 = sbr.rel (%p187) target = $region20
      $region19: #{tpu_custom_call.1} parent=11 // pred_region
        _
      $region20: #{tpu_custom_call.1} parent=11 // pred_fallthru
        _
      // Predicated region
      $region21: #{tpu_custom_call.1} parent=11 // pred_check
        %p190 = pneg %p101
      $region22: #{tpu_custom_call.1} parent=11 // pred_check_branch
        %192 = sbr.rel (%p190) target = $region24
      $region23: #{tpu_custom_call.1} parent=11 // pred_region
        _
      $region24: #{tpu_custom_call.1} parent=11 // pred_fallthru
        _
      // Predicated region
      $region25: #{tpu_custom_call.1} parent=11 // pred_check
        %p193 = pneg %p122
      $region26: #{tpu_custom_call.1} parent=11 // pred_check_branch
        %195 = sbr.rel (%p193) target = $region28
      $region27: #{tpu_custom_call.1} parent=11 // pred_region
        _
      $region28: #{tpu_custom_call.1} parent=11 // pred_fallthru
        _
      // Predicated region
      $region29: #{tpu_custom_call.1} parent=11 // pred_check
        %p196 = pneg %p143
      $region30: #{tpu_custom_call.1} parent=11 // pred_check_branch
        %198 = sbr.rel (%p196) target = $region32
      $region31: #{tpu_custom_call.1} parent=11 // pred_region
        _
      $region32: #{tpu_custom_call.1} parent=11 // pred_fallthru
        _
    $region12: #{tpu_custom_call.1} parent=5 // pred_fallthru
      _
    %p199 = scmp.lt.s32.totalorder %s12, 2
    // Predicated region
    $region33: #{tpu_custom_call.1} parent=5 // pred_check
      %p200 = pneg %p199
    $region34: #{tpu_custom_call.1} parent=5 // pred_check_branch
      %202 = sbr.rel (%p200) target = $region36
    $region35: #{tpu_custom_call.1} parent=5 // pred_region
      // Predicated region
      $region37: #{tpu_custom_call.1} parent=35 // pred_check
        %p203 = pneg %p32
      $region38: #{tpu_custom_call.1} parent=35 // pred_check_branch
        %205 = sbr.rel (%p203) target = $region40
      $region39: #{tpu_custom_call.1} parent=35 // pred_region
        %s206 = smul.u32 64, %s12
        %p207 = scmp.lt.s32.totalorder %s206, 127
        %s208 = scalar_select %p207, %s206, 127
        %s209 = smul.addr %s208, 8
        %s210 = scalar_lea.vmem %s0, %s209
        %s211 = smul.u32 64, %s12
      $region40: #{tpu_custom_call.1} parent=35 // pred_fallthru
        _
    $region36: #{tpu_custom_call.1} parent=5 // pred_fallthru
      _
    %p212 = scmp.le.s32.totalorder 1, %s12
    %p213 = scmp.lt.s32.totalorder %s12, 3
    %p214 = pnand %p212, %p213
    %p215 = pneg %p214
    // Predicated region
    $region41: #{tpu_custom_call.1} parent=5 // pred_check
      _
    $region42: #{tpu_custom_call.1} parent=5 // pred_check_branch
      %217 = sbr.rel (%p214) target = $region44
    $region43: #{tpu_custom_call.1} parent=5 // pred_region
      %s218 = ssub.s32 %s12, 1
      %s219 = smul.u32 64, %s17
      %p220 = scmp.lt.s32.totalorder %s219, 127
      %s221 = scalar_select %p220, %s219, 127
      %s222 = smul.addr %s221, 8
      %s223 = scalar_lea.vmem %s0, %s222
      %p224 = pneg %p38
      %p225 = pneg %p35
      %p226 = pneg %p59
      %p227 = pneg %p56
      %p228 = pneg %p80
      %p229 = pneg %p77
      %p230 = pneg %p101
      %p231 = pneg %p98
      %p232 = pneg %p122
      %p233 = pneg %p119
      %p234 = pneg %p143
      %p235 = pneg %p140
      %p236 = pneg %p169
      %p237 = pneg %p166
      %s238 = smul.u32 64, %s17
      %p239 = scmp.lt.s32.totalorder %s238, 127
      %s240 = scalar_select %p239, %s238, 127
      %s241 = smul.addr %s240, 8
      %s242 = scalar_lea.vmem %s6, %s241
      %s243 = smul.u32 64, %s17
      %p244 = scmp.lt.s32.totalorder %s243, 127
      %s245 = scalar_select %p244, %s243, 127
      %s246 = smul.addr %s245, 8
      %s247 = scalar_lea.vmem %s0, %s246
      %s248 = smul.u32 64, %s17
      %s249 = smul.u32 64, %s17
      %p250 = scmp.lt.s32.totalorder %s249, 127
      %s251 = scalar_select %p250, %s249, 127
      %s252 = smul.addr %s251, 8
      %s253 = scalar_lea.vmem %s6, %s252
      %s254 = smul.u32 64, %s17
      %v255 = vld [vmem:[%s247] sm:$0xff]
      %v256 = vld [vmem:[%s247 + $0x8] sm:$0xff]
      %v257 = vld [vmem:[%s247 + $0x10] sm:$0xff]
      %v258 = vld [vmem:[%s247 + $0x18] sm:$0xff]
      %v259 = vld [vmem:[%s247 + $0x20] sm:$0xff]
      %v260 = vld [vmem:[%s247 + $0x28] sm:$0xff]
      %v261 = vld [vmem:[%s247 + $0x30] sm:$0xff]
      %v262 = vld [vmem:[%s247 + $0x38] sm:$0xff]
      %v263 = vld [vmem:[%s247 + $0x40] sm:$0xff]
      %v264 = vld [vmem:[%s247 + $0x48] sm:$0xff]
      %v265 = vld [vmem:[%s247 + $0x50] sm:$0xff]
      %v266 = vld [vmem:[%s247 + $0x58] sm:$0xff]
      %v267 = vld [vmem:[%s247 + $0x60] sm:$0xff]
      %v268 = vld [vmem:[%s247 + $0x68] sm:$0xff]
      %v269 = vld [vmem:[%s247 + $0x70] sm:$0xff]
      %v270 = vld [vmem:[%s247 + $0x78] sm:$0xff]
      %v271 = vld [vmem:[%s247 + $0x80] sm:$0xff]
      %v272 = vld [vmem:[%s247 + $0x88] sm:$0xff]
      %v273 = vld [vmem:[%s247 + $0x90] sm:$0xff]
      %v274 = vld [vmem:[%s247 + $0x98] sm:$0xff]
      %v275 = vld [vmem:[%s247 + $0xa0] sm:$0xff]
      %v276 = vld [vmem:[%s247 + $0xa8] sm:$0xff]
      %v277 = vld [vmem:[%s247 + $0xb0] sm:$0xff]
      %v278 = vld [vmem:[%s247 + $0xb8] sm:$0xff]
      %v279 = vld [vmem:[%s247 + $0xc0] sm:$0xff]
      %v280 = vld [vmem:[%s247 + $0xc8] sm:$0xff]
      %v281 = vld [vmem:[%s247 + $0xd0] sm:$0xff]
      %v282 = vld [vmem:[%s247 + $0xd8] sm:$0xff]
      %v283 = vld [vmem:[%s247 + $0xe0] sm:$0xff]
      %v284 = vld [vmem:[%s247 + $0xe8] sm:$0xff]
      %v285 = vld [vmem:[%s247 + $0xf0] sm:$0xff]
      %v286 = vld [vmem:[%s247 + $0xf8] sm:$0xff]
      %v287 = vld [vmem:[%s247 + $0x100] sm:$0xff]
      %v288 = vld [vmem:[%s247 + $0x108] sm:$0xff]
      %v289 = vld [vmem:[%s247 + $0x110] sm:$0xff]
      %v290 = vld [vmem:[%s247 + $0x118] sm:$0xff]
      %v291 = vld [vmem:[%s247 + $0x120] sm:$0xff]
      %v292 = vld [vmem:[%s247 + $0x128] sm:$0xff]
      %v293 = vld [vmem:[%s247 + $0x130] sm:$0xff]
      %v294 = vld [vmem:[%s247 + $0x138] sm:$0xff]
      %v295 = vld [vmem:[%s247 + $0x140] sm:$0xff]
      %v296 = vld [vmem:[%s247 + $0x148] sm:$0xff]
      %v297 = vld [vmem:[%s247 + $0x150] sm:$0xff]
      %v298 = vld [vmem:[%s247 + $0x158] sm:$0xff]
      %v299 = vld [vmem:[%s247 + $0x160] sm:$0xff]
      %v300 = vld [vmem:[%s247 + $0x168] sm:$0xff]
      %v301 = vld [vmem:[%s247 + $0x170] sm:$0xff]
      %v302 = vld [vmem:[%s247 + $0x178] sm:$0xff]
      %v303 = vld [vmem:[%s247 + $0x180] sm:$0xff]
      %v304 = vld [vmem:[%s247 + $0x188] sm:$0xff]
      %v305 = vld [vmem:[%s247 + $0x190] sm:$0xff]
      %v306 = vld [vmem:[%s247 + $0x198] sm:$0xff]
      %v307 = vld [vmem:[%s247 + $0x1a0] sm:$0xff]
      %v308 = vld [vmem:[%s247 + $0x1a8] sm:$0xff]
      %v309 = vld [vmem:[%s247 + $0x1b0] sm:$0xff]
      %v310 = vld [vmem:[%s247 + $0x1b8] sm:$0xff]
      %v311 = vld [vmem:[%s247 + $0x1c0] sm:$0xff]
      %v312 = vld [vmem:[%s247 + $0x1c8] sm:$0xff]
      %v313 = vld [vmem:[%s247 + $0x1d0] sm:$0xff]
      %v314 = vld [vmem:[%s247 + $0x1d8] sm:$0xff]
      %v315 = vld [vmem:[%s247 + $0x1e0] sm:$0xff]
      %v316 = vld [vmem:[%s247 + $0x1e8] sm:$0xff]
      %v317 = vld [vmem:[%s247 + $0x1f0] sm:$0xff]
      %v318 = vld [vmem:[%s247 + $0x1f8] sm:$0xff]
      %v319 = vld [vmem:[%s1] sm:$0x3f]
      %v320 = vld [vmem:[%s2] sm:$0x1]
      %v322 = vlaneseq
      %v323 = vshrl.u32 %v322, 7
      %v324 = vsub.s32 0, %v323
      %v325 = vrot.slane %v320, %v324
      %vm327 = vcmask 48128
      %v329 = vsel %vm327, %v255, 0
      %v332 = vsel %vm327, %v256, 0
      %v335 = vsel %vm327, %v257, 0
      %v338 = vsel %vm327, %v258, 0
      %v341 = vsel %vm327, %v259, 0
      %v344 = vsel %vm327, %v260, 0
      %v347 = vsel %vm327, %v261, 0
      %v350 = vsel %vm327, %v262, 0
      %v353 = vsel %vm327, %v263, 0
      %v356 = vsel %vm327, %v264, 0
      %v359 = vsel %vm327, %v265, 0
      %v362 = vsel %vm327, %v266, 0
      %v365 = vsel %vm327, %v267, 0
      %v368 = vsel %vm327, %v268, 0
      %v371 = vsel %vm327, %v269, 0
      %v374 = vsel %vm327, %v270, 0
      %v377 = vsel %vm327, %v271, 0
      %v380 = vsel %vm327, %v272, 0
      %v383 = vsel %vm327, %v273, 0
      %v386 = vsel %vm327, %v274, 0
      %v389 = vsel %vm327, %v275, 0
      %v392 = vsel %vm327, %v276, 0
      %v395 = vsel %vm327, %v277, 0
      %v398 = vsel %vm327, %v278, 0
      %v401 = vsel %vm327, %v279, 0
      %v404 = vsel %vm327, %v280, 0
      %v407 = vsel %vm327, %v281, 0
      %v410 = vsel %vm327, %v282, 0
      %v413 = vsel %vm327, %v283, 0
      %v416 = vsel %vm327, %v284, 0
      %v419 = vsel %vm327, %v285, 0
      %v422 = vsel %vm327, %v286, 0
      %v425 = vsel %vm327, %v287, 0
      %v428 = vsel %vm327, %v288, 0
      %v431 = vsel %vm327, %v289, 0
      %v434 = vsel %vm327, %v290, 0
      %v437 = vsel %vm327, %v291, 0
      %v440 = vsel %vm327, %v292, 0
      %v443 = vsel %vm327, %v293, 0
      %v446 = vsel %vm327, %v294, 0
      %v449 = vsel %vm327, %v295, 0
      %v452 = vsel %vm327, %v296, 0
      %v455 = vsel %vm327, %v297, 0
      %v458 = vsel %vm327, %v298, 0
      %v461 = vsel %vm327, %v299, 0
      %v464 = vsel %vm327, %v300, 0
      %v467 = vsel %vm327, %v301, 0
      %v470 = vsel %vm327, %v302, 0
      %v473 = vsel %vm327, %v303, 0
      %v476 = vsel %vm327, %v304, 0
      %v479 = vsel %vm327, %v305, 0
      %v482 = vsel %vm327, %v306, 0
      %v485 = vsel %vm327, %v307, 0
      %v488 = vsel %vm327, %v308, 0
      %v491 = vsel %vm327, %v309, 0
      %v494 = vsel %vm327, %v310, 0
      %v497 = vsel %vm327, %v311, 0
      %v500 = vsel %vm327, %v312, 0
      %v503 = vsel %vm327, %v313, 0
      %v506 = vsel %vm327, %v314, 0
      %v509 = vsel %vm327, %v315, 0
      %v512 = vsel %vm327, %v316, 0
      %v515 = vsel %vm327, %v317, 0
      %v518 = vsel %vm327, %v318, 0
      %vm520 = vcmask 1045504
      %v522 = vsel %vm520, %v319, 0
      %524 = vmatprep.subr.mxu0 0.0
      %525 = vmatpush1.msra.mxu0 %v522
      %526 = vmatprep.subr.mxu0 0.0
      %527 = vmatpush1.msra.mxu0 0.0
      %528 = vmatprep.subr.mxu0 0.0
      %529 = vmatpush1.msra.mxu0 0.0
      %530 = vmatprep.subr.mxu0 0.0
      %531 = vmatpush1.msra.mxu0 0.0
      %532 = vmatprep.subr.mxu0 0.0
      %533 = vmatpush1.msra.mxu0 0.0
      %534 = vmatprep.subr.mxu0 0.0
      %535 = vmatpush1.msra.mxu0 0.0
      %536 = vmatprep.subr.mxu0 0.0
      %537 = vmatpush1.msra.mxu0 0.0
      %538 = vmatprep.subr.mxu0 0.0
      %539 = vmatpush1.msra.mxu0 0.0
      %540 = vmatprep.subr.mxu0 0.0
      %541 = vmatpush1.msra.mxu0 0.0
      %542 = vmatprep.subr.mxu0 0.0
      %543 = vmatpush1.msra.mxu0 0.0
      %544 = vmatprep.subr.mxu0 0.0
      %545 = vmatpush1.msra.mxu0 0.0
      %546 = vmatprep.subr.mxu0 0.0
      %547 = vmatpush1.msra.mxu0 0.0
      %548 = vmatprep.subr.mxu0 0.0
      %549 = vmatpush1.msra.mxu0 0.0
      %550 = vmatprep.subr.mxu0 0.0
      %551 = vmatpush1.msra.mxu0 0.0
      %552 = vmatprep.subr.mxu0 0.0
      %553 = vmatpush1.msra.mxu0 0.0
      %554 = vmatprep.subr.mxu0 0.0
      %555 = vmatpush1.msra.mxu0 0.0
      %556 = vmatprep.subr.mxu0 0.0
      %557 = vmatpush1.msra.mxu0 0.0
      %558 = vmatprep.subr.mxu0 0.0
      %559 = vmatpush1.msra.mxu0 0.0
      %560 = vmatprep.subr.mxu0 0.0
      %561 = vmatpush1.msra.mxu0 0.0
      %562 = vmatprep.subr.mxu0 0.0
      %563 = vmatpush1.msra.mxu0 0.0
      %564 = vmatprep.subr.mxu0 0.0
      %565 = vmatpush1.msra.mxu0 0.0
      %566 = vmatprep.subr.mxu0 0.0
      %567 = vmatpush1.msra.mxu0 0.0
      %568 = vmatprep.subr.mxu0 0.0
      %569 = vmatpush1.msra.mxu0 0.0
      %570 = vmatprep.subr.mxu0 0.0
      %571 = vmatpush1.msra.mxu0 0.0
      %572 = vmatprep.subr.mxu0 0.0
      %573 = vmatpush1.msra.mxu0 0.0
      %574 = vmatprep.subr.mxu0 0.0
      %575 = vmatpush1.msra.mxu0 0.0
      %576 = vmatprep.subr.mxu0 0.0
      %577 = vmatpush1.msra.mxu0 0.0
      %578 = vmatprep.subr.mxu0 0.0
      %579 = vmatpush1.msra.mxu0 0.0
      %580 = vmatprep.subr.mxu0 0.0
      %581 = vmatpush1.msra.mxu0 0.0
      %582 = vmatprep.subr.mxu0 0.0
      %583 = vmatpush1.msra.mxu0 0.0
      %584 = vmatprep.subr.mxu0 0.0
      %585 = vmatpush1.msra.mxu0 0.0
      %586 = vmatprep.subr.mxu0 0.0
      %587 = vmatpush1.msra.mxu0 0.0
      %588 = vmatprep.mubr.f32.mxu0 0.0
      %589 = vmatmul.mubr.f32.gmra.mrb[0].mxu0 %v329
      %v590 = vpop.f32.mrb[0].mxu0
      %v591 = vadd.f32 %v325, %v590
      %v592 = vpop.f32.mrb[0].mxu0
      %593 = vmatprep.mubr.f32.mxu0 0.0
      %594 = vmatmul.mubr.f32.gmra.mrb[0].mxu0 %v332
      %v595 = vpop.f32.mrb[0].mxu0
      %v596 = vadd.f32 %v325, %v595
      %v597 = vpop.f32.mrb[0].mxu0
      %598 = vmatprep.mubr.f32.mxu0 0.0
      %599 = vmatmul.mubr.f32.gmra.mrb[0].mxu0 %v335
      %v600 = vpop.f32.mrb[0].mxu0
      %v601 = vadd.f32 %v325, %v600
      %v602 = vpop.f32.mrb[0].mxu0
      %603 = vmatprep.mubr.f32.mxu0 0.0
      %604 = vmatmul.mubr.f32.gmra.mrb[0].mxu0 %v338
      %v605 = vpop.f32.mrb[0].mxu0
      %v606 = vadd.f32 %v325, %v605
      %v607 = vpop.f32.mrb[0].mxu0
      %608 = vmatprep.mubr.f32.mxu0 0.0
      %609 = vmatmul.mubr.f32.gmra.mrb[0].mxu0 %v341
      %v610 = vpop.f32.mrb[0].mxu0
      %v611 = vadd.f32 %v325, %v610
      %v612 = vpop.f32.mrb[0].mxu0
      %613 = vmatprep.mubr.f32.mxu0 0.0
      %614 = vmatmul.mubr.f32.gmra.mrb[0].mxu0 %v344
      %v615 = vpop.f32.mrb[0].mxu0
      %v616 = vadd.f32 %v325, %v615
      %v617 = vpop.f32.mrb[0].mxu0
      %618 = vmatprep.mubr.f32.mxu0 0.0
      %619 = vmatmul.mubr.f32.gmra.mrb[0].mxu0 %v347
      %v620 = vpop.f32.mrb[0].mxu0
      %v621 = vadd.f32 %v325, %v620
      %v622 = vpop.f32.mrb[0].mxu0
      %623 = vmatprep.mubr.f32.mxu0 0.0
      %624 = vmatmul.mubr.f32.gmra.mrb[0].mxu0 %v350
      %v625 = vpop.f32.mrb[0].mxu0
      %v626 = vadd.f32 %v325, %v625
      %v627 = vpop.f32.mrb[0].mxu0
      %628 = vmatprep.mubr.f32.mxu0 0.0
      %629 = vmatmul.mubr.f32.gmra.mrb[0].mxu0 %v353
      %v630 = vpop.f32.mrb[0].mxu0
      %v631 = vadd.f32 %v325, %v630
      %v632 = vpop.f32.mrb[0].mxu0
      %633 = vmatprep.mubr.f32.mxu0 0.0
      %634 = vmatmul.mubr.f32.gmra.mrb[0].mxu0 %v356
      %v635 = vpop.f32.mrb[0].mxu0
      %v636 = vadd.f32 %v325, %v635
      %v637 = vpop.f32.mrb[0].mxu0
      %638 = vmatprep.mubr.f32.mxu0 0.0
      %639 = vmatmul.mubr.f32.gmra.mrb[0].mxu0 %v359
      %v640 = vpop.f32.mrb[0].mxu0
      %v641 = vadd.f32 %v325, %v640
      %v642 = vpop.f32.mrb[0].mxu0
      %643 = vmatprep.mubr.f32.mxu0 0.0
      %644 = vmatmul.mubr.f32.gmra.mrb[0].mxu0 %v362
      %v645 = vpop.f32.mrb[0].mxu0
      %v646 = vadd.f32 %v325, %v645
      %v647 = vpop.f32.mrb[0].mxu0
      %648 = vmatprep.mubr.f32.mxu0 0.0
      %649 = vmatmul.mubr.f32.gmra.mrb[0].mxu0 %v365
      %v650 = vpop.f32.mrb[0].mxu0
      %v651 = vadd.f32 %v325, %v650
      %v652 = vpop.f32.mrb[0].mxu0
      %653 = vmatprep.mubr.f32.mxu0 0.0
      %654 = vmatmul.mubr.f32.gmra.mrb[0].mxu0 %v368
      %v655 = vpop.f32.mrb[0].mxu0
      %v656 = vadd.f32 %v325, %v655
      %v657 = vpop.f32.mrb[0].mxu0
      %658 = vmatprep.mubr.f32.mxu0 0.0
      %659 = vmatmul.mubr.f32.gmra.mrb[0].mxu0 %v371
      %v660 = vpop.f32.mrb[0].mxu0
      %v661 = vadd.f32 %v325, %v660
      %v662 = vpop.f32.mrb[0].mxu0
      %663 = vmatprep.mubr.f32.mxu0 0.0
      %664 = vmatmul.mubr.f32.gmra.mrb[0].mxu0 %v374
      %v665 = vpop.f32.mrb[0].mxu0
      %v666 = vadd.f32 %v325, %v665
      %v667 = vpop.f32.mrb[0].mxu0
      %668 = vmatprep.mubr.f32.mxu0 0.0
      %669 = vmatmul.mubr.f32.gmra.mrb[0].mxu0 %v377
      %v670 = vpop.f32.mrb[0].mxu0
      %v671 = vadd.f32 %v325, %v670
      %v672 = vpop.f32.mrb[0].mxu0
      %673 = vmatprep.mubr.f32.mxu0 0.0
      %674 = vmatmul.mubr.f32.gmra.mrb[0].mxu0 %v380
      %v675 = vpop.f32.mrb[0].mxu0
      %v676 = vadd.f32 %v325, %v675
      %v677 = vpop.f32.mrb[0].mxu0
      %678 = vmatprep.mubr.f32.mxu0 0.0
      %679 = vmatmul.mubr.f32.gmra.mrb[0].mxu0 %v383
      %v680 = vpop.f32.mrb[0].mxu0
      %v681 = vadd.f32 %v325, %v680
      %v682 = vpop.f32.mrb[0].mxu0
      %683 = vmatprep.mubr.f32.mxu0 0.0
      %684 = vmatmul.mubr.f32.gmra.mrb[0].mxu0 %v386
      %v685 = vpop.f32.mrb[0].mxu0
      %v686 = vadd.f32 %v325, %v685
      %v687 = vpop.f32.mrb[0].mxu0
      %688 = vmatprep.mubr.f32.mxu0 0.0
      %689 = vmatmul.mubr.f32.gmra.mrb[0].mxu0 %v389
      %v690 = vpop.f32.mrb[0].mxu0
      %v691 = vadd.f32 %v325, %v690
      %v692 = vpop.f32.mrb[0].mxu0
      %693 = vmatprep.mubr.f32.mxu0 0.0
      %694 = vmatmul.mubr.f32.gmra.mrb[0].mxu0 %v392
      %v695 = vpop.f32.mrb[0].mxu0
      %v696 = vadd.f32 %v325, %v695
      %v697 = vpop.f32.mrb[0].mxu0
      %698 = vmatprep.mubr.f32.mxu0 0.0
      %699 = vmatmul.mubr.f32.gmra.mrb[0].mxu0 %v395
      %v700 = vpop.f32.mrb[0].mxu0
      %v701 = vadd.f32 %v325, %v700
      %v702 = vpop.f32.mrb[0].mxu0
      %703 = vmatprep.mubr.f32.mxu0 0.0
      %704 = vmatmul.mubr.f32.gmra.mrb[0].mxu0 %v398
      %v705 = vpop.f32.mrb[0].mxu0
      %v706 = vadd.f32 %v325, %v705
      %v707 = vpop.f32.mrb[0].mxu0
      %708 = vmatprep.mubr.f32.mxu0 0.0
      %709 = vmatmul.mubr.f32.gmra.mrb[0].mxu0 %v401
      %v710 = vpop.f32.mrb[0].mxu0
      %v711 = vadd.f32 %v325, %v710
      %v712 = vpop.f32.mrb[0].mxu0
      %713 = vmatprep.mubr.f32.mxu0 0.0
      %714 = vmatmul.mubr.f32.gmra.mrb[0].mxu0 %v404
      %v715 = vpop.f32.mrb[0].mxu0
      %v716 = vadd.f32 %v325, %v715
      %v717 = vpop.f32.mrb[0].mxu0
      %718 = vmatprep.mubr.f32.mxu0 0.0
      %719 = vmatmul.mubr.f32.gmra.mrb[0].mxu0 %v407
      %v720 = vpop.f32.mrb[0].mxu0
      %v721 = vadd.f32 %v325, %v720
      %v722 = vpop.f32.mrb[0].mxu0
      %723 = vmatprep.mubr.f32.mxu0 0.0
      %724 = vmatmul.mubr.f32.gmra.mrb[0].mxu0 %v410
      %v725 = vpop.f32.mrb[0].mxu0
      %v726 = vadd.f32 %v325, %v725
      %v727 = vpop.f32.mrb[0].mxu0
      %728 = vmatprep.mubr.f32.mxu0 0.0
      %729 = vmatmul.mubr.f32.gmra.mrb[0].mxu0 %v413
      %v730 = vpop.f32.mrb[0].mxu0
      %v731 = vadd.f32 %v325, %v730
      %v732 = vpop.f32.mrb[0].mxu0
      %733 = vmatprep.mubr.f32.mxu0 0.0
      %734 = vmatmul.mubr.f32.gmra.mrb[0].mxu0 %v416
      %v735 = vpop.f32.mrb[0].mxu0
      %v736 = vadd.f32 %v325, %v735
      %v737 = vpop.f32.mrb[0].mxu0
      %738 = vmatprep.mubr.f32.mxu0 0.0
      %739 = vmatmul.mubr.f32.gmra.mrb[0].mxu0 %v419
      %v740 = vpop.f32.mrb[0].mxu0
      %v741 = vadd.f32 %v325, %v740
      %v742 = vpop.f32.mrb[0].mxu0
      %743 = vmatprep.mubr.f32.mxu0 0.0
      %744 = vmatmul.mubr.f32.gmra.mrb[0].mxu0 %v422
      %v745 = vpop.f32.mrb[0].mxu0
      %v746 = vadd.f32 %v325, %v745
      %v747 = vpop.f32.mrb[0].mxu0
      %748 = vmatprep.mubr.f32.mxu0 0.0
      %749 = vmatmul.mubr.f32.gmra.mrb[0].mxu0 %v425
      %v750 = vpop.f32.mrb[0].mxu0
      %v751 = vadd.f32 %v325, %v750
      %v752 = vpop.f32.mrb[0].mxu0
      %753 = vmatprep.mubr.f32.mxu0 0.0
      %754 = vmatmul.mubr.f32.gmra.mrb[0].mxu0 %v428
      %v755 = vpop.f32.mrb[0].mxu0
      %v756 = vadd.f32 %v325, %v755
      %v757 = vpop.f32.mrb[0].mxu0
      %758 = vmatprep.mubr.f32.mxu0 0.0
      %759 = vmatmul.mubr.f32.gmra.mrb[0].mxu0 %v431
      %v760 = vpop.f32.mrb[0].mxu0
      %v761 = vadd.f32 %v325, %v760
      %v762 = vpop.f32.mrb[0].mxu0
      %763 = vmatprep.mubr.f32.mxu0 0.0
      %764 = vmatmul.mubr.f32.gmra.mrb[0].mxu0 %v434
      %v765 = vpop.f32.mrb[0].mxu0
      %v766 = vadd.f32 %v325, %v765
      %v767 = vpop.f32.mrb[0].mxu0
      %768 = vmatprep.mubr.f32.mxu0 0.0
      %769 = vmatmul.mubr.f32.gmra.mrb[0].mxu0 %v437
      %v770 = vpop.f32.mrb[0].mxu0
      %v771 = vadd.f32 %v325, %v770
      %v772 = vpop.f32.mrb[0].mxu0
      %773 = vmatprep.mubr.f32.mxu0 0.0
      %774 = vmatmul.mubr.f32.gmra.mrb[0].mxu0 %v440
      %v775 = vpop.f32.mrb[0].mxu0
      %v776 = vadd.f32 %v325, %v775
      %v777 = vpop.f32.mrb[0].mxu0
      %778 = vmatprep.mubr.f32.mxu0 0.0
      %779 = vmatmul.mubr.f32.gmra.mrb[0].mxu0 %v443
      %v780 = vpop.f32.mrb[0].mxu0
      %v781 = vadd.f32 %v325, %v780
      %v782 = vpop.f32.mrb[0].mxu0
      %783 = vmatprep.mubr.f32.mxu0 0.0
      %784 = vmatmul.mubr.f32.gmra.mrb[0].mxu0 %v446
      %v785 = vpop.f32.mrb[0].mxu0
      %v786 = vadd.f32 %v325, %v785
      %v787 = vpop.f32.mrb[0].mxu0
      %788 = vmatprep.mubr.f32.mxu0 0.0
      %789 = vmatmul.mubr.f32.gmra.mrb[0].mxu0 %v449
      %v790 = vpop.f32.mrb[0].mxu0
      %v791 = vadd.f32 %v325, %v790
      %v792 = vpop.f32.mrb[0].mxu0
      %793 = vmatprep.mubr.f32.mxu0 0.0
      %794 = vmatmul.mubr.f32.gmra.mrb[0].mxu0 %v452
      %v795 = vpop.f32.mrb[0].mxu0
      %v796 = vadd.f32 %v325, %v795
      %v797 = vpop.f32.mrb[0].mxu0
      %798 = vmatprep.mubr.f32.mxu0 0.0
      %799 = vmatmul.mubr.f32.gmra.mrb[0].mxu0 %v455
      %v800 = vpop.f32.mrb[0].mxu0
      %v801 = vadd.f32 %v325, %v800
      %v802 = vpop.f32.mrb[0].mxu0
      %803 = vmatprep.mubr.f32.mxu0 0.0
      %804 = vmatmul.mubr.f32.gmra.mrb[0].mxu0 %v458
      %v805 = vpop.f32.mrb[0].mxu0
      %v806 = vadd.f32 %v325, %v805
      %v807 = vpop.f32.mrb[0].mxu0
      %808 = vmatprep.mubr.f32.mxu0 0.0
      %809 = vmatmul.mubr.f32.gmra.mrb[0].mxu0 %v461
      %v810 = vpop.f32.mrb[0].mxu0
      %v811 = vadd.f32 %v325, %v810
      %v812 = vpop.f32.mrb[0].mxu0
      %813 = vmatprep.mubr.f32.mxu0 0.0
      %814 = vmatmul.mubr.f32.gmra.mrb[0].mxu0 %v464
      %v815 = vpop.f32.mrb[0].mxu0
      %v816 = vadd.f32 %v325, %v815
      %v817 = vpop.f32.mrb[0].mxu0
      %818 = vmatprep.mubr.f32.mxu0 0.0
      %819 = vmatmul.mubr.f32.gmra.mrb[0].mxu0 %v467
      %v820 = vpop.f32.mrb[0].mxu0
      %v821 = vadd.f32 %v325, %v820
      %v822 = vpop.f32.mrb[0].mxu0
      %823 = vmatprep.mubr.f32.mxu0 0.0
      %824 = vmatmul.mubr.f32.gmra.mrb[0].mxu0 %v470
      %v825 = vpop.f32.mrb[0].mxu0
      %v826 = vadd.f32 %v325, %v825
      %v827 = vpop.f32.mrb[0].mxu0
      %828 = vmatprep.mubr.f32.mxu0 0.0
      %829 = vmatmul.mubr.f32.gmra.mrb[0].mxu0 %v473
      %v830 = vpop.f32.mrb[0].mxu0
      %v831 = vadd.f32 %v325, %v830
      %v832 = vpop.f32.mrb[0].mxu0
      %833 = vmatprep.mubr.f32.mxu0 0.0
      %834 = vmatmul.mubr.f32.gmra.mrb[0].mxu0 %v476
      %v835 = vpop.f32.mrb[0].mxu0
      %v836 = vadd.f32 %v325, %v835
      %v837 = vpop.f32.mrb[0].mxu0
      %838 = vmatprep.mubr.f32.mxu0 0.0
      %839 = vmatmul.mubr.f32.gmra.mrb[0].mxu0 %v479
      %v840 = vpop.f32.mrb[0].mxu0
      %v841 = vadd.f32 %v325, %v840
      %v842 = vpop.f32.mrb[0].mxu0
      %843 = vmatprep.mubr.f32.mxu0 0.0
      %844 = vmatmul.mubr.f32.gmra.mrb[0].mxu0 %v482
      %v845 = vpop.f32.mrb[0].mxu0
      %v846 = vadd.f32 %v325, %v845
      %v847 = vpop.f32.mrb[0].mxu0
      %848 = vmatprep.mubr.f32.mxu0 0.0
      %849 = vmatmul.mubr.f32.gmra.mrb[0].mxu0 %v485
      %v850 = vpop.f32.mrb[0].mxu0
      %v851 = vadd.f32 %v325, %v850
      %v852 = vpop.f32.mrb[0].mxu0
      %853 = vmatprep.mubr.f32.mxu0 0.0
      %854 = vmatmul.mubr.f32.gmra.mrb[0].mxu0 %v488
      %v855 = vpop.f32.mrb[0].mxu0
      %v856 = vadd.f32 %v325, %v855
      %v857 = vpop.f32.mrb[0].mxu0
      %858 = vmatprep.mubr.f32.mxu0 0.0
      %859 = vmatmul.mubr.f32.gmra.mrb[0].mxu0 %v491
      %v860 = vpop.f32.mrb[0].mxu0
      %v861 = vadd.f32 %v325, %v860
      %v862 = vpop.f32.mrb[0].mxu0
      %863 = vmatprep.mubr.f32.mxu0 0.0
      %864 = vmatmul.mubr.f32.gmra.mrb[0].mxu0 %v494
      %v865 = vpop.f32.mrb[0].mxu0
      %v866 = vadd.f32 %v325, %v865
      %v867 = vpop.f32.mrb[0].mxu0
      %868 = vmatprep.mubr.f32.mxu0 0.0
      %869 = vmatmul.mubr.f32.gmra.mrb[0].mxu0 %v497
      %v870 = vpop.f32.mrb[0].mxu0
      %v871 = vadd.f32 %v325, %v870
      %v872 = vpop.f32.mrb[0].mxu0
      %873 = vmatprep.mubr.f32.mxu0 0.0
      %874 = vmatmul.mubr.f32.gmra.mrb[0].mxu0 %v500
      %v875 = vpop.f32.mrb[0].mxu0
      %v876 = vadd.f32 %v325, %v875
      %v877 = vpop.f32.mrb[0].mxu0
      %878 = vmatprep.mubr.f32.mxu0 0.0
      %879 = vmatmul.mubr.f32.gmra.mrb[0].mxu0 %v503
      %v880 = vpop.f32.mrb[0].mxu0
      %v881 = vadd.f32 %v325, %v880
      %v882 = vpop.f32.mrb[0].mxu0
      %883 = vmatprep.mubr.f32.mxu0 0.0
      %884 = vmatmul.mubr.f32.gmra.mrb[0].mxu0 %v506
      %v885 = vpop.f32.mrb[0].mxu0
      %v886 = vadd.f32 %v325, %v885
      %v887 = vpop.f32.mrb[0].mxu0
      %888 = vmatprep.mubr.f32.mxu0 0.0
      %889 = vmatmul.mubr.f32.gmra.mrb[0].mxu0 %v509
      %v890 = vpop.f32.mrb[0].mxu0
      %v891 = vadd.f32 %v325, %v890
      %v892 = vpop.f32.mrb[0].mxu0
      %893 = vmatprep.mubr.f32.mxu0 0.0
      %894 = vmatmul.mubr.f32.gmra.mrb[0].mxu0 %v512
      %v895 = vpop.f32.mrb[0].mxu0
      %v896 = vadd.f32 %v325, %v895
      %v897 = vpop.f32.mrb[0].mxu0
      %898 = vmatprep.mubr.f32.mxu0 0.0
      %899 = vmatmul.mubr.f32.gmra.mrb[0].mxu0 %v515
      %v900 = vpop.f32.mrb[0].mxu0
      %v901 = vadd.f32 %v325, %v900
      %v902 = vpop.f32.mrb[0].mxu0
      %903 = vmatprep.mubr.f32.mxu0 0.0
      %904 = vmatmul.mubr.f32.gmra.mrb[0].mxu0 %v518
      %v905 = vpop.f32.mrb[0].mxu0
      %v906 = vadd.f32 %v325, %v905
      %v907 = vpop.f32.mrb[0].mxu0
      %908 = vdwg.mxu0
      %v909 = vand.u32 2147483647, %v591
      %vm910 = vcmp.le.f32.partialorder %v909, 0.7853982
      %vm911 = vcmp.lt.s32.totalorder %v591, 0
      %v912 = vand.u32 %v591, 2139095040
      %v913 = vshrl.u32 %v912, 23
      %v914 = vsub.s32 %v913, 127
      %v915 = vand.u32 2147483647, %v591
      %v916 = vand.u32 %v915, 8388607
      %v917 = vor.u32 %v916, 8388608
      %v918 = vsub.s32 0, %v917
      %v919 = vadd.s32 %v914, 1
      %vm920 = vcmp.gt.s32.totalorder %v919, 0
      %v921 = vsel %vm920, %v919, 0
      %v922 = vshrl.u32 %v921, 5
      %v923 = vand.u32 %v921, 31
      %v924 = vsub.s32 32, %v923
      %v925 = vshrl.u32 683565275, %v924
      %v926 = vshll.u32 683565275, %v923
      %v927 = vshrl.u32 2475754826, %v924
      %v928 = vor.u32 %v926, %v927
      %v929 = vshll.u32 2475754826, %v923
      %v930 = vshrl.u32 2131351028, %v924
      %v931 = vor.u32 %v929, %v930
      %v932 = vshll.u32 2131351028, %v923
      %v933 = vshrl.u32 2102212464, %v924
      %v934 = vor.u32 %v932, %v933
      %v935 = vshll.u32 2102212464, %v923
      %v936 = vshrl.u32 920167782, %v924
      %v937 = vor.u32 %v935, %v936
      %v938 = vshll.u32 920167782, %v923
      %v939 = vshrl.u32 1326507024, %v924
      %v940 = vor.u32 %v938, %v939
      %vm941 = vcmp.lt.s32.totalorder %v922, 1
      %vm942 = vcmp.lt.s32.totalorder %v922, 2
      %vm943 = vcmp.lt.s32.totalorder %v922, 3
      %vm944 = vcmp.lt.s32.totalorder %v922, 4
      %v945 = vsel %vm941, %v925, %v928
      %v946 = vsel %vm944, %v934, 2102212464
      %v947 = vsel %vm943, %v931, %v946
      %v948 = vsel %vm942, %v945, %v947
      %v949 = vsel %vm941, %v928, %v931
      %v950 = vsel %vm944, %v937, 920167782
      %v951 = vsel %vm943, %v934, %v950
      %v952 = vsel %vm942, %v949, %v951
      %v953 = vsel %vm941, %v931, %v934
      %v954 = vsel %vm944, %v940, 1326507024
      %v955 = vsel %vm943, %v937, %v954
      %v956 = vsel %vm942, %v953, %v955
      %v957 = vshll.u32 %v917, 8
      %v958 = vmul.u32.u64.compose %v957, %v956
      %v959 = vextract.low.u32 %v958
      %v960 = vextract.high.u32 %v958
      %v961 = vmul.u32.u64.compose %v957, %v952
      %v962 = vextract.low.u32 %v961
      %v963 = vextract.high.u32 %v961
      %v964 = vmul.u32 %v957, %v948
      %v965 = vadd.s32 %v960, %v962
      %vm966 = vc.u32 %v960, %v962
      %v967 = vadd.s32 %v963, 1
      %v968 = vsel %vm966, %v967, %v963
      %v969 = vadd.s32 %v964, %v968
      %v970 = vadd.s32 %v969, 536870912
      %v971 = vshrl.u32 %v970, 30
      %v972 = vshll.u32 %v971, 30
      %v973 = vsub.s32 %v969, %v972
      %vm974 = vcmp.lt.s32.totalorder %v973, 0
      %v975 = vsub.s32 0, %v973
      %v976 = vsel %vm974, %v975, %v973
      %v977 = vclz %v976
      %v978 = vsub.s32 %v977, 2
      %vm979 = vcmp.gt.s32.totalorder 0, %v978
      %v980 = vsel %vm979, 0, %v978
      %v981 = vsub.s32 32, %v980
      %v982 = vshll.u32 %v973, %v980
      %v983 = vshrl.u32 %v965, %v981
      %v984 = vor.u32 %v982, %v983
      %v985 = vsub.s32 4294967266, %v980
      %v986 = vadd.s32 %v985, 127
      %v987 = vshll.u32 %v986, 23
      %v988 = vor.u32 4788187, %v987
      %v989 = vand.u32 2147483647, %v988
      %v991 = vcvt.s32.f32 %v984
      %v992 = vmul.f32 %v991, %v989
      %v993 = vxor.u32 %v992, 2147483648
      %v994 = vsel %vm911, %v993, %v992
      %v995 = vsub.s32 4, %v971
      %v996 = vsel %vm911, %v995, %v971
      %v997 = vsel %vm910, %v591, %v994
      %v998 = vsel %vm910, 0, %v996
      %v999 = vcosq.f32.pop %v997
      %v1000 = vsinq.f32.pop %v997
      %vm1001 = vweird.f32 %v591
      %v1002 = vadd.s32 %v998, 3
      %v1003 = vand.u32 %v1002, 3
      %vm1004 = vcmp.lt.s32.totalorder %v1003, 2
      %vm1005 = vcmp.eq.s32.totalorder %v1003, 0
      %v1006 = vxor.u32 %v1000, 2147483648
      %v1007 = vsel %vm1005, %v999, %v1006
      %vm1008 = vcmp.eq.s32.totalorder %v1003, 2
      %v1009 = vxor.u32 %v999, 2147483648
      %v1010 = vsel %vm1008, %v1009, %v1000
      %v1011 = vsel %vm1004, %v1007, %v1010
      %v1012 = vsel %vm1001, nan, %v1011
      %v1013 = vand.u32 2147483647, %v596
      %vm1014 = vcmp.le.f32.partialorder %v1013, 0.7853982
      %vm1015 = vcmp.lt.s32.totalorder %v596, 0
      %v1016 = vand.u32 %v596, 2139095040
      %v1017 = vshrl.u32 %v1016, 23
      %v1018 = vsub.s32 %v1017, 127
      %v1019 = vand.u32 2147483647, %v596
      %v1020 = vand.u32 %v1019, 8388607
      %v1021 = vor.u32 %v1020, 8388608
      %v1022 = vsub.s32 0, %v1021
      %v1023 = vadd.s32 %v1018, 1
      %vm1024 = vcmp.gt.s32.totalorder %v1023, 0
      %v1025 = vsel %vm1024, %v1023, 0
      %v1026 = vshrl.u32 %v1025, 5
      %v1027 = vand.u32 %v1025, 31
      %v1028 = vsub.s32 32, %v1027
      %v1029 = vshrl.u32 683565275, %v1028
      %v1030 = vshll.u32 683565275, %v1027
      %v1031 = vshrl.u32 2475754826, %v1028
      %v1032 = vor.u32 %v1030, %v1031
      %v1033 = vshll.u32 2475754826, %v1027
      %v1034 = vshrl.u32 2131351028, %v1028
      %v1035 = vor.u32 %v1033, %v1034
      %v1036 = vshll.u32 2131351028, %v1027
      %v1037 = vshrl.u32 2102212464, %v1028
      %v1038 = vor.u32 %v1036, %v1037
      %v1039 = vshll.u32 2102212464, %v1027
      %v1040 = vshrl.u32 920167782, %v1028
      %v1041 = vor.u32 %v1039, %v1040
      %v1042 = vshll.u32 920167782, %v1027
      %v1043 = vshrl.u32 1326507024, %v1028
      %v1044 = vor.u32 %v1042, %v1043
      %vm1045 = vcmp.lt.s32.totalorder %v1026, 1
      %vm1046 = vcmp.lt.s32.totalorder %v1026, 2
      %vm1047 = vcmp.lt.s32.totalorder %v1026, 3
      %vm1048 = vcmp.lt.s32.totalorder %v1026, 4
      %v1049 = vsel %vm1045, %v1029, %v1032
      %v1050 = vsel %vm1048, %v1038, 2102212464
      %v1051 = vsel %vm1047, %v1035, %v1050
      %v1052 = vsel %vm1046, %v1049, %v1051
      %v1053 = vsel %vm1045, %v1032, %v1035
      %v1054 = vsel %vm1048, %v1041, 920167782
      %v1055 = vsel %vm1047, %v1038, %v1054
      %v1056 = vsel %vm1046, %v1053, %v1055
      %v1057 = vsel %vm1045, %v1035, %v1038
      %v1058 = vsel %vm1048, %v1044, 1326507024
      %v1059 = vsel %vm1047, %v1041, %v1058
      %v1060 = vsel %vm1046, %v1057, %v1059
      %v1061 = vshll.u32 %v1021, 8
      %v1062 = vmul.u32.u64.compose %v1061, %v1060
      %v1063 = vextract.low.u32 %v1062
      %v1064 = vextract.high.u32 %v1062
      %v1065 = vmul.u32.u64.compose %v1061, %v1056
      %v1066 = vextract.low.u32 %v1065
      %v1067 = vextract.high.u32 %v1065
      %v1068 = vmul.u32 %v1061, %v1052
      %v1069 = vadd.s32 %v1064, %v1066
      %vm1070 = vc.u32 %v1064, %v1066
      %v1071 = vadd.s32 %v1067, 1
      %v1072 = vsel %vm1070, %v1071, %v1067
      %v1073 = vadd.s32 %v1068, %v1072
      %v1074 = vadd.s32 %v1073, 536870912
      %v1075 = vshrl.u32 %v1074, 30
      %v1076 = vshll.u32 %v1075, 30
      %v1077 = vsub.s32 %v1073, %v1076
      %vm1078 = vcmp.lt.s32.totalorder %v1077, 0
      %v1079 = vsub.s32 0, %v1077
      %v1080 = vsel %vm1078, %v1079, %v1077
      %v1081 = vclz %v1080
      %v1082 = vsub.s32 %v1081, 2
      %vm1083 = vcmp.gt.s32.totalorder 0, %v1082
      %v1084 = vsel %vm1083, 0, %v1082
      %v1085 = vsub.s32 32, %v1084
      %v1086 = vshll.u32 %v1077, %v1084
      %v1087 = vshrl.u32 %v1069, %v1085
      %v1088 = vor.u32 %v1086, %v1087
      %v1089 = vsub.s32 4294967266, %v1084
      %v1090 = vadd.s32 %v1089, 127
      %v1091 = vshll.u32 %v1090, 23
      %v1092 = vor.u32 4788187, %v1091
      %v1093 = vand.u32 2147483647, %v1092
      %v1095 = vcvt.s32.f32 %v1088
      %v1096 = vmul.f32 %v1095, %v1093
      %v1097 = vxor.u32 %v1096, 2147483648
      %v1098 = vsel %vm1015, %v1097, %v1096
      %v1099 = vsub.s32 4, %v1075
      %v1100 = vsel %vm1015, %v1099, %v1075
      %v1101 = vsel %vm1014, %v596, %v1098
      %v1102 = vsel %vm1014, 0, %v1100
      %v1103 = vcosq.f32.pop %v1101
      %v1104 = vsinq.f32.pop %v1101
      %vm1105 = vweird.f32 %v596
      %v1106 = vadd.s32 %v1102, 3
      %v1107 = vand.u32 %v1106, 3
      %vm1108 = vcmp.lt.s32.totalorder %v1107, 2
      %vm1109 = vcmp.eq.s32.totalorder %v1107, 0
      %v1110 = vxor.u32 %v1104, 2147483648
      %v1111 = vsel %vm1109, %v1103, %v1110
      %vm1112 = vcmp.eq.s32.totalorder %v1107, 2
      %v1113 = vxor.u32 %v1103, 2147483648
      %v1114 = vsel %vm1112, %v1113, %v1104
      %v1115 = vsel %vm1108, %v1111, %v1114
      %v1116 = vsel %vm1105, nan, %v1115
      %v1117 = vand.u32 2147483647, %v601
      %vm1118 = vcmp.le.f32.partialorder %v1117, 0.7853982
      %vm1119 = vcmp.lt.s32.totalorder %v601, 0
      %v1120 = vand.u32 %v601, 2139095040
      %v1121 = vshrl.u32 %v1120, 23
      %v1122 = vsub.s32 %v1121, 127
      %v1123 = vand.u32 2147483647, %v601
      %v1124 = vand.u32 %v1123, 8388607
      %v1125 = vor.u32 %v1124, 8388608
      %v1126 = vsub.s32 0, %v1125
      %v1127 = vadd.s32 %v1122, 1
      %vm1128 = vcmp.gt.s32.totalorder %v1127, 0
      %v1129 = vsel %vm1128, %v1127, 0
      %v1130 = vshrl.u32 %v1129, 5
      %v1131 = vand.u32 %v1129, 31
      %v1132 = vsub.s32 32, %v1131
      %v1133 = vshrl.u32 683565275, %v1132
      %v1134 = vshll.u32 683565275, %v1131
      %v1135 = vshrl.u32 2475754826, %v1132
      %v1136 = vor.u32 %v1134, %v1135
      %v1137 = vshll.u32 2475754826, %v1131
      %v1138 = vshrl.u32 2131351028, %v1132
      %v1139 = vor.u32 %v1137, %v1138
      %v1140 = vshll.u32 2131351028, %v1131
      %v1141 = vshrl.u32 2102212464, %v1132
      %v1142 = vor.u32 %v1140, %v1141
      %v1143 = vshll.u32 2102212464, %v1131
      %v1144 = vshrl.u32 920167782, %v1132
      %v1145 = vor.u32 %v1143, %v1144
      %v1146 = vshll.u32 920167782, %v1131
      %v1147 = vshrl.u32 1326507024, %v1132
      %v1148 = vor.u32 %v1146, %v1147
      %vm1149 = vcmp.lt.s32.totalorder %v1130, 1
      %vm1150 = vcmp.lt.s32.totalorder %v1130, 2
      %vm1151 = vcmp.lt.s32.totalorder %v1130, 3
      %vm1152 = vcmp.lt.s32.totalorder %v1130, 4
      %v1153 = vsel %vm1149, %v1133, %v1136
      %v1154 = vsel %vm1152, %v1142, 2102212464
      %v1155 = vsel %vm1151, %v1139, %v1154
      %v1156 = vsel %vm1150, %v1153, %v1155
      %v1157 = vsel %vm1149, %v1136, %v1139
      %v1158 = vsel %vm1152, %v1145, 920167782
      %v1159 = vsel %vm1151, %v1142, %v1158
      %v1160 = vsel %vm1150, %v1157, %v1159
      %v1161 = vsel %vm1149, %v1139, %v1142
      %v1162 = vsel %vm1152, %v1148, 1326507024
      %v1163 = vsel %vm1151, %v1145, %v1162
      %v1164 = vsel %vm1150, %v1161, %v1163
      %v1165 = vshll.u32 %v1125, 8
      %v1166 = vmul.u32.u64.compose %v1165, %v1164
      %v1167 = vextract.low.u32 %v1166
      %v1168 = vextract.high.u32 %v1166
      %v1169 = vmul.u32.u64.compose %v1165, %v1160
      %v1170 = vextract.low.u32 %v1169
      %v1171 = vextract.high.u32 %v1169
      %v1172 = vmul.u32 %v1165, %v1156
      %v1173 = vadd.s32 %v1168, %v1170
      %vm1174 = vc.u32 %v1168, %v1170
      %v1175 = vadd.s32 %v1171, 1
      %v1176 = vsel %vm1174, %v1175, %v1171
      %v1177 = vadd.s32 %v1172, %v1176
      %v1178 = vadd.s32 %v1177, 536870912
      %v1179 = vshrl.u32 %v1178, 30
      %v1180 = vshll.u32 %v1179, 30
      %v1181 = vsub.s32 %v1177, %v1180
      %vm1182 = vcmp.lt.s32.totalorder %v1181, 0
      %v1183 = vsub.s32 0, %v1181
      %v1184 = vsel %vm1182, %v1183, %v1181
      %v1185 = vclz %v1184
      %v1186 = vsub.s32 %v1185, 2
      %vm1187 = vcmp.gt.s32.totalorder 0, %v1186
      %v1188 = vsel %vm1187, 0, %v1186
      %v1189 = vsub.s32 32, %v1188
      %v1190 = vshll.u32 %v1181, %v1188
      %v1191 = vshrl.u32 %v1173, %v1189
      %v1192 = vor.u32 %v1190, %v1191
      %v1193 = vsub.s32 4294967266, %v1188
      %v1194 = vadd.s32 %v1193, 127
      %v1195 = vshll.u32 %v1194, 23
      %v1196 = vor.u32 4788187, %v1195
      %v1197 = vand.u32 2147483647, %v1196
      %v1199 = vcvt.s32.f32 %v1192
      %v1200 = vmul.f32 %v1199, %v1197
      %v1201 = vxor.u32 %v1200, 2147483648
      %v1202 = vsel %vm1119, %v1201, %v1200
      %v1203 = vsub.s32 4, %v1179
      %v1204 = vsel %vm1119, %v1203, %v1179
      %v1205 = vsel %vm1118, %v601, %v1202
      %v1206 = vsel %vm1118, 0, %v1204
      %v1207 = vcosq.f32.pop %v1205
      %v1208 = vsinq.f32.pop %v1205
      %vm1209 = vweird.f32 %v601
      %v1210 = vadd.s32 %v1206, 3
      %v1211 = vand.u32 %v1210, 3
      %vm1212 = vcmp.lt.s32.totalorder %v1211, 2
      %vm1213 = vcmp.eq.s32.totalorder %v1211, 0
      %v1214 = vxor.u32 %v1208, 2147483648
      %v1215 = vsel %vm1213, %v1207, %v1214
      %vm1216 = vcmp.eq.s32.totalorder %v1211, 2
      %v1217 = vxor.u32 %v1207, 2147483648
      %v1218 = vsel %vm1216, %v1217, %v1208
      %v1219 = vsel %vm1212, %v1215, %v1218
      %v1220 = vsel %vm1209, nan, %v1219
      %v1221 = vand.u32 2147483647, %v606
      %vm1222 = vcmp.le.f32.partialorder %v1221, 0.7853982
      %vm1223 = vcmp.lt.s32.totalorder %v606, 0
      %v1224 = vand.u32 %v606, 2139095040
      %v1225 = vshrl.u32 %v1224, 23
      %v1226 = vsub.s32 %v1225, 127
      %v1227 = vand.u32 2147483647, %v606
      %v1228 = vand.u32 %v1227, 8388607
      %v1229 = vor.u32 %v1228, 8388608
      %v1230 = vsub.s32 0, %v1229
      %v1231 = vadd.s32 %v1226, 1
      %vm1232 = vcmp.gt.s32.totalorder %v1231, 0
      %v1233 = vsel %vm1232, %v1231, 0
      %v1234 = vshrl.u32 %v1233, 5
      %v1235 = vand.u32 %v1233, 31
      %v1236 = vsub.s32 32, %v1235
      %v1237 = vshrl.u32 683565275, %v1236
      %v1238 = vshll.u32 683565275, %v1235
      %v1239 = vshrl.u32 2475754826, %v1236
      %v1240 = vor.u32 %v1238, %v1239
      %v1241 = vshll.u32 2475754826, %v1235
      %v1242 = vshrl.u32 2131351028, %v1236
      %v1243 = vor.u32 %v1241, %v1242
      %v1244 = vshll.u32 2131351028, %v1235
      %v1245 = vshrl.u32 2102212464, %v1236
      %v1246 = vor.u32 %v1244, %v1245
      %v1247 = vshll.u32 2102212464, %v1235
      %v1248 = vshrl.u32 920167782, %v1236
      %v1249 = vor.u32 %v1247, %v1248
      %v1250 = vshll.u32 920167782, %v1235
      %v1251 = vshrl.u32 1326507024, %v1236
      %v1252 = vor.u32 %v1250, %v1251
      %vm1253 = vcmp.lt.s32.totalorder %v1234, 1
      %vm1254 = vcmp.lt.s32.totalorder %v1234, 2
      %vm1255 = vcmp.lt.s32.totalorder %v1234, 3
      %vm1256 = vcmp.lt.s32.totalorder %v1234, 4
      %v1257 = vsel %vm1253, %v1237, %v1240
      %v1258 = vsel %vm1256, %v1246, 2102212464
      %v1259 = vsel %vm1255, %v1243, %v1258
      %v1260 = vsel %vm1254, %v1257, %v1259
      %v1261 = vsel %vm1253, %v1240, %v1243
      %v1262 = vsel %vm1256, %v1249, 920167782
      %v1263 = vsel %vm1255, %v1246, %v1262
      %v1264 = vsel %vm1254, %v1261, %v1263
      %v1265 = vsel %vm1253, %v1243, %v1246
      %v1266 = vsel %vm1256, %v1252, 1326507024
      %v1267 = vsel %vm1255, %v1249, %v1266
      %v1268 = vsel %vm1254, %v1265, %v1267
      %v1269 = vshll.u32 %v1229, 8
      %v1270 = vmul.u32.u64.compose %v1269, %v1268
      %v1271 = vextract.low.u32 %v1270
      %v1272 = vextract.high.u32 %v1270
      %v1273 = vmul.u32.u64.compose %v1269, %v1264
      %v1274 = vextract.low.u32 %v1273
      %v1275 = vextract.high.u32 %v1273
      %v1276 = vmul.u32 %v1269, %v1260
      %v1277 = vadd.s32 %v1272, %v1274
      %vm1278 = vc.u32 %v1272, %v1274
      %v1279 = vadd.s32 %v1275, 1
      %v1280 = vsel %vm1278, %v1279, %v1275
      %v1281 = vadd.s32 %v1276, %v1280
      %v1282 = vadd.s32 %v1281, 536870912
      %v1283 = vshrl.u32 %v1282, 30
      %v1284 = vshll.u32 %v1283, 30
      %v1285 = vsub.s32 %v1281, %v1284
      %vm1286 = vcmp.lt.s32.totalorder %v1285, 0
      %v1287 = vsub.s32 0, %v1285
      %v1288 = vsel %vm1286, %v1287, %v1285
      %v1289 = vclz %v1288
      %v1290 = vsub.s32 %v1289, 2
      %vm1291 = vcmp.gt.s32.totalorder 0, %v1290
      %v1292 = vsel %vm1291, 0, %v1290
      %v1293 = vsub.s32 32, %v1292
      %v1294 = vshll.u32 %v1285, %v1292
      %v1295 = vshrl.u32 %v1277, %v1293
      %v1296 = vor.u32 %v1294, %v1295
      %v1297 = vsub.s32 4294967266, %v1292
      %v1298 = vadd.s32 %v1297, 127
      %v1299 = vshll.u32 %v1298, 23
      %v1300 = vor.u32 4788187, %v1299
      %v1301 = vand.u32 2147483647, %v1300
      %v1303 = vcvt.s32.f32 %v1296
      %v1304 = vmul.f32 %v1303, %v1301
      %v1305 = vxor.u32 %v1304, 2147483648
      %v1306 = vsel %vm1223, %v1305, %v1304
      %v1307 = vsub.s32 4, %v1283
      %v1308 = vsel %vm1223, %v1307, %v1283
      %v1309 = vsel %vm1222, %v606, %v1306
      %v1310 = vsel %vm1222, 0, %v1308
      %v1311 = vcosq.f32.pop %v1309
      %v1312 = vsinq.f32.pop %v1309
      %vm1313 = vweird.f32 %v606
      %v1314 = vadd.s32 %v1310, 3
      %v1315 = vand.u32 %v1314, 3
      %vm1316 = vcmp.lt.s32.totalorder %v1315, 2
      %vm1317 = vcmp.eq.s32.totalorder %v1315, 0
      %v1318 = vxor.u32 %v1312, 2147483648
      %v1319 = vsel %vm1317, %v1311, %v1318
      %vm1320 = vcmp.eq.s32.totalorder %v1315, 2
      %v1321 = vxor.u32 %v1311, 2147483648
      %v1322 = vsel %vm1320, %v1321, %v1312
      %v1323 = vsel %vm1316, %v1319, %v1322
      %v1324 = vsel %vm1313, nan, %v1323
      %v1325 = vand.u32 2147483647, %v611
      %vm1326 = vcmp.le.f32.partialorder %v1325, 0.7853982
      %vm1327 = vcmp.lt.s32.totalorder %v611, 0
      %v1328 = vand.u32 %v611, 2139095040
      %v1329 = vshrl.u32 %v1328, 23
      %v1330 = vsub.s32 %v1329, 127
      %v1331 = vand.u32 2147483647, %v611
      %v1332 = vand.u32 %v1331, 8388607
      %v1333 = vor.u32 %v1332, 8388608
      %v1334 = vsub.s32 0, %v1333
      %v1335 = vadd.s32 %v1330, 1
      %vm1336 = vcmp.gt.s32.totalorder %v1335, 0
      %v1337 = vsel %vm1336, %v1335, 0
      %v1338 = vshrl.u32 %v1337, 5
      %v1339 = vand.u32 %v1337, 31
      %v1340 = vsub.s32 32, %v1339
      %v1341 = vshrl.u32 683565275, %v1340
      %v1342 = vshll.u32 683565275, %v1339
      %v1343 = vshrl.u32 2475754826, %v1340
      %v1344 = vor.u32 %v1342, %v1343
      %v1345 = vshll.u32 2475754826, %v1339
      %v1346 = vshrl.u32 2131351028, %v1340
      %v1347 = vor.u32 %v1345, %v1346
      %v1348 = vshll.u32 2131351028, %v1339
      %v1349 = vshrl.u32 2102212464, %v1340
      %v1350 = vor.u32 %v1348, %v1349
      %v1351 = vshll.u32 2102212464, %v1339
      %v1352 = vshrl.u32 920167782, %v1340
      %v1353 = vor.u32 %v1351, %v1352
      %v1354 = vshll.u32 920167782, %v1339
      %v1355 = vshrl.u32 1326507024, %v1340
      %v1356 = vor.u32 %v1354, %v1355
      %vm1357 = vcmp.lt.s32.totalorder %v1338, 1
      %vm1358 = vcmp.lt.s32.totalorder %v1338, 2
      %vm1359 = vcmp.lt.s32.totalorder %v1338, 3
      %vm1360 = vcmp.lt.s32.totalorder %v1338, 4
      %v1361 = vsel %vm1357, %v1341, %v1344
      %v1362 = vsel %vm1360, %v1350, 2102212464
      %v1363 = vsel %vm1359, %v1347, %v1362
      %v1364 = vsel %vm1358, %v1361, %v1363
      %v1365 = vsel %vm1357, %v1344, %v1347
      %v1366 = vsel %vm1360, %v1353, 920167782
      %v1367 = vsel %vm1359, %v1350, %v1366
      %v1368 = vsel %vm1358, %v1365, %v1367
      %v1369 = vsel %vm1357, %v1347, %v1350
      %v1370 = vsel %vm1360, %v1356, 1326507024
      %v1371 = vsel %vm1359, %v1353, %v1370
      %v1372 = vsel %vm1358, %v1369, %v1371
      %v1373 = vshll.u32 %v1333, 8
      %v1374 = vmul.u32.u64.compose %v1373, %v1372
      %v1375 = vextract.low.u32 %v1374
      %v1376 = vextract.high.u32 %v1374
      %v1377 = vmul.u32.u64.compose %v1373, %v1368
      %v1378 = vextract.low.u32 %v1377
      %v1379 = vextract.high.u32 %v1377
      %v1380 = vmul.u32 %v1373, %v1364
      %v1381 = vadd.s32 %v1376, %v1378
      %vm1382 = vc.u32 %v1376, %v1378
      %v1383 = vadd.s32 %v1379, 1
      %v1384 = vsel %vm1382, %v1383, %v1379
      %v1385 = vadd.s32 %v1380, %v1384
      %v1386 = vadd.s32 %v1385, 536870912
      %v1387 = vshrl.u32 %v1386, 30
      %v1388 = vshll.u32 %v1387, 30
      %v1389 = vsub.s32 %v1385, %v1388
      %vm1390 = vcmp.lt.s32.totalorder %v1389, 0
      %v1391 = vsub.s32 0, %v1389
      %v1392 = vsel %vm1390, %v1391, %v1389
      %v1393 = vclz %v1392
      %v1394 = vsub.s32 %v1393, 2
      %vm1395 = vcmp.gt.s32.totalorder 0, %v1394
      %v1396 = vsel %vm1395, 0, %v1394
      %v1397 = vsub.s32 32, %v1396
      %v1398 = vshll.u32 %v1389, %v1396
      %v1399 = vshrl.u32 %v1381, %v1397
      %v1400 = vor.u32 %v1398, %v1399
      %v1401 = vsub.s32 4294967266, %v1396
      %v1402 = vadd.s32 %v1401, 127
      %v1403 = vshll.u32 %v1402, 23
      %v1404 = vor.u32 4788187, %v1403
      %v1405 = vand.u32 2147483647, %v1404
      %v1407 = vcvt.s32.f32 %v1400
      %v1408 = vmul.f32 %v1407, %v1405
      %v1409 = vxor.u32 %v1408, 2147483648
      %v1410 = vsel %vm1327, %v1409, %v1408
      %v1411 = vsub.s32 4, %v1387
      %v1412 = vsel %vm1327, %v1411, %v1387
      %v1413 = vsel %vm1326, %v611, %v1410
      %v1414 = vsel %vm1326, 0, %v1412
      %v1415 = vcosq.f32.pop %v1413
      %v1416 = vsinq.f32.pop %v1413
      %vm1417 = vweird.f32 %v611
      %v1418 = vadd.s32 %v1414, 3
      %v1419 = vand.u32 %v1418, 3
      %vm1420 = vcmp.lt.s32.totalorder %v1419, 2
      %vm1421 = vcmp.eq.s32.totalorder %v1419, 0
      %v1422 = vxor.u32 %v1416, 2147483648
      %v1423 = vsel %vm1421, %v1415, %v1422
      %vm1424 = vcmp.eq.s32.totalorder %v1419, 2
      %v1425 = vxor.u32 %v1415, 2147483648
      %v1426 = vsel %vm1424, %v1425, %v1416
      %v1427 = vsel %vm1420, %v1423, %v1426
      %v1428 = vsel %vm1417, nan, %v1427
      %v1429 = vand.u32 2147483647, %v616
      %vm1430 = vcmp.le.f32.partialorder %v1429, 0.7853982
      %vm1431 = vcmp.lt.s32.totalorder %v616, 0
      %v1432 = vand.u32 %v616, 2139095040
      %v1433 = vshrl.u32 %v1432, 23
      %v1434 = vsub.s32 %v1433, 127
      %v1435 = vand.u32 2147483647, %v616
      %v1436 = vand.u32 %v1435, 8388607
      %v1437 = vor.u32 %v1436, 8388608
      %v1438 = vsub.s32 0, %v1437
      %v1439 = vadd.s32 %v1434, 1
      %vm1440 = vcmp.gt.s32.totalorder %v1439, 0
      %v1441 = vsel %vm1440, %v1439, 0
      %v1442 = vshrl.u32 %v1441, 5
      %v1443 = vand.u32 %v1441, 31
      %v1444 = vsub.s32 32, %v1443
      %v1445 = vshrl.u32 683565275, %v1444
      %v1446 = vshll.u32 683565275, %v1443
      %v1447 = vshrl.u32 2475754826, %v1444
      %v1448 = vor.u32 %v1446, %v1447
      %v1449 = vshll.u32 2475754826, %v1443
      %v1450 = vshrl.u32 2131351028, %v1444
      %v1451 = vor.u32 %v1449, %v1450
      %v1452 = vshll.u32 2131351028, %v1443
      %v1453 = vshrl.u32 2102212464, %v1444
      %v1454 = vor.u32 %v1452, %v1453
      %v1455 = vshll.u32 2102212464, %v1443
      %v1456 = vshrl.u32 920167782, %v1444
      %v1457 = vor.u32 %v1455, %v1456
      %v1458 = vshll.u32 920167782, %v1443
      %v1459 = vshrl.u32 1326507024, %v1444
      %v1460 = vor.u32 %v1458, %v1459
      %vm1461 = vcmp.lt.s32.totalorder %v1442, 1
      %vm1462 = vcmp.lt.s32.totalorder %v1442, 2
      %vm1463 = vcmp.lt.s32.totalorder %v1442, 3
      %vm1464 = vcmp.lt.s32.totalorder %v1442, 4
      %v1465 = vsel %vm1461, %v1445, %v1448
      %v1466 = vsel %vm1464, %v1454, 2102212464
      %v1467 = vsel %vm1463, %v1451, %v1466
      %v1468 = vsel %vm1462, %v1465, %v1467
      %v1469 = vsel %vm1461, %v1448, %v1451
      %v1470 = vsel %vm1464, %v1457, 920167782
      %v1471 = vsel %vm1463, %v1454, %v1470
      %v1472 = vsel %vm1462, %v1469, %v1471
      %v1473 = vsel %vm1461, %v1451, %v1454
      %v1474 = vsel %vm1464, %v1460, 1326507024
      %v1475 = vsel %vm1463, %v1457, %v1474
      %v1476 = vsel %vm1462, %v1473, %v1475
      %v1477 = vshll.u32 %v1437, 8
      %v1478 = vmul.u32.u64.compose %v1477, %v1476
      %v1479 = vextract.low.u32 %v1478
      %v1480 = vextract.high.u32 %v1478
      %v1481 = vmul.u32.u64.compose %v1477, %v1472
      %v1482 = vextract.low.u32 %v1481
      %v1483 = vextract.high.u32 %v1481
      %v1484 = vmul.u32 %v1477, %v1468
      %v1485 = vadd.s32 %v1480, %v1482
      %vm1486 = vc.u32 %v1480, %v1482
      %v1487 = vadd.s32 %v1483, 1
      %v1488 = vsel %vm1486, %v1487, %v1483
      %v1489 = vadd.s32 %v1484, %v1488
      %v1490 = vadd.s32 %v1489, 536870912
      %v1491 = vshrl.u32 %v1490, 30
      %v1492 = vshll.u32 %v1491, 30
      %v1493 = vsub.s32 %v1489, %v1492
      %vm1494 = vcmp.lt.s32.totalorder %v1493, 0
      %v1495 = vsub.s32 0, %v1493
      %v1496 = vsel %vm1494, %v1495, %v1493
      %v1497 = vclz %v1496
      %v1498 = vsub.s32 %v1497, 2
      %vm1499 = vcmp.gt.s32.totalorder 0, %v1498
      %v1500 = vsel %vm1499, 0, %v1498
      %v1501 = vsub.s32 32, %v1500
      %v1502 = vshll.u32 %v1493, %v1500
      %v1503 = vshrl.u32 %v1485, %v1501
      %v1504 = vor.u32 %v1502, %v1503
      %v1505 = vsub.s32 4294967266, %v1500
      %v1506 = vadd.s32 %v1505, 127
      %v1507 = vshll.u32 %v1506, 23
      %v1508 = vor.u32 4788187, %v1507
      %v1509 = vand.u32 2147483647, %v1508
      %v1511 = vcvt.s32.f32 %v1504
      %v1512 = vmul.f32 %v1511, %v1509
      %v1513 = vxor.u32 %v1512, 2147483648
      %v1514 = vsel %vm1431, %v1513, %v1512
      %v1515 = vsub.s32 4, %v1491
      %v1516 = vsel %vm1431, %v1515, %v1491
      %v1517 = vsel %vm1430, %v616, %v1514
      %v1518 = vsel %vm1430, 0, %v1516
      %v1519 = vcosq.f32.pop %v1517
      %v1520 = vsinq.f32.pop %v1517
      %vm1521 = vweird.f32 %v616
      %v1522 = vadd.s32 %v1518, 3
      %v1523 = vand.u32 %v1522, 3
      %vm1524 = vcmp.lt.s32.totalorder %v1523, 2
      %vm1525 = vcmp.eq.s32.totalorder %v1523, 0
      %v1526 = vxor.u32 %v1520, 2147483648
      %v1527 = vsel %vm1525, %v1519, %v1526
      %vm1528 = vcmp.eq.s32.totalorder %v1523, 2
      %v1529 = vxor.u32 %v1519, 2147483648
      %v1530 = vsel %vm1528, %v1529, %v1520
      %v1531 = vsel %vm1524, %v1527, %v1530
      %v1532 = vsel %vm1521, nan, %v1531
      %v1533 = vand.u32 2147483647, %v621
      %vm1534 = vcmp.le.f32.partialorder %v1533, 0.7853982
      %vm1535 = vcmp.lt.s32.totalorder %v621, 0
      %v1536 = vand.u32 %v621, 2139095040
      %v1537 = vshrl.u32 %v1536, 23
      %v1538 = vsub.s32 %v1537, 127
      %v1539 = vand.u32 2147483647, %v621
      %v1540 = vand.u32 %v1539, 8388607
      %v1541 = vor.u32 %v1540, 8388608
      %v1542 = vsub.s32 0, %v1541
      %v1543 = vadd.s32 %v1538, 1
      %vm1544 = vcmp.gt.s32.totalorder %v1543, 0
      %v1545 = vsel %vm1544, %v1543, 0
      %v1546 = vshrl.u32 %v1545, 5
      %v1547 = vand.u32 %v1545, 31
      %v1548 = vsub.s32 32, %v1547
      %v1549 = vshrl.u32 683565275, %v1548
      %v1550 = vshll.u32 683565275, %v1547
      %v1551 = vshrl.u32 2475754826, %v1548
      %v1552 = vor.u32 %v1550, %v1551
      %v1553 = vshll.u32 2475754826, %v1547
      %v1554 = vshrl.u32 2131351028, %v1548
      %v1555 = vor.u32 %v1553, %v1554
      %v1556 = vshll.u32 2131351028, %v1547
      %v1557 = vshrl.u32 2102212464, %v1548
      %v1558 = vor.u32 %v1556, %v1557
      %v1559 = vshll.u32 2102212464, %v1547
      %v1560 = vshrl.u32 920167782, %v1548
      %v1561 = vor.u32 %v1559, %v1560
      %v1562 = vshll.u32 920167782, %v1547
      %v1563 = vshrl.u32 1326507024, %v1548
      %v1564 = vor.u32 %v1562, %v1563
      %vm1565 = vcmp.lt.s32.totalorder %v1546, 1
      %vm1566 = vcmp.lt.s32.totalorder %v1546, 2
      %vm1567 = vcmp.lt.s32.totalorder %v1546, 3
      %vm1568 = vcmp.lt.s32.totalorder %v1546, 4
      %v1569 = vsel %vm1565, %v1549, %v1552
      %v1570 = vsel %vm1568, %v1558, 2102212464
      %v1571 = vsel %vm1567, %v1555, %v1570
      %v1572 = vsel %vm1566, %v1569, %v1571
      %v1573 = vsel %vm1565, %v1552, %v1555
      %v1574 = vsel %vm1568, %v1561, 920167782
      %v1575 = vsel %vm1567, %v1558, %v1574
      %v1576 = vsel %vm1566, %v1573, %v1575
      %v1577 = vsel %vm1565, %v1555, %v1558
      %v1578 = vsel %vm1568, %v1564, 1326507024
      %v1579 = vsel %vm1567, %v1561, %v1578
      %v1580 = vsel %vm1566, %v1577, %v1579
      %v1581 = vshll.u32 %v1541, 8
      %v1582 = vmul.u32.u64.compose %v1581, %v1580
      %v1583 = vextract.low.u32 %v1582
      %v1584 = vextract.high.u32 %v1582
      %v1585 = vmul.u32.u64.compose %v1581, %v1576
      %v1586 = vextract.low.u32 %v1585
      %v1587 = vextract.high.u32 %v1585
      %v1588 = vmul.u32 %v1581, %v1572
      %v1589 = vadd.s32 %v1584, %v1586
      %vm1590 = vc.u32 %v1584, %v1586
      %v1591 = vadd.s32 %v1587, 1
      %v1592 = vsel %vm1590, %v1591, %v1587
      %v1593 = vadd.s32 %v1588, %v1592
      %v1594 = vadd.s32 %v1593, 536870912
      %v1595 = vshrl.u32 %v1594, 30
      %v1596 = vshll.u32 %v1595, 30
      %v1597 = vsub.s32 %v1593, %v1596
      %vm1598 = vcmp.lt.s32.totalorder %v1597, 0
      %v1599 = vsub.s32 0, %v1597
      %v1600 = vsel %vm1598, %v1599, %v1597
      %v1601 = vclz %v1600
      %v1602 = vsub.s32 %v1601, 2
      %vm1603 = vcmp.gt.s32.totalorder 0, %v1602
      %v1604 = vsel %vm1603, 0, %v1602
      %v1605 = vsub.s32 32, %v1604
      %v1606 = vshll.u32 %v1597, %v1604
      %v1607 = vshrl.u32 %v1589, %v1605
      %v1608 = vor.u32 %v1606, %v1607
      %v1609 = vsub.s32 4294967266, %v1604
      %v1610 = vadd.s32 %v1609, 127
      %v1611 = vshll.u32 %v1610, 23
      %v1612 = vor.u32 4788187, %v1611
      %v1613 = vand.u32 2147483647, %v1612
      %v1615 = vcvt.s32.f32 %v1608
      %v1616 = vmul.f32 %v1615, %v1613
      %v1617 = vxor.u32 %v1616, 2147483648
      %v1618 = vsel %vm1535, %v1617, %v1616
      %v1619 = vsub.s32 4, %v1595
      %v1620 = vsel %vm1535, %v1619, %v1595
      %v1621 = vsel %vm1534, %v621, %v1618
      %v1622 = vsel %vm1534, 0, %v1620
      %v1623 = vcosq.f32.pop %v1621
      %v1624 = vsinq.f32.pop %v1621
      %vm1625 = vweird.f32 %v621
      %v1626 = vadd.s32 %v1622, 3
      %v1627 = vand.u32 %v1626, 3
      %vm1628 = vcmp.lt.s32.totalorder %v1627, 2
      %vm1629 = vcmp.eq.s32.totalorder %v1627, 0
      %v1630 = vxor.u32 %v1624, 2147483648
      %v1631 = vsel %vm1629, %v1623, %v1630
      %vm1632 = vcmp.eq.s32.totalorder %v1627, 2
      %v1633 = vxor.u32 %v1623, 2147483648
      %v1634 = vsel %vm1632, %v1633, %v1624
      %v1635 = vsel %vm1628, %v1631, %v1634
      %v1636 = vsel %vm1625, nan, %v1635
      %v1637 = vand.u32 2147483647, %v626
      %vm1638 = vcmp.le.f32.partialorder %v1637, 0.7853982
      %vm1639 = vcmp.lt.s32.totalorder %v626, 0
      %v1640 = vand.u32 %v626, 2139095040
      %v1641 = vshrl.u32 %v1640, 23
      %v1642 = vsub.s32 %v1641, 127
      %v1643 = vand.u32 2147483647, %v626
      %v1644 = vand.u32 %v1643, 8388607
      %v1645 = vor.u32 %v1644, 8388608
      %v1646 = vsub.s32 0, %v1645
      %v1647 = vadd.s32 %v1642, 1
      %vm1648 = vcmp.gt.s32.totalorder %v1647, 0
      %v1649 = vsel %vm1648, %v1647, 0
      %v1650 = vshrl.u32 %v1649, 5
      %v1651 = vand.u32 %v1649, 31
      %v1652 = vsub.s32 32, %v1651
      %v1653 = vshrl.u32 683565275, %v1652
      %v1654 = vshll.u32 683565275, %v1651
      %v1655 = vshrl.u32 2475754826, %v1652
      %v1656 = vor.u32 %v1654, %v1655
      %v1657 = vshll.u32 2475754826, %v1651
      %v1658 = vshrl.u32 2131351028, %v1652
      %v1659 = vor.u32 %v1657, %v1658
      %v1660 = vshll.u32 2131351028, %v1651
      %v1661 = vshrl.u32 2102212464, %v1652
      %v1662 = vor.u32 %v1660, %v1661
      %v1663 = vshll.u32 2102212464, %v1651
      %v1664 = vshrl.u32 920167782, %v1652
      %v1665 = vor.u32 %v1663, %v1664
      %v1666 = vshll.u32 920167782, %v1651
      %v1667 = vshrl.u32 1326507024, %v1652
      %v1668 = vor.u32 %v1666, %v1667
      %vm1669 = vcmp.lt.s32.totalorder %v1650, 1
      %vm1670 = vcmp.lt.s32.totalorder %v1650, 2
      %vm1671 = vcmp.lt.s32.totalorder %v1650, 3
      %vm1672 = vcmp.lt.s32.totalorder %v1650, 4
      %v1673 = vsel %vm1669, %v1653, %v1656
      %v1674 = vsel %vm1672, %v1662, 2102212464
      %v1675 = vsel %vm1671, %v1659, %v1674
      %v1676 = vsel %vm1670, %v1673, %v1675
      %v1677 = vsel %vm1669, %v1656, %v1659
      %v1678 = vsel %vm1672, %v1665, 920167782
      %v1679 = vsel %vm1671, %v1662, %v1678
      %v1680 = vsel %vm1670, %v1677, %v1679
      %v1681 = vsel %vm1669, %v1659, %v1662
      %v1682 = vsel %vm1672, %v1668, 1326507024
      %v1683 = vsel %vm1671, %v1665, %v1682
      %v1684 = vsel %vm1670, %v1681, %v1683
      %v1685 = vshll.u32 %v1645, 8
      %v1686 = vmul.u32.u64.compose %v1685, %v1684
      %v1687 = vextract.low.u32 %v1686
      %v1688 = vextract.high.u32 %v1686
      %v1689 = vmul.u32.u64.compose %v1685, %v1680
      %v1690 = vextract.low.u32 %v1689
      %v1691 = vextract.high.u32 %v1689
      %v1692 = vmul.u32 %v1685, %v1676
      %v1693 = vadd.s32 %v1688, %v1690
      %vm1694 = vc.u32 %v1688, %v1690
      %v1695 = vadd.s32 %v1691, 1
      %v1696 = vsel %vm1694, %v1695, %v1691
      %v1697 = vadd.s32 %v1692, %v1696
      %v1698 = vadd.s32 %v1697, 536870912
      %v1699 = vshrl.u32 %v1698, 30
      %v1700 = vshll.u32 %v1699, 30
      %v1701 = vsub.s32 %v1697, %v1700
      %vm1702 = vcmp.lt.s32.totalorder %v1701, 0
      %v1703 = vsub.s32 0, %v1701
      %v1704 = vsel %vm1702, %v1703, %v1701
      %v1705 = vclz %v1704
      %v1706 = vsub.s32 %v1705, 2
      %vm1707 = vcmp.gt.s32.totalorder 0, %v1706
      %v1708 = vsel %vm1707, 0, %v1706
      %v1709 = vsub.s32 32, %v1708
      %v1710 = vshll.u32 %v1701, %v1708
      %v1711 = vshrl.u32 %v1693, %v1709
      %v1712 = vor.u32 %v1710, %v1711
      %v1713 = vsub.s32 4294967266, %v1708
      %v1714 = vadd.s32 %v1713, 127
      %v1715 = vshll.u32 %v1714, 23
      %v1716 = vor.u32 4788187, %v1715
      %v1717 = vand.u32 2147483647, %v1716
      %v1719 = vcvt.s32.f32 %v1712
      %v1720 = vmul.f32 %v1719, %v1717
      %v1721 = vxor.u32 %v1720, 2147483648
      %v1722 = vsel %vm1639, %v1721, %v1720
      %v1723 = vsub.s32 4, %v1699
      %v1724 = vsel %vm1639, %v1723, %v1699
      %v1725 = vsel %vm1638, %v626, %v1722
      %v1726 = vsel %vm1638, 0, %v1724
      %v1727 = vcosq.f32.pop %v1725
      %v1728 = vsinq.f32.pop %v1725
      %vm1729 = vweird.f32 %v626
      %v1730 = vadd.s32 %v1726, 3
      %v1731 = vand.u32 %v1730, 3
      %vm1732 = vcmp.lt.s32.totalorder %v1731, 2
      %vm1733 = vcmp.eq.s32.totalorder %v1731, 0
      %v1734 = vxor.u32 %v1728, 2147483648
      %v1735 = vsel %vm1733, %v1727, %v1734
      %vm1736 = vcmp.eq.s32.totalorder %v1731, 2
      %v1737 = vxor.u32 %v1727, 2147483648
      %v1738 = vsel %vm1736, %v1737, %v1728
      %v1739 = vsel %vm1732, %v1735, %v1738
      %v1740 = vsel %vm1729, nan, %v1739
      %v1741 = vand.u32 2147483647, %v631
      %vm1742 = vcmp.le.f32.partialorder %v1741, 0.7853982
      %vm1743 = vcmp.lt.s32.totalorder %v631, 0
      %v1744 = vand.u32 %v631, 2139095040
      %v1745 = vshrl.u32 %v1744, 23
      %v1746 = vsub.s32 %v1745, 127
      %v1747 = vand.u32 2147483647, %v631
      %v1748 = vand.u32 %v1747, 8388607
      %v1749 = vor.u32 %v1748, 8388608
      %v1750 = vsub.s32 0, %v1749
      %v1751 = vadd.s32 %v1746, 1
      %vm1752 = vcmp.gt.s32.totalorder %v1751, 0
      %v1753 = vsel %vm1752, %v1751, 0
      %v1754 = vshrl.u32 %v1753, 5
      %v1755 = vand.u32 %v1753, 31
      %v1756 = vsub.s32 32, %v1755
      %v1757 = vshrl.u32 683565275, %v1756
      %v1758 = vshll.u32 683565275, %v1755
      %v1759 = vshrl.u32 2475754826, %v1756
      %v1760 = vor.u32 %v1758, %v1759
      %v1761 = vshll.u32 2475754826, %v1755
      %v1762 = vshrl.u32 2131351028, %v1756
      %v1763 = vor.u32 %v1761, %v1762
      %v1764 = vshll.u32 2131351028, %v1755
      %v1765 = vshrl.u32 2102212464, %v1756
      %v1766 = vor.u32 %v1764, %v1765
      %v1767 = vshll.u32 2102212464, %v1755
      %v1768 = vshrl.u32 920167782, %v1756
      %v1769 = vor.u32 %v1767, %v1768
      %v1770 = vshll.u32 920167782, %v1755
      %v1771 = vshrl.u32 1326507024, %v1756
      %v1772 = vor.u32 %v1770, %v1771
      %vm1773 = vcmp.lt.s32.totalorder %v1754, 1
      %vm1774 = vcmp.lt.s32.totalorder %v1754, 2
      %vm1775 = vcmp.lt.s32.totalorder %v1754, 3
      %vm1776 = vcmp.lt.s32.totalorder %v1754, 4
      %v1777 = vsel %vm1773, %v1757, %v1760
      %v1778 = vsel %vm1776, %v1766, 2102212464
      %v1779 = vsel %vm1775, %v1763, %v1778
      %v1780 = vsel %vm1774, %v1777, %v1779
      %v1781 = vsel %vm1773, %v1760, %v1763
      %v1782 = vsel %vm1776, %v1769, 920167782
      %v1783 = vsel %vm1775, %v1766, %v1782
      %v1784 = vsel %vm1774, %v1781, %v1783
      %v1785 = vsel %vm1773, %v1763, %v1766
      %v1786 = vsel %vm1776, %v1772, 1326507024
      %v1787 = vsel %vm1775, %v1769, %v1786
      %v1788 = vsel %vm1774, %v1785, %v1787
      %v1789 = vshll.u32 %v1749, 8
      %v1790 = vmul.u32.u64.compose %v1789, %v1788
      %v1791 = vextract.low.u32 %v1790
      %v1792 = vextract.high.u32 %v1790
      %v1793 = vmul.u32.u64.compose %v1789, %v1784
      %v1794 = vextract.low.u32 %v1793
      %v1795 = vextract.high.u32 %v1793
      %v1796 = vmul.u32 %v1789, %v1780
      %v1797 = vadd.s32 %v1792, %v1794
      %vm1798 = vc.u32 %v1792, %v1794
      %v1799 = vadd.s32 %v1795, 1
      %v1800 = vsel %vm1798, %v1799, %v1795
      %v1801 = vadd.s32 %v1796, %v1800
      %v1802 = vadd.s32 %v1801, 536870912
      %v1803 = vshrl.u32 %v1802, 30
      %v1804 = vshll.u32 %v1803, 30
      %v1805 = vsub.s32 %v1801, %v1804
      %vm1806 = vcmp.lt.s32.totalorder %v1805, 0
      %v1807 = vsub.s32 0, %v1805
      %v1808 = vsel %vm1806, %v1807, %v1805
      %v1809 = vclz %v1808
      %v1810 = vsub.s32 %v1809, 2
      %vm1811 = vcmp.gt.s32.totalorder 0, %v1810
      %v1812 = vsel %vm1811, 0, %v1810
      %v1813 = vsub.s32 32, %v1812
      %v1814 = vshll.u32 %v1805, %v1812
      %v1815 = vshrl.u32 %v1797, %v1813
      %v1816 = vor.u32 %v1814, %v1815
      %v1817 = vsub.s32 4294967266, %v1812
      %v1818 = vadd.s32 %v1817, 127
      %v1819 = vshll.u32 %v1818, 23
      %v1820 = vor.u32 4788187, %v1819
      %v1821 = vand.u32 2147483647, %v1820
      %v1823 = vcvt.s32.f32 %v1816
      %v1824 = vmul.f32 %v1823, %v1821
      %v1825 = vxor.u32 %v1824, 2147483648
      %v1826 = vsel %vm1743, %v1825, %v1824
      %v1827 = vsub.s32 4, %v1803
      %v1828 = vsel %vm1743, %v1827, %v1803
      %v1829 = vsel %vm1742, %v631, %v1826
      %v1830 = vsel %vm1742, 0, %v1828
      %v1831 = vcosq.f32.pop %v1829
      %v1832 = vsinq.f32.pop %v1829
      %vm1833 = vweird.f32 %v631
      %v1834 = vadd.s32 %v1830, 3
      %v1835 = vand.u32 %v1834, 3
      %vm1836 = vcmp.lt.s32.totalorder %v1835, 2
      %vm1837 = vcmp.eq.s32.totalorder %v1835, 0
      %v1838 = vxor.u32 %v1832, 2147483648
      %v1839 = vsel %vm1837, %v1831, %v1838
      %vm1840 = vcmp.eq.s32.totalorder %v1835, 2
      %v1841 = vxor.u32 %v1831, 2147483648
      %v1842 = vsel %vm1840, %v1841, %v1832
      %v1843 = vsel %vm1836, %v1839, %v1842
      %v1844 = vsel %vm1833, nan, %v1843
      %v1845 = vand.u32 2147483647, %v636
      %vm1846 = vcmp.le.f32.partialorder %v1845, 0.7853982
      %vm1847 = vcmp.lt.s32.totalorder %v636, 0
      %v1848 = vand.u32 %v636, 2139095040
      %v1849 = vshrl.u32 %v1848, 23
      %v1850 = vsub.s32 %v1849, 127
      %v1851 = vand.u32 2147483647, %v636
      %v1852 = vand.u32 %v1851, 8388607
      %v1853 = vor.u32 %v1852, 8388608
      %v1854 = vsub.s32 0, %v1853
      %v1855 = vadd.s32 %v1850, 1
      %vm1856 = vcmp.gt.s32.totalorder %v1855, 0
      %v1857 = vsel %vm1856, %v1855, 0
      %v1858 = vshrl.u32 %v1857, 5
      %v1859 = vand.u32 %v1857, 31
      %v1860 = vsub.s32 32, %v1859
      %v1861 = vshrl.u32 683565275, %v1860
      %v1862 = vshll.u32 683565275, %v1859
      %v1863 = vshrl.u32 2475754826, %v1860
      %v1864 = vor.u32 %v1862, %v1863
      %v1865 = vshll.u32 2475754826, %v1859
      %v1866 = vshrl.u32 2131351028, %v1860
      %v1867 = vor.u32 %v1865, %v1866
      %v1868 = vshll.u32 2131351028, %v1859
      %v1869 = vshrl.u32 2102212464, %v1860
      %v1870 = vor.u32 %v1868, %v1869
      %v1871 = vshll.u32 2102212464, %v1859
      %v1872 = vshrl.u32 920167782, %v1860
      %v1873 = vor.u32 %v1871, %v1872
      %v1874 = vshll.u32 920167782, %v1859
      %v1875 = vshrl.u32 1326507024, %v1860
      %v1876 = vor.u32 %v1874, %v1875
      %vm1877 = vcmp.lt.s32.totalorder %v1858, 1
      %vm1878 = vcmp.lt.s32.totalorder %v1858, 2
      %vm1879 = vcmp.lt.s32.totalorder %v1858, 3
      %vm1880 = vcmp.lt.s32.totalorder %v1858, 4
      %v1881 = vsel %vm1877, %v1861, %v1864
      %v1882 = vsel %vm1880, %v1870, 2102212464
      %v1883 = vsel %vm1879, %v1867, %v1882
      %v1884 = vsel %vm1878, %v1881, %v1883
      %v1885 = vsel %vm1877, %v1864, %v1867
      %v1886 = vsel %vm1880, %v1873, 920167782
      %v1887 = vsel %vm1879, %v1870, %v1886
      %v1888 = vsel %vm1878, %v1885, %v1887
      %v1889 = vsel %vm1877, %v1867, %v1870
      %v1890 = vsel %vm1880, %v1876, 1326507024
      %v1891 = vsel %vm1879, %v1873, %v1890
      %v1892 = vsel %vm1878, %v1889, %v1891
      %v1893 = vshll.u32 %v1853, 8
      %v1894 = vmul.u32.u64.compose %v1893, %v1892
      %v1895 = vextract.low.u32 %v1894
      %v1896 = vextract.high.u32 %v1894
      %v1897 = vmul.u32.u64.compose %v1893, %v1888
      %v1898 = vextract.low.u32 %v1897
      %v1899 = vextract.high.u32 %v1897
      %v1900 = vmul.u32 %v1893, %v1884
      %v1901 = vadd.s32 %v1896, %v1898
      %vm1902 = vc.u32 %v1896, %v1898
      %v1903 = vadd.s32 %v1899, 1
      %v1904 = vsel %vm1902, %v1903, %v1899
      %v1905 = vadd.s32 %v1900, %v1904
      %v1906 = vadd.s32 %v1905, 536870912
      %v1907 = vshrl.u32 %v1906, 30
      %v1908 = vshll.u32 %v1907, 30
      %v1909 = vsub.s32 %v1905, %v1908
      %vm1910 = vcmp.lt.s32.totalorder %v1909, 0
      %v1911 = vsub.s32 0, %v1909
      %v1912 = vsel %vm1910, %v1911, %v1909
      %v1913 = vclz %v1912
      %v1914 = vsub.s32 %v1913, 2
      %vm1915 = vcmp.gt.s32.totalorder 0, %v1914
      %v1916 = vsel %vm1915, 0, %v1914
      %v1917 = vsub.s32 32, %v1916
      %v1918 = vshll.u32 %v1909, %v1916
      %v1919 = vshrl.u32 %v1901, %v1917
      %v1920 = vor.u32 %v1918, %v1919
      %v1921 = vsub.s32 4294967266, %v1916
      %v1922 = vadd.s32 %v1921, 127
      %v1923 = vshll.u32 %v1922, 23
      %v1924 = vor.u32 4788187, %v1923
      %v1925 = vand.u32 2147483647, %v1924
      %v1927 = vcvt.s32.f32 %v1920
      %v1928 = vmul.f32 %v1927, %v1925
      %v1929 = vxor.u32 %v1928, 2147483648
      %v1930 = vsel %vm1847, %v1929, %v1928
      %v1931 = vsub.s32 4, %v1907
      %v1932 = vsel %vm1847, %v1931, %v1907
      %v1933 = vsel %vm1846, %v636, %v1930
      %v1934 = vsel %vm1846, 0, %v1932
      %v1935 = vcosq.f32.pop %v1933
      %v1936 = vsinq.f32.pop %v1933
      %vm1937 = vweird.f32 %v636
      %v1938 = vadd.s32 %v1934, 3
      %v1939 = vand.u32 %v1938, 3
      %vm1940 = vcmp.lt.s32.totalorder %v1939, 2
      %vm1941 = vcmp.eq.s32.totalorder %v1939, 0
      %v1942 = vxor.u32 %v1936, 2147483648
      %v1943 = vsel %vm1941, %v1935, %v1942
      %vm1944 = vcmp.eq.s32.totalorder %v1939, 2
      %v1945 = vxor.u32 %v1935, 2147483648
      %v1946 = vsel %vm1944, %v1945, %v1936
      %v1947 = vsel %vm1940, %v1943, %v1946
      %v1948 = vsel %vm1937, nan, %v1947
      %v1949 = vand.u32 2147483647, %v641
      %vm1950 = vcmp.le.f32.partialorder %v1949, 0.7853982
      %vm1951 = vcmp.lt.s32.totalorder %v641, 0
      %v1952 = vand.u32 %v641, 2139095040
      %v1953 = vshrl.u32 %v1952, 23
      %v1954 = vsub.s32 %v1953, 127
      %v1955 = vand.u32 2147483647, %v641
      %v1956 = vand.u32 %v1955, 8388607
      %v1957 = vor.u32 %v1956, 8388608
      %v1958 = vsub.s32 0, %v1957
      %v1959 = vadd.s32 %v1954, 1
      %vm1960 = vcmp.gt.s32.totalorder %v1959, 0
      %v1961 = vsel %vm1960, %v1959, 0
      %v1962 = vshrl.u32 %v1961, 5
      %v1963 = vand.u32 %v1961, 31
      %v1964 = vsub.s32 32, %v1963
      %v1965 = vshrl.u32 683565275, %v1964
      %v1966 = vshll.u32 683565275, %v1963
      %v1967 = vshrl.u32 2475754826, %v1964
      %v1968 = vor.u32 %v1966, %v1967
      %v1969 = vshll.u32 2475754826, %v1963
      %v1970 = vshrl.u32 2131351028, %v1964
      %v1971 = vor.u32 %v1969, %v1970
      %v1972 = vshll.u32 2131351028, %v1963
      %v1973 = vshrl.u32 2102212464, %v1964
      %v1974 = vor.u32 %v1972, %v1973
      %v1975 = vshll.u32 2102212464, %v1963
      %v1976 = vshrl.u32 920167782, %v1964
      %v1977 = vor.u32 %v1975, %v1976
      %v1978 = vshll.u32 920167782, %v1963
      %v1979 = vshrl.u32 1326507024, %v1964
      %v1980 = vor.u32 %v1978, %v1979
      %vm1981 = vcmp.lt.s32.totalorder %v1962, 1
      %vm1982 = vcmp.lt.s32.totalorder %v1962, 2
      %vm1983 = vcmp.lt.s32.totalorder %v1962, 3
      %vm1984 = vcmp.lt.s32.totalorder %v1962, 4
      %v1985 = vsel %vm1981, %v1965, %v1968
      %v1986 = vsel %vm1984, %v1974, 2102212464
      %v1987 = vsel %vm1983, %v1971, %v1986
      %v1988 = vsel %vm1982, %v1985, %v1987
      %v1989 = vsel %vm1981, %v1968, %v1971
      %v1990 = vsel %vm1984, %v1977, 920167782
      %v1991 = vsel %vm1983, %v1974, %v1990
      %v1992 = vsel %vm1982, %v1989, %v1991
      %v1993 = vsel %vm1981, %v1971, %v1974
      %v1994 = vsel %vm1984, %v1980, 1326507024
      %v1995 = vsel %vm1983, %v1977, %v1994
      %v1996 = vsel %vm1982, %v1993, %v1995
      %v1997 = vshll.u32 %v1957, 8
      %v1998 = vmul.u32.u64.compose %v1997, %v1996
      %v1999 = vextract.low.u32 %v1998
      %v2000 = vextract.high.u32 %v1998
      %v2001 = vmul.u32.u64.compose %v1997, %v1992
      %v2002 = vextract.low.u32 %v2001
      %v2003 = vextract.high.u32 %v2001
      %v2004 = vmul.u32 %v1997, %v1988
      %v2005 = vadd.s32 %v2000, %v2002
      %vm2006 = vc.u32 %v2000, %v2002
      %v2007 = vadd.s32 %v2003, 1
      %v2008 = vsel %vm2006, %v2007, %v2003
      %v2009 = vadd.s32 %v2004, %v2008
      %v2010 = vadd.s32 %v2009, 536870912
      %v2011 = vshrl.u32 %v2010, 30
      %v2012 = vshll.u32 %v2011, 30
      %v2013 = vsub.s32 %v2009, %v2012
      %vm2014 = vcmp.lt.s32.totalorder %v2013, 0
      %v2015 = vsub.s32 0, %v2013
      %v2016 = vsel %vm2014, %v2015, %v2013
      %v2017 = vclz %v2016
      %v2018 = vsub.s32 %v2017, 2
      %vm2019 = vcmp.gt.s32.totalorder 0, %v2018
      %v2020 = vsel %vm2019, 0, %v2018
      %v2021 = vsub.s32 32, %v2020
      %v2022 = vshll.u32 %v2013, %v2020
      %v2023 = vshrl.u32 %v2005, %v2021
      %v2024 = vor.u32 %v2022, %v2023
      %v2025 = vsub.s32 4294967266, %v2020
      %v2026 = vadd.s32 %v2025, 127
      %v2027 = vshll.u32 %v2026, 23
      %v2028 = vor.u32 4788187, %v2027
      %v2029 = vand.u32 2147483647, %v2028
      %v2031 = vcvt.s32.f32 %v2024
      %v2032 = vmul.f32 %v2031, %v2029
      %v2033 = vxor.u32 %v2032, 2147483648
      %v2034 = vsel %vm1951, %v2033, %v2032
      %v2035 = vsub.s32 4, %v2011
      %v2036 = vsel %vm1951, %v2035, %v2011
      %v2037 = vsel %vm1950, %v641, %v2034
      %v2038 = vsel %vm1950, 0, %v2036
      %v2039 = vcosq.f32.pop %v2037
      %v2040 = vsinq.f32.pop %v2037
      %vm2041 = vweird.f32 %v641
      %v2042 = vadd.s32 %v2038, 3
      %v2043 = vand.u32 %v2042, 3
      %vm2044 = vcmp.lt.s32.totalorder %v2043, 2
      %vm2045 = vcmp.eq.s32.totalorder %v2043, 0
      %v2046 = vxor.u32 %v2040, 2147483648
      %v2047 = vsel %vm2045, %v2039, %v2046
      %vm2048 = vcmp.eq.s32.totalorder %v2043, 2
      %v2049 = vxor.u32 %v2039, 2147483648
      %v2050 = vsel %vm2048, %v2049, %v2040
      %v2051 = vsel %vm2044, %v2047, %v2050
      %v2052 = vsel %vm2041, nan, %v2051
      %v2053 = vand.u32 2147483647, %v646
      %vm2054 = vcmp.le.f32.partialorder %v2053, 0.7853982
      %vm2055 = vcmp.lt.s32.totalorder %v646, 0
      %v2056 = vand.u32 %v646, 2139095040
      %v2057 = vshrl.u32 %v2056, 23
      %v2058 = vsub.s32 %v2057, 127
      %v2059 = vand.u32 2147483647, %v646
      %v2060 = vand.u32 %v2059, 8388607
      %v2061 = vor.u32 %v2060, 8388608
      %v2062 = vsub.s32 0, %v2061
      %v2063 = vadd.s32 %v2058, 1
      %vm2064 = vcmp.gt.s32.totalorder %v2063, 0
      %v2065 = vsel %vm2064, %v2063, 0
      %v2066 = vshrl.u32 %v2065, 5
      %v2067 = vand.u32 %v2065, 31
      %v2068 = vsub.s32 32, %v2067
      %v2069 = vshrl.u32 683565275, %v2068
      %v2070 = vshll.u32 683565275, %v2067
      %v2071 = vshrl.u32 2475754826, %v2068
      %v2072 = vor.u32 %v2070, %v2071
      %v2073 = vshll.u32 2475754826, %v2067
      %v2074 = vshrl.u32 2131351028, %v2068
      %v2075 = vor.u32 %v2073, %v2074
      %v2076 = vshll.u32 2131351028, %v2067
      %v2077 = vshrl.u32 2102212464, %v2068
      %v2078 = vor.u32 %v2076, %v2077
      %v2079 = vshll.u32 2102212464, %v2067
      %v2080 = vshrl.u32 920167782, %v2068
      %v2081 = vor.u32 %v2079, %v2080
      %v2082 = vshll.u32 920167782, %v2067
      %v2083 = vshrl.u32 1326507024, %v2068
      %v2084 = vor.u32 %v2082, %v2083
      %vm2085 = vcmp.lt.s32.totalorder %v2066, 1
      %vm2086 = vcmp.lt.s32.totalorder %v2066, 2
      %vm2087 = vcmp.lt.s32.totalorder %v2066, 3
      %vm2088 = vcmp.lt.s32.totalorder %v2066, 4
      %v2089 = vsel %vm2085, %v2069, %v2072
      %v2090 = vsel %vm2088, %v2078, 2102212464
      %v2091 = vsel %vm2087, %v2075, %v2090
      %v2092 = vsel %vm2086, %v2089, %v2091
      %v2093 = vsel %vm2085, %v2072, %v2075
      %v2094 = vsel %vm2088, %v2081, 920167782
      %v2095 = vsel %vm2087, %v2078, %v2094
      %v2096 = vsel %vm2086, %v2093, %v2095
      %v2097 = vsel %vm2085, %v2075, %v2078
      %v2098 = vsel %vm2088, %v2084, 1326507024
      %v2099 = vsel %vm2087, %v2081, %v2098
      %v2100 = vsel %vm2086, %v2097, %v2099
      %v2101 = vshll.u32 %v2061, 8
      %v2102 = vmul.u32.u64.compose %v2101, %v2100
      %v2103 = vextract.low.u32 %v2102
      %v2104 = vextract.high.u32 %v2102
      %v2105 = vmul.u32.u64.compose %v2101, %v2096
      %v2106 = vextract.low.u32 %v2105
      %v2107 = vextract.high.u32 %v2105
      %v2108 = vmul.u32 %v2101, %v2092
      %v2109 = vadd.s32 %v2104, %v2106
      %vm2110 = vc.u32 %v2104, %v2106
      %v2111 = vadd.s32 %v2107, 1
      %v2112 = vsel %vm2110, %v2111, %v2107
      %v2113 = vadd.s32 %v2108, %v2112
      %v2114 = vadd.s32 %v2113, 536870912
      %v2115 = vshrl.u32 %v2114, 30
      %v2116 = vshll.u32 %v2115, 30
      %v2117 = vsub.s32 %v2113, %v2116
      %vm2118 = vcmp.lt.s32.totalorder %v2117, 0
      %v2119 = vsub.s32 0, %v2117
      %v2120 = vsel %vm2118, %v2119, %v2117
      %v2121 = vclz %v2120
      %v2122 = vsub.s32 %v2121, 2
      %vm2123 = vcmp.gt.s32.totalorder 0, %v2122
      %v2124 = vsel %vm2123, 0, %v2122
      %v2125 = vsub.s32 32, %v2124
      %v2126 = vshll.u32 %v2117, %v2124
      %v2127 = vshrl.u32 %v2109, %v2125
      %v2128 = vor.u32 %v2126, %v2127
      %v2129 = vsub.s32 4294967266, %v2124
      %v2130 = vadd.s32 %v2129, 127
      %v2131 = vshll.u32 %v2130, 23
      %v2132 = vor.u32 4788187, %v2131
      %v2133 = vand.u32 2147483647, %v2132
      %v2135 = vcvt.s32.f32 %v2128
      %v2136 = vmul.f32 %v2135, %v2133
      %v2137 = vxor.u32 %v2136, 2147483648
      %v2138 = vsel %vm2055, %v2137, %v2136
      %v2139 = vsub.s32 4, %v2115
      %v2140 = vsel %vm2055, %v2139, %v2115
      %v2141 = vsel %vm2054, %v646, %v2138
      %v2142 = vsel %vm2054, 0, %v2140
      %v2143 = vcosq.f32.pop %v2141
      %v2144 = vsinq.f32.pop %v2141
      %vm2145 = vweird.f32 %v646
      %v2146 = vadd.s32 %v2142, 3
      %v2147 = vand.u32 %v2146, 3
      %vm2148 = vcmp.lt.s32.totalorder %v2147, 2
      %vm2149 = vcmp.eq.s32.totalorder %v2147, 0
      %v2150 = vxor.u32 %v2144, 2147483648
      %v2151 = vsel %vm2149, %v2143, %v2150
      %vm2152 = vcmp.eq.s32.totalorder %v2147, 2
      %v2153 = vxor.u32 %v2143, 2147483648
      %v2154 = vsel %vm2152, %v2153, %v2144
      %v2155 = vsel %vm2148, %v2151, %v2154
      %v2156 = vsel %vm2145, nan, %v2155
      %v2157 = vand.u32 2147483647, %v651
      %vm2158 = vcmp.le.f32.partialorder %v2157, 0.7853982
      %vm2159 = vcmp.lt.s32.totalorder %v651, 0
      %v2160 = vand.u32 %v651, 2139095040
      %v2161 = vshrl.u32 %v2160, 23
      %v2162 = vsub.s32 %v2161, 127
      %v2163 = vand.u32 2147483647, %v651
      %v2164 = vand.u32 %v2163, 8388607
      %v2165 = vor.u32 %v2164, 8388608
      %v2166 = vsub.s32 0, %v2165
      %v2167 = vadd.s32 %v2162, 1
      %vm2168 = vcmp.gt.s32.totalorder %v2167, 0
      %v2169 = vsel %vm2168, %v2167, 0
      %v2170 = vshrl.u32 %v2169, 5
      %v2171 = vand.u32 %v2169, 31
      %v2172 = vsub.s32 32, %v2171
      %v2173 = vshrl.u32 683565275, %v2172
      %v2174 = vshll.u32 683565275, %v2171
      %v2175 = vshrl.u32 2475754826, %v2172
      %v2176 = vor.u32 %v2174, %v2175
      %v2177 = vshll.u32 2475754826, %v2171
      %v2178 = vshrl.u32 2131351028, %v2172
      %v2179 = vor.u32 %v2177, %v2178
      %v2180 = vshll.u32 2131351028, %v2171
      %v2181 = vshrl.u32 2102212464, %v2172
      %v2182 = vor.u32 %v2180, %v2181
      %v2183 = vshll.u32 2102212464, %v2171
      %v2184 = vshrl.u32 920167782, %v2172
      %v2185 = vor.u32 %v2183, %v2184
      %v2186 = vshll.u32 920167782, %v2171
      %v2187 = vshrl.u32 1326507024, %v2172
      %v2188 = vor.u32 %v2186, %v2187
      %vm2189 = vcmp.lt.s32.totalorder %v2170, 1
      %vm2190 = vcmp.lt.s32.totalorder %v2170, 2
      %vm2191 = vcmp.lt.s32.totalorder %v2170, 3
      %vm2192 = vcmp.lt.s32.totalorder %v2170, 4
      %v2193 = vsel %vm2189, %v2173, %v2176
      %v2194 = vsel %vm2192, %v2182, 2102212464
      %v2195 = vsel %vm2191, %v2179, %v2194
      %v2196 = vsel %vm2190, %v2193, %v2195
      %v2197 = vsel %vm2189, %v2176, %v2179
      %v2198 = vsel %vm2192, %v2185, 920167782
      %v2199 = vsel %vm2191, %v2182, %v2198
      %v2200 = vsel %vm2190, %v2197, %v2199
      %v2201 = vsel %vm2189, %v2179, %v2182
      %v2202 = vsel %vm2192, %v2188, 1326507024
      %v2203 = vsel %vm2191, %v2185, %v2202
      %v2204 = vsel %vm2190, %v2201, %v2203
      %v2205 = vshll.u32 %v2165, 8
      %v2206 = vmul.u32.u64.compose %v2205, %v2204
      %v2207 = vextract.low.u32 %v2206
      %v2208 = vextract.high.u32 %v2206
      %v2209 = vmul.u32.u64.compose %v2205, %v2200
      %v2210 = vextract.low.u32 %v2209
      %v2211 = vextract.high.u32 %v2209
      %v2212 = vmul.u32 %v2205, %v2196
      %v2213 = vadd.s32 %v2208, %v2210
      %vm2214 = vc.u32 %v2208, %v2210
      %v2215 = vadd.s32 %v2211, 1
      %v2216 = vsel %vm2214, %v2215, %v2211
      %v2217 = vadd.s32 %v2212, %v2216
      %v2218 = vadd.s32 %v2217, 536870912
      %v2219 = vshrl.u32 %v2218, 30
      %v2220 = vshll.u32 %v2219, 30
      %v2221 = vsub.s32 %v2217, %v2220
      %vm2222 = vcmp.lt.s32.totalorder %v2221, 0
      %v2223 = vsub.s32 0, %v2221
      %v2224 = vsel %vm2222, %v2223, %v2221
      %v2225 = vclz %v2224
      %v2226 = vsub.s32 %v2225, 2
      %vm2227 = vcmp.gt.s32.totalorder 0, %v2226
      %v2228 = vsel %vm2227, 0, %v2226
      %v2229 = vsub.s32 32, %v2228
      %v2230 = vshll.u32 %v2221, %v2228
      %v2231 = vshrl.u32 %v2213, %v2229
      %v2232 = vor.u32 %v2230, %v2231
      %v2233 = vsub.s32 4294967266, %v2228
      %v2234 = vadd.s32 %v2233, 127
      %v2235 = vshll.u32 %v2234, 23
      %v2236 = vor.u32 4788187, %v2235
      %v2237 = vand.u32 2147483647, %v2236
      %v2239 = vcvt.s32.f32 %v2232
      %v2240 = vmul.f32 %v2239, %v2237
      %v2241 = vxor.u32 %v2240, 2147483648
      %v2242 = vsel %vm2159, %v2241, %v2240
      %v2243 = vsub.s32 4, %v2219
      %v2244 = vsel %vm2159, %v2243, %v2219
      %v2245 = vsel %vm2158, %v651, %v2242
      %v2246 = vsel %vm2158, 0, %v2244
      %v2247 = vcosq.f32.pop %v2245
      %v2248 = vsinq.f32.pop %v2245
      %vm2249 = vweird.f32 %v651
      %v2250 = vadd.s32 %v2246, 3
      %v2251 = vand.u32 %v2250, 3
      %vm2252 = vcmp.lt.s32.totalorder %v2251, 2
      %vm2253 = vcmp.eq.s32.totalorder %v2251, 0
      %v2254 = vxor.u32 %v2248, 2147483648
      %v2255 = vsel %vm2253, %v2247, %v2254
      %vm2256 = vcmp.eq.s32.totalorder %v2251, 2
      %v2257 = vxor.u32 %v2247, 2147483648
      %v2258 = vsel %vm2256, %v2257, %v2248
      %v2259 = vsel %vm2252, %v2255, %v2258
      %v2260 = vsel %vm2249, nan, %v2259
      %v2261 = vand.u32 2147483647, %v656
      %vm2262 = vcmp.le.f32.partialorder %v2261, 0.7853982
      %vm2263 = vcmp.lt.s32.totalorder %v656, 0
      %v2264 = vand.u32 %v656, 2139095040
      %v2265 = vshrl.u32 %v2264, 23
      %v2266 = vsub.s32 %v2265, 127
      %v2267 = vand.u32 2147483647, %v656
      %v2268 = vand.u32 %v2267, 8388607
      %v2269 = vor.u32 %v2268, 8388608
      %v2270 = vsub.s32 0, %v2269
      %v2271 = vadd.s32 %v2266, 1
      %vm2272 = vcmp.gt.s32.totalorder %v2271, 0
      %v2273 = vsel %vm2272, %v2271, 0
      %v2274 = vshrl.u32 %v2273, 5
      %v2275 = vand.u32 %v2273, 31
      %v2276 = vsub.s32 32, %v2275
      %v2277 = vshrl.u32 683565275, %v2276
      %v2278 = vshll.u32 683565275, %v2275
      %v2279 = vshrl.u32 2475754826, %v2276
      %v2280 = vor.u32 %v2278, %v2279
      %v2281 = vshll.u32 2475754826, %v2275
      %v2282 = vshrl.u32 2131351028, %v2276
      %v2283 = vor.u32 %v2281, %v2282
      %v2284 = vshll.u32 2131351028, %v2275
      %v2285 = vshrl.u32 2102212464, %v2276
      %v2286 = vor.u32 %v2284, %v2285
      %v2287 = vshll.u32 2102212464, %v2275
      %v2288 = vshrl.u32 920167782, %v2276
      %v2289 = vor.u32 %v2287, %v2288
      %v2290 = vshll.u32 920167782, %v2275
      %v2291 = vshrl.u32 1326507024, %v2276
      %v2292 = vor.u32 %v2290, %v2291
      %vm2293 = vcmp.lt.s32.totalorder %v2274, 1
      %vm2294 = vcmp.lt.s32.totalorder %v2274, 2
      %vm2295 = vcmp.lt.s32.totalorder %v2274, 3
      %vm2296 = vcmp.lt.s32.totalorder %v2274, 4
      %v2297 = vsel %vm2293, %v2277, %v2280
      %v2298 = vsel %vm2296, %v2286, 2102212464
      %v2299 = vsel %vm2295, %v2283, %v2298
      %v2300 = vsel %vm2294, %v2297, %v2299
      %v2301 = vsel %vm2293, %v2280, %v2283
      %v2302 = vsel %vm2296, %v2289, 920167782
      %v2303 = vsel %vm2295, %v2286, %v2302
      %v2304 = vsel %vm2294, %v2301, %v2303
      %v2305 = vsel %vm2293, %v2283, %v2286
      %v2306 = vsel %vm2296, %v2292, 1326507024
      %v2307 = vsel %vm2295, %v2289, %v2306
      %v2308 = vsel %vm2294, %v2305, %v2307
      %v2309 = vshll.u32 %v2269, 8
      %v2310 = vmul.u32.u64.compose %v2309, %v2308
      %v2311 = vextract.low.u32 %v2310
      %v2312 = vextract.high.u32 %v2310
      %v2313 = vmul.u32.u64.compose %v2309, %v2304
      %v2314 = vextract.low.u32 %v2313
      %v2315 = vextract.high.u32 %v2313
      %v2316 = vmul.u32 %v2309, %v2300
      %v2317 = vadd.s32 %v2312, %v2314
      %vm2318 = vc.u32 %v2312, %v2314
      %v2319 = vadd.s32 %v2315, 1
      %v2320 = vsel %vm2318, %v2319, %v2315
      %v2321 = vadd.s32 %v2316, %v2320
      %v2322 = vadd.s32 %v2321, 536870912
      %v2323 = vshrl.u32 %v2322, 30
      %v2324 = vshll.u32 %v2323, 30
      %v2325 = vsub.s32 %v2321, %v2324
      %vm2326 = vcmp.lt.s32.totalorder %v2325, 0
      %v2327 = vsub.s32 0, %v2325
      %v2328 = vsel %vm2326, %v2327, %v2325
      %v2329 = vclz %v2328
      %v2330 = vsub.s32 %v2329, 2
      %vm2331 = vcmp.gt.s32.totalorder 0, %v2330
      %v2332 = vsel %vm2331, 0, %v2330
      %v2333 = vsub.s32 32, %v2332
      %v2334 = vshll.u32 %v2325, %v2332
      %v2335 = vshrl.u32 %v2317, %v2333
      %v2336 = vor.u32 %v2334, %v2335
      %v2337 = vsub.s32 4294967266, %v2332
      %v2338 = vadd.s32 %v2337, 127
      %v2339 = vshll.u32 %v2338, 23
      %v2340 = vor.u32 4788187, %v2339
      %v2341 = vand.u32 2147483647, %v2340
      %v2343 = vcvt.s32.f32 %v2336
      %v2344 = vmul.f32 %v2343, %v2341
      %v2345 = vxor.u32 %v2344, 2147483648
      %v2346 = vsel %vm2263, %v2345, %v2344
      %v2347 = vsub.s32 4, %v2323
      %v2348 = vsel %vm2263, %v2347, %v2323
      %v2349 = vsel %vm2262, %v656, %v2346
      %v2350 = vsel %vm2262, 0, %v2348
      %v2351 = vcosq.f32.pop %v2349
      %v2352 = vsinq.f32.pop %v2349
      %vm2353 = vweird.f32 %v656
      %v2354 = vadd.s32 %v2350, 3
      %v2355 = vand.u32 %v2354, 3
      %vm2356 = vcmp.lt.s32.totalorder %v2355, 2
      %vm2357 = vcmp.eq.s32.totalorder %v2355, 0
      %v2358 = vxor.u32 %v2352, 2147483648
      %v2359 = vsel %vm2357, %v2351, %v2358
      %vm2360 = vcmp.eq.s32.totalorder %v2355, 2
      %v2361 = vxor.u32 %v2351, 2147483648
      %v2362 = vsel %vm2360, %v2361, %v2352
      %v2363 = vsel %vm2356, %v2359, %v2362
      %v2364 = vsel %vm2353, nan, %v2363
      %v2365 = vand.u32 2147483647, %v661
      %vm2366 = vcmp.le.f32.partialorder %v2365, 0.7853982
      %vm2367 = vcmp.lt.s32.totalorder %v661, 0
      %v2368 = vand.u32 %v661, 2139095040
      %v2369 = vshrl.u32 %v2368, 23
      %v2370 = vsub.s32 %v2369, 127
      %v2371 = vand.u32 2147483647, %v661
      %v2372 = vand.u32 %v2371, 8388607
      %v2373 = vor.u32 %v2372, 8388608
      %v2374 = vsub.s32 0, %v2373
      %v2375 = vadd.s32 %v2370, 1
      %vm2376 = vcmp.gt.s32.totalorder %v2375, 0
      %v2377 = vsel %vm2376, %v2375, 0
      %v2378 = vshrl.u32 %v2377, 5
      %v2379 = vand.u32 %v2377, 31
      %v2380 = vsub.s32 32, %v2379
      %v2381 = vshrl.u32 683565275, %v2380
      %v2382 = vshll.u32 683565275, %v2379
      %v2383 = vshrl.u32 2475754826, %v2380
      %v2384 = vor.u32 %v2382, %v2383
      %v2385 = vshll.u32 2475754826, %v2379
      %v2386 = vshrl.u32 2131351028, %v2380
      %v2387 = vor.u32 %v2385, %v2386
      %v2388 = vshll.u32 2131351028, %v2379
      %v2389 = vshrl.u32 2102212464, %v2380
      %v2390 = vor.u32 %v2388, %v2389
      %v2391 = vshll.u32 2102212464, %v2379
      %v2392 = vshrl.u32 920167782, %v2380
      %v2393 = vor.u32 %v2391, %v2392
      %v2394 = vshll.u32 920167782, %v2379
      %v2395 = vshrl.u32 1326507024, %v2380
      %v2396 = vor.u32 %v2394, %v2395
      %vm2397 = vcmp.lt.s32.totalorder %v2378, 1
      %vm2398 = vcmp.lt.s32.totalorder %v2378, 2
      %vm2399 = vcmp.lt.s32.totalorder %v2378, 3
      %vm2400 = vcmp.lt.s32.totalorder %v2378, 4
      %v2401 = vsel %vm2397, %v2381, %v2384
      %v2402 = vsel %vm2400, %v2390, 2102212464
      %v2403 = vsel %vm2399, %v2387, %v2402
      %v2404 = vsel %vm2398, %v2401, %v2403
      %v2405 = vsel %vm2397, %v2384, %v2387
      %v2406 = vsel %vm2400, %v2393, 920167782
      %v2407 = vsel %vm2399, %v2390, %v2406
      %v2408 = vsel %vm2398, %v2405, %v2407
      %v2409 = vsel %vm2397, %v2387, %v2390
      %v2410 = vsel %vm2400, %v2396, 1326507024
      %v2411 = vsel %vm2399, %v2393, %v2410
      %v2412 = vsel %vm2398, %v2409, %v2411
      %v2413 = vshll.u32 %v2373, 8
      %v2414 = vmul.u32.u64.compose %v2413, %v2412
      %v2415 = vextract.low.u32 %v2414
      %v2416 = vextract.high.u32 %v2414
      %v2417 = vmul.u32.u64.compose %v2413, %v2408
      %v2418 = vextract.low.u32 %v2417
      %v2419 = vextract.high.u32 %v2417
      %v2420 = vmul.u32 %v2413, %v2404
      %v2421 = vadd.s32 %v2416, %v2418
      %vm2422 = vc.u32 %v2416, %v2418
      %v2423 = vadd.s32 %v2419, 1
      %v2424 = vsel %vm2422, %v2423, %v2419
      %v2425 = vadd.s32 %v2420, %v2424
      %v2426 = vadd.s32 %v2425, 536870912
      %v2427 = vshrl.u32 %v2426, 30
      %v2428 = vshll.u32 %v2427, 30
      %v2429 = vsub.s32 %v2425, %v2428
      %vm2430 = vcmp.lt.s32.totalorder %v2429, 0
      %v2431 = vsub.s32 0, %v2429
      %v2432 = vsel %vm2430, %v2431, %v2429
      %v2433 = vclz %v2432
      %v2434 = vsub.s32 %v2433, 2
      %vm2435 = vcmp.gt.s32.totalorder 0, %v2434
      %v2436 = vsel %vm2435, 0, %v2434
      %v2437 = vsub.s32 32, %v2436
      %v2438 = vshll.u32 %v2429, %v2436
      %v2439 = vshrl.u32 %v2421, %v2437
      %v2440 = vor.u32 %v2438, %v2439
      %v2441 = vsub.s32 4294967266, %v2436
      %v2442 = vadd.s32 %v2441, 127
      %v2443 = vshll.u32 %v2442, 23
      %v2444 = vor.u32 4788187, %v2443
      %v2445 = vand.u32 2147483647, %v2444
      %v2447 = vcvt.s32.f32 %v2440
      %v2448 = vmul.f32 %v2447, %v2445
      %v2449 = vxor.u32 %v2448, 2147483648
      %v2450 = vsel %vm2367, %v2449, %v2448
      %v2451 = vsub.s32 4, %v2427
      %v2452 = vsel %vm2367, %v2451, %v2427
      %v2453 = vsel %vm2366, %v661, %v2450
      %v2454 = vsel %vm2366, 0, %v2452
      %v2455 = vcosq.f32.pop %v2453
      %v2456 = vsinq.f32.pop %v2453
      %vm2457 = vweird.f32 %v661
      %v2458 = vadd.s32 %v2454, 3
      %v2459 = vand.u32 %v2458, 3
      %vm2460 = vcmp.lt.s32.totalorder %v2459, 2
      %vm2461 = vcmp.eq.s32.totalorder %v2459, 0
      %v2462 = vxor.u32 %v2456, 2147483648
      %v2463 = vsel %vm2461, %v2455, %v2462
      %vm2464 = vcmp.eq.s32.totalorder %v2459, 2
      %v2465 = vxor.u32 %v2455, 2147483648
      %v2466 = vsel %vm2464, %v2465, %v2456
      %v2467 = vsel %vm2460, %v2463, %v2466
      %v2468 = vsel %vm2457, nan, %v2467
      %v2469 = vand.u32 2147483647, %v666
      %vm2470 = vcmp.le.f32.partialorder %v2469, 0.7853982
      %vm2471 = vcmp.lt.s32.totalorder %v666, 0
      %v2472 = vand.u32 %v666, 2139095040
      %v2473 = vshrl.u32 %v2472, 23
      %v2474 = vsub.s32 %v2473, 127
      %v2475 = vand.u32 2147483647, %v666
      %v2476 = vand.u32 %v2475, 8388607
      %v2477 = vor.u32 %v2476, 8388608
      %v2478 = vsub.s32 0, %v2477
      %v2479 = vadd.s32 %v2474, 1
      %vm2480 = vcmp.gt.s32.totalorder %v2479, 0
      %v2481 = vsel %vm2480, %v2479, 0
      %v2482 = vshrl.u32 %v2481, 5
      %v2483 = vand.u32 %v2481, 31
      %v2484 = vsub.s32 32, %v2483
      %v2485 = vshrl.u32 683565275, %v2484
      %v2486 = vshll.u32 683565275, %v2483
      %v2487 = vshrl.u32 2475754826, %v2484
      %v2488 = vor.u32 %v2486, %v2487
      %v2489 = vshll.u32 2475754826, %v2483
      %v2490 = vshrl.u32 2131351028, %v2484
      %v2491 = vor.u32 %v2489, %v2490
      %v2492 = vshll.u32 2131351028, %v2483
      %v2493 = vshrl.u32 2102212464, %v2484
      %v2494 = vor.u32 %v2492, %v2493
      %v2495 = vshll.u32 2102212464, %v2483
      %v2496 = vshrl.u32 920167782, %v2484
      %v2497 = vor.u32 %v2495, %v2496
      %v2498 = vshll.u32 920167782, %v2483
      %v2499 = vshrl.u32 1326507024, %v2484
      %v2500 = vor.u32 %v2498, %v2499
      %vm2501 = vcmp.lt.s32.totalorder %v2482, 1
      %vm2502 = vcmp.lt.s32.totalorder %v2482, 2
      %vm2503 = vcmp.lt.s32.totalorder %v2482, 3
      %vm2504 = vcmp.lt.s32.totalorder %v2482, 4
      %v2505 = vsel %vm2501, %v2485, %v2488
      %v2506 = vsel %vm2504, %v2494, 2102212464
      %v2507 = vsel %vm2503, %v2491, %v2506
      %v2508 = vsel %vm2502, %v2505, %v2507
      %v2509 = vsel %vm2501, %v2488, %v2491
      %v2510 = vsel %vm2504, %v2497, 920167782
      %v2511 = vsel %vm2503, %v2494, %v2510
      %v2512 = vsel %vm2502, %v2509, %v2511
      %v2513 = vsel %vm2501, %v2491, %v2494
      %v2514 = vsel %vm2504, %v2500, 1326507024
      %v2515 = vsel %vm2503, %v2497, %v2514
      %v2516 = vsel %vm2502, %v2513, %v2515
      %v2517 = vshll.u32 %v2477, 8
      %v2518 = vmul.u32.u64.compose %v2517, %v2516
      %v2519 = vextract.low.u32 %v2518
      %v2520 = vextract.high.u32 %v2518
      %v2521 = vmul.u32.u64.compose %v2517, %v2512
      %v2522 = vextract.low.u32 %v2521
      %v2523 = vextract.high.u32 %v2521
      %v2524 = vmul.u32 %v2517, %v2508
      %v2525 = vadd.s32 %v2520, %v2522
      %vm2526 = vc.u32 %v2520, %v2522
      %v2527 = vadd.s32 %v2523, 1
      %v2528 = vsel %vm2526, %v2527, %v2523
      %v2529 = vadd.s32 %v2524, %v2528
      %v2530 = vadd.s32 %v2529, 536870912
      %v2531 = vshrl.u32 %v2530, 30
      %v2532 = vshll.u32 %v2531, 30
      %v2533 = vsub.s32 %v2529, %v2532
      %vm2534 = vcmp.lt.s32.totalorder %v2533, 0
      %v2535 = vsub.s32 0, %v2533
      %v2536 = vsel %vm2534, %v2535, %v2533
      %v2537 = vclz %v2536
      %v2538 = vsub.s32 %v2537, 2
      %vm2539 = vcmp.gt.s32.totalorder 0, %v2538
      %v2540 = vsel %vm2539, 0, %v2538
      %v2541 = vsub.s32 32, %v2540
      %v2542 = vshll.u32 %v2533, %v2540
      %v2543 = vshrl.u32 %v2525, %v2541
      %v2544 = vor.u32 %v2542, %v2543
      %v2545 = vsub.s32 4294967266, %v2540
      %v2546 = vadd.s32 %v2545, 127
      %v2547 = vshll.u32 %v2546, 23
      %v2548 = vor.u32 4788187, %v2547
      %v2549 = vand.u32 2147483647, %v2548
      %v2551 = vcvt.s32.f32 %v2544
      %v2552 = vmul.f32 %v2551, %v2549
      %v2553 = vxor.u32 %v2552, 2147483648
      %v2554 = vsel %vm2471, %v2553, %v2552
      %v2555 = vsub.s32 4, %v2531
      %v2556 = vsel %vm2471, %v2555, %v2531
      %v2557 = vsel %vm2470, %v666, %v2554
      %v2558 = vsel %vm2470, 0, %v2556
      %v2559 = vcosq.f32.pop %v2557
      %v2560 = vsinq.f32.pop %v2557
      %vm2561 = vweird.f32 %v666
      %v2562 = vadd.s32 %v2558, 3
      %v2563 = vand.u32 %v2562, 3
      %vm2564 = vcmp.lt.s32.totalorder %v2563, 2
      %vm2565 = vcmp.eq.s32.totalorder %v2563, 0
      %v2566 = vxor.u32 %v2560, 2147483648
      %v2567 = vsel %vm2565, %v2559, %v2566
      %vm2568 = vcmp.eq.s32.totalorder %v2563, 2
      %v2569 = vxor.u32 %v2559, 2147483648
      %v2570 = vsel %vm2568, %v2569, %v2560
      %v2571 = vsel %vm2564, %v2567, %v2570
      %v2572 = vsel %vm2561, nan, %v2571
      %v2573 = vand.u32 2147483647, %v671
      %vm2574 = vcmp.le.f32.partialorder %v2573, 0.7853982
      %vm2575 = vcmp.lt.s32.totalorder %v671, 0
      %v2576 = vand.u32 %v671, 2139095040
      %v2577 = vshrl.u32 %v2576, 23
      %v2578 = vsub.s32 %v2577, 127
      %v2579 = vand.u32 2147483647, %v671
      %v2580 = vand.u32 %v2579, 8388607
      %v2581 = vor.u32 %v2580, 8388608
      %v2582 = vsub.s32 0, %v2581
      %v2583 = vadd.s32 %v2578, 1
      %vm2584 = vcmp.gt.s32.totalorder %v2583, 0
      %v2585 = vsel %vm2584, %v2583, 0
      %v2586 = vshrl.u32 %v2585, 5
      %v2587 = vand.u32 %v2585, 31
      %v2588 = vsub.s32 32, %v2587
      %v2589 = vshrl.u32 683565275, %v2588
      %v2590 = vshll.u32 683565275, %v2587
      %v2591 = vshrl.u32 2475754826, %v2588
      %v2592 = vor.u32 %v2590, %v2591
      %v2593 = vshll.u32 2475754826, %v2587
      %v2594 = vshrl.u32 2131351028, %v2588
      %v2595 = vor.u32 %v2593, %v2594
      %v2596 = vshll.u32 2131351028, %v2587
      %v2597 = vshrl.u32 2102212464, %v2588
      %v2598 = vor.u32 %v2596, %v2597
      %v2599 = vshll.u32 2102212464, %v2587
      %v2600 = vshrl.u32 920167782, %v2588
      %v2601 = vor.u32 %v2599, %v2600
      %v2602 = vshll.u32 920167782, %v2587
      %v2603 = vshrl.u32 1326507024, %v2588
      %v2604 = vor.u32 %v2602, %v2603
      %vm2605 = vcmp.lt.s32.totalorder %v2586, 1
      %vm2606 = vcmp.lt.s32.totalorder %v2586, 2
      %vm2607 = vcmp.lt.s32.totalorder %v2586, 3
      %vm2608 = vcmp.lt.s32.totalorder %v2586, 4
      %v2609 = vsel %vm2605, %v2589, %v2592
      %v2610 = vsel %vm2608, %v2598, 2102212464
      %v2611 = vsel %vm2607, %v2595, %v2610
      %v2612 = vsel %vm2606, %v2609, %v2611
      %v2613 = vsel %vm2605, %v2592, %v2595
      %v2614 = vsel %vm2608, %v2601, 920167782
      %v2615 = vsel %vm2607, %v2598, %v2614
      %v2616 = vsel %vm2606, %v2613, %v2615
      %v2617 = vsel %vm2605, %v2595, %v2598
      %v2618 = vsel %vm2608, %v2604, 1326507024
      %v2619 = vsel %vm2607, %v2601, %v2618
      %v2620 = vsel %vm2606, %v2617, %v2619
      %v2621 = vshll.u32 %v2581, 8
      %v2622 = vmul.u32.u64.compose %v2621, %v2620
      %v2623 = vextract.low.u32 %v2622
      %v2624 = vextract.high.u32 %v2622
      %v2625 = vmul.u32.u64.compose %v2621, %v2616
      %v2626 = vextract.low.u32 %v2625
      %v2627 = vextract.high.u32 %v2625
      %v2628 = vmul.u32 %v2621, %v2612
      %v2629 = vadd.s32 %v2624, %v2626
      %vm2630 = vc.u32 %v2624, %v2626
      %v2631 = vadd.s32 %v2627, 1
      %v2632 = vsel %vm2630, %v2631, %v2627
      %v2633 = vadd.s32 %v2628, %v2632
      %v2634 = vadd.s32 %v2633, 536870912
      %v2635 = vshrl.u32 %v2634, 30
      %v2636 = vshll.u32 %v2635, 30
      %v2637 = vsub.s32 %v2633, %v2636
      %vm2638 = vcmp.lt.s32.totalorder %v2637, 0
      %v2639 = vsub.s32 0, %v2637
      %v2640 = vsel %vm2638, %v2639, %v2637
      %v2641 = vclz %v2640
      %v2642 = vsub.s32 %v2641, 2
      %vm2643 = vcmp.gt.s32.totalorder 0, %v2642
      %v2644 = vsel %vm2643, 0, %v2642
      %v2645 = vsub.s32 32, %v2644
      %v2646 = vshll.u32 %v2637, %v2644
      %v2647 = vshrl.u32 %v2629, %v2645
      %v2648 = vor.u32 %v2646, %v2647
      %v2649 = vsub.s32 4294967266, %v2644
      %v2650 = vadd.s32 %v2649, 127
      %v2651 = vshll.u32 %v2650, 23
      %v2652 = vor.u32 4788187, %v2651
      %v2653 = vand.u32 2147483647, %v2652
      %v2655 = vcvt.s32.f32 %v2648
      %v2656 = vmul.f32 %v2655, %v2653
      %v2657 = vxor.u32 %v2656, 2147483648
      %v2658 = vsel %vm2575, %v2657, %v2656
      %v2659 = vsub.s32 4, %v2635
      %v2660 = vsel %vm2575, %v2659, %v2635
      %v2661 = vsel %vm2574, %v671, %v2658
      %v2662 = vsel %vm2574, 0, %v2660
      %v2663 = vcosq.f32.pop %v2661
      %v2664 = vsinq.f32.pop %v2661
      %vm2665 = vweird.f32 %v671
      %v2666 = vadd.s32 %v2662, 3
      %v2667 = vand.u32 %v2666, 3
      %vm2668 = vcmp.lt.s32.totalorder %v2667, 2
      %vm2669 = vcmp.eq.s32.totalorder %v2667, 0
      %v2670 = vxor.u32 %v2664, 2147483648
      %v2671 = vsel %vm2669, %v2663, %v2670
      %vm2672 = vcmp.eq.s32.totalorder %v2667, 2
      %v2673 = vxor.u32 %v2663, 2147483648
      %v2674 = vsel %vm2672, %v2673, %v2664
      %v2675 = vsel %vm2668, %v2671, %v2674
      %v2676 = vsel %vm2665, nan, %v2675
      %v2677 = vand.u32 2147483647, %v676
      %vm2678 = vcmp.le.f32.partialorder %v2677, 0.7853982
      %vm2679 = vcmp.lt.s32.totalorder %v676, 0
      %v2680 = vand.u32 %v676, 2139095040
      %v2681 = vshrl.u32 %v2680, 23
      %v2682 = vsub.s32 %v2681, 127
      %v2683 = vand.u32 2147483647, %v676
      %v2684 = vand.u32 %v2683, 8388607
      %v2685 = vor.u32 %v2684, 8388608
      %v2686 = vsub.s32 0, %v2685
      %v2687 = vadd.s32 %v2682, 1
      %vm2688 = vcmp.gt.s32.totalorder %v2687, 0
      %v2689 = vsel %vm2688, %v2687, 0
      %v2690 = vshrl.u32 %v2689, 5
      %v2691 = vand.u32 %v2689, 31
      %v2692 = vsub.s32 32, %v2691
      %v2693 = vshrl.u32 683565275, %v2692
      %v2694 = vshll.u32 683565275, %v2691
      %v2695 = vshrl.u32 2475754826, %v2692
      %v2696 = vor.u32 %v2694, %v2695
      %v2697 = vshll.u32 2475754826, %v2691
      %v2698 = vshrl.u32 2131351028, %v2692
      %v2699 = vor.u32 %v2697, %v2698
      %v2700 = vshll.u32 2131351028, %v2691
      %v2701 = vshrl.u32 2102212464, %v2692
      %v2702 = vor.u32 %v2700, %v2701
      %v2703 = vshll.u32 2102212464, %v2691
      %v2704 = vshrl.u32 920167782, %v2692
      %v2705 = vor.u32 %v2703, %v2704
      %v2706 = vshll.u32 920167782, %v2691
      %v2707 = vshrl.u32 1326507024, %v2692
      %v2708 = vor.u32 %v2706, %v2707
      %vm2709 = vcmp.lt.s32.totalorder %v2690, 1
      %vm2710 = vcmp.lt.s32.totalorder %v2690, 2
      %vm2711 = vcmp.lt.s32.totalorder %v2690, 3
      %vm2712 = vcmp.lt.s32.totalorder %v2690, 4
      %v2713 = vsel %vm2709, %v2693, %v2696
      %v2714 = vsel %vm2712, %v2702, 2102212464
      %v2715 = vsel %vm2711, %v2699, %v2714
      %v2716 = vsel %vm2710, %v2713, %v2715
      %v2717 = vsel %vm2709, %v2696, %v2699
      %v2718 = vsel %vm2712, %v2705, 920167782
      %v2719 = vsel %vm2711, %v2702, %v2718
      %v2720 = vsel %vm2710, %v2717, %v2719
      %v2721 = vsel %vm2709, %v2699, %v2702
      %v2722 = vsel %vm2712, %v2708, 1326507024
      %v2723 = vsel %vm2711, %v2705, %v2722
      %v2724 = vsel %vm2710, %v2721, %v2723
      %v2725 = vshll.u32 %v2685, 8
      %v2726 = vmul.u32.u64.compose %v2725, %v2724
      %v2727 = vextract.low.u32 %v2726
      %v2728 = vextract.high.u32 %v2726
      %v2729 = vmul.u32.u64.compose %v2725, %v2720
      %v2730 = vextract.low.u32 %v2729
      %v2731 = vextract.high.u32 %v2729
      %v2732 = vmul.u32 %v2725, %v2716
      %v2733 = vadd.s32 %v2728, %v2730
      %vm2734 = vc.u32 %v2728, %v2730
      %v2735 = vadd.s32 %v2731, 1
      %v2736 = vsel %vm2734, %v2735, %v2731
      %v2737 = vadd.s32 %v2732, %v2736
      %v2738 = vadd.s32 %v2737, 536870912
      %v2739 = vshrl.u32 %v2738, 30
      %v2740 = vshll.u32 %v2739, 30
      %v2741 = vsub.s32 %v2737, %v2740
      %vm2742 = vcmp.lt.s32.totalorder %v2741, 0
      %v2743 = vsub.s32 0, %v2741
      %v2744 = vsel %vm2742, %v2743, %v2741
      %v2745 = vclz %v2744
      %v2746 = vsub.s32 %v2745, 2
      %vm2747 = vcmp.gt.s32.totalorder 0, %v2746
      %v2748 = vsel %vm2747, 0, %v2746
      %v2749 = vsub.s32 32, %v2748
      %v2750 = vshll.u32 %v2741, %v2748
      %v2751 = vshrl.u32 %v2733, %v2749
      %v2752 = vor.u32 %v2750, %v2751
      %v2753 = vsub.s32 4294967266, %v2748
      %v2754 = vadd.s32 %v2753, 127
      %v2755 = vshll.u32 %v2754, 23
      %v2756 = vor.u32 4788187, %v2755
      %v2757 = vand.u32 2147483647, %v2756
      %v2759 = vcvt.s32.f32 %v2752
      %v2760 = vmul.f32 %v2759, %v2757
      %v2761 = vxor.u32 %v2760, 2147483648
      %v2762 = vsel %vm2679, %v2761, %v2760
      %v2763 = vsub.s32 4, %v2739
      %v2764 = vsel %vm2679, %v2763, %v2739
      %v2765 = vsel %vm2678, %v676, %v2762
      %v2766 = vsel %vm2678, 0, %v2764
      %v2767 = vcosq.f32.pop %v2765
      %v2768 = vsinq.f32.pop %v2765
      %vm2769 = vweird.f32 %v676
      %v2770 = vadd.s32 %v2766, 3
      %v2771 = vand.u32 %v2770, 3
      %vm2772 = vcmp.lt.s32.totalorder %v2771, 2
      %vm2773 = vcmp.eq.s32.totalorder %v2771, 0
      %v2774 = vxor.u32 %v2768, 2147483648
      %v2775 = vsel %vm2773, %v2767, %v2774
      %vm2776 = vcmp.eq.s32.totalorder %v2771, 2
      %v2777 = vxor.u32 %v2767, 2147483648
      %v2778 = vsel %vm2776, %v2777, %v2768
      %v2779 = vsel %vm2772, %v2775, %v2778
      %v2780 = vsel %vm2769, nan, %v2779
      %v2781 = vand.u32 2147483647, %v681
      %vm2782 = vcmp.le.f32.partialorder %v2781, 0.7853982
      %vm2783 = vcmp.lt.s32.totalorder %v681, 0
      %v2784 = vand.u32 %v681, 2139095040
      %v2785 = vshrl.u32 %v2784, 23
      %v2786 = vsub.s32 %v2785, 127
      %v2787 = vand.u32 2147483647, %v681
      %v2788 = vand.u32 %v2787, 8388607
      %v2789 = vor.u32 %v2788, 8388608
      %v2790 = vsub.s32 0, %v2789
      %v2791 = vadd.s32 %v2786, 1
      %vm2792 = vcmp.gt.s32.totalorder %v2791, 0
      %v2793 = vsel %vm2792, %v2791, 0
      %v2794 = vshrl.u32 %v2793, 5
      %v2795 = vand.u32 %v2793, 31
      %v2796 = vsub.s32 32, %v2795
      %v2797 = vshrl.u32 683565275, %v2796
      %v2798 = vshll.u32 683565275, %v2795
      %v2799 = vshrl.u32 2475754826, %v2796
      %v2800 = vor.u32 %v2798, %v2799
      %v2801 = vshll.u32 2475754826, %v2795
      %v2802 = vshrl.u32 2131351028, %v2796
      %v2803 = vor.u32 %v2801, %v2802
      %v2804 = vshll.u32 2131351028, %v2795
      %v2805 = vshrl.u32 2102212464, %v2796
      %v2806 = vor.u32 %v2804, %v2805
      %v2807 = vshll.u32 2102212464, %v2795
      %v2808 = vshrl.u32 920167782, %v2796
      %v2809 = vor.u32 %v2807, %v2808
      %v2810 = vshll.u32 920167782, %v2795
      %v2811 = vshrl.u32 1326507024, %v2796
      %v2812 = vor.u32 %v2810, %v2811
      %vm2813 = vcmp.lt.s32.totalorder %v2794, 1
      %vm2814 = vcmp.lt.s32.totalorder %v2794, 2
      %vm2815 = vcmp.lt.s32.totalorder %v2794, 3
      %vm2816 = vcmp.lt.s32.totalorder %v2794, 4
      %v2817 = vsel %vm2813, %v2797, %v2800
      %v2818 = vsel %vm2816, %v2806, 2102212464
      %v2819 = vsel %vm2815, %v2803, %v2818
      %v2820 = vsel %vm2814, %v2817, %v2819
      %v2821 = vsel %vm2813, %v2800, %v2803
      %v2822 = vsel %vm2816, %v2809, 920167782
      %v2823 = vsel %vm2815, %v2806, %v2822
      %v2824 = vsel %vm2814, %v2821, %v2823
      %v2825 = vsel %vm2813, %v2803, %v2806
      %v2826 = vsel %vm2816, %v2812, 1326507024
      %v2827 = vsel %vm2815, %v2809, %v2826
      %v2828 = vsel %vm2814, %v2825, %v2827
      %v2829 = vshll.u32 %v2789, 8
      %v2830 = vmul.u32.u64.compose %v2829, %v2828
      %v2831 = vextract.low.u32 %v2830
      %v2832 = vextract.high.u32 %v2830
      %v2833 = vmul.u32.u64.compose %v2829, %v2824
      %v2834 = vextract.low.u32 %v2833
      %v2835 = vextract.high.u32 %v2833
      %v2836 = vmul.u32 %v2829, %v2820
      %v2837 = vadd.s32 %v2832, %v2834
      %vm2838 = vc.u32 %v2832, %v2834
      %v2839 = vadd.s32 %v2835, 1
      %v2840 = vsel %vm2838, %v2839, %v2835
      %v2841 = vadd.s32 %v2836, %v2840
      %v2842 = vadd.s32 %v2841, 536870912
      %v2843 = vshrl.u32 %v2842, 30
      %v2844 = vshll.u32 %v2843, 30
      %v2845 = vsub.s32 %v2841, %v2844
      %vm2846 = vcmp.lt.s32.totalorder %v2845, 0
      %v2847 = vsub.s32 0, %v2845
      %v2848 = vsel %vm2846, %v2847, %v2845
      %v2849 = vclz %v2848
      %v2850 = vsub.s32 %v2849, 2
      %vm2851 = vcmp.gt.s32.totalorder 0, %v2850
      %v2852 = vsel %vm2851, 0, %v2850
      %v2853 = vsub.s32 32, %v2852
      %v2854 = vshll.u32 %v2845, %v2852
      %v2855 = vshrl.u32 %v2837, %v2853
      %v2856 = vor.u32 %v2854, %v2855
      %v2857 = vsub.s32 4294967266, %v2852
      %v2858 = vadd.s32 %v2857, 127
      %v2859 = vshll.u32 %v2858, 23
      %v2860 = vor.u32 4788187, %v2859
      %v2861 = vand.u32 2147483647, %v2860
      %v2863 = vcvt.s32.f32 %v2856
      %v2864 = vmul.f32 %v2863, %v2861
      %v2865 = vxor.u32 %v2864, 2147483648
      %v2866 = vsel %vm2783, %v2865, %v2864
      %v2867 = vsub.s32 4, %v2843
      %v2868 = vsel %vm2783, %v2867, %v2843
      %v2869 = vsel %vm2782, %v681, %v2866
      %v2870 = vsel %vm2782, 0, %v2868
      %v2871 = vcosq.f32.pop %v2869
      %v2872 = vsinq.f32.pop %v2869
      %vm2873 = vweird.f32 %v681
      %v2874 = vadd.s32 %v2870, 3
      %v2875 = vand.u32 %v2874, 3
      %vm2876 = vcmp.lt.s32.totalorder %v2875, 2
      %vm2877 = vcmp.eq.s32.totalorder %v2875, 0
      %v2878 = vxor.u32 %v2872, 2147483648
      %v2879 = vsel %vm2877, %v2871, %v2878
      %vm2880 = vcmp.eq.s32.totalorder %v2875, 2
      %v2881 = vxor.u32 %v2871, 2147483648
      %v2882 = vsel %vm2880, %v2881, %v2872
      %v2883 = vsel %vm2876, %v2879, %v2882
      %v2884 = vsel %vm2873, nan, %v2883
      %v2885 = vand.u32 2147483647, %v686
      %vm2886 = vcmp.le.f32.partialorder %v2885, 0.7853982
      %vm2887 = vcmp.lt.s32.totalorder %v686, 0
      %v2888 = vand.u32 %v686, 2139095040
      %v2889 = vshrl.u32 %v2888, 23
      %v2890 = vsub.s32 %v2889, 127
      %v2891 = vand.u32 2147483647, %v686
      %v2892 = vand.u32 %v2891, 8388607
      %v2893 = vor.u32 %v2892, 8388608
      %v2894 = vsub.s32 0, %v2893
      %v2895 = vadd.s32 %v2890, 1
      %vm2896 = vcmp.gt.s32.totalorder %v2895, 0
      %v2897 = vsel %vm2896, %v2895, 0
      %v2898 = vshrl.u32 %v2897, 5
      %v2899 = vand.u32 %v2897, 31
      %v2900 = vsub.s32 32, %v2899
      %v2901 = vshrl.u32 683565275, %v2900
      %v2902 = vshll.u32 683565275, %v2899
      %v2903 = vshrl.u32 2475754826, %v2900
      %v2904 = vor.u32 %v2902, %v2903
      %v2905 = vshll.u32 2475754826, %v2899
      %v2906 = vshrl.u32 2131351028, %v2900
      %v2907 = vor.u32 %v2905, %v2906
      %v2908 = vshll.u32 2131351028, %v2899
      %v2909 = vshrl.u32 2102212464, %v2900
      %v2910 = vor.u32 %v2908, %v2909
      %v2911 = vshll.u32 2102212464, %v2899
      %v2912 = vshrl.u32 920167782, %v2900
      %v2913 = vor.u32 %v2911, %v2912
      %v2914 = vshll.u32 920167782, %v2899
      %v2915 = vshrl.u32 1326507024, %v2900
      %v2916 = vor.u32 %v2914, %v2915
      %vm2917 = vcmp.lt.s32.totalorder %v2898, 1
      %vm2918 = vcmp.lt.s32.totalorder %v2898, 2
      %vm2919 = vcmp.lt.s32.totalorder %v2898, 3
      %vm2920 = vcmp.lt.s32.totalorder %v2898, 4
      %v2921 = vsel %vm2917, %v2901, %v2904
      %v2922 = vsel %vm2920, %v2910, 2102212464
      %v2923 = vsel %vm2919, %v2907, %v2922
      %v2924 = vsel %vm2918, %v2921, %v2923
      %v2925 = vsel %vm2917, %v2904, %v2907
      %v2926 = vsel %vm2920, %v2913, 920167782
      %v2927 = vsel %vm2919, %v2910, %v2926
      %v2928 = vsel %vm2918, %v2925, %v2927
      %v2929 = vsel %vm2917, %v2907, %v2910
      %v2930 = vsel %vm2920, %v2916, 1326507024
      %v2931 = vsel %vm2919, %v2913, %v2930
      %v2932 = vsel %vm2918, %v2929, %v2931
      %v2933 = vshll.u32 %v2893, 8
      %v2934 = vmul.u32.u64.compose %v2933, %v2932
      %v2935 = vextract.low.u32 %v2934
      %v2936 = vextract.high.u32 %v2934
      %v2937 = vmul.u32.u64.compose %v2933, %v2928
      %v2938 = vextract.low.u32 %v2937
      %v2939 = vextract.high.u32 %v2937
      %v2940 = vmul.u32 %v2933, %v2924
      %v2941 = vadd.s32 %v2936, %v2938
      %vm2942 = vc.u32 %v2936, %v2938
      %v2943 = vadd.s32 %v2939, 1
      %v2944 = vsel %vm2942, %v2943, %v2939
      %v2945 = vadd.s32 %v2940, %v2944
      %v2946 = vadd.s32 %v2945, 536870912
      %v2947 = vshrl.u32 %v2946, 30
      %v2948 = vshll.u32 %v2947, 30
      %v2949 = vsub.s32 %v2945, %v2948
      %vm2950 = vcmp.lt.s32.totalorder %v2949, 0
      %v2951 = vsub.s32 0, %v2949
      %v2952 = vsel %vm2950, %v2951, %v2949
      %v2953 = vclz %v2952
      %v2954 = vsub.s32 %v2953, 2
      %vm2955 = vcmp.gt.s32.totalorder 0, %v2954
      %v2956 = vsel %vm2955, 0, %v2954
      %v2957 = vsub.s32 32, %v2956
      %v2958 = vshll.u32 %v2949, %v2956
      %v2959 = vshrl.u32 %v2941, %v2957
      %v2960 = vor.u32 %v2958, %v2959
      %v2961 = vsub.s32 4294967266, %v2956
      %v2962 = vadd.s32 %v2961, 127
      %v2963 = vshll.u32 %v2962, 23
      %v2964 = vor.u32 4788187, %v2963
      %v2965 = vand.u32 2147483647, %v2964
      %v2967 = vcvt.s32.f32 %v2960
      %v2968 = vmul.f32 %v2967, %v2965
      %v2969 = vxor.u32 %v2968, 2147483648
      %v2970 = vsel %vm2887, %v2969, %v2968
      %v2971 = vsub.s32 4, %v2947
      %v2972 = vsel %vm2887, %v2971, %v2947
      %v2973 = vsel %vm2886, %v686, %v2970
      %v2974 = vsel %vm2886, 0, %v2972
      %v2975 = vcosq.f32.pop %v2973
      %v2976 = vsinq.f32.pop %v2973
      %vm2977 = vweird.f32 %v686
      %v2978 = vadd.s32 %v2974, 3
      %v2979 = vand.u32 %v2978, 3
      %vm2980 = vcmp.lt.s32.totalorder %v2979, 2
      %vm2981 = vcmp.eq.s32.totalorder %v2979, 0
      %v2982 = vxor.u32 %v2976, 2147483648
      %v2983 = vsel %vm2981, %v2975, %v2982
      %vm2984 = vcmp.eq.s32.totalorder %v2979, 2
      %v2985 = vxor.u32 %v2975, 2147483648
      %v2986 = vsel %vm2984, %v2985, %v2976
      %v2987 = vsel %vm2980, %v2983, %v2986
      %v2988 = vsel %vm2977, nan, %v2987
      %v2989 = vand.u32 2147483647, %v691
      %vm2990 = vcmp.le.f32.partialorder %v2989, 0.7853982
      %vm2991 = vcmp.lt.s32.totalorder %v691, 0
      %v2992 = vand.u32 %v691, 2139095040
      %v2993 = vshrl.u32 %v2992, 23
      %v2994 = vsub.s32 %v2993, 127
      %v2995 = vand.u32 2147483647, %v691
      %v2996 = vand.u32 %v2995, 8388607
      %v2997 = vor.u32 %v2996, 8388608
      %v2998 = vsub.s32 0, %v2997
      %v2999 = vadd.s32 %v2994, 1
      %vm3000 = vcmp.gt.s32.totalorder %v2999, 0
      %v3001 = vsel %vm3000, %v2999, 0
      %v3002 = vshrl.u32 %v3001, 5
      %v3003 = vand.u32 %v3001, 31
      %v3004 = vsub.s32 32, %v3003
      %v3005 = vshrl.u32 683565275, %v3004
      %v3006 = vshll.u32 683565275, %v3003
      %v3007 = vshrl.u32 2475754826, %v3004
      %v3008 = vor.u32 %v3006, %v3007
      %v3009 = vshll.u32 2475754826, %v3003
      %v3010 = vshrl.u32 2131351028, %v3004
      %v3011 = vor.u32 %v3009, %v3010
      %v3012 = vshll.u32 2131351028, %v3003
      %v3013 = vshrl.u32 2102212464, %v3004
      %v3014 = vor.u32 %v3012, %v3013
      %v3015 = vshll.u32 2102212464, %v3003
      %v3016 = vshrl.u32 920167782, %v3004
      %v3017 = vor.u32 %v3015, %v3016
      %v3018 = vshll.u32 920167782, %v3003
      %v3019 = vshrl.u32 1326507024, %v3004
      %v3020 = vor.u32 %v3018, %v3019
      %vm3021 = vcmp.lt.s32.totalorder %v3002, 1
      %vm3022 = vcmp.lt.s32.totalorder %v3002, 2
      %vm3023 = vcmp.lt.s32.totalorder %v3002, 3
      %vm3024 = vcmp.lt.s32.totalorder %v3002, 4
      %v3025 = vsel %vm3021, %v3005, %v3008
      %v3026 = vsel %vm3024, %v3014, 2102212464
      %v3027 = vsel %vm3023, %v3011, %v3026
      %v3028 = vsel %vm3022, %v3025, %v3027
      %v3029 = vsel %vm3021, %v3008, %v3011
      %v3030 = vsel %vm3024, %v3017, 920167782
      %v3031 = vsel %vm3023, %v3014, %v3030
      %v3032 = vsel %vm3022, %v3029, %v3031
      %v3033 = vsel %vm3021, %v3011, %v3014
      %v3034 = vsel %vm3024, %v3020, 1326507024
      %v3035 = vsel %vm3023, %v3017, %v3034
      %v3036 = vsel %vm3022, %v3033, %v3035
      %v3037 = vshll.u32 %v2997, 8
      %v3038 = vmul.u32.u64.compose %v3037, %v3036
      %v3039 = vextract.low.u32 %v3038
      %v3040 = vextract.high.u32 %v3038
      %v3041 = vmul.u32.u64.compose %v3037, %v3032
      %v3042 = vextract.low.u32 %v3041
      %v3043 = vextract.high.u32 %v3041
      %v3044 = vmul.u32 %v3037, %v3028
      %v3045 = vadd.s32 %v3040, %v3042
      %vm3046 = vc.u32 %v3040, %v3042
      %v3047 = vadd.s32 %v3043, 1
      %v3048 = vsel %vm3046, %v3047, %v3043
      %v3049 = vadd.s32 %v3044, %v3048
      %v3050 = vadd.s32 %v3049, 536870912
      %v3051 = vshrl.u32 %v3050, 30
      %v3052 = vshll.u32 %v3051, 30
      %v3053 = vsub.s32 %v3049, %v3052
      %vm3054 = vcmp.lt.s32.totalorder %v3053, 0
      %v3055 = vsub.s32 0, %v3053
      %v3056 = vsel %vm3054, %v3055, %v3053
      %v3057 = vclz %v3056
      %v3058 = vsub.s32 %v3057, 2
      %vm3059 = vcmp.gt.s32.totalorder 0, %v3058
      %v3060 = vsel %vm3059, 0, %v3058
      %v3061 = vsub.s32 32, %v3060
      %v3062 = vshll.u32 %v3053, %v3060
      %v3063 = vshrl.u32 %v3045, %v3061
      %v3064 = vor.u32 %v3062, %v3063
      %v3065 = vsub.s32 4294967266, %v3060
      %v3066 = vadd.s32 %v3065, 127
      %v3067 = vshll.u32 %v3066, 23
      %v3068 = vor.u32 4788187, %v3067
      %v3069 = vand.u32 2147483647, %v3068
      %v3071 = vcvt.s32.f32 %v3064
      %v3072 = vmul.f32 %v3071, %v3069
      %v3073 = vxor.u32 %v3072, 2147483648
      %v3074 = vsel %vm2991, %v3073, %v3072
      %v3075 = vsub.s32 4, %v3051
      %v3076 = vsel %vm2991, %v3075, %v3051
      %v3077 = vsel %vm2990, %v691, %v3074
      %v3078 = vsel %vm2990, 0, %v3076
      %v3079 = vcosq.f32.pop %v3077
      %v3080 = vsinq.f32.pop %v3077
      %vm3081 = vweird.f32 %v691
      %v3082 = vadd.s32 %v3078, 3
      %v3083 = vand.u32 %v3082, 3
      %vm3084 = vcmp.lt.s32.totalorder %v3083, 2
      %vm3085 = vcmp.eq.s32.totalorder %v3083, 0
      %v3086 = vxor.u32 %v3080, 2147483648
      %v3087 = vsel %vm3085, %v3079, %v3086
      %vm3088 = vcmp.eq.s32.totalorder %v3083, 2
      %v3089 = vxor.u32 %v3079, 2147483648
      %v3090 = vsel %vm3088, %v3089, %v3080
      %v3091 = vsel %vm3084, %v3087, %v3090
      %v3092 = vsel %vm3081, nan, %v3091
      %v3093 = vand.u32 2147483647, %v696
      %vm3094 = vcmp.le.f32.partialorder %v3093, 0.7853982
      %vm3095 = vcmp.lt.s32.totalorder %v696, 0
      %v3096 = vand.u32 %v696, 2139095040
      %v3097 = vshrl.u32 %v3096, 23
      %v3098 = vsub.s32 %v3097, 127
      %v3099 = vand.u32 2147483647, %v696
      %v3100 = vand.u32 %v3099, 8388607
      %v3101 = vor.u32 %v3100, 8388608
      %v3102 = vsub.s32 0, %v3101
      %v3103 = vadd.s32 %v3098, 1
      %vm3104 = vcmp.gt.s32.totalorder %v3103, 0
      %v3105 = vsel %vm3104, %v3103, 0
      %v3106 = vshrl.u32 %v3105, 5
      %v3107 = vand.u32 %v3105, 31
      %v3108 = vsub.s32 32, %v3107
      %v3109 = vshrl.u32 683565275, %v3108
      %v3110 = vshll.u32 683565275, %v3107
      %v3111 = vshrl.u32 2475754826, %v3108
      %v3112 = vor.u32 %v3110, %v3111
      %v3113 = vshll.u32 2475754826, %v3107
      %v3114 = vshrl.u32 2131351028, %v3108
      %v3115 = vor.u32 %v3113, %v3114
      %v3116 = vshll.u32 2131351028, %v3107
      %v3117 = vshrl.u32 2102212464, %v3108
      %v3118 = vor.u32 %v3116, %v3117
      %v3119 = vshll.u32 2102212464, %v3107
      %v3120 = vshrl.u32 920167782, %v3108
      %v3121 = vor.u32 %v3119, %v3120
      %v3122 = vshll.u32 920167782, %v3107
      %v3123 = vshrl.u32 1326507024, %v3108
      %v3124 = vor.u32 %v3122, %v3123
      %vm3125 = vcmp.lt.s32.totalorder %v3106, 1
      %vm3126 = vcmp.lt.s32.totalorder %v3106, 2
      %vm3127 = vcmp.lt.s32.totalorder %v3106, 3
      %vm3128 = vcmp.lt.s32.totalorder %v3106, 4
      %v3129 = vsel %vm3125, %v3109, %v3112
      %v3130 = vsel %vm3128, %v3118, 2102212464
      %v3131 = vsel %vm3127, %v3115, %v3130
      %v3132 = vsel %vm3126, %v3129, %v3131
      %v3133 = vsel %vm3125, %v3112, %v3115
      %v3134 = vsel %vm3128, %v3121, 920167782
      %v3135 = vsel %vm3127, %v3118, %v3134
      %v3136 = vsel %vm3126, %v3133, %v3135
      %v3137 = vsel %vm3125, %v3115, %v3118
      %v3138 = vsel %vm3128, %v3124, 1326507024
      %v3139 = vsel %vm3127, %v3121, %v3138
      %v3140 = vsel %vm3126, %v3137, %v3139
      %v3141 = vshll.u32 %v3101, 8
      %v3142 = vmul.u32.u64.compose %v3141, %v3140
      %v3143 = vextract.low.u32 %v3142
      %v3144 = vextract.high.u32 %v3142
      %v3145 = vmul.u32.u64.compose %v3141, %v3136
      %v3146 = vextract.low.u32 %v3145
      %v3147 = vextract.high.u32 %v3145
      %v3148 = vmul.u32 %v3141, %v3132
      %v3149 = vadd.s32 %v3144, %v3146
      %vm3150 = vc.u32 %v3144, %v3146
      %v3151 = vadd.s32 %v3147, 1
      %v3152 = vsel %vm3150, %v3151, %v3147
      %v3153 = vadd.s32 %v3148, %v3152
      %v3154 = vadd.s32 %v3153, 536870912
      %v3155 = vshrl.u32 %v3154, 30
      %v3156 = vshll.u32 %v3155, 30
      %v3157 = vsub.s32 %v3153, %v3156
      %vm3158 = vcmp.lt.s32.totalorder %v3157, 0
      %v3159 = vsub.s32 0, %v3157
      %v3160 = vsel %vm3158, %v3159, %v3157
      %v3161 = vclz %v3160
      %v3162 = vsub.s32 %v3161, 2
      %vm3163 = vcmp.gt.s32.totalorder 0, %v3162
      %v3164 = vsel %vm3163, 0, %v3162
      %v3165 = vsub.s32 32, %v3164
      %v3166 = vshll.u32 %v3157, %v3164
      %v3167 = vshrl.u32 %v3149, %v3165
      %v3168 = vor.u32 %v3166, %v3167
      %v3169 = vsub.s32 4294967266, %v3164
      %v3170 = vadd.s32 %v3169, 127
      %v3171 = vshll.u32 %v3170, 23
      %v3172 = vor.u32 4788187, %v3171
      %v3173 = vand.u32 2147483647, %v3172
      %v3175 = vcvt.s32.f32 %v3168
      %v3176 = vmul.f32 %v3175, %v3173
      %v3177 = vxor.u32 %v3176, 2147483648
      %v3178 = vsel %vm3095, %v3177, %v3176
      %v3179 = vsub.s32 4, %v3155
      %v3180 = vsel %vm3095, %v3179, %v3155
      %v3181 = vsel %vm3094, %v696, %v3178
      %v3182 = vsel %vm3094, 0, %v3180
      %v3183 = vcosq.f32.pop %v3181
      %v3184 = vsinq.f32.pop %v3181
      %vm3185 = vweird.f32 %v696
      %v3186 = vadd.s32 %v3182, 3
      %v3187 = vand.u32 %v3186, 3
      %vm3188 = vcmp.lt.s32.totalorder %v3187, 2
      %vm3189 = vcmp.eq.s32.totalorder %v3187, 0
      %v3190 = vxor.u32 %v3184, 2147483648
      %v3191 = vsel %vm3189, %v3183, %v3190
      %vm3192 = vcmp.eq.s32.totalorder %v3187, 2
      %v3193 = vxor.u32 %v3183, 2147483648
      %v3194 = vsel %vm3192, %v3193, %v3184
      %v3195 = vsel %vm3188, %v3191, %v3194
      %v3196 = vsel %vm3185, nan, %v3195
      %v3197 = vand.u32 2147483647, %v701
      %vm3198 = vcmp.le.f32.partialorder %v3197, 0.7853982
      %vm3199 = vcmp.lt.s32.totalorder %v701, 0
      %v3200 = vand.u32 %v701, 2139095040
      %v3201 = vshrl.u32 %v3200, 23
      %v3202 = vsub.s32 %v3201, 127
      %v3203 = vand.u32 2147483647, %v701
      %v3204 = vand.u32 %v3203, 8388607
      %v3205 = vor.u32 %v3204, 8388608
      %v3206 = vsub.s32 0, %v3205
      %v3207 = vadd.s32 %v3202, 1
      %vm3208 = vcmp.gt.s32.totalorder %v3207, 0
      %v3209 = vsel %vm3208, %v3207, 0
      %v3210 = vshrl.u32 %v3209, 5
      %v3211 = vand.u32 %v3209, 31
      %v3212 = vsub.s32 32, %v3211
      %v3213 = vshrl.u32 683565275, %v3212
      %v3214 = vshll.u32 683565275, %v3211
      %v3215 = vshrl.u32 2475754826, %v3212
      %v3216 = vor.u32 %v3214, %v3215
      %v3217 = vshll.u32 2475754826, %v3211
      %v3218 = vshrl.u32 2131351028, %v3212
      %v3219 = vor.u32 %v3217, %v3218
      %v3220 = vshll.u32 2131351028, %v3211
      %v3221 = vshrl.u32 2102212464, %v3212
      %v3222 = vor.u32 %v3220, %v3221
      %v3223 = vshll.u32 2102212464, %v3211
      %v3224 = vshrl.u32 920167782, %v3212
      %v3225 = vor.u32 %v3223, %v3224
      %v3226 = vshll.u32 920167782, %v3211
      %v3227 = vshrl.u32 1326507024, %v3212
      %v3228 = vor.u32 %v3226, %v3227
      %vm3229 = vcmp.lt.s32.totalorder %v3210, 1
      %vm3230 = vcmp.lt.s32.totalorder %v3210, 2
      %vm3231 = vcmp.lt.s32.totalorder %v3210, 3
      %vm3232 = vcmp.lt.s32.totalorder %v3210, 4
      %v3233 = vsel %vm3229, %v3213, %v3216
      %v3234 = vsel %vm3232, %v3222, 2102212464
      %v3235 = vsel %vm3231, %v3219, %v3234
      %v3236 = vsel %vm3230, %v3233, %v3235
      %v3237 = vsel %vm3229, %v3216, %v3219
      %v3238 = vsel %vm3232, %v3225, 920167782
      %v3239 = vsel %vm3231, %v3222, %v3238
      %v3240 = vsel %vm3230, %v3237, %v3239
      %v3241 = vsel %vm3229, %v3219, %v3222
      %v3242 = vsel %vm3232, %v3228, 1326507024
      %v3243 = vsel %vm3231, %v3225, %v3242
      %v3244 = vsel %vm3230, %v3241, %v3243
      %v3245 = vshll.u32 %v3205, 8
      %v3246 = vmul.u32.u64.compose %v3245, %v3244
      %v3247 = vextract.low.u32 %v3246
      %v3248 = vextract.high.u32 %v3246
      %v3249 = vmul.u32.u64.compose %v3245, %v3240
      %v3250 = vextract.low.u32 %v3249
      %v3251 = vextract.high.u32 %v3249
      %v3252 = vmul.u32 %v3245, %v3236
      %v3253 = vadd.s32 %v3248, %v3250
      %vm3254 = vc.u32 %v3248, %v3250
      %v3255 = vadd.s32 %v3251, 1
      %v3256 = vsel %vm3254, %v3255, %v3251
      %v3257 = vadd.s32 %v3252, %v3256
      %v3258 = vadd.s32 %v3257, 536870912
      %v3259 = vshrl.u32 %v3258, 30
      %v3260 = vshll.u32 %v3259, 30
      %v3261 = vsub.s32 %v3257, %v3260
      %vm3262 = vcmp.lt.s32.totalorder %v3261, 0
      %v3263 = vsub.s32 0, %v3261
      %v3264 = vsel %vm3262, %v3263, %v3261
      %v3265 = vclz %v3264
      %v3266 = vsub.s32 %v3265, 2
      %vm3267 = vcmp.gt.s32.totalorder 0, %v3266
      %v3268 = vsel %vm3267, 0, %v3266
      %v3269 = vsub.s32 32, %v3268
      %v3270 = vshll.u32 %v3261, %v3268
      %v3271 = vshrl.u32 %v3253, %v3269
      %v3272 = vor.u32 %v3270, %v3271
      %v3273 = vsub.s32 4294967266, %v3268
      %v3274 = vadd.s32 %v3273, 127
      %v3275 = vshll.u32 %v3274, 23
      %v3276 = vor.u32 4788187, %v3275
      %v3277 = vand.u32 2147483647, %v3276
      %v3279 = vcvt.s32.f32 %v3272
      %v3280 = vmul.f32 %v3279, %v3277
      %v3281 = vxor.u32 %v3280, 2147483648
      %v3282 = vsel %vm3199, %v3281, %v3280
      %v3283 = vsub.s32 4, %v3259
      %v3284 = vsel %vm3199, %v3283, %v3259
      %v3285 = vsel %vm3198, %v701, %v3282
      %v3286 = vsel %vm3198, 0, %v3284
      %v3287 = vcosq.f32.pop %v3285
      %v3288 = vsinq.f32.pop %v3285
      %vm3289 = vweird.f32 %v701
      %v3290 = vadd.s32 %v3286, 3
      %v3291 = vand.u32 %v3290, 3
      %vm3292 = vcmp.lt.s32.totalorder %v3291, 2
      %vm3293 = vcmp.eq.s32.totalorder %v3291, 0
      %v3294 = vxor.u32 %v3288, 2147483648
      %v3295 = vsel %vm3293, %v3287, %v3294
      %vm3296 = vcmp.eq.s32.totalorder %v3291, 2
      %v3297 = vxor.u32 %v3287, 2147483648
      %v3298 = vsel %vm3296, %v3297, %v3288
      %v3299 = vsel %vm3292, %v3295, %v3298
      %v3300 = vsel %vm3289, nan, %v3299
      %v3301 = vand.u32 2147483647, %v706
      %vm3302 = vcmp.le.f32.partialorder %v3301, 0.7853982
      %vm3303 = vcmp.lt.s32.totalorder %v706, 0
      %v3304 = vand.u32 %v706, 2139095040
      %v3305 = vshrl.u32 %v3304, 23
      %v3306 = vsub.s32 %v3305, 127
      %v3307 = vand.u32 2147483647, %v706
      %v3308 = vand.u32 %v3307, 8388607
      %v3309 = vor.u32 %v3308, 8388608
      %v3310 = vsub.s32 0, %v3309
      %v3311 = vadd.s32 %v3306, 1
      %vm3312 = vcmp.gt.s32.totalorder %v3311, 0
      %v3313 = vsel %vm3312, %v3311, 0
      %v3314 = vshrl.u32 %v3313, 5
      %v3315 = vand.u32 %v3313, 31
      %v3316 = vsub.s32 32, %v3315
      %v3317 = vshrl.u32 683565275, %v3316
      %v3318 = vshll.u32 683565275, %v3315
      %v3319 = vshrl.u32 2475754826, %v3316
      %v3320 = vor.u32 %v3318, %v3319
      %v3321 = vshll.u32 2475754826, %v3315
      %v3322 = vshrl.u32 2131351028, %v3316
      %v3323 = vor.u32 %v3321, %v3322
      %v3324 = vshll.u32 2131351028, %v3315
      %v3325 = vshrl.u32 2102212464, %v3316
      %v3326 = vor.u32 %v3324, %v3325
      %v3327 = vshll.u32 2102212464, %v3315
      %v3328 = vshrl.u32 920167782, %v3316
      %v3329 = vor.u32 %v3327, %v3328
      %v3330 = vshll.u32 920167782, %v3315
      %v3331 = vshrl.u32 1326507024, %v3316
      %v3332 = vor.u32 %v3330, %v3331
      %vm3333 = vcmp.lt.s32.totalorder %v3314, 1
      %vm3334 = vcmp.lt.s32.totalorder %v3314, 2
      %vm3335 = vcmp.lt.s32.totalorder %v3314, 3
      %vm3336 = vcmp.lt.s32.totalorder %v3314, 4
      %v3337 = vsel %vm3333, %v3317, %v3320
      %v3338 = vsel %vm3336, %v3326, 2102212464
      %v3339 = vsel %vm3335, %v3323, %v3338
      %v3340 = vsel %vm3334, %v3337, %v3339
      %v3341 = vsel %vm3333, %v3320, %v3323
      %v3342 = vsel %vm3336, %v3329, 920167782
      %v3343 = vsel %vm3335, %v3326, %v3342
      %v3344 = vsel %vm3334, %v3341, %v3343
      %v3345 = vsel %vm3333, %v3323, %v3326
      %v3346 = vsel %vm3336, %v3332, 1326507024
      %v3347 = vsel %vm3335, %v3329, %v3346
      %v3348 = vsel %vm3334, %v3345, %v3347
      %v3349 = vshll.u32 %v3309, 8
      %v3350 = vmul.u32.u64.compose %v3349, %v3348
      %v3351 = vextract.low.u32 %v3350
      %v3352 = vextract.high.u32 %v3350
      %v3353 = vmul.u32.u64.compose %v3349, %v3344
      %v3354 = vextract.low.u32 %v3353
      %v3355 = vextract.high.u32 %v3353
      %v3356 = vmul.u32 %v3349, %v3340
      %v3357 = vadd.s32 %v3352, %v3354
      %vm3358 = vc.u32 %v3352, %v3354
      %v3359 = vadd.s32 %v3355, 1
      %v3360 = vsel %vm3358, %v3359, %v3355
      %v3361 = vadd.s32 %v3356, %v3360
      %v3362 = vadd.s32 %v3361, 536870912
      %v3363 = vshrl.u32 %v3362, 30
      %v3364 = vshll.u32 %v3363, 30
      %v3365 = vsub.s32 %v3361, %v3364
      %vm3366 = vcmp.lt.s32.totalorder %v3365, 0
      %v3367 = vsub.s32 0, %v3365
      %v3368 = vsel %vm3366, %v3367, %v3365
      %v3369 = vclz %v3368
      %v3370 = vsub.s32 %v3369, 2
      %vm3371 = vcmp.gt.s32.totalorder 0, %v3370
      %v3372 = vsel %vm3371, 0, %v3370
      %v3373 = vsub.s32 32, %v3372
      %v3374 = vshll.u32 %v3365, %v3372
      %v3375 = vshrl.u32 %v3357, %v3373
      %v3376 = vor.u32 %v3374, %v3375
      %v3377 = vsub.s32 4294967266, %v3372
      %v3378 = vadd.s32 %v3377, 127
      %v3379 = vshll.u32 %v3378, 23
      %v3380 = vor.u32 4788187, %v3379
      %v3381 = vand.u32 2147483647, %v3380
      %v3383 = vcvt.s32.f32 %v3376
      %v3384 = vmul.f32 %v3383, %v3381
      %v3385 = vxor.u32 %v3384, 2147483648
      %v3386 = vsel %vm3303, %v3385, %v3384
      %v3387 = vsub.s32 4, %v3363
      %v3388 = vsel %vm3303, %v3387, %v3363
      %v3389 = vsel %vm3302, %v706, %v3386
      %v3390 = vsel %vm3302, 0, %v3388
      %v3391 = vcosq.f32.pop %v3389
      %v3392 = vsinq.f32.pop %v3389
      %vm3393 = vweird.f32 %v706
      %v3394 = vadd.s32 %v3390, 3
      %v3395 = vand.u32 %v3394, 3
      %vm3396 = vcmp.lt.s32.totalorder %v3395, 2
      %vm3397 = vcmp.eq.s32.totalorder %v3395, 0
      %v3398 = vxor.u32 %v3392, 2147483648
      %v3399 = vsel %vm3397, %v3391, %v3398
      %vm3400 = vcmp.eq.s32.totalorder %v3395, 2
      %v3401 = vxor.u32 %v3391, 2147483648
      %v3402 = vsel %vm3400, %v3401, %v3392
      %v3403 = vsel %vm3396, %v3399, %v3402
      %v3404 = vsel %vm3393, nan, %v3403
      %v3405 = vand.u32 2147483647, %v711
      %vm3406 = vcmp.le.f32.partialorder %v3405, 0.7853982
      %vm3407 = vcmp.lt.s32.totalorder %v711, 0
      %v3408 = vand.u32 %v711, 2139095040
      %v3409 = vshrl.u32 %v3408, 23
      %v3410 = vsub.s32 %v3409, 127
      %v3411 = vand.u32 2147483647, %v711
      %v3412 = vand.u32 %v3411, 8388607
      %v3413 = vor.u32 %v3412, 8388608
      %v3414 = vsub.s32 0, %v3413
      %v3415 = vadd.s32 %v3410, 1
      %vm3416 = vcmp.gt.s32.totalorder %v3415, 0
      %v3417 = vsel %vm3416, %v3415, 0
      %v3418 = vshrl.u32 %v3417, 5
      %v3419 = vand.u32 %v3417, 31
      %v3420 = vsub.s32 32, %v3419
      %v3421 = vshrl.u32 683565275, %v3420
      %v3422 = vshll.u32 683565275, %v3419
      %v3423 = vshrl.u32 2475754826, %v3420
      %v3424 = vor.u32 %v3422, %v3423
      %v3425 = vshll.u32 2475754826, %v3419
      %v3426 = vshrl.u32 2131351028, %v3420
      %v3427 = vor.u32 %v3425, %v3426
      %v3428 = vshll.u32 2131351028, %v3419
      %v3429 = vshrl.u32 2102212464, %v3420
      %v3430 = vor.u32 %v3428, %v3429
      %v3431 = vshll.u32 2102212464, %v3419
      %v3432 = vshrl.u32 920167782, %v3420
      %v3433 = vor.u32 %v3431, %v3432
      %v3434 = vshll.u32 920167782, %v3419
      %v3435 = vshrl.u32 1326507024, %v3420
      %v3436 = vor.u32 %v3434, %v3435
      %vm3437 = vcmp.lt.s32.totalorder %v3418, 1
      %vm3438 = vcmp.lt.s32.totalorder %v3418, 2
      %vm3439 = vcmp.lt.s32.totalorder %v3418, 3
      %vm3440 = vcmp.lt.s32.totalorder %v3418, 4
      %v3441 = vsel %vm3437, %v3421, %v3424
      %v3442 = vsel %vm3440, %v3430, 2102212464
      %v3443 = vsel %vm3439, %v3427, %v3442
      %v3444 = vsel %vm3438, %v3441, %v3443
      %v3445 = vsel %vm3437, %v3424, %v3427
      %v3446 = vsel %vm3440, %v3433, 920167782
      %v3447 = vsel %vm3439, %v3430, %v3446
      %v3448 = vsel %vm3438, %v3445, %v3447
      %v3449 = vsel %vm3437, %v3427, %v3430
      %v3450 = vsel %vm3440, %v3436, 1326507024
      %v3451 = vsel %vm3439, %v3433, %v3450
      %v3452 = vsel %vm3438, %v3449, %v3451
      %v3453 = vshll.u32 %v3413, 8
      %v3454 = vmul.u32.u64.compose %v3453, %v3452
      %v3455 = vextract.low.u32 %v3454
      %v3456 = vextract.high.u32 %v3454
      %v3457 = vmul.u32.u64.compose %v3453, %v3448
      %v3458 = vextract.low.u32 %v3457
      %v3459 = vextract.high.u32 %v3457
      %v3460 = vmul.u32 %v3453, %v3444
      %v3461 = vadd.s32 %v3456, %v3458
      %vm3462 = vc.u32 %v3456, %v3458
      %v3463 = vadd.s32 %v3459, 1
      %v3464 = vsel %vm3462, %v3463, %v3459
      %v3465 = vadd.s32 %v3460, %v3464
      %v3466 = vadd.s32 %v3465, 536870912
      %v3467 = vshrl.u32 %v3466, 30
      %v3468 = vshll.u32 %v3467, 30
      %v3469 = vsub.s32 %v3465, %v3468
      %vm3470 = vcmp.lt.s32.totalorder %v3469, 0
      %v3471 = vsub.s32 0, %v3469
      %v3472 = vsel %vm3470, %v3471, %v3469
      %v3473 = vclz %v3472
      %v3474 = vsub.s32 %v3473, 2
      %vm3475 = vcmp.gt.s32.totalorder 0, %v3474
      %v3476 = vsel %vm3475, 0, %v3474
      %v3477 = vsub.s32 32, %v3476
      %v3478 = vshll.u32 %v3469, %v3476
      %v3479 = vshrl.u32 %v3461, %v3477
      %v3480 = vor.u32 %v3478, %v3479
      %v3481 = vsub.s32 4294967266, %v3476
      %v3482 = vadd.s32 %v3481, 127
      %v3483 = vshll.u32 %v3482, 23
      %v3484 = vor.u32 4788187, %v3483
      %v3485 = vand.u32 2147483647, %v3484
      %v3487 = vcvt.s32.f32 %v3480
      %v3488 = vmul.f32 %v3487, %v3485
      %v3489 = vxor.u32 %v3488, 2147483648
      %v3490 = vsel %vm3407, %v3489, %v3488
      %v3491 = vsub.s32 4, %v3467
      %v3492 = vsel %vm3407, %v3491, %v3467
      %v3493 = vsel %vm3406, %v711, %v3490
      %v3494 = vsel %vm3406, 0, %v3492
      %v3495 = vcosq.f32.pop %v3493
      %v3496 = vsinq.f32.pop %v3493
      %vm3497 = vweird.f32 %v711
      %v3498 = vadd.s32 %v3494, 3
      %v3499 = vand.u32 %v3498, 3
      %vm3500 = vcmp.lt.s32.totalorder %v3499, 2
      %vm3501 = vcmp.eq.s32.totalorder %v3499, 0
      %v3502 = vxor.u32 %v3496, 2147483648
      %v3503 = vsel %vm3501, %v3495, %v3502
      %vm3504 = vcmp.eq.s32.totalorder %v3499, 2
      %v3505 = vxor.u32 %v3495, 2147483648
      %v3506 = vsel %vm3504, %v3505, %v3496
      %v3507 = vsel %vm3500, %v3503, %v3506
      %v3508 = vsel %vm3497, nan, %v3507
      %v3509 = vand.u32 2147483647, %v716
      %vm3510 = vcmp.le.f32.partialorder %v3509, 0.7853982
      %vm3511 = vcmp.lt.s32.totalorder %v716, 0
      %v3512 = vand.u32 %v716, 2139095040
      %v3513 = vshrl.u32 %v3512, 23
      %v3514 = vsub.s32 %v3513, 127
      %v3515 = vand.u32 2147483647, %v716
      %v3516 = vand.u32 %v3515, 8388607
      %v3517 = vor.u32 %v3516, 8388608
      %v3518 = vsub.s32 0, %v3517
      %v3519 = vadd.s32 %v3514, 1
      %vm3520 = vcmp.gt.s32.totalorder %v3519, 0
      %v3521 = vsel %vm3520, %v3519, 0
      %v3522 = vshrl.u32 %v3521, 5
      %v3523 = vand.u32 %v3521, 31
      %v3524 = vsub.s32 32, %v3523
      %v3525 = vshrl.u32 683565275, %v3524
      %v3526 = vshll.u32 683565275, %v3523
      %v3527 = vshrl.u32 2475754826, %v3524
      %v3528 = vor.u32 %v3526, %v3527
      %v3529 = vshll.u32 2475754826, %v3523
      %v3530 = vshrl.u32 2131351028, %v3524
      %v3531 = vor.u32 %v3529, %v3530
      %v3532 = vshll.u32 2131351028, %v3523
      %v3533 = vshrl.u32 2102212464, %v3524
      %v3534 = vor.u32 %v3532, %v3533
      %v3535 = vshll.u32 2102212464, %v3523
      %v3536 = vshrl.u32 920167782, %v3524
      %v3537 = vor.u32 %v3535, %v3536
      %v3538 = vshll.u32 920167782, %v3523
      %v3539 = vshrl.u32 1326507024, %v3524
      %v3540 = vor.u32 %v3538, %v3539
      %vm3541 = vcmp.lt.s32.totalorder %v3522, 1
      %vm3542 = vcmp.lt.s32.totalorder %v3522, 2
      %vm3543 = vcmp.lt.s32.totalorder %v3522, 3
      %vm3544 = vcmp.lt.s32.totalorder %v3522, 4
      %v3545 = vsel %vm3541, %v3525, %v3528
      %v3546 = vsel %vm3544, %v3534, 2102212464
      %v3547 = vsel %vm3543, %v3531, %v3546
      %v3548 = vsel %vm3542, %v3545, %v3547
      %v3549 = vsel %vm3541, %v3528, %v3531
      %v3550 = vsel %vm3544, %v3537, 920167782
      %v3551 = vsel %vm3543, %v3534, %v3550
      %v3552 = vsel %vm3542, %v3549, %v3551
      %v3553 = vsel %vm3541, %v3531, %v3534
      %v3554 = vsel %vm3544, %v3540, 1326507024
      %v3555 = vsel %vm3543, %v3537, %v3554
      %v3556 = vsel %vm3542, %v3553, %v3555
      %v3557 = vshll.u32 %v3517, 8
      %v3558 = vmul.u32.u64.compose %v3557, %v3556
      %v3559 = vextract.low.u32 %v3558
      %v3560 = vextract.high.u32 %v3558
      %v3561 = vmul.u32.u64.compose %v3557, %v3552
      %v3562 = vextract.low.u32 %v3561
      %v3563 = vextract.high.u32 %v3561
      %v3564 = vmul.u32 %v3557, %v3548
      %v3565 = vadd.s32 %v3560, %v3562
      %vm3566 = vc.u32 %v3560, %v3562
      %v3567 = vadd.s32 %v3563, 1
      %v3568 = vsel %vm3566, %v3567, %v3563
      %v3569 = vadd.s32 %v3564, %v3568
      %v3570 = vadd.s32 %v3569, 536870912
      %v3571 = vshrl.u32 %v3570, 30
      %v3572 = vshll.u32 %v3571, 30
      %v3573 = vsub.s32 %v3569, %v3572
      %vm3574 = vcmp.lt.s32.totalorder %v3573, 0
      %v3575 = vsub.s32 0, %v3573
      %v3576 = vsel %vm3574, %v3575, %v3573
      %v3577 = vclz %v3576
      %v3578 = vsub.s32 %v3577, 2
      %vm3579 = vcmp.gt.s32.totalorder 0, %v3578
      %v3580 = vsel %vm3579, 0, %v3578
      %v3581 = vsub.s32 32, %v3580
      %v3582 = vshll.u32 %v3573, %v3580
      %v3583 = vshrl.u32 %v3565, %v3581
      %v3584 = vor.u32 %v3582, %v3583
      %v3585 = vsub.s32 4294967266, %v3580
      %v3586 = vadd.s32 %v3585, 127
      %v3587 = vshll.u32 %v3586, 23
      %v3588 = vor.u32 4788187, %v3587
      %v3589 = vand.u32 2147483647, %v3588
      %v3591 = vcvt.s32.f32 %v3584
      %v3592 = vmul.f32 %v3591, %v3589
      %v3593 = vxor.u32 %v3592, 2147483648
      %v3594 = vsel %vm3511, %v3593, %v3592
      %v3595 = vsub.s32 4, %v3571
      %v3596 = vsel %vm3511, %v3595, %v3571
      %v3597 = vsel %vm3510, %v716, %v3594
      %v3598 = vsel %vm3510, 0, %v3596
      %v3599 = vcosq.f32.pop %v3597
      %v3600 = vsinq.f32.pop %v3597
      %vm3601 = vweird.f32 %v716
      %v3602 = vadd.s32 %v3598, 3
      %v3603 = vand.u32 %v3602, 3
      %vm3604 = vcmp.lt.s32.totalorder %v3603, 2
      %vm3605 = vcmp.eq.s32.totalorder %v3603, 0
      %v3606 = vxor.u32 %v3600, 2147483648
      %v3607 = vsel %vm3605, %v3599, %v3606
      %vm3608 = vcmp.eq.s32.totalorder %v3603, 2
      %v3609 = vxor.u32 %v3599, 2147483648
      %v3610 = vsel %vm3608, %v3609, %v3600
      %v3611 = vsel %vm3604, %v3607, %v3610
      %v3612 = vsel %vm3601, nan, %v3611
      %v3613 = vand.u32 2147483647, %v721
      %vm3614 = vcmp.le.f32.partialorder %v3613, 0.7853982
      %vm3615 = vcmp.lt.s32.totalorder %v721, 0
      %v3616 = vand.u32 %v721, 2139095040
      %v3617 = vshrl.u32 %v3616, 23
      %v3618 = vsub.s32 %v3617, 127
      %v3619 = vand.u32 2147483647, %v721
      %v3620 = vand.u32 %v3619, 8388607
      %v3621 = vor.u32 %v3620, 8388608
      %v3622 = vsub.s32 0, %v3621
      %v3623 = vadd.s32 %v3618, 1
      %vm3624 = vcmp.gt.s32.totalorder %v3623, 0
      %v3625 = vsel %vm3624, %v3623, 0
      %v3626 = vshrl.u32 %v3625, 5
      %v3627 = vand.u32 %v3625, 31
      %v3628 = vsub.s32 32, %v3627
      %v3629 = vshrl.u32 683565275, %v3628
      %v3630 = vshll.u32 683565275, %v3627
      %v3631 = vshrl.u32 2475754826, %v3628
      %v3632 = vor.u32 %v3630, %v3631
      %v3633 = vshll.u32 2475754826, %v3627
      %v3634 = vshrl.u32 2131351028, %v3628
      %v3635 = vor.u32 %v3633, %v3634
      %v3636 = vshll.u32 2131351028, %v3627
      %v3637 = vshrl.u32 2102212464, %v3628
      %v3638 = vor.u32 %v3636, %v3637
      %v3639 = vshll.u32 2102212464, %v3627
      %v3640 = vshrl.u32 920167782, %v3628
      %v3641 = vor.u32 %v3639, %v3640
      %v3642 = vshll.u32 920167782, %v3627
      %v3643 = vshrl.u32 1326507024, %v3628
      %v3644 = vor.u32 %v3642, %v3643
      %vm3645 = vcmp.lt.s32.totalorder %v3626, 1
      %vm3646 = vcmp.lt.s32.totalorder %v3626, 2
      %vm3647 = vcmp.lt.s32.totalorder %v3626, 3
      %vm3648 = vcmp.lt.s32.totalorder %v3626, 4
      %v3649 = vsel %vm3645, %v3629, %v3632
      %v3650 = vsel %vm3648, %v3638, 2102212464
      %v3651 = vsel %vm3647, %v3635, %v3650
      %v3652 = vsel %vm3646, %v3649, %v3651
      %v3653 = vsel %vm3645, %v3632, %v3635
      %v3654 = vsel %vm3648, %v3641, 920167782
      %v3655 = vsel %vm3647, %v3638, %v3654
      %v3656 = vsel %vm3646, %v3653, %v3655
      %v3657 = vsel %vm3645, %v3635, %v3638
      %v3658 = vsel %vm3648, %v3644, 1326507024
      %v3659 = vsel %vm3647, %v3641, %v3658
      %v3660 = vsel %vm3646, %v3657, %v3659
      %v3661 = vshll.u32 %v3621, 8
      %v3662 = vmul.u32.u64.compose %v3661, %v3660
      %v3663 = vextract.low.u32 %v3662
      %v3664 = vextract.high.u32 %v3662
      %v3665 = vmul.u32.u64.compose %v3661, %v3656
      %v3666 = vextract.low.u32 %v3665
      %v3667 = vextract.high.u32 %v3665
      %v3668 = vmul.u32 %v3661, %v3652
      %v3669 = vadd.s32 %v3664, %v3666
      %vm3670 = vc.u32 %v3664, %v3666
      %v3671 = vadd.s32 %v3667, 1
      %v3672 = vsel %vm3670, %v3671, %v3667
      %v3673 = vadd.s32 %v3668, %v3672
      %v3674 = vadd.s32 %v3673, 536870912
      %v3675 = vshrl.u32 %v3674, 30
      %v3676 = vshll.u32 %v3675, 30
      %v3677 = vsub.s32 %v3673, %v3676
      %vm3678 = vcmp.lt.s32.totalorder %v3677, 0
      %v3679 = vsub.s32 0, %v3677
      %v3680 = vsel %vm3678, %v3679, %v3677
      %v3681 = vclz %v3680
      %v3682 = vsub.s32 %v3681, 2
      %vm3683 = vcmp.gt.s32.totalorder 0, %v3682
      %v3684 = vsel %vm3683, 0, %v3682
      %v3685 = vsub.s32 32, %v3684
      %v3686 = vshll.u32 %v3677, %v3684
      %v3687 = vshrl.u32 %v3669, %v3685
      %v3688 = vor.u32 %v3686, %v3687
      %v3689 = vsub.s32 4294967266, %v3684
      %v3690 = vadd.s32 %v3689, 127
      %v3691 = vshll.u32 %v3690, 23
      %v3692 = vor.u32 4788187, %v3691
      %v3693 = vand.u32 2147483647, %v3692
      %v3695 = vcvt.s32.f32 %v3688
      %v3696 = vmul.f32 %v3695, %v3693
      %v3697 = vxor.u32 %v3696, 2147483648
      %v3698 = vsel %vm3615, %v3697, %v3696
      %v3699 = vsub.s32 4, %v3675
      %v3700 = vsel %vm3615, %v3699, %v3675
      %v3701 = vsel %vm3614, %v721, %v3698
      %v3702 = vsel %vm3614, 0, %v3700
      %v3703 = vcosq.f32.pop %v3701
      %v3704 = vsinq.f32.pop %v3701
      %vm3705 = vweird.f32 %v721
      %v3706 = vadd.s32 %v3702, 3
      %v3707 = vand.u32 %v3706, 3
      %vm3708 = vcmp.lt.s32.totalorder %v3707, 2
      %vm3709 = vcmp.eq.s32.totalorder %v3707, 0
      %v3710 = vxor.u32 %v3704, 2147483648
      %v3711 = vsel %vm3709, %v3703, %v3710
      %vm3712 = vcmp.eq.s32.totalorder %v3707, 2
      %v3713 = vxor.u32 %v3703, 2147483648
      %v3714 = vsel %vm3712, %v3713, %v3704
      %v3715 = vsel %vm3708, %v3711, %v3714
      %v3716 = vsel %vm3705, nan, %v3715
      %v3717 = vand.u32 2147483647, %v726
      %vm3718 = vcmp.le.f32.partialorder %v3717, 0.7853982
      %vm3719 = vcmp.lt.s32.totalorder %v726, 0
      %v3720 = vand.u32 %v726, 2139095040
      %v3721 = vshrl.u32 %v3720, 23
      %v3722 = vsub.s32 %v3721, 127
      %v3723 = vand.u32 2147483647, %v726
      %v3724 = vand.u32 %v3723, 8388607
      %v3725 = vor.u32 %v3724, 8388608
      %v3726 = vsub.s32 0, %v3725
      %v3727 = vadd.s32 %v3722, 1
      %vm3728 = vcmp.gt.s32.totalorder %v3727, 0
      %v3729 = vsel %vm3728, %v3727, 0
      %v3730 = vshrl.u32 %v3729, 5
      %v3731 = vand.u32 %v3729, 31
      %v3732 = vsub.s32 32, %v3731
      %v3733 = vshrl.u32 683565275, %v3732
      %v3734 = vshll.u32 683565275, %v3731
      %v3735 = vshrl.u32 2475754826, %v3732
      %v3736 = vor.u32 %v3734, %v3735
      %v3737 = vshll.u32 2475754826, %v3731
      %v3738 = vshrl.u32 2131351028, %v3732
      %v3739 = vor.u32 %v3737, %v3738
      %v3740 = vshll.u32 2131351028, %v3731
      %v3741 = vshrl.u32 2102212464, %v3732
      %v3742 = vor.u32 %v3740, %v3741
      %v3743 = vshll.u32 2102212464, %v3731
      %v3744 = vshrl.u32 920167782, %v3732
      %v3745 = vor.u32 %v3743, %v3744
      %v3746 = vshll.u32 920167782, %v3731
      %v3747 = vshrl.u32 1326507024, %v3732
      %v3748 = vor.u32 %v3746, %v3747
      %vm3749 = vcmp.lt.s32.totalorder %v3730, 1
      %vm3750 = vcmp.lt.s32.totalorder %v3730, 2
      %vm3751 = vcmp.lt.s32.totalorder %v3730, 3
      %vm3752 = vcmp.lt.s32.totalorder %v3730, 4
      %v3753 = vsel %vm3749, %v3733, %v3736
      %v3754 = vsel %vm3752, %v3742, 2102212464
      %v3755 = vsel %vm3751, %v3739, %v3754
      %v3756 = vsel %vm3750, %v3753, %v3755
      %v3757 = vsel %vm3749, %v3736, %v3739
      %v3758 = vsel %vm3752, %v3745, 920167782
      %v3759 = vsel %vm3751, %v3742, %v3758
      %v3760 = vsel %vm3750, %v3757, %v3759
      %v3761 = vsel %vm3749, %v3739, %v3742
      %v3762 = vsel %vm3752, %v3748, 1326507024
      %v3763 = vsel %vm3751, %v3745, %v3762
      %v3764 = vsel %vm3750, %v3761, %v3763
      %v3765 = vshll.u32 %v3725, 8
      %v3766 = vmul.u32.u64.compose %v3765, %v3764
      %v3767 = vextract.low.u32 %v3766
      %v3768 = vextract.high.u32 %v3766
      %v3769 = vmul.u32.u64.compose %v3765, %v3760
      %v3770 = vextract.low.u32 %v3769
      %v3771 = vextract.high.u32 %v3769
      %v3772 = vmul.u32 %v3765, %v3756
      %v3773 = vadd.s32 %v3768, %v3770
      %vm3774 = vc.u32 %v3768, %v3770
      %v3775 = vadd.s32 %v3771, 1
      %v3776 = vsel %vm3774, %v3775, %v3771
      %v3777 = vadd.s32 %v3772, %v3776
      %v3778 = vadd.s32 %v3777, 536870912
      %v3779 = vshrl.u32 %v3778, 30
      %v3780 = vshll.u32 %v3779, 30
      %v3781 = vsub.s32 %v3777, %v3780
      %vm3782 = vcmp.lt.s32.totalorder %v3781, 0
      %v3783 = vsub.s32 0, %v3781
      %v3784 = vsel %vm3782, %v3783, %v3781
      %v3785 = vclz %v3784
      %v3786 = vsub.s32 %v3785, 2
      %vm3787 = vcmp.gt.s32.totalorder 0, %v3786
      %v3788 = vsel %vm3787, 0, %v3786
      %v3789 = vsub.s32 32, %v3788
      %v3790 = vshll.u32 %v3781, %v3788
      %v3791 = vshrl.u32 %v3773, %v3789
      %v3792 = vor.u32 %v3790, %v3791
      %v3793 = vsub.s32 4294967266, %v3788
      %v3794 = vadd.s32 %v3793, 127
      %v3795 = vshll.u32 %v3794, 23
      %v3796 = vor.u32 4788187, %v3795
      %v3797 = vand.u32 2147483647, %v3796
      %v3799 = vcvt.s32.f32 %v3792
      %v3800 = vmul.f32 %v3799, %v3797
      %v3801 = vxor.u32 %v3800, 2147483648
      %v3802 = vsel %vm3719, %v3801, %v3800
      %v3803 = vsub.s32 4, %v3779
      %v3804 = vsel %vm3719, %v3803, %v3779
      %v3805 = vsel %vm3718, %v726, %v3802
      %v3806 = vsel %vm3718, 0, %v3804
      %v3807 = vcosq.f32.pop %v3805
      %v3808 = vsinq.f32.pop %v3805
      %vm3809 = vweird.f32 %v726
      %v3810 = vadd.s32 %v3806, 3
      %v3811 = vand.u32 %v3810, 3
      %vm3812 = vcmp.lt.s32.totalorder %v3811, 2
      %vm3813 = vcmp.eq.s32.totalorder %v3811, 0
      %v3814 = vxor.u32 %v3808, 2147483648
      %v3815 = vsel %vm3813, %v3807, %v3814
      %vm3816 = vcmp.eq.s32.totalorder %v3811, 2
      %v3817 = vxor.u32 %v3807, 2147483648
      %v3818 = vsel %vm3816, %v3817, %v3808
      %v3819 = vsel %vm3812, %v3815, %v3818
      %v3820 = vsel %vm3809, nan, %v3819
      %v3821 = vand.u32 2147483647, %v731
      %vm3822 = vcmp.le.f32.partialorder %v3821, 0.7853982
      %vm3823 = vcmp.lt.s32.totalorder %v731, 0
      %v3824 = vand.u32 %v731, 2139095040
      %v3825 = vshrl.u32 %v3824, 23
      %v3826 = vsub.s32 %v3825, 127
      %v3827 = vand.u32 2147483647, %v731
      %v3828 = vand.u32 %v3827, 8388607
      %v3829 = vor.u32 %v3828, 8388608
      %v3830 = vsub.s32 0, %v3829
      %v3831 = vadd.s32 %v3826, 1
      %vm3832 = vcmp.gt.s32.totalorder %v3831, 0
      %v3833 = vsel %vm3832, %v3831, 0
      %v3834 = vshrl.u32 %v3833, 5
      %v3835 = vand.u32 %v3833, 31
      %v3836 = vsub.s32 32, %v3835
      %v3837 = vshrl.u32 683565275, %v3836
      %v3838 = vshll.u32 683565275, %v3835
      %v3839 = vshrl.u32 2475754826, %v3836
      %v3840 = vor.u32 %v3838, %v3839
      %v3841 = vshll.u32 2475754826, %v3835
      %v3842 = vshrl.u32 2131351028, %v3836
      %v3843 = vor.u32 %v3841, %v3842
      %v3844 = vshll.u32 2131351028, %v3835
      %v3845 = vshrl.u32 2102212464, %v3836
      %v3846 = vor.u32 %v3844, %v3845
      %v3847 = vshll.u32 2102212464, %v3835
      %v3848 = vshrl.u32 920167782, %v3836
      %v3849 = vor.u32 %v3847, %v3848
      %v3850 = vshll.u32 920167782, %v3835
      %v3851 = vshrl.u32 1326507024, %v3836
      %v3852 = vor.u32 %v3850, %v3851
      %vm3853 = vcmp.lt.s32.totalorder %v3834, 1
      %vm3854 = vcmp.lt.s32.totalorder %v3834, 2
      %vm3855 = vcmp.lt.s32.totalorder %v3834, 3
      %vm3856 = vcmp.lt.s32.totalorder %v3834, 4
      %v3857 = vsel %vm3853, %v3837, %v3840
      %v3858 = vsel %vm3856, %v3846, 2102212464
      %v3859 = vsel %vm3855, %v3843, %v3858
      %v3860 = vsel %vm3854, %v3857, %v3859
      %v3861 = vsel %vm3853, %v3840, %v3843
      %v3862 = vsel %vm3856, %v3849, 920167782
      %v3863 = vsel %vm3855, %v3846, %v3862
      %v3864 = vsel %vm3854, %v3861, %v3863
      %v3865 = vsel %vm3853, %v3843, %v3846
      %v3866 = vsel %vm3856, %v3852, 1326507024
      %v3867 = vsel %vm3855, %v3849, %v3866
      %v3868 = vsel %vm3854, %v3865, %v3867
      %v3869 = vshll.u32 %v3829, 8
      %v3870 = vmul.u32.u64.compose %v3869, %v3868
      %v3871 = vextract.low.u32 %v3870
      %v3872 = vextract.high.u32 %v3870
      %v3873 = vmul.u32.u64.compose %v3869, %v3864
      %v3874 = vextract.low.u32 %v3873
      %v3875 = vextract.high.u32 %v3873
      %v3876 = vmul.u32 %v3869, %v3860
      %v3877 = vadd.s32 %v3872, %v3874
      %vm3878 = vc.u32 %v3872, %v3874
      %v3879 = vadd.s32 %v3875, 1
      %v3880 = vsel %vm3878, %v3879, %v3875
      %v3881 = vadd.s32 %v3876, %v3880
      %v3882 = vadd.s32 %v3881, 536870912
      %v3883 = vshrl.u32 %v3882, 30
      %v3884 = vshll.u32 %v3883, 30
      %v3885 = vsub.s32 %v3881, %v3884
      %vm3886 = vcmp.lt.s32.totalorder %v3885, 0
      %v3887 = vsub.s32 0, %v3885
      %v3888 = vsel %vm3886, %v3887, %v3885
      %v3889 = vclz %v3888
      %v3890 = vsub.s32 %v3889, 2
      %vm3891 = vcmp.gt.s32.totalorder 0, %v3890
      %v3892 = vsel %vm3891, 0, %v3890
      %v3893 = vsub.s32 32, %v3892
      %v3894 = vshll.u32 %v3885, %v3892
      %v3895 = vshrl.u32 %v3877, %v3893
      %v3896 = vor.u32 %v3894, %v3895
      %v3897 = vsub.s32 4294967266, %v3892
      %v3898 = vadd.s32 %v3897, 127
      %v3899 = vshll.u32 %v3898, 23
      %v3900 = vor.u32 4788187, %v3899
      %v3901 = vand.u32 2147483647, %v3900
      %v3903 = vcvt.s32.f32 %v3896
      %v3904 = vmul.f32 %v3903, %v3901
      %v3905 = vxor.u32 %v3904, 2147483648
      %v3906 = vsel %vm3823, %v3905, %v3904
      %v3907 = vsub.s32 4, %v3883
      %v3908 = vsel %vm3823, %v3907, %v3883
      %v3909 = vsel %vm3822, %v731, %v3906
      %v3910 = vsel %vm3822, 0, %v3908
      %v3911 = vcosq.f32.pop %v3909
      %v3912 = vsinq.f32.pop %v3909
      %vm3913 = vweird.f32 %v731
      %v3914 = vadd.s32 %v3910, 3
      %v3915 = vand.u32 %v3914, 3
      %vm3916 = vcmp.lt.s32.totalorder %v3915, 2
      %vm3917 = vcmp.eq.s32.totalorder %v3915, 0
      %v3918 = vxor.u32 %v3912, 2147483648
      %v3919 = vsel %vm3917, %v3911, %v3918
      %vm3920 = vcmp.eq.s32.totalorder %v3915, 2
      %v3921 = vxor.u32 %v3911, 2147483648
      %v3922 = vsel %vm3920, %v3921, %v3912
      %v3923 = vsel %vm3916, %v3919, %v3922
      %v3924 = vsel %vm3913, nan, %v3923
      %v3925 = vand.u32 2147483647, %v736
      %vm3926 = vcmp.le.f32.partialorder %v3925, 0.7853982
      %vm3927 = vcmp.lt.s32.totalorder %v736, 0
      %v3928 = vand.u32 %v736, 2139095040
      %v3929 = vshrl.u32 %v3928, 23
      %v3930 = vsub.s32 %v3929, 127
      %v3931 = vand.u32 2147483647, %v736
      %v3932 = vand.u32 %v3931, 8388607
      %v3933 = vor.u32 %v3932, 8388608
      %v3934 = vsub.s32 0, %v3933
      %v3935 = vadd.s32 %v3930, 1
      %vm3936 = vcmp.gt.s32.totalorder %v3935, 0
      %v3937 = vsel %vm3936, %v3935, 0
      %v3938 = vshrl.u32 %v3937, 5
      %v3939 = vand.u32 %v3937, 31
      %v3940 = vsub.s32 32, %v3939
      %v3941 = vshrl.u32 683565275, %v3940
      %v3942 = vshll.u32 683565275, %v3939
      %v3943 = vshrl.u32 2475754826, %v3940
      %v3944 = vor.u32 %v3942, %v3943
      %v3945 = vshll.u32 2475754826, %v3939
      %v3946 = vshrl.u32 2131351028, %v3940
      %v3947 = vor.u32 %v3945, %v3946
      %v3948 = vshll.u32 2131351028, %v3939
      %v3949 = vshrl.u32 2102212464, %v3940
      %v3950 = vor.u32 %v3948, %v3949
      %v3951 = vshll.u32 2102212464, %v3939
      %v3952 = vshrl.u32 920167782, %v3940
      %v3953 = vor.u32 %v3951, %v3952
      %v3954 = vshll.u32 920167782, %v3939
      %v3955 = vshrl.u32 1326507024, %v3940
      %v3956 = vor.u32 %v3954, %v3955
      %vm3957 = vcmp.lt.s32.totalorder %v3938, 1
      %vm3958 = vcmp.lt.s32.totalorder %v3938, 2
      %vm3959 = vcmp.lt.s32.totalorder %v3938, 3
      %vm3960 = vcmp.lt.s32.totalorder %v3938, 4
      %v3961 = vsel %vm3957, %v3941, %v3944
      %v3962 = vsel %vm3960, %v3950, 2102212464
      %v3963 = vsel %vm3959, %v3947, %v3962
      %v3964 = vsel %vm3958, %v3961, %v3963
      %v3965 = vsel %vm3957, %v3944, %v3947
      %v3966 = vsel %vm3960, %v3953, 920167782
      %v3967 = vsel %vm3959, %v3950, %v3966
      %v3968 = vsel %vm3958, %v3965, %v3967
      %v3969 = vsel %vm3957, %v3947, %v3950
      %v3970 = vsel %vm3960, %v3956, 1326507024
      %v3971 = vsel %vm3959, %v3953, %v3970
      %v3972 = vsel %vm3958, %v3969, %v3971
      %v3973 = vshll.u32 %v3933, 8
      %v3974 = vmul.u32.u64.compose %v3973, %v3972
      %v3975 = vextract.low.u32 %v3974
      %v3976 = vextract.high.u32 %v3974
      %v3977 = vmul.u32.u64.compose %v3973, %v3968
      %v3978 = vextract.low.u32 %v3977
      %v3979 = vextract.high.u32 %v3977
      %v3980 = vmul.u32 %v3973, %v3964
      %v3981 = vadd.s32 %v3976, %v3978
      %vm3982 = vc.u32 %v3976, %v3978
      %v3983 = vadd.s32 %v3979, 1
      %v3984 = vsel %vm3982, %v3983, %v3979
      %v3985 = vadd.s32 %v3980, %v3984
      %v3986 = vadd.s32 %v3985, 536870912
      %v3987 = vshrl.u32 %v3986, 30
      %v3988 = vshll.u32 %v3987, 30
      %v3989 = vsub.s32 %v3985, %v3988
      %vm3990 = vcmp.lt.s32.totalorder %v3989, 0
      %v3991 = vsub.s32 0, %v3989
      %v3992 = vsel %vm3990, %v3991, %v3989
      %v3993 = vclz %v3992
      %v3994 = vsub.s32 %v3993, 2
      %vm3995 = vcmp.gt.s32.totalorder 0, %v3994
      %v3996 = vsel %vm3995, 0, %v3994
      %v3997 = vsub.s32 32, %v3996
      %v3998 = vshll.u32 %v3989, %v3996
      %v3999 = vshrl.u32 %v3981, %v3997
      %v4000 = vor.u32 %v3998, %v3999
      %v4001 = vsub.s32 4294967266, %v3996
      %v4002 = vadd.s32 %v4001, 127
      %v4003 = vshll.u32 %v4002, 23
      %v4004 = vor.u32 4788187, %v4003
      %v4005 = vand.u32 2147483647, %v4004
      %v4007 = vcvt.s32.f32 %v4000
      %v4008 = vmul.f32 %v4007, %v4005
      %v4009 = vxor.u32 %v4008, 2147483648
      %v4010 = vsel %vm3927, %v4009, %v4008
      %v4011 = vsub.s32 4, %v3987
      %v4012 = vsel %vm3927, %v4011, %v3987
      %v4013 = vsel %vm3926, %v736, %v4010
      %v4014 = vsel %vm3926, 0, %v4012
      %v4015 = vcosq.f32.pop %v4013
      %v4016 = vsinq.f32.pop %v4013
      %vm4017 = vweird.f32 %v736
      %v4018 = vadd.s32 %v4014, 3
      %v4019 = vand.u32 %v4018, 3
      %vm4020 = vcmp.lt.s32.totalorder %v4019, 2
      %vm4021 = vcmp.eq.s32.totalorder %v4019, 0
      %v4022 = vxor.u32 %v4016, 2147483648
      %v4023 = vsel %vm4021, %v4015, %v4022
      %vm4024 = vcmp.eq.s32.totalorder %v4019, 2
      %v4025 = vxor.u32 %v4015, 2147483648
      %v4026 = vsel %vm4024, %v4025, %v4016
      %v4027 = vsel %vm4020, %v4023, %v4026
      %v4028 = vsel %vm4017, nan, %v4027
      %v4029 = vand.u32 2147483647, %v741
      %vm4030 = vcmp.le.f32.partialorder %v4029, 0.7853982
      %vm4031 = vcmp.lt.s32.totalorder %v741, 0
      %v4032 = vand.u32 %v741, 2139095040
      %v4033 = vshrl.u32 %v4032, 23
      %v4034 = vsub.s32 %v4033, 127
      %v4035 = vand.u32 2147483647, %v741
      %v4036 = vand.u32 %v4035, 8388607
      %v4037 = vor.u32 %v4036, 8388608
      %v4038 = vsub.s32 0, %v4037
      %v4039 = vadd.s32 %v4034, 1
      %vm4040 = vcmp.gt.s32.totalorder %v4039, 0
      %v4041 = vsel %vm4040, %v4039, 0
      %v4042 = vshrl.u32 %v4041, 5
      %v4043 = vand.u32 %v4041, 31
      %v4044 = vsub.s32 32, %v4043
      %v4045 = vshrl.u32 683565275, %v4044
      %v4046 = vshll.u32 683565275, %v4043
      %v4047 = vshrl.u32 2475754826, %v4044
      %v4048 = vor.u32 %v4046, %v4047
      %v4049 = vshll.u32 2475754826, %v4043
      %v4050 = vshrl.u32 2131351028, %v4044
      %v4051 = vor.u32 %v4049, %v4050
      %v4052 = vshll.u32 2131351028, %v4043
      %v4053 = vshrl.u32 2102212464, %v4044
      %v4054 = vor.u32 %v4052, %v4053
      %v4055 = vshll.u32 2102212464, %v4043
      %v4056 = vshrl.u32 920167782, %v4044
      %v4057 = vor.u32 %v4055, %v4056
      %v4058 = vshll.u32 920167782, %v4043
      %v4059 = vshrl.u32 1326507024, %v4044
      %v4060 = vor.u32 %v4058, %v4059
      %vm4061 = vcmp.lt.s32.totalorder %v4042, 1
      %vm4062 = vcmp.lt.s32.totalorder %v4042, 2
      %vm4063 = vcmp.lt.s32.totalorder %v4042, 3
      %vm4064 = vcmp.lt.s32.totalorder %v4042, 4
      %v4065 = vsel %vm4061, %v4045, %v4048
      %v4066 = vsel %vm4064, %v4054, 2102212464
      %v4067 = vsel %vm4063, %v4051, %v4066
      %v4068 = vsel %vm4062, %v4065, %v4067
      %v4069 = vsel %vm4061, %v4048, %v4051
      %v4070 = vsel %vm4064, %v4057, 920167782
      %v4071 = vsel %vm4063, %v4054, %v4070
      %v4072 = vsel %vm4062, %v4069, %v4071
      %v4073 = vsel %vm4061, %v4051, %v4054
      %v4074 = vsel %vm4064, %v4060, 1326507024
      %v4075 = vsel %vm4063, %v4057, %v4074
      %v4076 = vsel %vm4062, %v4073, %v4075
      %v4077 = vshll.u32 %v4037, 8
      %v4078 = vmul.u32.u64.compose %v4077, %v4076
      %v4079 = vextract.low.u32 %v4078
      %v4080 = vextract.high.u32 %v4078
      %v4081 = vmul.u32.u64.compose %v4077, %v4072
      %v4082 = vextract.low.u32 %v4081
      %v4083 = vextract.high.u32 %v4081
      %v4084 = vmul.u32 %v4077, %v4068
      %v4085 = vadd.s32 %v4080, %v4082
      %vm4086 = vc.u32 %v4080, %v4082
      %v4087 = vadd.s32 %v4083, 1
      %v4088 = vsel %vm4086, %v4087, %v4083
      %v4089 = vadd.s32 %v4084, %v4088
      %v4090 = vadd.s32 %v4089, 536870912
      %v4091 = vshrl.u32 %v4090, 30
      %v4092 = vshll.u32 %v4091, 30
      %v4093 = vsub.s32 %v4089, %v4092
      %vm4094 = vcmp.lt.s32.totalorder %v4093, 0
      %v4095 = vsub.s32 0, %v4093
      %v4096 = vsel %vm4094, %v4095, %v4093
      %v4097 = vclz %v4096
      %v4098 = vsub.s32 %v4097, 2
      %vm4099 = vcmp.gt.s32.totalorder 0, %v4098
      %v4100 = vsel %vm4099, 0, %v4098
      %v4101 = vsub.s32 32, %v4100
      %v4102 = vshll.u32 %v4093, %v4100
      %v4103 = vshrl.u32 %v4085, %v4101
      %v4104 = vor.u32 %v4102, %v4103
      %v4105 = vsub.s32 4294967266, %v4100
      %v4106 = vadd.s32 %v4105, 127
      %v4107 = vshll.u32 %v4106, 23
      %v4108 = vor.u32 4788187, %v4107
      %v4109 = vand.u32 2147483647, %v4108
      %v4111 = vcvt.s32.f32 %v4104
      %v4112 = vmul.f32 %v4111, %v4109
      %v4113 = vxor.u32 %v4112, 2147483648
      %v4114 = vsel %vm4031, %v4113, %v4112
      %v4115 = vsub.s32 4, %v4091
      %v4116 = vsel %vm4031, %v4115, %v4091
      %v4117 = vsel %vm4030, %v741, %v4114
      %v4118 = vsel %vm4030, 0, %v4116
      %v4119 = vcosq.f32.pop %v4117
      %v4120 = vsinq.f32.pop %v4117
      %vm4121 = vweird.f32 %v741
      %v4122 = vadd.s32 %v4118, 3
      %v4123 = vand.u32 %v4122, 3
      %vm4124 = vcmp.lt.s32.totalorder %v4123, 2
      %vm4125 = vcmp.eq.s32.totalorder %v4123, 0
      %v4126 = vxor.u32 %v4120, 2147483648
      %v4127 = vsel %vm4125, %v4119, %v4126
      %vm4128 = vcmp.eq.s32.totalorder %v4123, 2
      %v4129 = vxor.u32 %v4119, 2147483648
      %v4130 = vsel %vm4128, %v4129, %v4120
      %v4131 = vsel %vm4124, %v4127, %v4130
      %v4132 = vsel %vm4121, nan, %v4131
      %v4133 = vand.u32 2147483647, %v746
      %vm4134 = vcmp.le.f32.partialorder %v4133, 0.7853982
      %vm4135 = vcmp.lt.s32.totalorder %v746, 0
      %v4136 = vand.u32 %v746, 2139095040
      %v4137 = vshrl.u32 %v4136, 23
      %v4138 = vsub.s32 %v4137, 127
      %v4139 = vand.u32 2147483647, %v746
      %v4140 = vand.u32 %v4139, 8388607
      %v4141 = vor.u32 %v4140, 8388608
      %v4142 = vsub.s32 0, %v4141
      %v4143 = vadd.s32 %v4138, 1
      %vm4144 = vcmp.gt.s32.totalorder %v4143, 0
      %v4145 = vsel %vm4144, %v4143, 0
      %v4146 = vshrl.u32 %v4145, 5
      %v4147 = vand.u32 %v4145, 31
      %v4148 = vsub.s32 32, %v4147
      %v4149 = vshrl.u32 683565275, %v4148
      %v4150 = vshll.u32 683565275, %v4147
      %v4151 = vshrl.u32 2475754826, %v4148
      %v4152 = vor.u32 %v4150, %v4151
      %v4153 = vshll.u32 2475754826, %v4147
      %v4154 = vshrl.u32 2131351028, %v4148
      %v4155 = vor.u32 %v4153, %v4154
      %v4156 = vshll.u32 2131351028, %v4147
      %v4157 = vshrl.u32 2102212464, %v4148
      %v4158 = vor.u32 %v4156, %v4157
      %v4159 = vshll.u32 2102212464, %v4147
      %v4160 = vshrl.u32 920167782, %v4148
      %v4161 = vor.u32 %v4159, %v4160
      %v4162 = vshll.u32 920167782, %v4147
      %v4163 = vshrl.u32 1326507024, %v4148
      %v4164 = vor.u32 %v4162, %v4163
      %vm4165 = vcmp.lt.s32.totalorder %v4146, 1
      %vm4166 = vcmp.lt.s32.totalorder %v4146, 2
      %vm4167 = vcmp.lt.s32.totalorder %v4146, 3
      %vm4168 = vcmp.lt.s32.totalorder %v4146, 4
      %v4169 = vsel %vm4165, %v4149, %v4152
      %v4170 = vsel %vm4168, %v4158, 2102212464
      %v4171 = vsel %vm4167, %v4155, %v4170
      %v4172 = vsel %vm4166, %v4169, %v4171
      %v4173 = vsel %vm4165, %v4152, %v4155
      %v4174 = vsel %vm4168, %v4161, 920167782
      %v4175 = vsel %vm4167, %v4158, %v4174
      %v4176 = vsel %vm4166, %v4173, %v4175
      %v4177 = vsel %vm4165, %v4155, %v4158
      %v4178 = vsel %vm4168, %v4164, 1326507024
      %v4179 = vsel %vm4167, %v4161, %v4178
      %v4180 = vsel %vm4166, %v4177, %v4179
      %v4181 = vshll.u32 %v4141, 8
      %v4182 = vmul.u32.u64.compose %v4181, %v4180
      %v4183 = vextract.low.u32 %v4182
      %v4184 = vextract.high.u32 %v4182
      %v4185 = vmul.u32.u64.compose %v4181, %v4176
      %v4186 = vextract.low.u32 %v4185
      %v4187 = vextract.high.u32 %v4185
      %v4188 = vmul.u32 %v4181, %v4172
      %v4189 = vadd.s32 %v4184, %v4186
      %vm4190 = vc.u32 %v4184, %v4186
      %v4191 = vadd.s32 %v4187, 1
      %v4192 = vsel %vm4190, %v4191, %v4187
      %v4193 = vadd.s32 %v4188, %v4192
      %v4194 = vadd.s32 %v4193, 536870912
      %v4195 = vshrl.u32 %v4194, 30
      %v4196 = vshll.u32 %v4195, 30
      %v4197 = vsub.s32 %v4193, %v4196
      %vm4198 = vcmp.lt.s32.totalorder %v4197, 0
      %v4199 = vsub.s32 0, %v4197
      %v4200 = vsel %vm4198, %v4199, %v4197
      %v4201 = vclz %v4200
      %v4202 = vsub.s32 %v4201, 2
      %vm4203 = vcmp.gt.s32.totalorder 0, %v4202
      %v4204 = vsel %vm4203, 0, %v4202
      %v4205 = vsub.s32 32, %v4204
      %v4206 = vshll.u32 %v4197, %v4204
      %v4207 = vshrl.u32 %v4189, %v4205
      %v4208 = vor.u32 %v4206, %v4207
      %v4209 = vsub.s32 4294967266, %v4204
      %v4210 = vadd.s32 %v4209, 127
      %v4211 = vshll.u32 %v4210, 23
      %v4212 = vor.u32 4788187, %v4211
      %v4213 = vand.u32 2147483647, %v4212
      %v4215 = vcvt.s32.f32 %v4208
      %v4216 = vmul.f32 %v4215, %v4213
      %v4217 = vxor.u32 %v4216, 2147483648
      %v4218 = vsel %vm4135, %v4217, %v4216
      %v4219 = vsub.s32 4, %v4195
      %v4220 = vsel %vm4135, %v4219, %v4195
      %v4221 = vsel %vm4134, %v746, %v4218
      %v4222 = vsel %vm4134, 0, %v4220
      %v4223 = vcosq.f32.pop %v4221
      %v4224 = vsinq.f32.pop %v4221
      %vm4225 = vweird.f32 %v746
      %v4226 = vadd.s32 %v4222, 3
      %v4227 = vand.u32 %v4226, 3
      %vm4228 = vcmp.lt.s32.totalorder %v4227, 2
      %vm4229 = vcmp.eq.s32.totalorder %v4227, 0
      %v4230 = vxor.u32 %v4224, 2147483648
      %v4231 = vsel %vm4229, %v4223, %v4230
      %vm4232 = vcmp.eq.s32.totalorder %v4227, 2
      %v4233 = vxor.u32 %v4223, 2147483648
      %v4234 = vsel %vm4232, %v4233, %v4224
      %v4235 = vsel %vm4228, %v4231, %v4234
      %v4236 = vsel %vm4225, nan, %v4235
      %v4237 = vand.u32 2147483647, %v751
      %vm4238 = vcmp.le.f32.partialorder %v4237, 0.7853982
      %vm4239 = vcmp.lt.s32.totalorder %v751, 0
      %v4240 = vand.u32 %v751, 2139095040
      %v4241 = vshrl.u32 %v4240, 23
      %v4242 = vsub.s32 %v4241, 127
      %v4243 = vand.u32 2147483647, %v751
      %v4244 = vand.u32 %v4243, 8388607
      %v4245 = vor.u32 %v4244, 8388608
      %v4246 = vsub.s32 0, %v4245
      %v4247 = vadd.s32 %v4242, 1
      %vm4248 = vcmp.gt.s32.totalorder %v4247, 0
      %v4249 = vsel %vm4248, %v4247, 0
      %v4250 = vshrl.u32 %v4249, 5
      %v4251 = vand.u32 %v4249, 31
      %v4252 = vsub.s32 32, %v4251
      %v4253 = vshrl.u32 683565275, %v4252
      %v4254 = vshll.u32 683565275, %v4251
      %v4255 = vshrl.u32 2475754826, %v4252
      %v4256 = vor.u32 %v4254, %v4255
      %v4257 = vshll.u32 2475754826, %v4251
      %v4258 = vshrl.u32 2131351028, %v4252
      %v4259 = vor.u32 %v4257, %v4258
      %v4260 = vshll.u32 2131351028, %v4251
      %v4261 = vshrl.u32 2102212464, %v4252
      %v4262 = vor.u32 %v4260, %v4261
      %v4263 = vshll.u32 2102212464, %v4251
      %v4264 = vshrl.u32 920167782, %v4252
      %v4265 = vor.u32 %v4263, %v4264
      %v4266 = vshll.u32 920167782, %v4251
      %v4267 = vshrl.u32 1326507024, %v4252
      %v4268 = vor.u32 %v4266, %v4267
      %vm4269 = vcmp.lt.s32.totalorder %v4250, 1
      %vm4270 = vcmp.lt.s32.totalorder %v4250, 2
      %vm4271 = vcmp.lt.s32.totalorder %v4250, 3
      %vm4272 = vcmp.lt.s32.totalorder %v4250, 4
      %v4273 = vsel %vm4269, %v4253, %v4256
      %v4274 = vsel %vm4272, %v4262, 2102212464
      %v4275 = vsel %vm4271, %v4259, %v4274
      %v4276 = vsel %vm4270, %v4273, %v4275
      %v4277 = vsel %vm4269, %v4256, %v4259
      %v4278 = vsel %vm4272, %v4265, 920167782
      %v4279 = vsel %vm4271, %v4262, %v4278
      %v4280 = vsel %vm4270, %v4277, %v4279
      %v4281 = vsel %vm4269, %v4259, %v4262
      %v4282 = vsel %vm4272, %v4268, 1326507024
      %v4283 = vsel %vm4271, %v4265, %v4282
      %v4284 = vsel %vm4270, %v4281, %v4283
      %v4285 = vshll.u32 %v4245, 8
      %v4286 = vmul.u32.u64.compose %v4285, %v4284
      %v4287 = vextract.low.u32 %v4286
      %v4288 = vextract.high.u32 %v4286
      %v4289 = vmul.u32.u64.compose %v4285, %v4280
      %v4290 = vextract.low.u32 %v4289
      %v4291 = vextract.high.u32 %v4289
      %v4292 = vmul.u32 %v4285, %v4276
      %v4293 = vadd.s32 %v4288, %v4290
      %vm4294 = vc.u32 %v4288, %v4290
      %v4295 = vadd.s32 %v4291, 1
      %v4296 = vsel %vm4294, %v4295, %v4291
      %v4297 = vadd.s32 %v4292, %v4296
      %v4298 = vadd.s32 %v4297, 536870912
      %v4299 = vshrl.u32 %v4298, 30
      %v4300 = vshll.u32 %v4299, 30
      %v4301 = vsub.s32 %v4297, %v4300
      %vm4302 = vcmp.lt.s32.totalorder %v4301, 0
      %v4303 = vsub.s32 0, %v4301
      %v4304 = vsel %vm4302, %v4303, %v4301
      %v4305 = vclz %v4304
      %v4306 = vsub.s32 %v4305, 2
      %vm4307 = vcmp.gt.s32.totalorder 0, %v4306
      %v4308 = vsel %vm4307, 0, %v4306
      %v4309 = vsub.s32 32, %v4308
      %v4310 = vshll.u32 %v4301, %v4308
      %v4311 = vshrl.u32 %v4293, %v4309
      %v4312 = vor.u32 %v4310, %v4311
      %v4313 = vsub.s32 4294967266, %v4308
      %v4314 = vadd.s32 %v4313, 127
      %v4315 = vshll.u32 %v4314, 23
      %v4316 = vor.u32 4788187, %v4315
      %v4317 = vand.u32 2147483647, %v4316
      %v4319 = vcvt.s32.f32 %v4312
      %v4320 = vmul.f32 %v4319, %v4317
      %v4321 = vxor.u32 %v4320, 2147483648
      %v4322 = vsel %vm4239, %v4321, %v4320
      %v4323 = vsub.s32 4, %v4299
      %v4324 = vsel %vm4239, %v4323, %v4299
      %v4325 = vsel %vm4238, %v751, %v4322
      %v4326 = vsel %vm4238, 0, %v4324
      %v4327 = vcosq.f32.pop %v4325
      %v4328 = vsinq.f32.pop %v4325
      %vm4329 = vweird.f32 %v751
      %v4330 = vadd.s32 %v4326, 3
      %v4331 = vand.u32 %v4330, 3
      %vm4332 = vcmp.lt.s32.totalorder %v4331, 2
      %vm4333 = vcmp.eq.s32.totalorder %v4331, 0
      %v4334 = vxor.u32 %v4328, 2147483648
      %v4335 = vsel %vm4333, %v4327, %v4334
      %vm4336 = vcmp.eq.s32.totalorder %v4331, 2
      %v4337 = vxor.u32 %v4327, 2147483648
      %v4338 = vsel %vm4336, %v4337, %v4328
      %v4339 = vsel %vm4332, %v4335, %v4338
      %v4340 = vsel %vm4329, nan, %v4339
      %v4341 = vand.u32 2147483647, %v756
      %vm4342 = vcmp.le.f32.partialorder %v4341, 0.7853982
      %vm4343 = vcmp.lt.s32.totalorder %v756, 0
      %v4344 = vand.u32 %v756, 2139095040
      %v4345 = vshrl.u32 %v4344, 23
      %v4346 = vsub.s32 %v4345, 127
      %v4347 = vand.u32 2147483647, %v756
      %v4348 = vand.u32 %v4347, 8388607
      %v4349 = vor.u32 %v4348, 8388608
      %v4350 = vsub.s32 0, %v4349
      %v4351 = vadd.s32 %v4346, 1
      %vm4352 = vcmp.gt.s32.totalorder %v4351, 0
      %v4353 = vsel %vm4352, %v4351, 0
      %v4354 = vshrl.u32 %v4353, 5
      %v4355 = vand.u32 %v4353, 31
      %v4356 = vsub.s32 32, %v4355
      %v4357 = vshrl.u32 683565275, %v4356
      %v4358 = vshll.u32 683565275, %v4355
      %v4359 = vshrl.u32 2475754826, %v4356
      %v4360 = vor.u32 %v4358, %v4359
      %v4361 = vshll.u32 2475754826, %v4355
      %v4362 = vshrl.u32 2131351028, %v4356
      %v4363 = vor.u32 %v4361, %v4362
      %v4364 = vshll.u32 2131351028, %v4355
      %v4365 = vshrl.u32 2102212464, %v4356
      %v4366 = vor.u32 %v4364, %v4365
      %v4367 = vshll.u32 2102212464, %v4355
      %v4368 = vshrl.u32 920167782, %v4356
      %v4369 = vor.u32 %v4367, %v4368
      %v4370 = vshll.u32 920167782, %v4355
      %v4371 = vshrl.u32 1326507024, %v4356
      %v4372 = vor.u32 %v4370, %v4371
      %vm4373 = vcmp.lt.s32.totalorder %v4354, 1
      %vm4374 = vcmp.lt.s32.totalorder %v4354, 2
      %vm4375 = vcmp.lt.s32.totalorder %v4354, 3
      %vm4376 = vcmp.lt.s32.totalorder %v4354, 4
      %v4377 = vsel %vm4373, %v4357, %v4360
      %v4378 = vsel %vm4376, %v4366, 2102212464
      %v4379 = vsel %vm4375, %v4363, %v4378
      %v4380 = vsel %vm4374, %v4377, %v4379
      %v4381 = vsel %vm4373, %v4360, %v4363
      %v4382 = vsel %vm4376, %v4369, 920167782
      %v4383 = vsel %vm4375, %v4366, %v4382
      %v4384 = vsel %vm4374, %v4381, %v4383
      %v4385 = vsel %vm4373, %v4363, %v4366
      %v4386 = vsel %vm4376, %v4372, 1326507024
      %v4387 = vsel %vm4375, %v4369, %v4386
      %v4388 = vsel %vm4374, %v4385, %v4387
      %v4389 = vshll.u32 %v4349, 8
      %v4390 = vmul.u32.u64.compose %v4389, %v4388
      %v4391 = vextract.low.u32 %v4390
      %v4392 = vextract.high.u32 %v4390
      %v4393 = vmul.u32.u64.compose %v4389, %v4384
      %v4394 = vextract.low.u32 %v4393
      %v4395 = vextract.high.u32 %v4393
      %v4396 = vmul.u32 %v4389, %v4380
      %v4397 = vadd.s32 %v4392, %v4394
      %vm4398 = vc.u32 %v4392, %v4394
      %v4399 = vadd.s32 %v4395, 1
      %v4400 = vsel %vm4398, %v4399, %v4395
      %v4401 = vadd.s32 %v4396, %v4400
      %v4402 = vadd.s32 %v4401, 536870912
      %v4403 = vshrl.u32 %v4402, 30
      %v4404 = vshll.u32 %v4403, 30
      %v4405 = vsub.s32 %v4401, %v4404
      %vm4406 = vcmp.lt.s32.totalorder %v4405, 0
      %v4407 = vsub.s32 0, %v4405
      %v4408 = vsel %vm4406, %v4407, %v4405
      %v4409 = vclz %v4408
      %v4410 = vsub.s32 %v4409, 2
      %vm4411 = vcmp.gt.s32.totalorder 0, %v4410
      %v4412 = vsel %vm4411, 0, %v4410
      %v4413 = vsub.s32 32, %v4412
      %v4414 = vshll.u32 %v4405, %v4412
      %v4415 = vshrl.u32 %v4397, %v4413
      %v4416 = vor.u32 %v4414, %v4415
      %v4417 = vsub.s32 4294967266, %v4412
      %v4418 = vadd.s32 %v4417, 127
      %v4419 = vshll.u32 %v4418, 23
      %v4420 = vor.u32 4788187, %v4419
      %v4421 = vand.u32 2147483647, %v4420
      %v4423 = vcvt.s32.f32 %v4416
      %v4424 = vmul.f32 %v4423, %v4421
      %v4425 = vxor.u32 %v4424, 2147483648
      %v4426 = vsel %vm4343, %v4425, %v4424
      %v4427 = vsub.s32 4, %v4403
      %v4428 = vsel %vm4343, %v4427, %v4403
      %v4429 = vsel %vm4342, %v756, %v4426
      %v4430 = vsel %vm4342, 0, %v4428
      %v4431 = vcosq.f32.pop %v4429
      %v4432 = vsinq.f32.pop %v4429
      %vm4433 = vweird.f32 %v756
      %v4434 = vadd.s32 %v4430, 3
      %v4435 = vand.u32 %v4434, 3
      %vm4436 = vcmp.lt.s32.totalorder %v4435, 2
      %vm4437 = vcmp.eq.s32.totalorder %v4435, 0
      %v4438 = vxor.u32 %v4432, 2147483648
      %v4439 = vsel %vm4437, %v4431, %v4438
      %vm4440 = vcmp.eq.s32.totalorder %v4435, 2
      %v4441 = vxor.u32 %v4431, 2147483648
      %v4442 = vsel %vm4440, %v4441, %v4432
      %v4443 = vsel %vm4436, %v4439, %v4442
      %v4444 = vsel %vm4433, nan, %v4443
      %v4445 = vand.u32 2147483647, %v761
      %vm4446 = vcmp.le.f32.partialorder %v4445, 0.7853982
      %vm4447 = vcmp.lt.s32.totalorder %v761, 0
      %v4448 = vand.u32 %v761, 2139095040
      %v4449 = vshrl.u32 %v4448, 23
      %v4450 = vsub.s32 %v4449, 127
      %v4451 = vand.u32 2147483647, %v761
      %v4452 = vand.u32 %v4451, 8388607
      %v4453 = vor.u32 %v4452, 8388608
      %v4454 = vsub.s32 0, %v4453
      %v4455 = vadd.s32 %v4450, 1
      %vm4456 = vcmp.gt.s32.totalorder %v4455, 0
      %v4457 = vsel %vm4456, %v4455, 0
      %v4458 = vshrl.u32 %v4457, 5
      %v4459 = vand.u32 %v4457, 31
      %v4460 = vsub.s32 32, %v4459
      %v4461 = vshrl.u32 683565275, %v4460
      %v4462 = vshll.u32 683565275, %v4459
      %v4463 = vshrl.u32 2475754826, %v4460
      %v4464 = vor.u32 %v4462, %v4463
      %v4465 = vshll.u32 2475754826, %v4459
      %v4466 = vshrl.u32 2131351028, %v4460
      %v4467 = vor.u32 %v4465, %v4466
      %v4468 = vshll.u32 2131351028, %v4459
      %v4469 = vshrl.u32 2102212464, %v4460
      %v4470 = vor.u32 %v4468, %v4469
      %v4471 = vshll.u32 2102212464, %v4459
      %v4472 = vshrl.u32 920167782, %v4460
      %v4473 = vor.u32 %v4471, %v4472
      %v4474 = vshll.u32 920167782, %v4459
      %v4475 = vshrl.u32 1326507024, %v4460
      %v4476 = vor.u32 %v4474, %v4475
      %vm4477 = vcmp.lt.s32.totalorder %v4458, 1
      %vm4478 = vcmp.lt.s32.totalorder %v4458, 2
      %vm4479 = vcmp.lt.s32.totalorder %v4458, 3
      %vm4480 = vcmp.lt.s32.totalorder %v4458, 4
      %v4481 = vsel %vm4477, %v4461, %v4464
      %v4482 = vsel %vm4480, %v4470, 2102212464
      %v4483 = vsel %vm4479, %v4467, %v4482
      %v4484 = vsel %vm4478, %v4481, %v4483
      %v4485 = vsel %vm4477, %v4464, %v4467
      %v4486 = vsel %vm4480, %v4473, 920167782
      %v4487 = vsel %vm4479, %v4470, %v4486
      %v4488 = vsel %vm4478, %v4485, %v4487
      %v4489 = vsel %vm4477, %v4467, %v4470
      %v4490 = vsel %vm4480, %v4476, 1326507024
      %v4491 = vsel %vm4479, %v4473, %v4490
      %v4492 = vsel %vm4478, %v4489, %v4491
      %v4493 = vshll.u32 %v4453, 8
      %v4494 = vmul.u32.u64.compose %v4493, %v4492
      %v4495 = vextract.low.u32 %v4494
      %v4496 = vextract.high.u32 %v4494
      %v4497 = vmul.u32.u64.compose %v4493, %v4488
      %v4498 = vextract.low.u32 %v4497
      %v4499 = vextract.high.u32 %v4497
      %v4500 = vmul.u32 %v4493, %v4484
      %v4501 = vadd.s32 %v4496, %v4498
      %vm4502 = vc.u32 %v4496, %v4498
      %v4503 = vadd.s32 %v4499, 1
      %v4504 = vsel %vm4502, %v4503, %v4499
      %v4505 = vadd.s32 %v4500, %v4504
      %v4506 = vadd.s32 %v4505, 536870912
      %v4507 = vshrl.u32 %v4506, 30
      %v4508 = vshll.u32 %v4507, 30
      %v4509 = vsub.s32 %v4505, %v4508
      %vm4510 = vcmp.lt.s32.totalorder %v4509, 0
      %v4511 = vsub.s32 0, %v4509
      %v4512 = vsel %vm4510, %v4511, %v4509
      %v4513 = vclz %v4512
      %v4514 = vsub.s32 %v4513, 2
      %vm4515 = vcmp.gt.s32.totalorder 0, %v4514
      %v4516 = vsel %vm4515, 0, %v4514
      %v4517 = vsub.s32 32, %v4516
      %v4518 = vshll.u32 %v4509, %v4516
      %v4519 = vshrl.u32 %v4501, %v4517
      %v4520 = vor.u32 %v4518, %v4519
      %v4521 = vsub.s32 4294967266, %v4516
      %v4522 = vadd.s32 %v4521, 127
      %v4523 = vshll.u32 %v4522, 23
      %v4524 = vor.u32 4788187, %v4523
      %v4525 = vand.u32 2147483647, %v4524
      %v4527 = vcvt.s32.f32 %v4520
      %v4528 = vmul.f32 %v4527, %v4525
      %v4529 = vxor.u32 %v4528, 2147483648
      %v4530 = vsel %vm4447, %v4529, %v4528
      %v4531 = vsub.s32 4, %v4507
      %v4532 = vsel %vm4447, %v4531, %v4507
      %v4533 = vsel %vm4446, %v761, %v4530
      %v4534 = vsel %vm4446, 0, %v4532
      %v4535 = vcosq.f32.pop %v4533
      %v4536 = vsinq.f32.pop %v4533
      %vm4537 = vweird.f32 %v761
      %v4538 = vadd.s32 %v4534, 3
      %v4539 = vand.u32 %v4538, 3
      %vm4540 = vcmp.lt.s32.totalorder %v4539, 2
      %vm4541 = vcmp.eq.s32.totalorder %v4539, 0
      %v4542 = vxor.u32 %v4536, 2147483648
      %v4543 = vsel %vm4541, %v4535, %v4542
      %vm4544 = vcmp.eq.s32.totalorder %v4539, 2
      %v4545 = vxor.u32 %v4535, 2147483648
      %v4546 = vsel %vm4544, %v4545, %v4536
      %v4547 = vsel %vm4540, %v4543, %v4546
      %v4548 = vsel %vm4537, nan, %v4547
      %v4549 = vand.u32 2147483647, %v766
      %vm4550 = vcmp.le.f32.partialorder %v4549, 0.7853982
      %vm4551 = vcmp.lt.s32.totalorder %v766, 0
      %v4552 = vand.u32 %v766, 2139095040
      %v4553 = vshrl.u32 %v4552, 23
      %v4554 = vsub.s32 %v4553, 127
      %v4555 = vand.u32 2147483647, %v766
      %v4556 = vand.u32 %v4555, 8388607
      %v4557 = vor.u32 %v4556, 8388608
      %v4558 = vsub.s32 0, %v4557
      %v4559 = vadd.s32 %v4554, 1
      %vm4560 = vcmp.gt.s32.totalorder %v4559, 0
      %v4561 = vsel %vm4560, %v4559, 0
      %v4562 = vshrl.u32 %v4561, 5
      %v4563 = vand.u32 %v4561, 31
      %v4564 = vsub.s32 32, %v4563
      %v4565 = vshrl.u32 683565275, %v4564
      %v4566 = vshll.u32 683565275, %v4563
      %v4567 = vshrl.u32 2475754826, %v4564
      %v4568 = vor.u32 %v4566, %v4567
      %v4569 = vshll.u32 2475754826, %v4563
      %v4570 = vshrl.u32 2131351028, %v4564
      %v4571 = vor.u32 %v4569, %v4570
      %v4572 = vshll.u32 2131351028, %v4563
      %v4573 = vshrl.u32 2102212464, %v4564
      %v4574 = vor.u32 %v4572, %v4573
      %v4575 = vshll.u32 2102212464, %v4563
      %v4576 = vshrl.u32 920167782, %v4564
      %v4577 = vor.u32 %v4575, %v4576
      %v4578 = vshll.u32 920167782, %v4563
      %v4579 = vshrl.u32 1326507024, %v4564
      %v4580 = vor.u32 %v4578, %v4579
      %vm4581 = vcmp.lt.s32.totalorder %v4562, 1
      %vm4582 = vcmp.lt.s32.totalorder %v4562, 2
      %vm4583 = vcmp.lt.s32.totalorder %v4562, 3
      %vm4584 = vcmp.lt.s32.totalorder %v4562, 4
      %v4585 = vsel %vm4581, %v4565, %v4568
      %v4586 = vsel %vm4584, %v4574, 2102212464
      %v4587 = vsel %vm4583, %v4571, %v4586
      %v4588 = vsel %vm4582, %v4585, %v4587
      %v4589 = vsel %vm4581, %v4568, %v4571
      %v4590 = vsel %vm4584, %v4577, 920167782
      %v4591 = vsel %vm4583, %v4574, %v4590
      %v4592 = vsel %vm4582, %v4589, %v4591
      %v4593 = vsel %vm4581, %v4571, %v4574
      %v4594 = vsel %vm4584, %v4580, 1326507024
      %v4595 = vsel %vm4583, %v4577, %v4594
      %v4596 = vsel %vm4582, %v4593, %v4595
      %v4597 = vshll.u32 %v4557, 8
      %v4598 = vmul.u32.u64.compose %v4597, %v4596
      %v4599 = vextract.low.u32 %v4598
      %v4600 = vextract.high.u32 %v4598
      %v4601 = vmul.u32.u64.compose %v4597, %v4592
      %v4602 = vextract.low.u32 %v4601
      %v4603 = vextract.high.u32 %v4601
      %v4604 = vmul.u32 %v4597, %v4588
      %v4605 = vadd.s32 %v4600, %v4602
      %vm4606 = vc.u32 %v4600, %v4602
      %v4607 = vadd.s32 %v4603, 1
      %v4608 = vsel %vm4606, %v4607, %v4603
      %v4609 = vadd.s32 %v4604, %v4608
      %v4610 = vadd.s32 %v4609, 536870912
      %v4611 = vshrl.u32 %v4610, 30
      %v4612 = vshll.u32 %v4611, 30
      %v4613 = vsub.s32 %v4609, %v4612
      %vm4614 = vcmp.lt.s32.totalorder %v4613, 0
      %v4615 = vsub.s32 0, %v4613
      %v4616 = vsel %vm4614, %v4615, %v4613
      %v4617 = vclz %v4616
      %v4618 = vsub.s32 %v4617, 2
      %vm4619 = vcmp.gt.s32.totalorder 0, %v4618
      %v4620 = vsel %vm4619, 0, %v4618
      %v4621 = vsub.s32 32, %v4620
      %v4622 = vshll.u32 %v4613, %v4620
      %v4623 = vshrl.u32 %v4605, %v4621
      %v4624 = vor.u32 %v4622, %v4623
      %v4625 = vsub.s32 4294967266, %v4620
      %v4626 = vadd.s32 %v4625, 127
      %v4627 = vshll.u32 %v4626, 23
      %v4628 = vor.u32 4788187, %v4627
      %v4629 = vand.u32 2147483647, %v4628
      %v4631 = vcvt.s32.f32 %v4624
      %v4632 = vmul.f32 %v4631, %v4629
      %v4633 = vxor.u32 %v4632, 2147483648
      %v4634 = vsel %vm4551, %v4633, %v4632
      %v4635 = vsub.s32 4, %v4611
      %v4636 = vsel %vm4551, %v4635, %v4611
      %v4637 = vsel %vm4550, %v766, %v4634
      %v4638 = vsel %vm4550, 0, %v4636
      %v4639 = vcosq.f32.pop %v4637
      %v4640 = vsinq.f32.pop %v4637
      %vm4641 = vweird.f32 %v766
      %v4642 = vadd.s32 %v4638, 3
      %v4643 = vand.u32 %v4642, 3
      %vm4644 = vcmp.lt.s32.totalorder %v4643, 2
      %vm4645 = vcmp.eq.s32.totalorder %v4643, 0
      %v4646 = vxor.u32 %v4640, 2147483648
      %v4647 = vsel %vm4645, %v4639, %v4646
      %vm4648 = vcmp.eq.s32.totalorder %v4643, 2
      %v4649 = vxor.u32 %v4639, 2147483648
      %v4650 = vsel %vm4648, %v4649, %v4640
      %v4651 = vsel %vm4644, %v4647, %v4650
      %v4652 = vsel %vm4641, nan, %v4651
      %v4653 = vand.u32 2147483647, %v771
      %vm4654 = vcmp.le.f32.partialorder %v4653, 0.7853982
      %vm4655 = vcmp.lt.s32.totalorder %v771, 0
      %v4656 = vand.u32 %v771, 2139095040
      %v4657 = vshrl.u32 %v4656, 23
      %v4658 = vsub.s32 %v4657, 127
      %v4659 = vand.u32 2147483647, %v771
      %v4660 = vand.u32 %v4659, 8388607
      %v4661 = vor.u32 %v4660, 8388608
      %v4662 = vsub.s32 0, %v4661
      %v4663 = vadd.s32 %v4658, 1
      %vm4664 = vcmp.gt.s32.totalorder %v4663, 0
      %v4665 = vsel %vm4664, %v4663, 0
      %v4666 = vshrl.u32 %v4665, 5
      %v4667 = vand.u32 %v4665, 31
      %v4668 = vsub.s32 32, %v4667
      %v4669 = vshrl.u32 683565275, %v4668
      %v4670 = vshll.u32 683565275, %v4667
      %v4671 = vshrl.u32 2475754826, %v4668
      %v4672 = vor.u32 %v4670, %v4671
      %v4673 = vshll.u32 2475754826, %v4667
      %v4674 = vshrl.u32 2131351028, %v4668
      %v4675 = vor.u32 %v4673, %v4674
      %v4676 = vshll.u32 2131351028, %v4667
      %v4677 = vshrl.u32 2102212464, %v4668
      %v4678 = vor.u32 %v4676, %v4677
      %v4679 = vshll.u32 2102212464, %v4667
      %v4680 = vshrl.u32 920167782, %v4668
      %v4681 = vor.u32 %v4679, %v4680
      %v4682 = vshll.u32 920167782, %v4667
      %v4683 = vshrl.u32 1326507024, %v4668
      %v4684 = vor.u32 %v4682, %v4683
      %vm4685 = vcmp.lt.s32.totalorder %v4666, 1
      %vm4686 = vcmp.lt.s32.totalorder %v4666, 2
      %vm4687 = vcmp.lt.s32.totalorder %v4666, 3
      %vm4688 = vcmp.lt.s32.totalorder %v4666, 4
      %v4689 = vsel %vm4685, %v4669, %v4672
      %v4690 = vsel %vm4688, %v4678, 2102212464
      %v4691 = vsel %vm4687, %v4675, %v4690
      %v4692 = vsel %vm4686, %v4689, %v4691
      %v4693 = vsel %vm4685, %v4672, %v4675
      %v4694 = vsel %vm4688, %v4681, 920167782
      %v4695 = vsel %vm4687, %v4678, %v4694
      %v4696 = vsel %vm4686, %v4693, %v4695
      %v4697 = vsel %vm4685, %v4675, %v4678
      %v4698 = vsel %vm4688, %v4684, 1326507024
      %v4699 = vsel %vm4687, %v4681, %v4698
      %v4700 = vsel %vm4686, %v4697, %v4699
      %v4701 = vshll.u32 %v4661, 8
      %v4702 = vmul.u32.u64.compose %v4701, %v4700
      %v4703 = vextract.low.u32 %v4702
      %v4704 = vextract.high.u32 %v4702
      %v4705 = vmul.u32.u64.compose %v4701, %v4696
      %v4706 = vextract.low.u32 %v4705
      %v4707 = vextract.high.u32 %v4705
      %v4708 = vmul.u32 %v4701, %v4692
      %v4709 = vadd.s32 %v4704, %v4706
      %vm4710 = vc.u32 %v4704, %v4706
      %v4711 = vadd.s32 %v4707, 1
      %v4712 = vsel %vm4710, %v4711, %v4707
      %v4713 = vadd.s32 %v4708, %v4712
      %v4714 = vadd.s32 %v4713, 536870912
      %v4715 = vshrl.u32 %v4714, 30
      %v4716 = vshll.u32 %v4715, 30
      %v4717 = vsub.s32 %v4713, %v4716
      %vm4718 = vcmp.lt.s32.totalorder %v4717, 0
      %v4719 = vsub.s32 0, %v4717
      %v4720 = vsel %vm4718, %v4719, %v4717
      %v4721 = vclz %v4720
      %v4722 = vsub.s32 %v4721, 2
      %vm4723 = vcmp.gt.s32.totalorder 0, %v4722
      %v4724 = vsel %vm4723, 0, %v4722
      %v4725 = vsub.s32 32, %v4724
      %v4726 = vshll.u32 %v4717, %v4724
      %v4727 = vshrl.u32 %v4709, %v4725
      %v4728 = vor.u32 %v4726, %v4727
      %v4729 = vsub.s32 4294967266, %v4724
      %v4730 = vadd.s32 %v4729, 127
      %v4731 = vshll.u32 %v4730, 23
      %v4732 = vor.u32 4788187, %v4731
      %v4733 = vand.u32 2147483647, %v4732
      %v4735 = vcvt.s32.f32 %v4728
      %v4736 = vmul.f32 %v4735, %v4733
      %v4737 = vxor.u32 %v4736, 2147483648
      %v4738 = vsel %vm4655, %v4737, %v4736
      %v4739 = vsub.s32 4, %v4715
      %v4740 = vsel %vm4655, %v4739, %v4715
      %v4741 = vsel %vm4654, %v771, %v4738
      %v4742 = vsel %vm4654, 0, %v4740
      %v4743 = vcosq.f32.pop %v4741
      %v4744 = vsinq.f32.pop %v4741
      %vm4745 = vweird.f32 %v771
      %v4746 = vadd.s32 %v4742, 3
      %v4747 = vand.u32 %v4746, 3
      %vm4748 = vcmp.lt.s32.totalorder %v4747, 2
      %vm4749 = vcmp.eq.s32.totalorder %v4747, 0
      %v4750 = vxor.u32 %v4744, 2147483648
      %v4751 = vsel %vm4749, %v4743, %v4750
      %vm4752 = vcmp.eq.s32.totalorder %v4747, 2
      %v4753 = vxor.u32 %v4743, 2147483648
      %v4754 = vsel %vm4752, %v4753, %v4744
      %v4755 = vsel %vm4748, %v4751, %v4754
      %v4756 = vsel %vm4745, nan, %v4755
      %v4757 = vand.u32 2147483647, %v776
      %vm4758 = vcmp.le.f32.partialorder %v4757, 0.7853982
      %vm4759 = vcmp.lt.s32.totalorder %v776, 0
      %v4760 = vand.u32 %v776, 2139095040
      %v4761 = vshrl.u32 %v4760, 23
      %v4762 = vsub.s32 %v4761, 127
      %v4763 = vand.u32 2147483647, %v776
      %v4764 = vand.u32 %v4763, 8388607
      %v4765 = vor.u32 %v4764, 8388608
      %v4766 = vsub.s32 0, %v4765
      %v4767 = vadd.s32 %v4762, 1
      %vm4768 = vcmp.gt.s32.totalorder %v4767, 0
      %v4769 = vsel %vm4768, %v4767, 0
      %v4770 = vshrl.u32 %v4769, 5
      %v4771 = vand.u32 %v4769, 31
      %v4772 = vsub.s32 32, %v4771
      %v4773 = vshrl.u32 683565275, %v4772
      %v4774 = vshll.u32 683565275, %v4771
      %v4775 = vshrl.u32 2475754826, %v4772
      %v4776 = vor.u32 %v4774, %v4775
      %v4777 = vshll.u32 2475754826, %v4771
      %v4778 = vshrl.u32 2131351028, %v4772
      %v4779 = vor.u32 %v4777, %v4778
      %v4780 = vshll.u32 2131351028, %v4771
      %v4781 = vshrl.u32 2102212464, %v4772
      %v4782 = vor.u32 %v4780, %v4781
      %v4783 = vshll.u32 2102212464, %v4771
      %v4784 = vshrl.u32 920167782, %v4772
      %v4785 = vor.u32 %v4783, %v4784
      %v4786 = vshll.u32 920167782, %v4771
      %v4787 = vshrl.u32 1326507024, %v4772
      %v4788 = vor.u32 %v4786, %v4787
      %vm4789 = vcmp.lt.s32.totalorder %v4770, 1
      %vm4790 = vcmp.lt.s32.totalorder %v4770, 2
      %vm4791 = vcmp.lt.s32.totalorder %v4770, 3
      %vm4792 = vcmp.lt.s32.totalorder %v4770, 4
      %v4793 = vsel %vm4789, %v4773, %v4776
      %v4794 = vsel %vm4792, %v4782, 2102212464
      %v4795 = vsel %vm4791, %v4779, %v4794
      %v4796 = vsel %vm4790, %v4793, %v4795
      %v4797 = vsel %vm4789, %v4776, %v4779
      %v4798 = vsel %vm4792, %v4785, 920167782
      %v4799 = vsel %vm4791, %v4782, %v4798
      %v4800 = vsel %vm4790, %v4797, %v4799
      %v4801 = vsel %vm4789, %v4779, %v4782
      %v4802 = vsel %vm4792, %v4788, 1326507024
      %v4803 = vsel %vm4791, %v4785, %v4802
      %v4804 = vsel %vm4790, %v4801, %v4803
      %v4805 = vshll.u32 %v4765, 8
      %v4806 = vmul.u32.u64.compose %v4805, %v4804
      %v4807 = vextract.low.u32 %v4806
      %v4808 = vextract.high.u32 %v4806
      %v4809 = vmul.u32.u64.compose %v4805, %v4800
      %v4810 = vextract.low.u32 %v4809
      %v4811 = vextract.high.u32 %v4809
      %v4812 = vmul.u32 %v4805, %v4796
      %v4813 = vadd.s32 %v4808, %v4810
      %vm4814 = vc.u32 %v4808, %v4810
      %v4815 = vadd.s32 %v4811, 1
      %v4816 = vsel %vm4814, %v4815, %v4811
      %v4817 = vadd.s32 %v4812, %v4816
      %v4818 = vadd.s32 %v4817, 536870912
      %v4819 = vshrl.u32 %v4818, 30
      %v4820 = vshll.u32 %v4819, 30
      %v4821 = vsub.s32 %v4817, %v4820
      %vm4822 = vcmp.lt.s32.totalorder %v4821, 0
      %v4823 = vsub.s32 0, %v4821
      %v4824 = vsel %vm4822, %v4823, %v4821
      %v4825 = vclz %v4824
      %v4826 = vsub.s32 %v4825, 2
      %vm4827 = vcmp.gt.s32.totalorder 0, %v4826
      %v4828 = vsel %vm4827, 0, %v4826
      %v4829 = vsub.s32 32, %v4828
      %v4830 = vshll.u32 %v4821, %v4828
      %v4831 = vshrl.u32 %v4813, %v4829
      %v4832 = vor.u32 %v4830, %v4831
      %v4833 = vsub.s32 4294967266, %v4828
      %v4834 = vadd.s32 %v4833, 127
      %v4835 = vshll.u32 %v4834, 23
      %v4836 = vor.u32 4788187, %v4835
      %v4837 = vand.u32 2147483647, %v4836
      %v4839 = vcvt.s32.f32 %v4832
      %v4840 = vmul.f32 %v4839, %v4837
      %v4841 = vxor.u32 %v4840, 2147483648
      %v4842 = vsel %vm4759, %v4841, %v4840
      %v4843 = vsub.s32 4, %v4819
      %v4844 = vsel %vm4759, %v4843, %v4819
      %v4845 = vsel %vm4758, %v776, %v4842
      %v4846 = vsel %vm4758, 0, %v4844
      %v4847 = vcosq.f32.pop %v4845
      %v4848 = vsinq.f32.pop %v4845
      %vm4849 = vweird.f32 %v776
      %v4850 = vadd.s32 %v4846, 3
      %v4851 = vand.u32 %v4850, 3
      %vm4852 = vcmp.lt.s32.totalorder %v4851, 2
      %vm4853 = vcmp.eq.s32.totalorder %v4851, 0
      %v4854 = vxor.u32 %v4848, 2147483648
      %v4855 = vsel %vm4853, %v4847, %v4854
      %vm4856 = vcmp.eq.s32.totalorder %v4851, 2
      %v4857 = vxor.u32 %v4847, 2147483648
      %v4858 = vsel %vm4856, %v4857, %v4848
      %v4859 = vsel %vm4852, %v4855, %v4858
      %v4860 = vsel %vm4849, nan, %v4859
      %v4861 = vand.u32 2147483647, %v781
      %vm4862 = vcmp.le.f32.partialorder %v4861, 0.7853982
      %vm4863 = vcmp.lt.s32.totalorder %v781, 0
      %v4864 = vand.u32 %v781, 2139095040
      %v4865 = vshrl.u32 %v4864, 23
      %v4866 = vsub.s32 %v4865, 127
      %v4867 = vand.u32 2147483647, %v781
      %v4868 = vand.u32 %v4867, 8388607
      %v4869 = vor.u32 %v4868, 8388608
      %v4870 = vsub.s32 0, %v4869
      %v4871 = vadd.s32 %v4866, 1
      %vm4872 = vcmp.gt.s32.totalorder %v4871, 0
      %v4873 = vsel %vm4872, %v4871, 0
      %v4874 = vshrl.u32 %v4873, 5
      %v4875 = vand.u32 %v4873, 31
      %v4876 = vsub.s32 32, %v4875
      %v4877 = vshrl.u32 683565275, %v4876
      %v4878 = vshll.u32 683565275, %v4875
      %v4879 = vshrl.u32 2475754826, %v4876
      %v4880 = vor.u32 %v4878, %v4879
      %v4881 = vshll.u32 2475754826, %v4875
      %v4882 = vshrl.u32 2131351028, %v4876
      %v4883 = vor.u32 %v4881, %v4882
      %v4884 = vshll.u32 2131351028, %v4875
      %v4885 = vshrl.u32 2102212464, %v4876
      %v4886 = vor.u32 %v4884, %v4885
      %v4887 = vshll.u32 2102212464, %v4875
      %v4888 = vshrl.u32 920167782, %v4876
      %v4889 = vor.u32 %v4887, %v4888
      %v4890 = vshll.u32 920167782, %v4875
      %v4891 = vshrl.u32 1326507024, %v4876
      %v4892 = vor.u32 %v4890, %v4891
      %vm4893 = vcmp.lt.s32.totalorder %v4874, 1
      %vm4894 = vcmp.lt.s32.totalorder %v4874, 2
      %vm4895 = vcmp.lt.s32.totalorder %v4874, 3
      %vm4896 = vcmp.lt.s32.totalorder %v4874, 4
      %v4897 = vsel %vm4893, %v4877, %v4880
      %v4898 = vsel %vm4896, %v4886, 2102212464
      %v4899 = vsel %vm4895, %v4883, %v4898
      %v4900 = vsel %vm4894, %v4897, %v4899
      %v4901 = vsel %vm4893, %v4880, %v4883
      %v4902 = vsel %vm4896, %v4889, 920167782
      %v4903 = vsel %vm4895, %v4886, %v4902
      %v4904 = vsel %vm4894, %v4901, %v4903
      %v4905 = vsel %vm4893, %v4883, %v4886
      %v4906 = vsel %vm4896, %v4892, 1326507024
      %v4907 = vsel %vm4895, %v4889, %v4906
      %v4908 = vsel %vm4894, %v4905, %v4907
      %v4909 = vshll.u32 %v4869, 8
      %v4910 = vmul.u32.u64.compose %v4909, %v4908
      %v4911 = vextract.low.u32 %v4910
      %v4912 = vextract.high.u32 %v4910
      %v4913 = vmul.u32.u64.compose %v4909, %v4904
      %v4914 = vextract.low.u32 %v4913
      %v4915 = vextract.high.u32 %v4913
      %v4916 = vmul.u32 %v4909, %v4900
      %v4917 = vadd.s32 %v4912, %v4914
      %vm4918 = vc.u32 %v4912, %v4914
      %v4919 = vadd.s32 %v4915, 1
      %v4920 = vsel %vm4918, %v4919, %v4915
      %v4921 = vadd.s32 %v4916, %v4920
      %v4922 = vadd.s32 %v4921, 536870912
      %v4923 = vshrl.u32 %v4922, 30
      %v4924 = vshll.u32 %v4923, 30
      %v4925 = vsub.s32 %v4921, %v4924
      %vm4926 = vcmp.lt.s32.totalorder %v4925, 0
      %v4927 = vsub.s32 0, %v4925
      %v4928 = vsel %vm4926, %v4927, %v4925
      %v4929 = vclz %v4928
      %v4930 = vsub.s32 %v4929, 2
      %vm4931 = vcmp.gt.s32.totalorder 0, %v4930
      %v4932 = vsel %vm4931, 0, %v4930
      %v4933 = vsub.s32 32, %v4932
      %v4934 = vshll.u32 %v4925, %v4932
      %v4935 = vshrl.u32 %v4917, %v4933
      %v4936 = vor.u32 %v4934, %v4935
      %v4937 = vsub.s32 4294967266, %v4932
      %v4938 = vadd.s32 %v4937, 127
      %v4939 = vshll.u32 %v4938, 23
      %v4940 = vor.u32 4788187, %v4939
      %v4941 = vand.u32 2147483647, %v4940
      %v4943 = vcvt.s32.f32 %v4936
      %v4944 = vmul.f32 %v4943, %v4941
      %v4945 = vxor.u32 %v4944, 2147483648
      %v4946 = vsel %vm4863, %v4945, %v4944
      %v4947 = vsub.s32 4, %v4923
      %v4948 = vsel %vm4863, %v4947, %v4923
      %v4949 = vsel %vm4862, %v781, %v4946
      %v4950 = vsel %vm4862, 0, %v4948
      %v4951 = vcosq.f32.pop %v4949
      %v4952 = vsinq.f32.pop %v4949
      %vm4953 = vweird.f32 %v781
      %v4954 = vadd.s32 %v4950, 3
      %v4955 = vand.u32 %v4954, 3
      %vm4956 = vcmp.lt.s32.totalorder %v4955, 2
      %vm4957 = vcmp.eq.s32.totalorder %v4955, 0
      %v4958 = vxor.u32 %v4952, 2147483648
      %v4959 = vsel %vm4957, %v4951, %v4958
      %vm4960 = vcmp.eq.s32.totalorder %v4955, 2
      %v4961 = vxor.u32 %v4951, 2147483648
      %v4962 = vsel %vm4960, %v4961, %v4952
      %v4963 = vsel %vm4956, %v4959, %v4962
      %v4964 = vsel %vm4953, nan, %v4963
      %v4965 = vand.u32 2147483647, %v786
      %vm4966 = vcmp.le.f32.partialorder %v4965, 0.7853982
      %vm4967 = vcmp.lt.s32.totalorder %v786, 0
      %v4968 = vand.u32 %v786, 2139095040
      %v4969 = vshrl.u32 %v4968, 23
      %v4970 = vsub.s32 %v4969, 127
      %v4971 = vand.u32 2147483647, %v786
      %v4972 = vand.u32 %v4971, 8388607
      %v4973 = vor.u32 %v4972, 8388608
      %v4974 = vsub.s32 0, %v4973
      %v4975 = vadd.s32 %v4970, 1
      %vm4976 = vcmp.gt.s32.totalorder %v4975, 0
      %v4977 = vsel %vm4976, %v4975, 0
      %v4978 = vshrl.u32 %v4977, 5
      %v4979 = vand.u32 %v4977, 31
      %v4980 = vsub.s32 32, %v4979
      %v4981 = vshrl.u32 683565275, %v4980
      %v4982 = vshll.u32 683565275, %v4979
      %v4983 = vshrl.u32 2475754826, %v4980
      %v4984 = vor.u32 %v4982, %v4983
      %v4985 = vshll.u32 2475754826, %v4979
      %v4986 = vshrl.u32 2131351028, %v4980
      %v4987 = vor.u32 %v4985, %v4986
      %v4988 = vshll.u32 2131351028, %v4979
      %v4989 = vshrl.u32 2102212464, %v4980
      %v4990 = vor.u32 %v4988, %v4989
      %v4991 = vshll.u32 2102212464, %v4979
      %v4992 = vshrl.u32 920167782, %v4980
      %v4993 = vor.u32 %v4991, %v4992
      %v4994 = vshll.u32 920167782, %v4979
      %v4995 = vshrl.u32 1326507024, %v4980
      %v4996 = vor.u32 %v4994, %v4995
      %vm4997 = vcmp.lt.s32.totalorder %v4978, 1
      %vm4998 = vcmp.lt.s32.totalorder %v4978, 2
      %vm4999 = vcmp.lt.s32.totalorder %v4978, 3
      %vm5000 = vcmp.lt.s32.totalorder %v4978, 4
      %v5001 = vsel %vm4997, %v4981, %v4984
      %v5002 = vsel %vm5000, %v4990, 2102212464
      %v5003 = vsel %vm4999, %v4987, %v5002
      %v5004 = vsel %vm4998, %v5001, %v5003
      %v5005 = vsel %vm4997, %v4984, %v4987
      %v5006 = vsel %vm5000, %v4993, 920167782
      %v5007 = vsel %vm4999, %v4990, %v5006
      %v5008 = vsel %vm4998, %v5005, %v5007
      %v5009 = vsel %vm4997, %v4987, %v4990
      %v5010 = vsel %vm5000, %v4996, 1326507024
      %v5011 = vsel %vm4999, %v4993, %v5010
      %v5012 = vsel %vm4998, %v5009, %v5011
      %v5013 = vshll.u32 %v4973, 8
      %v5014 = vmul.u32.u64.compose %v5013, %v5012
      %v5015 = vextract.low.u32 %v5014
      %v5016 = vextract.high.u32 %v5014
      %v5017 = vmul.u32.u64.compose %v5013, %v5008
      %v5018 = vextract.low.u32 %v5017
      %v5019 = vextract.high.u32 %v5017
      %v5020 = vmul.u32 %v5013, %v5004
      %v5021 = vadd.s32 %v5016, %v5018
      %vm5022 = vc.u32 %v5016, %v5018
      %v5023 = vadd.s32 %v5019, 1
      %v5024 = vsel %vm5022, %v5023, %v5019
      %v5025 = vadd.s32 %v5020, %v5024
      %v5026 = vadd.s32 %v5025, 536870912
      %v5027 = vshrl.u32 %v5026, 30
      %v5028 = vshll.u32 %v5027, 30
      %v5029 = vsub.s32 %v5025, %v5028
      %vm5030 = vcmp.lt.s32.totalorder %v5029, 0
      %v5031 = vsub.s32 0, %v5029
      %v5032 = vsel %vm5030, %v5031, %v5029
      %v5033 = vclz %v5032
      %v5034 = vsub.s32 %v5033, 2
      %vm5035 = vcmp.gt.s32.totalorder 0, %v5034
      %v5036 = vsel %vm5035, 0, %v5034
      %v5037 = vsub.s32 32, %v5036
      %v5038 = vshll.u32 %v5029, %v5036
      %v5039 = vshrl.u32 %v5021, %v5037
      %v5040 = vor.u32 %v5038, %v5039
      %v5041 = vsub.s32 4294967266, %v5036
      %v5042 = vadd.s32 %v5041, 127
      %v5043 = vshll.u32 %v5042, 23
      %v5044 = vor.u32 4788187, %v5043
      %v5045 = vand.u32 2147483647, %v5044
      %v5047 = vcvt.s32.f32 %v5040
      %v5048 = vmul.f32 %v5047, %v5045
      %v5049 = vxor.u32 %v5048, 2147483648
      %v5050 = vsel %vm4967, %v5049, %v5048
      %v5051 = vsub.s32 4, %v5027
      %v5052 = vsel %vm4967, %v5051, %v5027
      %v5053 = vsel %vm4966, %v786, %v5050
      %v5054 = vsel %vm4966, 0, %v5052
      %v5055 = vcosq.f32.pop %v5053
      %v5056 = vsinq.f32.pop %v5053
      %vm5057 = vweird.f32 %v786
      %v5058 = vadd.s32 %v5054, 3
      %v5059 = vand.u32 %v5058, 3
      %vm5060 = vcmp.lt.s32.totalorder %v5059, 2
      %vm5061 = vcmp.eq.s32.totalorder %v5059, 0
      %v5062 = vxor.u32 %v5056, 2147483648
      %v5063 = vsel %vm5061, %v5055, %v5062
      %vm5064 = vcmp.eq.s32.totalorder %v5059, 2
      %v5065 = vxor.u32 %v5055, 2147483648
      %v5066 = vsel %vm5064, %v5065, %v5056
      %v5067 = vsel %vm5060, %v5063, %v5066
      %v5068 = vsel %vm5057, nan, %v5067
      %v5069 = vand.u32 2147483647, %v791
      %vm5070 = vcmp.le.f32.partialorder %v5069, 0.7853982
      %vm5071 = vcmp.lt.s32.totalorder %v791, 0
      %v5072 = vand.u32 %v791, 2139095040
      %v5073 = vshrl.u32 %v5072, 23
      %v5074 = vsub.s32 %v5073, 127
      %v5075 = vand.u32 2147483647, %v791
      %v5076 = vand.u32 %v5075, 8388607
      %v5077 = vor.u32 %v5076, 8388608
      %v5078 = vsub.s32 0, %v5077
      %v5079 = vadd.s32 %v5074, 1
      %vm5080 = vcmp.gt.s32.totalorder %v5079, 0
      %v5081 = vsel %vm5080, %v5079, 0
      %v5082 = vshrl.u32 %v5081, 5
      %v5083 = vand.u32 %v5081, 31
      %v5084 = vsub.s32 32, %v5083
      %v5085 = vshrl.u32 683565275, %v5084
      %v5086 = vshll.u32 683565275, %v5083
      %v5087 = vshrl.u32 2475754826, %v5084
      %v5088 = vor.u32 %v5086, %v5087
      %v5089 = vshll.u32 2475754826, %v5083
      %v5090 = vshrl.u32 2131351028, %v5084
      %v5091 = vor.u32 %v5089, %v5090
      %v5092 = vshll.u32 2131351028, %v5083
      %v5093 = vshrl.u32 2102212464, %v5084
      %v5094 = vor.u32 %v5092, %v5093
      %v5095 = vshll.u32 2102212464, %v5083
      %v5096 = vshrl.u32 920167782, %v5084
      %v5097 = vor.u32 %v5095, %v5096
      %v5098 = vshll.u32 920167782, %v5083
      %v5099 = vshrl.u32 1326507024, %v5084
      %v5100 = vor.u32 %v5098, %v5099
      %vm5101 = vcmp.lt.s32.totalorder %v5082, 1
      %vm5102 = vcmp.lt.s32.totalorder %v5082, 2
      %vm5103 = vcmp.lt.s32.totalorder %v5082, 3
      %vm5104 = vcmp.lt.s32.totalorder %v5082, 4
      %v5105 = vsel %vm5101, %v5085, %v5088
      %v5106 = vsel %vm5104, %v5094, 2102212464
      %v5107 = vsel %vm5103, %v5091, %v5106
      %v5108 = vsel %vm5102, %v5105, %v5107
      %v5109 = vsel %vm5101, %v5088, %v5091
      %v5110 = vsel %vm5104, %v5097, 920167782
      %v5111 = vsel %vm5103, %v5094, %v5110
      %v5112 = vsel %vm5102, %v5109, %v5111
      %v5113 = vsel %vm5101, %v5091, %v5094
      %v5114 = vsel %vm5104, %v5100, 1326507024
      %v5115 = vsel %vm5103, %v5097, %v5114
      %v5116 = vsel %vm5102, %v5113, %v5115
      %v5117 = vshll.u32 %v5077, 8
      %v5118 = vmul.u32.u64.compose %v5117, %v5116
      %v5119 = vextract.low.u32 %v5118
      %v5120 = vextract.high.u32 %v5118
      %v5121 = vmul.u32.u64.compose %v5117, %v5112
      %v5122 = vextract.low.u32 %v5121
      %v5123 = vextract.high.u32 %v5121
      %v5124 = vmul.u32 %v5117, %v5108
      %v5125 = vadd.s32 %v5120, %v5122
      %vm5126 = vc.u32 %v5120, %v5122
      %v5127 = vadd.s32 %v5123, 1
      %v5128 = vsel %vm5126, %v5127, %v5123
      %v5129 = vadd.s32 %v5124, %v5128
      %v5130 = vadd.s32 %v5129, 536870912
      %v5131 = vshrl.u32 %v5130, 30
      %v5132 = vshll.u32 %v5131, 30
      %v5133 = vsub.s32 %v5129, %v5132
      %vm5134 = vcmp.lt.s32.totalorder %v5133, 0
      %v5135 = vsub.s32 0, %v5133
      %v5136 = vsel %vm5134, %v5135, %v5133
      %v5137 = vclz %v5136
      %v5138 = vsub.s32 %v5137, 2
      %vm5139 = vcmp.gt.s32.totalorder 0, %v5138
      %v5140 = vsel %vm5139, 0, %v5138
      %v5141 = vsub.s32 32, %v5140
      %v5142 = vshll.u32 %v5133, %v5140
      %v5143 = vshrl.u32 %v5125, %v5141
      %v5144 = vor.u32 %v5142, %v5143
      %v5145 = vsub.s32 4294967266, %v5140
      %v5146 = vadd.s32 %v5145, 127
      %v5147 = vshll.u32 %v5146, 23
      %v5148 = vor.u32 4788187, %v5147
      %v5149 = vand.u32 2147483647, %v5148
      %v5151 = vcvt.s32.f32 %v5144
      %v5152 = vmul.f32 %v5151, %v5149
      %v5153 = vxor.u32 %v5152, 2147483648
      %v5154 = vsel %vm5071, %v5153, %v5152
      %v5155 = vsub.s32 4, %v5131
      %v5156 = vsel %vm5071, %v5155, %v5131
      %v5157 = vsel %vm5070, %v791, %v5154
      %v5158 = vsel %vm5070, 0, %v5156
      %v5159 = vcosq.f32.pop %v5157
      %v5160 = vsinq.f32.pop %v5157
      %vm5161 = vweird.f32 %v791
      %v5162 = vadd.s32 %v5158, 3
      %v5163 = vand.u32 %v5162, 3
      %vm5164 = vcmp.lt.s32.totalorder %v5163, 2
      %vm5165 = vcmp.eq.s32.totalorder %v5163, 0
      %v5166 = vxor.u32 %v5160, 2147483648
      %v5167 = vsel %vm5165, %v5159, %v5166
      %vm5168 = vcmp.eq.s32.totalorder %v5163, 2
      %v5169 = vxor.u32 %v5159, 2147483648
      %v5170 = vsel %vm5168, %v5169, %v5160
      %v5171 = vsel %vm5164, %v5167, %v5170
      %v5172 = vsel %vm5161, nan, %v5171
      %v5173 = vand.u32 2147483647, %v796
      %vm5174 = vcmp.le.f32.partialorder %v5173, 0.7853982
      %vm5175 = vcmp.lt.s32.totalorder %v796, 0
      %v5176 = vand.u32 %v796, 2139095040
      %v5177 = vshrl.u32 %v5176, 23
      %v5178 = vsub.s32 %v5177, 127
      %v5179 = vand.u32 2147483647, %v796
      %v5180 = vand.u32 %v5179, 8388607
      %v5181 = vor.u32 %v5180, 8388608
      %v5182 = vsub.s32 0, %v5181
      %v5183 = vadd.s32 %v5178, 1
      %vm5184 = vcmp.gt.s32.totalorder %v5183, 0
      %v5185 = vsel %vm5184, %v5183, 0
      %v5186 = vshrl.u32 %v5185, 5
      %v5187 = vand.u32 %v5185, 31
      %v5188 = vsub.s32 32, %v5187
      %v5189 = vshrl.u32 683565275, %v5188
      %v5190 = vshll.u32 683565275, %v5187
      %v5191 = vshrl.u32 2475754826, %v5188
      %v5192 = vor.u32 %v5190, %v5191
      %v5193 = vshll.u32 2475754826, %v5187
      %v5194 = vshrl.u32 2131351028, %v5188
      %v5195 = vor.u32 %v5193, %v5194
      %v5196 = vshll.u32 2131351028, %v5187
      %v5197 = vshrl.u32 2102212464, %v5188
      %v5198 = vor.u32 %v5196, %v5197
      %v5199 = vshll.u32 2102212464, %v5187
      %v5200 = vshrl.u32 920167782, %v5188
      %v5201 = vor.u32 %v5199, %v5200
      %v5202 = vshll.u32 920167782, %v5187
      %v5203 = vshrl.u32 1326507024, %v5188
      %v5204 = vor.u32 %v5202, %v5203
      %vm5205 = vcmp.lt.s32.totalorder %v5186, 1
      %vm5206 = vcmp.lt.s32.totalorder %v5186, 2
      %vm5207 = vcmp.lt.s32.totalorder %v5186, 3
      %vm5208 = vcmp.lt.s32.totalorder %v5186, 4
      %v5209 = vsel %vm5205, %v5189, %v5192
      %v5210 = vsel %vm5208, %v5198, 2102212464
      %v5211 = vsel %vm5207, %v5195, %v5210
      %v5212 = vsel %vm5206, %v5209, %v5211
      %v5213 = vsel %vm5205, %v5192, %v5195
      %v5214 = vsel %vm5208, %v5201, 920167782
      %v5215 = vsel %vm5207, %v5198, %v5214
      %v5216 = vsel %vm5206, %v5213, %v5215
      %v5217 = vsel %vm5205, %v5195, %v5198
      %v5218 = vsel %vm5208, %v5204, 1326507024
      %v5219 = vsel %vm5207, %v5201, %v5218
      %v5220 = vsel %vm5206, %v5217, %v5219
      %v5221 = vshll.u32 %v5181, 8
      %v5222 = vmul.u32.u64.compose %v5221, %v5220
      %v5223 = vextract.low.u32 %v5222
      %v5224 = vextract.high.u32 %v5222
      %v5225 = vmul.u32.u64.compose %v5221, %v5216
      %v5226 = vextract.low.u32 %v5225
      %v5227 = vextract.high.u32 %v5225
      %v5228 = vmul.u32 %v5221, %v5212
      %v5229 = vadd.s32 %v5224, %v5226
      %vm5230 = vc.u32 %v5224, %v5226
      %v5231 = vadd.s32 %v5227, 1
      %v5232 = vsel %vm5230, %v5231, %v5227
      %v5233 = vadd.s32 %v5228, %v5232
      %v5234 = vadd.s32 %v5233, 536870912
      %v5235 = vshrl.u32 %v5234, 30
      %v5236 = vshll.u32 %v5235, 30
      %v5237 = vsub.s32 %v5233, %v5236
      %vm5238 = vcmp.lt.s32.totalorder %v5237, 0
      %v5239 = vsub.s32 0, %v5237
      %v5240 = vsel %vm5238, %v5239, %v5237
      %v5241 = vclz %v5240
      %v5242 = vsub.s32 %v5241, 2
      %vm5243 = vcmp.gt.s32.totalorder 0, %v5242
      %v5244 = vsel %vm5243, 0, %v5242
      %v5245 = vsub.s32 32, %v5244
      %v5246 = vshll.u32 %v5237, %v5244
      %v5247 = vshrl.u32 %v5229, %v5245
      %v5248 = vor.u32 %v5246, %v5247
      %v5249 = vsub.s32 4294967266, %v5244
      %v5250 = vadd.s32 %v5249, 127
      %v5251 = vshll.u32 %v5250, 23
      %v5252 = vor.u32 4788187, %v5251
      %v5253 = vand.u32 2147483647, %v5252
      %v5255 = vcvt.s32.f32 %v5248
      %v5256 = vmul.f32 %v5255, %v5253
      %v5257 = vxor.u32 %v5256, 2147483648
      %v5258 = vsel %vm5175, %v5257, %v5256
      %v5259 = vsub.s32 4, %v5235
      %v5260 = vsel %vm5175, %v5259, %v5235
      %v5261 = vsel %vm5174, %v796, %v5258
      %v5262 = vsel %vm5174, 0, %v5260
      %v5263 = vcosq.f32.pop %v5261
      %v5264 = vsinq.f32.pop %v5261
      %vm5265 = vweird.f32 %v796
      %v5266 = vadd.s32 %v5262, 3
      %v5267 = vand.u32 %v5266, 3
      %vm5268 = vcmp.lt.s32.totalorder %v5267, 2
      %vm5269 = vcmp.eq.s32.totalorder %v5267, 0
      %v5270 = vxor.u32 %v5264, 2147483648
      %v5271 = vsel %vm5269, %v5263, %v5270
      %vm5272 = vcmp.eq.s32.totalorder %v5267, 2
      %v5273 = vxor.u32 %v5263, 2147483648
      %v5274 = vsel %vm5272, %v5273, %v5264
      %v5275 = vsel %vm5268, %v5271, %v5274
      %v5276 = vsel %vm5265, nan, %v5275
      %v5277 = vand.u32 2147483647, %v801
      %vm5278 = vcmp.le.f32.partialorder %v5277, 0.7853982
      %vm5279 = vcmp.lt.s32.totalorder %v801, 0
      %v5280 = vand.u32 %v801, 2139095040
      %v5281 = vshrl.u32 %v5280, 23
      %v5282 = vsub.s32 %v5281, 127
      %v5283 = vand.u32 2147483647, %v801
      %v5284 = vand.u32 %v5283, 8388607
      %v5285 = vor.u32 %v5284, 8388608
      %v5286 = vsub.s32 0, %v5285
      %v5287 = vadd.s32 %v5282, 1
      %vm5288 = vcmp.gt.s32.totalorder %v5287, 0
      %v5289 = vsel %vm5288, %v5287, 0
      %v5290 = vshrl.u32 %v5289, 5
      %v5291 = vand.u32 %v5289, 31
      %v5292 = vsub.s32 32, %v5291
      %v5293 = vshrl.u32 683565275, %v5292
      %v5294 = vshll.u32 683565275, %v5291
      %v5295 = vshrl.u32 2475754826, %v5292
      %v5296 = vor.u32 %v5294, %v5295
      %v5297 = vshll.u32 2475754826, %v5291
      %v5298 = vshrl.u32 2131351028, %v5292
      %v5299 = vor.u32 %v5297, %v5298
      %v5300 = vshll.u32 2131351028, %v5291
      %v5301 = vshrl.u32 2102212464, %v5292
      %v5302 = vor.u32 %v5300, %v5301
      %v5303 = vshll.u32 2102212464, %v5291
      %v5304 = vshrl.u32 920167782, %v5292
      %v5305 = vor.u32 %v5303, %v5304
      %v5306 = vshll.u32 920167782, %v5291
      %v5307 = vshrl.u32 1326507024, %v5292
      %v5308 = vor.u32 %v5306, %v5307
      %vm5309 = vcmp.lt.s32.totalorder %v5290, 1
      %vm5310 = vcmp.lt.s32.totalorder %v5290, 2
      %vm5311 = vcmp.lt.s32.totalorder %v5290, 3
      %vm5312 = vcmp.lt.s32.totalorder %v5290, 4
      %v5313 = vsel %vm5309, %v5293, %v5296
      %v5314 = vsel %vm5312, %v5302, 2102212464
      %v5315 = vsel %vm5311, %v5299, %v5314
      %v5316 = vsel %vm5310, %v5313, %v5315
      %v5317 = vsel %vm5309, %v5296, %v5299
      %v5318 = vsel %vm5312, %v5305, 920167782
      %v5319 = vsel %vm5311, %v5302, %v5318
      %v5320 = vsel %vm5310, %v5317, %v5319
      %v5321 = vsel %vm5309, %v5299, %v5302
      %v5322 = vsel %vm5312, %v5308, 1326507024
      %v5323 = vsel %vm5311, %v5305, %v5322
      %v5324 = vsel %vm5310, %v5321, %v5323
      %v5325 = vshll.u32 %v5285, 8
      %v5326 = vmul.u32.u64.compose %v5325, %v5324
      %v5327 = vextract.low.u32 %v5326
      %v5328 = vextract.high.u32 %v5326
      %v5329 = vmul.u32.u64.compose %v5325, %v5320
      %v5330 = vextract.low.u32 %v5329
      %v5331 = vextract.high.u32 %v5329
      %v5332 = vmul.u32 %v5325, %v5316
      %v5333 = vadd.s32 %v5328, %v5330
      %vm5334 = vc.u32 %v5328, %v5330
      %v5335 = vadd.s32 %v5331, 1
      %v5336 = vsel %vm5334, %v5335, %v5331
      %v5337 = vadd.s32 %v5332, %v5336
      %v5338 = vadd.s32 %v5337, 536870912
      %v5339 = vshrl.u32 %v5338, 30
      %v5340 = vshll.u32 %v5339, 30
      %v5341 = vsub.s32 %v5337, %v5340
      %vm5342 = vcmp.lt.s32.totalorder %v5341, 0
      %v5343 = vsub.s32 0, %v5341
      %v5344 = vsel %vm5342, %v5343, %v5341
      %v5345 = vclz %v5344
      %v5346 = vsub.s32 %v5345, 2
      %vm5347 = vcmp.gt.s32.totalorder 0, %v5346
      %v5348 = vsel %vm5347, 0, %v5346
      %v5349 = vsub.s32 32, %v5348
      %v5350 = vshll.u32 %v5341, %v5348
      %v5351 = vshrl.u32 %v5333, %v5349
      %v5352 = vor.u32 %v5350, %v5351
      %v5353 = vsub.s32 4294967266, %v5348
      %v5354 = vadd.s32 %v5353, 127
      %v5355 = vshll.u32 %v5354, 23
      %v5356 = vor.u32 4788187, %v5355
      %v5357 = vand.u32 2147483647, %v5356
      %v5359 = vcvt.s32.f32 %v5352
      %v5360 = vmul.f32 %v5359, %v5357
      %v5361 = vxor.u32 %v5360, 2147483648
      %v5362 = vsel %vm5279, %v5361, %v5360
      %v5363 = vsub.s32 4, %v5339
      %v5364 = vsel %vm5279, %v5363, %v5339
      %v5365 = vsel %vm5278, %v801, %v5362
      %v5366 = vsel %vm5278, 0, %v5364
      %v5367 = vcosq.f32.pop %v5365
      %v5368 = vsinq.f32.pop %v5365
      %vm5369 = vweird.f32 %v801
      %v5370 = vadd.s32 %v5366, 3
      %v5371 = vand.u32 %v5370, 3
      %vm5372 = vcmp.lt.s32.totalorder %v5371, 2
      %vm5373 = vcmp.eq.s32.totalorder %v5371, 0
      %v5374 = vxor.u32 %v5368, 2147483648
      %v5375 = vsel %vm5373, %v5367, %v5374
      %vm5376 = vcmp.eq.s32.totalorder %v5371, 2
      %v5377 = vxor.u32 %v5367, 2147483648
      %v5378 = vsel %vm5376, %v5377, %v5368
      %v5379 = vsel %vm5372, %v5375, %v5378
      %v5380 = vsel %vm5369, nan, %v5379
      %v5381 = vand.u32 2147483647, %v806
      %vm5382 = vcmp.le.f32.partialorder %v5381, 0.7853982
      %vm5383 = vcmp.lt.s32.totalorder %v806, 0
      %v5384 = vand.u32 %v806, 2139095040
      %v5385 = vshrl.u32 %v5384, 23
      %v5386 = vsub.s32 %v5385, 127
      %v5387 = vand.u32 2147483647, %v806
      %v5388 = vand.u32 %v5387, 8388607
      %v5389 = vor.u32 %v5388, 8388608
      %v5390 = vsub.s32 0, %v5389
      %v5391 = vadd.s32 %v5386, 1
      %vm5392 = vcmp.gt.s32.totalorder %v5391, 0
      %v5393 = vsel %vm5392, %v5391, 0
      %v5394 = vshrl.u32 %v5393, 5
      %v5395 = vand.u32 %v5393, 31
      %v5396 = vsub.s32 32, %v5395
      %v5397 = vshrl.u32 683565275, %v5396
      %v5398 = vshll.u32 683565275, %v5395
      %v5399 = vshrl.u32 2475754826, %v5396
      %v5400 = vor.u32 %v5398, %v5399
      %v5401 = vshll.u32 2475754826, %v5395
      %v5402 = vshrl.u32 2131351028, %v5396
      %v5403 = vor.u32 %v5401, %v5402
      %v5404 = vshll.u32 2131351028, %v5395
      %v5405 = vshrl.u32 2102212464, %v5396
      %v5406 = vor.u32 %v5404, %v5405
      %v5407 = vshll.u32 2102212464, %v5395
      %v5408 = vshrl.u32 920167782, %v5396
      %v5409 = vor.u32 %v5407, %v5408
      %v5410 = vshll.u32 920167782, %v5395
      %v5411 = vshrl.u32 1326507024, %v5396
      %v5412 = vor.u32 %v5410, %v5411
      %vm5413 = vcmp.lt.s32.totalorder %v5394, 1
      %vm5414 = vcmp.lt.s32.totalorder %v5394, 2
      %vm5415 = vcmp.lt.s32.totalorder %v5394, 3
      %vm5416 = vcmp.lt.s32.totalorder %v5394, 4
      %v5417 = vsel %vm5413, %v5397, %v5400
      %v5418 = vsel %vm5416, %v5406, 2102212464
      %v5419 = vsel %vm5415, %v5403, %v5418
      %v5420 = vsel %vm5414, %v5417, %v5419
      %v5421 = vsel %vm5413, %v5400, %v5403
      %v5422 = vsel %vm5416, %v5409, 920167782
      %v5423 = vsel %vm5415, %v5406, %v5422
      %v5424 = vsel %vm5414, %v5421, %v5423
      %v5425 = vsel %vm5413, %v5403, %v5406
      %v5426 = vsel %vm5416, %v5412, 1326507024
      %v5427 = vsel %vm5415, %v5409, %v5426
      %v5428 = vsel %vm5414, %v5425, %v5427
      %v5429 = vshll.u32 %v5389, 8
      %v5430 = vmul.u32.u64.compose %v5429, %v5428
      %v5431 = vextract.low.u32 %v5430
      %v5432 = vextract.high.u32 %v5430
      %v5433 = vmul.u32.u64.compose %v5429, %v5424
      %v5434 = vextract.low.u32 %v5433
      %v5435 = vextract.high.u32 %v5433
      %v5436 = vmul.u32 %v5429, %v5420
      %v5437 = vadd.s32 %v5432, %v5434
      %vm5438 = vc.u32 %v5432, %v5434
      %v5439 = vadd.s32 %v5435, 1
      %v5440 = vsel %vm5438, %v5439, %v5435
      %v5441 = vadd.s32 %v5436, %v5440
      %v5442 = vadd.s32 %v5441, 536870912
      %v5443 = vshrl.u32 %v5442, 30
      %v5444 = vshll.u32 %v5443, 30
      %v5445 = vsub.s32 %v5441, %v5444
      %vm5446 = vcmp.lt.s32.totalorder %v5445, 0
      %v5447 = vsub.s32 0, %v5445
      %v5448 = vsel %vm5446, %v5447, %v5445
      %v5449 = vclz %v5448
      %v5450 = vsub.s32 %v5449, 2
      %vm5451 = vcmp.gt.s32.totalorder 0, %v5450
      %v5452 = vsel %vm5451, 0, %v5450
      %v5453 = vsub.s32 32, %v5452
      %v5454 = vshll.u32 %v5445, %v5452
      %v5455 = vshrl.u32 %v5437, %v5453
      %v5456 = vor.u32 %v5454, %v5455
      %v5457 = vsub.s32 4294967266, %v5452
      %v5458 = vadd.s32 %v5457, 127
      %v5459 = vshll.u32 %v5458, 23
      %v5460 = vor.u32 4788187, %v5459
      %v5461 = vand.u32 2147483647, %v5460
      %v5463 = vcvt.s32.f32 %v5456
      %v5464 = vmul.f32 %v5463, %v5461
      %v5465 = vxor.u32 %v5464, 2147483648
      %v5466 = vsel %vm5383, %v5465, %v5464
      %v5467 = vsub.s32 4, %v5443
      %v5468 = vsel %vm5383, %v5467, %v5443
      %v5469 = vsel %vm5382, %v806, %v5466
      %v5470 = vsel %vm5382, 0, %v5468
      %v5471 = vcosq.f32.pop %v5469
      %v5472 = vsinq.f32.pop %v5469
      %vm5473 = vweird.f32 %v806
      %v5474 = vadd.s32 %v5470, 3
      %v5475 = vand.u32 %v5474, 3
      %vm5476 = vcmp.lt.s32.totalorder %v5475, 2
      %vm5477 = vcmp.eq.s32.totalorder %v5475, 0
      %v5478 = vxor.u32 %v5472, 2147483648
      %v5479 = vsel %vm5477, %v5471, %v5478
      %vm5480 = vcmp.eq.s32.totalorder %v5475, 2
      %v5481 = vxor.u32 %v5471, 2147483648
      %v5482 = vsel %vm5480, %v5481, %v5472
      %v5483 = vsel %vm5476, %v5479, %v5482
      %v5484 = vsel %vm5473, nan, %v5483
      %v5485 = vand.u32 2147483647, %v811
      %vm5486 = vcmp.le.f32.partialorder %v5485, 0.7853982
      %vm5487 = vcmp.lt.s32.totalorder %v811, 0
      %v5488 = vand.u32 %v811, 2139095040
      %v5489 = vshrl.u32 %v5488, 23
      %v5490 = vsub.s32 %v5489, 127
      %v5491 = vand.u32 2147483647, %v811
      %v5492 = vand.u32 %v5491, 8388607
      %v5493 = vor.u32 %v5492, 8388608
      %v5494 = vsub.s32 0, %v5493
      %v5495 = vadd.s32 %v5490, 1
      %vm5496 = vcmp.gt.s32.totalorder %v5495, 0
      %v5497 = vsel %vm5496, %v5495, 0
      %v5498 = vshrl.u32 %v5497, 5
      %v5499 = vand.u32 %v5497, 31
      %v5500 = vsub.s32 32, %v5499
      %v5501 = vshrl.u32 683565275, %v5500
      %v5502 = vshll.u32 683565275, %v5499
      %v5503 = vshrl.u32 2475754826, %v5500
      %v5504 = vor.u32 %v5502, %v5503
      %v5505 = vshll.u32 2475754826, %v5499
      %v5506 = vshrl.u32 2131351028, %v5500
      %v5507 = vor.u32 %v5505, %v5506
      %v5508 = vshll.u32 2131351028, %v5499
      %v5509 = vshrl.u32 2102212464, %v5500
      %v5510 = vor.u32 %v5508, %v5509
      %v5511 = vshll.u32 2102212464, %v5499
      %v5512 = vshrl.u32 920167782, %v5500
      %v5513 = vor.u32 %v5511, %v5512
      %v5514 = vshll.u32 920167782, %v5499
      %v5515 = vshrl.u32 1326507024, %v5500
      %v5516 = vor.u32 %v5514, %v5515
      %vm5517 = vcmp.lt.s32.totalorder %v5498, 1
      %vm5518 = vcmp.lt.s32.totalorder %v5498, 2
      %vm5519 = vcmp.lt.s32.totalorder %v5498, 3
      %vm5520 = vcmp.lt.s32.totalorder %v5498, 4
      %v5521 = vsel %vm5517, %v5501, %v5504
      %v5522 = vsel %vm5520, %v5510, 2102212464
      %v5523 = vsel %vm5519, %v5507, %v5522
      %v5524 = vsel %vm5518, %v5521, %v5523
      %v5525 = vsel %vm5517, %v5504, %v5507
      %v5526 = vsel %vm5520, %v5513, 920167782
      %v5527 = vsel %vm5519, %v5510, %v5526
      %v5528 = vsel %vm5518, %v5525, %v5527
      %v5529 = vsel %vm5517, %v5507, %v5510
      %v5530 = vsel %vm5520, %v5516, 1326507024
      %v5531 = vsel %vm5519, %v5513, %v5530
      %v5532 = vsel %vm5518, %v5529, %v5531
      %v5533 = vshll.u32 %v5493, 8
      %v5534 = vmul.u32.u64.compose %v5533, %v5532
      %v5535 = vextract.low.u32 %v5534
      %v5536 = vextract.high.u32 %v5534
      %v5537 = vmul.u32.u64.compose %v5533, %v5528
      %v5538 = vextract.low.u32 %v5537
      %v5539 = vextract.high.u32 %v5537
      %v5540 = vmul.u32 %v5533, %v5524
      %v5541 = vadd.s32 %v5536, %v5538
      %vm5542 = vc.u32 %v5536, %v5538
      %v5543 = vadd.s32 %v5539, 1
      %v5544 = vsel %vm5542, %v5543, %v5539
      %v5545 = vadd.s32 %v5540, %v5544
      %v5546 = vadd.s32 %v5545, 536870912
      %v5547 = vshrl.u32 %v5546, 30
      %v5548 = vshll.u32 %v5547, 30
      %v5549 = vsub.s32 %v5545, %v5548
      %vm5550 = vcmp.lt.s32.totalorder %v5549, 0
      %v5551 = vsub.s32 0, %v5549
      %v5552 = vsel %vm5550, %v5551, %v5549
      %v5553 = vclz %v5552
      %v5554 = vsub.s32 %v5553, 2
      %vm5555 = vcmp.gt.s32.totalorder 0, %v5554
      %v5556 = vsel %vm5555, 0, %v5554
      %v5557 = vsub.s32 32, %v5556
      %v5558 = vshll.u32 %v5549, %v5556
      %v5559 = vshrl.u32 %v5541, %v5557
      %v5560 = vor.u32 %v5558, %v5559
      %v5561 = vsub.s32 4294967266, %v5556
      %v5562 = vadd.s32 %v5561, 127
      %v5563 = vshll.u32 %v5562, 23
      %v5564 = vor.u32 4788187, %v5563
      %v5565 = vand.u32 2147483647, %v5564
      %v5567 = vcvt.s32.f32 %v5560
      %v5568 = vmul.f32 %v5567, %v5565
      %v5569 = vxor.u32 %v5568, 2147483648
      %v5570 = vsel %vm5487, %v5569, %v5568
      %v5571 = vsub.s32 4, %v5547
      %v5572 = vsel %vm5487, %v5571, %v5547
      %v5573 = vsel %vm5486, %v811, %v5570
      %v5574 = vsel %vm5486, 0, %v5572
      %v5575 = vcosq.f32.pop %v5573
      %v5576 = vsinq.f32.pop %v5573
      %vm5577 = vweird.f32 %v811
      %v5578 = vadd.s32 %v5574, 3
      %v5579 = vand.u32 %v5578, 3
      %vm5580 = vcmp.lt.s32.totalorder %v5579, 2
      %vm5581 = vcmp.eq.s32.totalorder %v5579, 0
      %v5582 = vxor.u32 %v5576, 2147483648
      %v5583 = vsel %vm5581, %v5575, %v5582
      %vm5584 = vcmp.eq.s32.totalorder %v5579, 2
      %v5585 = vxor.u32 %v5575, 2147483648
      %v5586 = vsel %vm5584, %v5585, %v5576
      %v5587 = vsel %vm5580, %v5583, %v5586
      %v5588 = vsel %vm5577, nan, %v5587
      %v5589 = vand.u32 2147483647, %v816
      %vm5590 = vcmp.le.f32.partialorder %v5589, 0.7853982
      %vm5591 = vcmp.lt.s32.totalorder %v816, 0
      %v5592 = vand.u32 %v816, 2139095040
      %v5593 = vshrl.u32 %v5592, 23
      %v5594 = vsub.s32 %v5593, 127
      %v5595 = vand.u32 2147483647, %v816
      %v5596 = vand.u32 %v5595, 8388607
      %v5597 = vor.u32 %v5596, 8388608
      %v5598 = vsub.s32 0, %v5597
      %v5599 = vadd.s32 %v5594, 1
      %vm5600 = vcmp.gt.s32.totalorder %v5599, 0
      %v5601 = vsel %vm5600, %v5599, 0
      %v5602 = vshrl.u32 %v5601, 5
      %v5603 = vand.u32 %v5601, 31
      %v5604 = vsub.s32 32, %v5603
      %v5605 = vshrl.u32 683565275, %v5604
      %v5606 = vshll.u32 683565275, %v5603
      %v5607 = vshrl.u32 2475754826, %v5604
      %v5608 = vor.u32 %v5606, %v5607
      %v5609 = vshll.u32 2475754826, %v5603
      %v5610 = vshrl.u32 2131351028, %v5604
      %v5611 = vor.u32 %v5609, %v5610
      %v5612 = vshll.u32 2131351028, %v5603
      %v5613 = vshrl.u32 2102212464, %v5604
      %v5614 = vor.u32 %v5612, %v5613
      %v5615 = vshll.u32 2102212464, %v5603
      %v5616 = vshrl.u32 920167782, %v5604
      %v5617 = vor.u32 %v5615, %v5616
      %v5618 = vshll.u32 920167782, %v5603
      %v5619 = vshrl.u32 1326507024, %v5604
      %v5620 = vor.u32 %v5618, %v5619
      %vm5621 = vcmp.lt.s32.totalorder %v5602, 1
      %vm5622 = vcmp.lt.s32.totalorder %v5602, 2
      %vm5623 = vcmp.lt.s32.totalorder %v5602, 3
      %vm5624 = vcmp.lt.s32.totalorder %v5602, 4
      %v5625 = vsel %vm5621, %v5605, %v5608
      %v5626 = vsel %vm5624, %v5614, 2102212464
      %v5627 = vsel %vm5623, %v5611, %v5626
      %v5628 = vsel %vm5622, %v5625, %v5627
      %v5629 = vsel %vm5621, %v5608, %v5611
      %v5630 = vsel %vm5624, %v5617, 920167782
      %v5631 = vsel %vm5623, %v5614, %v5630
      %v5632 = vsel %vm5622, %v5629, %v5631
      %v5633 = vsel %vm5621, %v5611, %v5614
      %v5634 = vsel %vm5624, %v5620, 1326507024
      %v5635 = vsel %vm5623, %v5617, %v5634
      %v5636 = vsel %vm5622, %v5633, %v5635
      %v5637 = vshll.u32 %v5597, 8
      %v5638 = vmul.u32.u64.compose %v5637, %v5636
      %v5639 = vextract.low.u32 %v5638
      %v5640 = vextract.high.u32 %v5638
      %v5641 = vmul.u32.u64.compose %v5637, %v5632
      %v5642 = vextract.low.u32 %v5641
      %v5643 = vextract.high.u32 %v5641
      %v5644 = vmul.u32 %v5637, %v5628
      %v5645 = vadd.s32 %v5640, %v5642
      %vm5646 = vc.u32 %v5640, %v5642
      %v5647 = vadd.s32 %v5643, 1
      %v5648 = vsel %vm5646, %v5647, %v5643
      %v5649 = vadd.s32 %v5644, %v5648
      %v5650 = vadd.s32 %v5649, 536870912
      %v5651 = vshrl.u32 %v5650, 30
      %v5652 = vshll.u32 %v5651, 30
      %v5653 = vsub.s32 %v5649, %v5652
      %vm5654 = vcmp.lt.s32.totalorder %v5653, 0
      %v5655 = vsub.s32 0, %v5653
      %v5656 = vsel %vm5654, %v5655, %v5653
      %v5657 = vclz %v5656
      %v5658 = vsub.s32 %v5657, 2
      %vm5659 = vcmp.gt.s32.totalorder 0, %v5658
      %v5660 = vsel %vm5659, 0, %v5658
      %v5661 = vsub.s32 32, %v5660
      %v5662 = vshll.u32 %v5653, %v5660
      %v5663 = vshrl.u32 %v5645, %v5661
      %v5664 = vor.u32 %v5662, %v5663
      %v5665 = vsub.s32 4294967266, %v5660
      %v5666 = vadd.s32 %v5665, 127
      %v5667 = vshll.u32 %v5666, 23
      %v5668 = vor.u32 4788187, %v5667
      %v5669 = vand.u32 2147483647, %v5668
      %v5671 = vcvt.s32.f32 %v5664
      %v5672 = vmul.f32 %v5671, %v5669
      %v5673 = vxor.u32 %v5672, 2147483648
      %v5674 = vsel %vm5591, %v5673, %v5672
      %v5675 = vsub.s32 4, %v5651
      %v5676 = vsel %vm5591, %v5675, %v5651
      %v5677 = vsel %vm5590, %v816, %v5674
      %v5678 = vsel %vm5590, 0, %v5676
      %v5679 = vcosq.f32.pop %v5677
      %v5680 = vsinq.f32.pop %v5677
      %vm5681 = vweird.f32 %v816
      %v5682 = vadd.s32 %v5678, 3
      %v5683 = vand.u32 %v5682, 3
      %vm5684 = vcmp.lt.s32.totalorder %v5683, 2
      %vm5685 = vcmp.eq.s32.totalorder %v5683, 0
      %v5686 = vxor.u32 %v5680, 2147483648
      %v5687 = vsel %vm5685, %v5679, %v5686
      %vm5688 = vcmp.eq.s32.totalorder %v5683, 2
      %v5689 = vxor.u32 %v5679, 2147483648
      %v5690 = vsel %vm5688, %v5689, %v5680
      %v5691 = vsel %vm5684, %v5687, %v5690
      %v5692 = vsel %vm5681, nan, %v5691
      %v5693 = vand.u32 2147483647, %v821
      %vm5694 = vcmp.le.f32.partialorder %v5693, 0.7853982
      %vm5695 = vcmp.lt.s32.totalorder %v821, 0
      %v5696 = vand.u32 %v821, 2139095040
      %v5697 = vshrl.u32 %v5696, 23
      %v5698 = vsub.s32 %v5697, 127
      %v5699 = vand.u32 2147483647, %v821
      %v5700 = vand.u32 %v5699, 8388607
      %v5701 = vor.u32 %v5700, 8388608
      %v5702 = vsub.s32 0, %v5701
      %v5703 = vadd.s32 %v5698, 1
      %vm5704 = vcmp.gt.s32.totalorder %v5703, 0
      %v5705 = vsel %vm5704, %v5703, 0
      %v5706 = vshrl.u32 %v5705, 5
      %v5707 = vand.u32 %v5705, 31
      %v5708 = vsub.s32 32, %v5707
      %v5709 = vshrl.u32 683565275, %v5708
      %v5710 = vshll.u32 683565275, %v5707
      %v5711 = vshrl.u32 2475754826, %v5708
      %v5712 = vor.u32 %v5710, %v5711
      %v5713 = vshll.u32 2475754826, %v5707
      %v5714 = vshrl.u32 2131351028, %v5708
      %v5715 = vor.u32 %v5713, %v5714
      %v5716 = vshll.u32 2131351028, %v5707
      %v5717 = vshrl.u32 2102212464, %v5708
      %v5718 = vor.u32 %v5716, %v5717
      %v5719 = vshll.u32 2102212464, %v5707
      %v5720 = vshrl.u32 920167782, %v5708
      %v5721 = vor.u32 %v5719, %v5720
      %v5722 = vshll.u32 920167782, %v5707
      %v5723 = vshrl.u32 1326507024, %v5708
      %v5724 = vor.u32 %v5722, %v5723
      %vm5725 = vcmp.lt.s32.totalorder %v5706, 1
      %vm5726 = vcmp.lt.s32.totalorder %v5706, 2
      %vm5727 = vcmp.lt.s32.totalorder %v5706, 3
      %vm5728 = vcmp.lt.s32.totalorder %v5706, 4
      %v5729 = vsel %vm5725, %v5709, %v5712
      %v5730 = vsel %vm5728, %v5718, 2102212464
      %v5731 = vsel %vm5727, %v5715, %v5730
      %v5732 = vsel %vm5726, %v5729, %v5731
      %v5733 = vsel %vm5725, %v5712, %v5715
      %v5734 = vsel %vm5728, %v5721, 920167782
      %v5735 = vsel %vm5727, %v5718, %v5734
      %v5736 = vsel %vm5726, %v5733, %v5735
      %v5737 = vsel %vm5725, %v5715, %v5718
      %v5738 = vsel %vm5728, %v5724, 1326507024
      %v5739 = vsel %vm5727, %v5721, %v5738
      %v5740 = vsel %vm5726, %v5737, %v5739
      %v5741 = vshll.u32 %v5701, 8
      %v5742 = vmul.u32.u64.compose %v5741, %v5740
      %v5743 = vextract.low.u32 %v5742
      %v5744 = vextract.high.u32 %v5742
      %v5745 = vmul.u32.u64.compose %v5741, %v5736
      %v5746 = vextract.low.u32 %v5745
      %v5747 = vextract.high.u32 %v5745
      %v5748 = vmul.u32 %v5741, %v5732
      %v5749 = vadd.s32 %v5744, %v5746
      %vm5750 = vc.u32 %v5744, %v5746
      %v5751 = vadd.s32 %v5747, 1
      %v5752 = vsel %vm5750, %v5751, %v5747
      %v5753 = vadd.s32 %v5748, %v5752
      %v5754 = vadd.s32 %v5753, 536870912
      %v5755 = vshrl.u32 %v5754, 30
      %v5756 = vshll.u32 %v5755, 30
      %v5757 = vsub.s32 %v5753, %v5756
      %vm5758 = vcmp.lt.s32.totalorder %v5757, 0
      %v5759 = vsub.s32 0, %v5757
      %v5760 = vsel %vm5758, %v5759, %v5757
      %v5761 = vclz %v5760
      %v5762 = vsub.s32 %v5761, 2
      %vm5763 = vcmp.gt.s32.totalorder 0, %v5762
      %v5764 = vsel %vm5763, 0, %v5762
      %v5765 = vsub.s32 32, %v5764
      %v5766 = vshll.u32 %v5757, %v5764
      %v5767 = vshrl.u32 %v5749, %v5765
      %v5768 = vor.u32 %v5766, %v5767
      %v5769 = vsub.s32 4294967266, %v5764
      %v5770 = vadd.s32 %v5769, 127
      %v5771 = vshll.u32 %v5770, 23
      %v5772 = vor.u32 4788187, %v5771
      %v5773 = vand.u32 2147483647, %v5772
      %v5775 = vcvt.s32.f32 %v5768
      %v5776 = vmul.f32 %v5775, %v5773
      %v5777 = vxor.u32 %v5776, 2147483648
      %v5778 = vsel %vm5695, %v5777, %v5776
      %v5779 = vsub.s32 4, %v5755
      %v5780 = vsel %vm5695, %v5779, %v5755
      %v5781 = vsel %vm5694, %v821, %v5778
      %v5782 = vsel %vm5694, 0, %v5780
      %v5783 = vcosq.f32.pop %v5781
      %v5784 = vsinq.f32.pop %v5781
      %vm5785 = vweird.f32 %v821
      %v5786 = vadd.s32 %v5782, 3
      %v5787 = vand.u32 %v5786, 3
      %vm5788 = vcmp.lt.s32.totalorder %v5787, 2
      %vm5789 = vcmp.eq.s32.totalorder %v5787, 0
      %v5790 = vxor.u32 %v5784, 2147483648
      %v5791 = vsel %vm5789, %v5783, %v5790
      %vm5792 = vcmp.eq.s32.totalorder %v5787, 2
      %v5793 = vxor.u32 %v5783, 2147483648
      %v5794 = vsel %vm5792, %v5793, %v5784
      %v5795 = vsel %vm5788, %v5791, %v5794
      %v5796 = vsel %vm5785, nan, %v5795
      %v5797 = vand.u32 2147483647, %v826
      %vm5798 = vcmp.le.f32.partialorder %v5797, 0.7853982
      %vm5799 = vcmp.lt.s32.totalorder %v826, 0
      %v5800 = vand.u32 %v826, 2139095040
      %v5801 = vshrl.u32 %v5800, 23
      %v5802 = vsub.s32 %v5801, 127
      %v5803 = vand.u32 2147483647, %v826
      %v5804 = vand.u32 %v5803, 8388607
      %v5805 = vor.u32 %v5804, 8388608
      %v5806 = vsub.s32 0, %v5805
      %v5807 = vadd.s32 %v5802, 1
      %vm5808 = vcmp.gt.s32.totalorder %v5807, 0
      %v5809 = vsel %vm5808, %v5807, 0
      %v5810 = vshrl.u32 %v5809, 5
      %v5811 = vand.u32 %v5809, 31
      %v5812 = vsub.s32 32, %v5811
      %v5813 = vshrl.u32 683565275, %v5812
      %v5814 = vshll.u32 683565275, %v5811
      %v5815 = vshrl.u32 2475754826, %v5812
      %v5816 = vor.u32 %v5814, %v5815
      %v5817 = vshll.u32 2475754826, %v5811
      %v5818 = vshrl.u32 2131351028, %v5812
      %v5819 = vor.u32 %v5817, %v5818
      %v5820 = vshll.u32 2131351028, %v5811
      %v5821 = vshrl.u32 2102212464, %v5812
      %v5822 = vor.u32 %v5820, %v5821
      %v5823 = vshll.u32 2102212464, %v5811
      %v5824 = vshrl.u32 920167782, %v5812
      %v5825 = vor.u32 %v5823, %v5824
      %v5826 = vshll.u32 920167782, %v5811
      %v5827 = vshrl.u32 1326507024, %v5812
      %v5828 = vor.u32 %v5826, %v5827
      %vm5829 = vcmp.lt.s32.totalorder %v5810, 1
      %vm5830 = vcmp.lt.s32.totalorder %v5810, 2
      %vm5831 = vcmp.lt.s32.totalorder %v5810, 3
      %vm5832 = vcmp.lt.s32.totalorder %v5810, 4
      %v5833 = vsel %vm5829, %v5813, %v5816
      %v5834 = vsel %vm5832, %v5822, 2102212464
      %v5835 = vsel %vm5831, %v5819, %v5834
      %v5836 = vsel %vm5830, %v5833, %v5835
      %v5837 = vsel %vm5829, %v5816, %v5819
      %v5838 = vsel %vm5832, %v5825, 920167782
      %v5839 = vsel %vm5831, %v5822, %v5838
      %v5840 = vsel %vm5830, %v5837, %v5839
      %v5841 = vsel %vm5829, %v5819, %v5822
      %v5842 = vsel %vm5832, %v5828, 1326507024
      %v5843 = vsel %vm5831, %v5825, %v5842
      %v5844 = vsel %vm5830, %v5841, %v5843
      %v5845 = vshll.u32 %v5805, 8
      %v5846 = vmul.u32.u64.compose %v5845, %v5844
      %v5847 = vextract.low.u32 %v5846
      %v5848 = vextract.high.u32 %v5846
      %v5849 = vmul.u32.u64.compose %v5845, %v5840
      %v5850 = vextract.low.u32 %v5849
      %v5851 = vextract.high.u32 %v5849
      %v5852 = vmul.u32 %v5845, %v5836
      %v5853 = vadd.s32 %v5848, %v5850
      %vm5854 = vc.u32 %v5848, %v5850
      %v5855 = vadd.s32 %v5851, 1
      %v5856 = vsel %vm5854, %v5855, %v5851
      %v5857 = vadd.s32 %v5852, %v5856
      %v5858 = vadd.s32 %v5857, 536870912
      %v5859 = vshrl.u32 %v5858, 30
      %v5860 = vshll.u32 %v5859, 30
      %v5861 = vsub.s32 %v5857, %v5860
      %vm5862 = vcmp.lt.s32.totalorder %v5861, 0
      %v5863 = vsub.s32 0, %v5861
      %v5864 = vsel %vm5862, %v5863, %v5861
      %v5865 = vclz %v5864
      %v5866 = vsub.s32 %v5865, 2
      %vm5867 = vcmp.gt.s32.totalorder 0, %v5866
      %v5868 = vsel %vm5867, 0, %v5866
      %v5869 = vsub.s32 32, %v5868
      %v5870 = vshll.u32 %v5861, %v5868
      %v5871 = vshrl.u32 %v5853, %v5869
      %v5872 = vor.u32 %v5870, %v5871
      %v5873 = vsub.s32 4294967266, %v5868
      %v5874 = vadd.s32 %v5873, 127
      %v5875 = vshll.u32 %v5874, 23
      %v5876 = vor.u32 4788187, %v5875
      %v5877 = vand.u32 2147483647, %v5876
      %v5879 = vcvt.s32.f32 %v5872
      %v5880 = vmul.f32 %v5879, %v5877
      %v5881 = vxor.u32 %v5880, 2147483648
      %v5882 = vsel %vm5799, %v5881, %v5880
      %v5883 = vsub.s32 4, %v5859
      %v5884 = vsel %vm5799, %v5883, %v5859
      %v5885 = vsel %vm5798, %v826, %v5882
      %v5886 = vsel %vm5798, 0, %v5884
      %v5887 = vcosq.f32.pop %v5885
      %v5888 = vsinq.f32.pop %v5885
      %vm5889 = vweird.f32 %v826
      %v5890 = vadd.s32 %v5886, 3
      %v5891 = vand.u32 %v5890, 3
      %vm5892 = vcmp.lt.s32.totalorder %v5891, 2
      %vm5893 = vcmp.eq.s32.totalorder %v5891, 0
      %v5894 = vxor.u32 %v5888, 2147483648
      %v5895 = vsel %vm5893, %v5887, %v5894
      %vm5896 = vcmp.eq.s32.totalorder %v5891, 2
      %v5897 = vxor.u32 %v5887, 2147483648
      %v5898 = vsel %vm5896, %v5897, %v5888
      %v5899 = vsel %vm5892, %v5895, %v5898
      %v5900 = vsel %vm5889, nan, %v5899
      %v5901 = vand.u32 2147483647, %v831
      %vm5902 = vcmp.le.f32.partialorder %v5901, 0.7853982
      %vm5903 = vcmp.lt.s32.totalorder %v831, 0
      %v5904 = vand.u32 %v831, 2139095040
      %v5905 = vshrl.u32 %v5904, 23
      %v5906 = vsub.s32 %v5905, 127
      %v5907 = vand.u32 2147483647, %v831
      %v5908 = vand.u32 %v5907, 8388607
      %v5909 = vor.u32 %v5908, 8388608
      %v5910 = vsub.s32 0, %v5909
      %v5911 = vadd.s32 %v5906, 1
      %vm5912 = vcmp.gt.s32.totalorder %v5911, 0
      %v5913 = vsel %vm5912, %v5911, 0
      %v5914 = vshrl.u32 %v5913, 5
      %v5915 = vand.u32 %v5913, 31
      %v5916 = vsub.s32 32, %v5915
      %v5917 = vshrl.u32 683565275, %v5916
      %v5918 = vshll.u32 683565275, %v5915
      %v5919 = vshrl.u32 2475754826, %v5916
      %v5920 = vor.u32 %v5918, %v5919
      %v5921 = vshll.u32 2475754826, %v5915
      %v5922 = vshrl.u32 2131351028, %v5916
      %v5923 = vor.u32 %v5921, %v5922
      %v5924 = vshll.u32 2131351028, %v5915
      %v5925 = vshrl.u32 2102212464, %v5916
      %v5926 = vor.u32 %v5924, %v5925
      %v5927 = vshll.u32 2102212464, %v5915
      %v5928 = vshrl.u32 920167782, %v5916
      %v5929 = vor.u32 %v5927, %v5928
      %v5930 = vshll.u32 920167782, %v5915
      %v5931 = vshrl.u32 1326507024, %v5916
      %v5932 = vor.u32 %v5930, %v5931
      %vm5933 = vcmp.lt.s32.totalorder %v5914, 1
      %vm5934 = vcmp.lt.s32.totalorder %v5914, 2
      %vm5935 = vcmp.lt.s32.totalorder %v5914, 3
      %vm5936 = vcmp.lt.s32.totalorder %v5914, 4
      %v5937 = vsel %vm5933, %v5917, %v5920
      %v5938 = vsel %vm5936, %v5926, 2102212464
      %v5939 = vsel %vm5935, %v5923, %v5938
      %v5940 = vsel %vm5934, %v5937, %v5939
      %v5941 = vsel %vm5933, %v5920, %v5923
      %v5942 = vsel %vm5936, %v5929, 920167782
      %v5943 = vsel %vm5935, %v5926, %v5942
      %v5944 = vsel %vm5934, %v5941, %v5943
      %v5945 = vsel %vm5933, %v5923, %v5926
      %v5946 = vsel %vm5936, %v5932, 1326507024
      %v5947 = vsel %vm5935, %v5929, %v5946
      %v5948 = vsel %vm5934, %v5945, %v5947
      %v5949 = vshll.u32 %v5909, 8
      %v5950 = vmul.u32.u64.compose %v5949, %v5948
      %v5951 = vextract.low.u32 %v5950
      %v5952 = vextract.high.u32 %v5950
      %v5953 = vmul.u32.u64.compose %v5949, %v5944
      %v5954 = vextract.low.u32 %v5953
      %v5955 = vextract.high.u32 %v5953
      %v5956 = vmul.u32 %v5949, %v5940
      %v5957 = vadd.s32 %v5952, %v5954
      %vm5958 = vc.u32 %v5952, %v5954
      %v5959 = vadd.s32 %v5955, 1
      %v5960 = vsel %vm5958, %v5959, %v5955
      %v5961 = vadd.s32 %v5956, %v5960
      %v5962 = vadd.s32 %v5961, 536870912
      %v5963 = vshrl.u32 %v5962, 30
      %v5964 = vshll.u32 %v5963, 30
      %v5965 = vsub.s32 %v5961, %v5964
      %vm5966 = vcmp.lt.s32.totalorder %v5965, 0
      %v5967 = vsub.s32 0, %v5965
      %v5968 = vsel %vm5966, %v5967, %v5965
      %v5969 = vclz %v5968
      %v5970 = vsub.s32 %v5969, 2
      %vm5971 = vcmp.gt.s32.totalorder 0, %v5970
      %v5972 = vsel %vm5971, 0, %v5970
      %v5973 = vsub.s32 32, %v5972
      %v5974 = vshll.u32 %v5965, %v5972
      %v5975 = vshrl.u32 %v5957, %v5973
      %v5976 = vor.u32 %v5974, %v5975
      %v5977 = vsub.s32 4294967266, %v5972
      %v5978 = vadd.s32 %v5977, 127
      %v5979 = vshll.u32 %v5978, 23
      %v5980 = vor.u32 4788187, %v5979
      %v5981 = vand.u32 2147483647, %v5980
      %v5983 = vcvt.s32.f32 %v5976
      %v5984 = vmul.f32 %v5983, %v5981
      %v5985 = vxor.u32 %v5984, 2147483648
      %v5986 = vsel %vm5903, %v5985, %v5984
      %v5987 = vsub.s32 4, %v5963
      %v5988 = vsel %vm5903, %v5987, %v5963
      %v5989 = vsel %vm5902, %v831, %v5986
      %v5990 = vsel %vm5902, 0, %v5988
      %v5991 = vcosq.f32.pop %v5989
      %v5992 = vsinq.f32.pop %v5989
      %vm5993 = vweird.f32 %v831
      %v5994 = vadd.s32 %v5990, 3
      %v5995 = vand.u32 %v5994, 3
      %vm5996 = vcmp.lt.s32.totalorder %v5995, 2
      %vm5997 = vcmp.eq.s32.totalorder %v5995, 0
      %v5998 = vxor.u32 %v5992, 2147483648
      %v5999 = vsel %vm5997, %v5991, %v5998
      %vm6000 = vcmp.eq.s32.totalorder %v5995, 2
      %v6001 = vxor.u32 %v5991, 2147483648
      %v6002 = vsel %vm6000, %v6001, %v5992
      %v6003 = vsel %vm5996, %v5999, %v6002
      %v6004 = vsel %vm5993, nan, %v6003
      %v6005 = vand.u32 2147483647, %v836
      %vm6006 = vcmp.le.f32.partialorder %v6005, 0.7853982
      %vm6007 = vcmp.lt.s32.totalorder %v836, 0
      %v6008 = vand.u32 %v836, 2139095040
      %v6009 = vshrl.u32 %v6008, 23
      %v6010 = vsub.s32 %v6009, 127
      %v6011 = vand.u32 2147483647, %v836
      %v6012 = vand.u32 %v6011, 8388607
      %v6013 = vor.u32 %v6012, 8388608
      %v6014 = vsub.s32 0, %v6013
      %v6015 = vadd.s32 %v6010, 1
      %vm6016 = vcmp.gt.s32.totalorder %v6015, 0
      %v6017 = vsel %vm6016, %v6015, 0
      %v6018 = vshrl.u32 %v6017, 5
      %v6019 = vand.u32 %v6017, 31
      %v6020 = vsub.s32 32, %v6019
      %v6021 = vshrl.u32 683565275, %v6020
      %v6022 = vshll.u32 683565275, %v6019
      %v6023 = vshrl.u32 2475754826, %v6020
      %v6024 = vor.u32 %v6022, %v6023
      %v6025 = vshll.u32 2475754826, %v6019
      %v6026 = vshrl.u32 2131351028, %v6020
      %v6027 = vor.u32 %v6025, %v6026
      %v6028 = vshll.u32 2131351028, %v6019
      %v6029 = vshrl.u32 2102212464, %v6020
      %v6030 = vor.u32 %v6028, %v6029
      %v6031 = vshll.u32 2102212464, %v6019
      %v6032 = vshrl.u32 920167782, %v6020
      %v6033 = vor.u32 %v6031, %v6032
      %v6034 = vshll.u32 920167782, %v6019
      %v6035 = vshrl.u32 1326507024, %v6020
      %v6036 = vor.u32 %v6034, %v6035
      %vm6037 = vcmp.lt.s32.totalorder %v6018, 1
      %vm6038 = vcmp.lt.s32.totalorder %v6018, 2
      %vm6039 = vcmp.lt.s32.totalorder %v6018, 3
      %vm6040 = vcmp.lt.s32.totalorder %v6018, 4
      %v6041 = vsel %vm6037, %v6021, %v6024
      %v6042 = vsel %vm6040, %v6030, 2102212464
      %v6043 = vsel %vm6039, %v6027, %v6042
      %v6044 = vsel %vm6038, %v6041, %v6043
      %v6045 = vsel %vm6037, %v6024, %v6027
      %v6046 = vsel %vm6040, %v6033, 920167782
      %v6047 = vsel %vm6039, %v6030, %v6046
      %v6048 = vsel %vm6038, %v6045, %v6047
      %v6049 = vsel %vm6037, %v6027, %v6030
      %v6050 = vsel %vm6040, %v6036, 1326507024
      %v6051 = vsel %vm6039, %v6033, %v6050
      %v6052 = vsel %vm6038, %v6049, %v6051
      %v6053 = vshll.u32 %v6013, 8
      %v6054 = vmul.u32.u64.compose %v6053, %v6052
      %v6055 = vextract.low.u32 %v6054
      %v6056 = vextract.high.u32 %v6054
      %v6057 = vmul.u32.u64.compose %v6053, %v6048
      %v6058 = vextract.low.u32 %v6057
      %v6059 = vextract.high.u32 %v6057
      %v6060 = vmul.u32 %v6053, %v6044
      %v6061 = vadd.s32 %v6056, %v6058
      %vm6062 = vc.u32 %v6056, %v6058
      %v6063 = vadd.s32 %v6059, 1
      %v6064 = vsel %vm6062, %v6063, %v6059
      %v6065 = vadd.s32 %v6060, %v6064
      %v6066 = vadd.s32 %v6065, 536870912
      %v6067 = vshrl.u32 %v6066, 30
      %v6068 = vshll.u32 %v6067, 30
      %v6069 = vsub.s32 %v6065, %v6068
      %vm6070 = vcmp.lt.s32.totalorder %v6069, 0
      %v6071 = vsub.s32 0, %v6069
      %v6072 = vsel %vm6070, %v6071, %v6069
      %v6073 = vclz %v6072
      %v6074 = vsub.s32 %v6073, 2
      %vm6075 = vcmp.gt.s32.totalorder 0, %v6074
      %v6076 = vsel %vm6075, 0, %v6074
      %v6077 = vsub.s32 32, %v6076
      %v6078 = vshll.u32 %v6069, %v6076
      %v6079 = vshrl.u32 %v6061, %v6077
      %v6080 = vor.u32 %v6078, %v6079
      %v6081 = vsub.s32 4294967266, %v6076
      %v6082 = vadd.s32 %v6081, 127
      %v6083 = vshll.u32 %v6082, 23
      %v6084 = vor.u32 4788187, %v6083
      %v6085 = vand.u32 2147483647, %v6084
      %v6087 = vcvt.s32.f32 %v6080
      %v6088 = vmul.f32 %v6087, %v6085
      %v6089 = vxor.u32 %v6088, 2147483648
      %v6090 = vsel %vm6007, %v6089, %v6088
      %v6091 = vsub.s32 4, %v6067
      %v6092 = vsel %vm6007, %v6091, %v6067
      %v6093 = vsel %vm6006, %v836, %v6090
      %v6094 = vsel %vm6006, 0, %v6092
      %v6095 = vcosq.f32.pop %v6093
      %v6096 = vsinq.f32.pop %v6093
      %vm6097 = vweird.f32 %v836
      %v6098 = vadd.s32 %v6094, 3
      %v6099 = vand.u32 %v6098, 3
      %vm6100 = vcmp.lt.s32.totalorder %v6099, 2
      %vm6101 = vcmp.eq.s32.totalorder %v6099, 0
      %v6102 = vxor.u32 %v6096, 2147483648
      %v6103 = vsel %vm6101, %v6095, %v6102
      %vm6104 = vcmp.eq.s32.totalorder %v6099, 2
      %v6105 = vxor.u32 %v6095, 2147483648
      %v6106 = vsel %vm6104, %v6105, %v6096
      %v6107 = vsel %vm6100, %v6103, %v6106
      %v6108 = vsel %vm6097, nan, %v6107
      %v6109 = vand.u32 2147483647, %v841
      %vm6110 = vcmp.le.f32.partialorder %v6109, 0.7853982
      %vm6111 = vcmp.lt.s32.totalorder %v841, 0
      %v6112 = vand.u32 %v841, 2139095040
      %v6113 = vshrl.u32 %v6112, 23
      %v6114 = vsub.s32 %v6113, 127
      %v6115 = vand.u32 2147483647, %v841
      %v6116 = vand.u32 %v6115, 8388607
      %v6117 = vor.u32 %v6116, 8388608
      %v6118 = vsub.s32 0, %v6117
      %v6119 = vadd.s32 %v6114, 1
      %vm6120 = vcmp.gt.s32.totalorder %v6119, 0
      %v6121 = vsel %vm6120, %v6119, 0
      %v6122 = vshrl.u32 %v6121, 5
      %v6123 = vand.u32 %v6121, 31
      %v6124 = vsub.s32 32, %v6123
      %v6125 = vshrl.u32 683565275, %v6124
      %v6126 = vshll.u32 683565275, %v6123
      %v6127 = vshrl.u32 2475754826, %v6124
      %v6128 = vor.u32 %v6126, %v6127
      %v6129 = vshll.u32 2475754826, %v6123
      %v6130 = vshrl.u32 2131351028, %v6124
      %v6131 = vor.u32 %v6129, %v6130
      %v6132 = vshll.u32 2131351028, %v6123
      %v6133 = vshrl.u32 2102212464, %v6124
      %v6134 = vor.u32 %v6132, %v6133
      %v6135 = vshll.u32 2102212464, %v6123
      %v6136 = vshrl.u32 920167782, %v6124
      %v6137 = vor.u32 %v6135, %v6136
      %v6138 = vshll.u32 920167782, %v6123
      %v6139 = vshrl.u32 1326507024, %v6124
      %v6140 = vor.u32 %v6138, %v6139
      %vm6141 = vcmp.lt.s32.totalorder %v6122, 1
      %vm6142 = vcmp.lt.s32.totalorder %v6122, 2
      %vm6143 = vcmp.lt.s32.totalorder %v6122, 3
      %vm6144 = vcmp.lt.s32.totalorder %v6122, 4
      %v6145 = vsel %vm6141, %v6125, %v6128
      %v6146 = vsel %vm6144, %v6134, 2102212464
      %v6147 = vsel %vm6143, %v6131, %v6146
      %v6148 = vsel %vm6142, %v6145, %v6147
      %v6149 = vsel %vm6141, %v6128, %v6131
      %v6150 = vsel %vm6144, %v6137, 920167782
      %v6151 = vsel %vm6143, %v6134, %v6150
      %v6152 = vsel %vm6142, %v6149, %v6151
      %v6153 = vsel %vm6141, %v6131, %v6134
      %v6154 = vsel %vm6144, %v6140, 1326507024
      %v6155 = vsel %vm6143, %v6137, %v6154
      %v6156 = vsel %vm6142, %v6153, %v6155
      %v6157 = vshll.u32 %v6117, 8
      %v6158 = vmul.u32.u64.compose %v6157, %v6156
      %v6159 = vextract.low.u32 %v6158
      %v6160 = vextract.high.u32 %v6158
      %v6161 = vmul.u32.u64.compose %v6157, %v6152
      %v6162 = vextract.low.u32 %v6161
      %v6163 = vextract.high.u32 %v6161
      %v6164 = vmul.u32 %v6157, %v6148
      %v6165 = vadd.s32 %v6160, %v6162
      %vm6166 = vc.u32 %v6160, %v6162
      %v6167 = vadd.s32 %v6163, 1
      %v6168 = vsel %vm6166, %v6167, %v6163
      %v6169 = vadd.s32 %v6164, %v6168
      %v6170 = vadd.s32 %v6169, 536870912
      %v6171 = vshrl.u32 %v6170, 30
      %v6172 = vshll.u32 %v6171, 30
      %v6173 = vsub.s32 %v6169, %v6172
      %vm6174 = vcmp.lt.s32.totalorder %v6173, 0
      %v6175 = vsub.s32 0, %v6173
      %v6176 = vsel %vm6174, %v6175, %v6173
      %v6177 = vclz %v6176
      %v6178 = vsub.s32 %v6177, 2
      %vm6179 = vcmp.gt.s32.totalorder 0, %v6178
      %v6180 = vsel %vm6179, 0, %v6178
      %v6181 = vsub.s32 32, %v6180
      %v6182 = vshll.u32 %v6173, %v6180
      %v6183 = vshrl.u32 %v6165, %v6181
      %v6184 = vor.u32 %v6182, %v6183
      %v6185 = vsub.s32 4294967266, %v6180
      %v6186 = vadd.s32 %v6185, 127
      %v6187 = vshll.u32 %v6186, 23
      %v6188 = vor.u32 4788187, %v6187
      %v6189 = vand.u32 2147483647, %v6188
      %v6191 = vcvt.s32.f32 %v6184
      %v6192 = vmul.f32 %v6191, %v6189
      %v6193 = vxor.u32 %v6192, 2147483648
      %v6194 = vsel %vm6111, %v6193, %v6192
      %v6195 = vsub.s32 4, %v6171
      %v6196 = vsel %vm6111, %v6195, %v6171
      %v6197 = vsel %vm6110, %v841, %v6194
      %v6198 = vsel %vm6110, 0, %v6196
      %v6199 = vcosq.f32.pop %v6197
      %v6200 = vsinq.f32.pop %v6197
      %vm6201 = vweird.f32 %v841
      %v6202 = vadd.s32 %v6198, 3
      %v6203 = vand.u32 %v6202, 3
      %vm6204 = vcmp.lt.s32.totalorder %v6203, 2
      %vm6205 = vcmp.eq.s32.totalorder %v6203, 0
      %v6206 = vxor.u32 %v6200, 2147483648
      %v6207 = vsel %vm6205, %v6199, %v6206
      %vm6208 = vcmp.eq.s32.totalorder %v6203, 2
      %v6209 = vxor.u32 %v6199, 2147483648
      %v6210 = vsel %vm6208, %v6209, %v6200
      %v6211 = vsel %vm6204, %v6207, %v6210
      %v6212 = vsel %vm6201, nan, %v6211
      %v6213 = vand.u32 2147483647, %v846
      %vm6214 = vcmp.le.f32.partialorder %v6213, 0.7853982
      %vm6215 = vcmp.lt.s32.totalorder %v846, 0
      %v6216 = vand.u32 %v846, 2139095040
      %v6217 = vshrl.u32 %v6216, 23
      %v6218 = vsub.s32 %v6217, 127
      %v6219 = vand.u32 2147483647, %v846
      %v6220 = vand.u32 %v6219, 8388607
      %v6221 = vor.u32 %v6220, 8388608
      %v6222 = vsub.s32 0, %v6221
      %v6223 = vadd.s32 %v6218, 1
      %vm6224 = vcmp.gt.s32.totalorder %v6223, 0
      %v6225 = vsel %vm6224, %v6223, 0
      %v6226 = vshrl.u32 %v6225, 5
      %v6227 = vand.u32 %v6225, 31
      %v6228 = vsub.s32 32, %v6227
      %v6229 = vshrl.u32 683565275, %v6228
      %v6230 = vshll.u32 683565275, %v6227
      %v6231 = vshrl.u32 2475754826, %v6228
      %v6232 = vor.u32 %v6230, %v6231
      %v6233 = vshll.u32 2475754826, %v6227
      %v6234 = vshrl.u32 2131351028, %v6228
      %v6235 = vor.u32 %v6233, %v6234
      %v6236 = vshll.u32 2131351028, %v6227
      %v6237 = vshrl.u32 2102212464, %v6228
      %v6238 = vor.u32 %v6236, %v6237
      %v6239 = vshll.u32 2102212464, %v6227
      %v6240 = vshrl.u32 920167782, %v6228
      %v6241 = vor.u32 %v6239, %v6240
      %v6242 = vshll.u32 920167782, %v6227
      %v6243 = vshrl.u32 1326507024, %v6228
      %v6244 = vor.u32 %v6242, %v6243
      %vm6245 = vcmp.lt.s32.totalorder %v6226, 1
      %vm6246 = vcmp.lt.s32.totalorder %v6226, 2
      %vm6247 = vcmp.lt.s32.totalorder %v6226, 3
      %vm6248 = vcmp.lt.s32.totalorder %v6226, 4
      %v6249 = vsel %vm6245, %v6229, %v6232
      %v6250 = vsel %vm6248, %v6238, 2102212464
      %v6251 = vsel %vm6247, %v6235, %v6250
      %v6252 = vsel %vm6246, %v6249, %v6251
      %v6253 = vsel %vm6245, %v6232, %v6235
      %v6254 = vsel %vm6248, %v6241, 920167782
      %v6255 = vsel %vm6247, %v6238, %v6254
      %v6256 = vsel %vm6246, %v6253, %v6255
      %v6257 = vsel %vm6245, %v6235, %v6238
      %v6258 = vsel %vm6248, %v6244, 1326507024
      %v6259 = vsel %vm6247, %v6241, %v6258
      %v6260 = vsel %vm6246, %v6257, %v6259
      %v6261 = vshll.u32 %v6221, 8
      %v6262 = vmul.u32.u64.compose %v6261, %v6260
      %v6263 = vextract.low.u32 %v6262
      %v6264 = vextract.high.u32 %v6262
      %v6265 = vmul.u32.u64.compose %v6261, %v6256
      %v6266 = vextract.low.u32 %v6265
      %v6267 = vextract.high.u32 %v6265
      %v6268 = vmul.u32 %v6261, %v6252
      %v6269 = vadd.s32 %v6264, %v6266
      %vm6270 = vc.u32 %v6264, %v6266
      %v6271 = vadd.s32 %v6267, 1
      %v6272 = vsel %vm6270, %v6271, %v6267
      %v6273 = vadd.s32 %v6268, %v6272
      %v6274 = vadd.s32 %v6273, 536870912
      %v6275 = vshrl.u32 %v6274, 30
      %v6276 = vshll.u32 %v6275, 30
      %v6277 = vsub.s32 %v6273, %v6276
      %vm6278 = vcmp.lt.s32.totalorder %v6277, 0
      %v6279 = vsub.s32 0, %v6277
      %v6280 = vsel %vm6278, %v6279, %v6277
      %v6281 = vclz %v6280
      %v6282 = vsub.s32 %v6281, 2
      %vm6283 = vcmp.gt.s32.totalorder 0, %v6282
      %v6284 = vsel %vm6283, 0, %v6282
      %v6285 = vsub.s32 32, %v6284
      %v6286 = vshll.u32 %v6277, %v6284
      %v6287 = vshrl.u32 %v6269, %v6285
      %v6288 = vor.u32 %v6286, %v6287
      %v6289 = vsub.s32 4294967266, %v6284
      %v6290 = vadd.s32 %v6289, 127
      %v6291 = vshll.u32 %v6290, 23
      %v6292 = vor.u32 4788187, %v6291
      %v6293 = vand.u32 2147483647, %v6292
      %v6295 = vcvt.s32.f32 %v6288
      %v6296 = vmul.f32 %v6295, %v6293
      %v6297 = vxor.u32 %v6296, 2147483648
      %v6298 = vsel %vm6215, %v6297, %v6296
      %v6299 = vsub.s32 4, %v6275
      %v6300 = vsel %vm6215, %v6299, %v6275
      %v6301 = vsel %vm6214, %v846, %v6298
      %v6302 = vsel %vm6214, 0, %v6300
      %v6303 = vcosq.f32.pop %v6301
      %v6304 = vsinq.f32.pop %v6301
      %vm6305 = vweird.f32 %v846
      %v6306 = vadd.s32 %v6302, 3
      %v6307 = vand.u32 %v6306, 3
      %vm6308 = vcmp.lt.s32.totalorder %v6307, 2
      %vm6309 = vcmp.eq.s32.totalorder %v6307, 0
      %v6310 = vxor.u32 %v6304, 2147483648
      %v6311 = vsel %vm6309, %v6303, %v6310
      %vm6312 = vcmp.eq.s32.totalorder %v6307, 2
      %v6313 = vxor.u32 %v6303, 2147483648
      %v6314 = vsel %vm6312, %v6313, %v6304
      %v6315 = vsel %vm6308, %v6311, %v6314
      %v6316 = vsel %vm6305, nan, %v6315
      %v6317 = vand.u32 2147483647, %v851
      %vm6318 = vcmp.le.f32.partialorder %v6317, 0.7853982
      %vm6319 = vcmp.lt.s32.totalorder %v851, 0
      %v6320 = vand.u32 %v851, 2139095040
      %v6321 = vshrl.u32 %v6320, 23
      %v6322 = vsub.s32 %v6321, 127
      %v6323 = vand.u32 2147483647, %v851
      %v6324 = vand.u32 %v6323, 8388607
      %v6325 = vor.u32 %v6324, 8388608
      %v6326 = vsub.s32 0, %v6325
      %v6327 = vadd.s32 %v6322, 1
      %vm6328 = vcmp.gt.s32.totalorder %v6327, 0
      %v6329 = vsel %vm6328, %v6327, 0
      %v6330 = vshrl.u32 %v6329, 5
      %v6331 = vand.u32 %v6329, 31
      %v6332 = vsub.s32 32, %v6331
      %v6333 = vshrl.u32 683565275, %v6332
      %v6334 = vshll.u32 683565275, %v6331
      %v6335 = vshrl.u32 2475754826, %v6332
      %v6336 = vor.u32 %v6334, %v6335
      %v6337 = vshll.u32 2475754826, %v6331
      %v6338 = vshrl.u32 2131351028, %v6332
      %v6339 = vor.u32 %v6337, %v6338
      %v6340 = vshll.u32 2131351028, %v6331
      %v6341 = vshrl.u32 2102212464, %v6332
      %v6342 = vor.u32 %v6340, %v6341
      %v6343 = vshll.u32 2102212464, %v6331
      %v6344 = vshrl.u32 920167782, %v6332
      %v6345 = vor.u32 %v6343, %v6344
      %v6346 = vshll.u32 920167782, %v6331
      %v6347 = vshrl.u32 1326507024, %v6332
      %v6348 = vor.u32 %v6346, %v6347
      %vm6349 = vcmp.lt.s32.totalorder %v6330, 1
      %vm6350 = vcmp.lt.s32.totalorder %v6330, 2
      %vm6351 = vcmp.lt.s32.totalorder %v6330, 3
      %vm6352 = vcmp.lt.s32.totalorder %v6330, 4
      %v6353 = vsel %vm6349, %v6333, %v6336
      %v6354 = vsel %vm6352, %v6342, 2102212464
      %v6355 = vsel %vm6351, %v6339, %v6354
      %v6356 = vsel %vm6350, %v6353, %v6355
      %v6357 = vsel %vm6349, %v6336, %v6339
      %v6358 = vsel %vm6352, %v6345, 920167782
      %v6359 = vsel %vm6351, %v6342, %v6358
      %v6360 = vsel %vm6350, %v6357, %v6359
      %v6361 = vsel %vm6349, %v6339, %v6342
      %v6362 = vsel %vm6352, %v6348, 1326507024
      %v6363 = vsel %vm6351, %v6345, %v6362
      %v6364 = vsel %vm6350, %v6361, %v6363
      %v6365 = vshll.u32 %v6325, 8
      %v6366 = vmul.u32.u64.compose %v6365, %v6364
      %v6367 = vextract.low.u32 %v6366
      %v6368 = vextract.high.u32 %v6366
      %v6369 = vmul.u32.u64.compose %v6365, %v6360
      %v6370 = vextract.low.u32 %v6369
      %v6371 = vextract.high.u32 %v6369
      %v6372 = vmul.u32 %v6365, %v6356
      %v6373 = vadd.s32 %v6368, %v6370
      %vm6374 = vc.u32 %v6368, %v6370
      %v6375 = vadd.s32 %v6371, 1
      %v6376 = vsel %vm6374, %v6375, %v6371
      %v6377 = vadd.s32 %v6372, %v6376
      %v6378 = vadd.s32 %v6377, 536870912
      %v6379 = vshrl.u32 %v6378, 30
      %v6380 = vshll.u32 %v6379, 30
      %v6381 = vsub.s32 %v6377, %v6380
      %vm6382 = vcmp.lt.s32.totalorder %v6381, 0
      %v6383 = vsub.s32 0, %v6381
      %v6384 = vsel %vm6382, %v6383, %v6381
      %v6385 = vclz %v6384
      %v6386 = vsub.s32 %v6385, 2
      %vm6387 = vcmp.gt.s32.totalorder 0, %v6386
      %v6388 = vsel %vm6387, 0, %v6386
      %v6389 = vsub.s32 32, %v6388
      %v6390 = vshll.u32 %v6381, %v6388
      %v6391 = vshrl.u32 %v6373, %v6389
      %v6392 = vor.u32 %v6390, %v6391
      %v6393 = vsub.s32 4294967266, %v6388
      %v6394 = vadd.s32 %v6393, 127
      %v6395 = vshll.u32 %v6394, 23
      %v6396 = vor.u32 4788187, %v6395
      %v6397 = vand.u32 2147483647, %v6396
      %v6399 = vcvt.s32.f32 %v6392
      %v6400 = vmul.f32 %v6399, %v6397
      %v6401 = vxor.u32 %v6400, 2147483648
      %v6402 = vsel %vm6319, %v6401, %v6400
      %v6403 = vsub.s32 4, %v6379
      %v6404 = vsel %vm6319, %v6403, %v6379
      %v6405 = vsel %vm6318, %v851, %v6402
      %v6406 = vsel %vm6318, 0, %v6404
      %v6407 = vcosq.f32.pop %v6405
      %v6408 = vsinq.f32.pop %v6405
      %vm6409 = vweird.f32 %v851
      %v6410 = vadd.s32 %v6406, 3
      %v6411 = vand.u32 %v6410, 3
      %vm6412 = vcmp.lt.s32.totalorder %v6411, 2
      %vm6413 = vcmp.eq.s32.totalorder %v6411, 0
      %v6414 = vxor.u32 %v6408, 2147483648
      %v6415 = vsel %vm6413, %v6407, %v6414
      %vm6416 = vcmp.eq.s32.totalorder %v6411, 2
      %v6417 = vxor.u32 %v6407, 2147483648
      %v6418 = vsel %vm6416, %v6417, %v6408
      %v6419 = vsel %vm6412, %v6415, %v6418
      %v6420 = vsel %vm6409, nan, %v6419
      %v6421 = vand.u32 2147483647, %v856
      %vm6422 = vcmp.le.f32.partialorder %v6421, 0.7853982
      %vm6423 = vcmp.lt.s32.totalorder %v856, 0
      %v6424 = vand.u32 %v856, 2139095040
      %v6425 = vshrl.u32 %v6424, 23
      %v6426 = vsub.s32 %v6425, 127
      %v6427 = vand.u32 2147483647, %v856
      %v6428 = vand.u32 %v6427, 8388607
      %v6429 = vor.u32 %v6428, 8388608
      %v6430 = vsub.s32 0, %v6429
      %v6431 = vadd.s32 %v6426, 1
      %vm6432 = vcmp.gt.s32.totalorder %v6431, 0
      %v6433 = vsel %vm6432, %v6431, 0
      %v6434 = vshrl.u32 %v6433, 5
      %v6435 = vand.u32 %v6433, 31
      %v6436 = vsub.s32 32, %v6435
      %v6437 = vshrl.u32 683565275, %v6436
      %v6438 = vshll.u32 683565275, %v6435
      %v6439 = vshrl.u32 2475754826, %v6436
      %v6440 = vor.u32 %v6438, %v6439
      %v6441 = vshll.u32 2475754826, %v6435
      %v6442 = vshrl.u32 2131351028, %v6436
      %v6443 = vor.u32 %v6441, %v6442
      %v6444 = vshll.u32 2131351028, %v6435
      %v6445 = vshrl.u32 2102212464, %v6436
      %v6446 = vor.u32 %v6444, %v6445
      %v6447 = vshll.u32 2102212464, %v6435
      %v6448 = vshrl.u32 920167782, %v6436
      %v6449 = vor.u32 %v6447, %v6448
      %v6450 = vshll.u32 920167782, %v6435
      %v6451 = vshrl.u32 1326507024, %v6436
      %v6452 = vor.u32 %v6450, %v6451
      %vm6453 = vcmp.lt.s32.totalorder %v6434, 1
      %vm6454 = vcmp.lt.s32.totalorder %v6434, 2
      %vm6455 = vcmp.lt.s32.totalorder %v6434, 3
      %vm6456 = vcmp.lt.s32.totalorder %v6434, 4
      %v6457 = vsel %vm6453, %v6437, %v6440
      %v6458 = vsel %vm6456, %v6446, 2102212464
      %v6459 = vsel %vm6455, %v6443, %v6458
      %v6460 = vsel %vm6454, %v6457, %v6459
      %v6461 = vsel %vm6453, %v6440, %v6443
      %v6462 = vsel %vm6456, %v6449, 920167782
      %v6463 = vsel %vm6455, %v6446, %v6462
      %v6464 = vsel %vm6454, %v6461, %v6463
      %v6465 = vsel %vm6453, %v6443, %v6446
      %v6466 = vsel %vm6456, %v6452, 1326507024
      %v6467 = vsel %vm6455, %v6449, %v6466
      %v6468 = vsel %vm6454, %v6465, %v6467
      %v6469 = vshll.u32 %v6429, 8
      %v6470 = vmul.u32.u64.compose %v6469, %v6468
      %v6471 = vextract.low.u32 %v6470
      %v6472 = vextract.high.u32 %v6470
      %v6473 = vmul.u32.u64.compose %v6469, %v6464
      %v6474 = vextract.low.u32 %v6473
      %v6475 = vextract.high.u32 %v6473
      %v6476 = vmul.u32 %v6469, %v6460
      %v6477 = vadd.s32 %v6472, %v6474
      %vm6478 = vc.u32 %v6472, %v6474
      %v6479 = vadd.s32 %v6475, 1
      %v6480 = vsel %vm6478, %v6479, %v6475
      %v6481 = vadd.s32 %v6476, %v6480
      %v6482 = vadd.s32 %v6481, 536870912
      %v6483 = vshrl.u32 %v6482, 30
      %v6484 = vshll.u32 %v6483, 30
      %v6485 = vsub.s32 %v6481, %v6484
      %vm6486 = vcmp.lt.s32.totalorder %v6485, 0
      %v6487 = vsub.s32 0, %v6485
      %v6488 = vsel %vm6486, %v6487, %v6485
      %v6489 = vclz %v6488
      %v6490 = vsub.s32 %v6489, 2
      %vm6491 = vcmp.gt.s32.totalorder 0, %v6490
      %v6492 = vsel %vm6491, 0, %v6490
      %v6493 = vsub.s32 32, %v6492
      %v6494 = vshll.u32 %v6485, %v6492
      %v6495 = vshrl.u32 %v6477, %v6493
      %v6496 = vor.u32 %v6494, %v6495
      %v6497 = vsub.s32 4294967266, %v6492
      %v6498 = vadd.s32 %v6497, 127
      %v6499 = vshll.u32 %v6498, 23
      %v6500 = vor.u32 4788187, %v6499
      %v6501 = vand.u32 2147483647, %v6500
      %v6503 = vcvt.s32.f32 %v6496
      %v6504 = vmul.f32 %v6503, %v6501
      %v6505 = vxor.u32 %v6504, 2147483648
      %v6506 = vsel %vm6423, %v6505, %v6504
      %v6507 = vsub.s32 4, %v6483
      %v6508 = vsel %vm6423, %v6507, %v6483
      %v6509 = vsel %vm6422, %v856, %v6506
      %v6510 = vsel %vm6422, 0, %v6508
      %v6511 = vcosq.f32.pop %v6509
      %v6512 = vsinq.f32.pop %v6509
      %vm6513 = vweird.f32 %v856
      %v6514 = vadd.s32 %v6510, 3
      %v6515 = vand.u32 %v6514, 3
      %vm6516 = vcmp.lt.s32.totalorder %v6515, 2
      %vm6517 = vcmp.eq.s32.totalorder %v6515, 0
      %v6518 = vxor.u32 %v6512, 2147483648
      %v6519 = vsel %vm6517, %v6511, %v6518
      %vm6520 = vcmp.eq.s32.totalorder %v6515, 2
      %v6521 = vxor.u32 %v6511, 2147483648
      %v6522 = vsel %vm6520, %v6521, %v6512
      %v6523 = vsel %vm6516, %v6519, %v6522
      %v6524 = vsel %vm6513, nan, %v6523
      %v6525 = vand.u32 2147483647, %v861
      %vm6526 = vcmp.le.f32.partialorder %v6525, 0.7853982
      %vm6527 = vcmp.lt.s32.totalorder %v861, 0
      %v6528 = vand.u32 %v861, 2139095040
      %v6529 = vshrl.u32 %v6528, 23
      %v6530 = vsub.s32 %v6529, 127
      %v6531 = vand.u32 2147483647, %v861
      %v6532 = vand.u32 %v6531, 8388607
      %v6533 = vor.u32 %v6532, 8388608
      %v6534 = vsub.s32 0, %v6533
      %v6535 = vadd.s32 %v6530, 1
      %vm6536 = vcmp.gt.s32.totalorder %v6535, 0
      %v6537 = vsel %vm6536, %v6535, 0
      %v6538 = vshrl.u32 %v6537, 5
      %v6539 = vand.u32 %v6537, 31
      %v6540 = vsub.s32 32, %v6539
      %v6541 = vshrl.u32 683565275, %v6540
      %v6542 = vshll.u32 683565275, %v6539
      %v6543 = vshrl.u32 2475754826, %v6540
      %v6544 = vor.u32 %v6542, %v6543
      %v6545 = vshll.u32 2475754826, %v6539
      %v6546 = vshrl.u32 2131351028, %v6540
      %v6547 = vor.u32 %v6545, %v6546
      %v6548 = vshll.u32 2131351028, %v6539
      %v6549 = vshrl.u32 2102212464, %v6540
      %v6550 = vor.u32 %v6548, %v6549
      %v6551 = vshll.u32 2102212464, %v6539
      %v6552 = vshrl.u32 920167782, %v6540
      %v6553 = vor.u32 %v6551, %v6552
      %v6554 = vshll.u32 920167782, %v6539
      %v6555 = vshrl.u32 1326507024, %v6540
      %v6556 = vor.u32 %v6554, %v6555
      %vm6557 = vcmp.lt.s32.totalorder %v6538, 1
      %vm6558 = vcmp.lt.s32.totalorder %v6538, 2
      %vm6559 = vcmp.lt.s32.totalorder %v6538, 3
      %vm6560 = vcmp.lt.s32.totalorder %v6538, 4
      %v6561 = vsel %vm6557, %v6541, %v6544
      %v6562 = vsel %vm6560, %v6550, 2102212464
      %v6563 = vsel %vm6559, %v6547, %v6562
      %v6564 = vsel %vm6558, %v6561, %v6563
      %v6565 = vsel %vm6557, %v6544, %v6547
      %v6566 = vsel %vm6560, %v6553, 920167782
      %v6567 = vsel %vm6559, %v6550, %v6566
      %v6568 = vsel %vm6558, %v6565, %v6567
      %v6569 = vsel %vm6557, %v6547, %v6550
      %v6570 = vsel %vm6560, %v6556, 1326507024
      %v6571 = vsel %vm6559, %v6553, %v6570
      %v6572 = vsel %vm6558, %v6569, %v6571
      %v6573 = vshll.u32 %v6533, 8
      %v6574 = vmul.u32.u64.compose %v6573, %v6572
      %v6575 = vextract.low.u32 %v6574
      %v6576 = vextract.high.u32 %v6574
      %v6577 = vmul.u32.u64.compose %v6573, %v6568
      %v6578 = vextract.low.u32 %v6577
      %v6579 = vextract.high.u32 %v6577
      %v6580 = vmul.u32 %v6573, %v6564
      %v6581 = vadd.s32 %v6576, %v6578
      %vm6582 = vc.u32 %v6576, %v6578
      %v6583 = vadd.s32 %v6579, 1
      %v6584 = vsel %vm6582, %v6583, %v6579
      %v6585 = vadd.s32 %v6580, %v6584
      %v6586 = vadd.s32 %v6585, 536870912
      %v6587 = vshrl.u32 %v6586, 30
      %v6588 = vshll.u32 %v6587, 30
      %v6589 = vsub.s32 %v6585, %v6588
      %vm6590 = vcmp.lt.s32.totalorder %v6589, 0
      %v6591 = vsub.s32 0, %v6589
      %v6592 = vsel %vm6590, %v6591, %v6589
      %v6593 = vclz %v6592
      %v6594 = vsub.s32 %v6593, 2
      %vm6595 = vcmp.gt.s32.totalorder 0, %v6594
      %v6596 = vsel %vm6595, 0, %v6594
      %v6597 = vsub.s32 32, %v6596
      %v6598 = vshll.u32 %v6589, %v6596
      %v6599 = vshrl.u32 %v6581, %v6597
      %v6600 = vor.u32 %v6598, %v6599
      %v6601 = vsub.s32 4294967266, %v6596
      %v6602 = vadd.s32 %v6601, 127
      %v6603 = vshll.u32 %v6602, 23
      %v6604 = vor.u32 4788187, %v6603
      %v6605 = vand.u32 2147483647, %v6604
      %v6607 = vcvt.s32.f32 %v6600
      %v6608 = vmul.f32 %v6607, %v6605
      %v6609 = vxor.u32 %v6608, 2147483648
      %v6610 = vsel %vm6527, %v6609, %v6608
      %v6611 = vsub.s32 4, %v6587
      %v6612 = vsel %vm6527, %v6611, %v6587
      %v6613 = vsel %vm6526, %v861, %v6610
      %v6614 = vsel %vm6526, 0, %v6612
      %v6615 = vcosq.f32.pop %v6613
      %v6616 = vsinq.f32.pop %v6613
      %vm6617 = vweird.f32 %v861
      %v6618 = vadd.s32 %v6614, 3
      %v6619 = vand.u32 %v6618, 3
      %vm6620 = vcmp.lt.s32.totalorder %v6619, 2
      %vm6621 = vcmp.eq.s32.totalorder %v6619, 0
      %v6622 = vxor.u32 %v6616, 2147483648
      %v6623 = vsel %vm6621, %v6615, %v6622
      %vm6624 = vcmp.eq.s32.totalorder %v6619, 2
      %v6625 = vxor.u32 %v6615, 2147483648
      %v6626 = vsel %vm6624, %v6625, %v6616
      %v6627 = vsel %vm6620, %v6623, %v6626
      %v6628 = vsel %vm6617, nan, %v6627
      %v6629 = vand.u32 2147483647, %v866
      %vm6630 = vcmp.le.f32.partialorder %v6629, 0.7853982
      %vm6631 = vcmp.lt.s32.totalorder %v866, 0
      %v6632 = vand.u32 %v866, 2139095040
      %v6633 = vshrl.u32 %v6632, 23
      %v6634 = vsub.s32 %v6633, 127
      %v6635 = vand.u32 2147483647, %v866
      %v6636 = vand.u32 %v6635, 8388607
      %v6637 = vor.u32 %v6636, 8388608
      %v6638 = vsub.s32 0, %v6637
      %v6639 = vadd.s32 %v6634, 1
      %vm6640 = vcmp.gt.s32.totalorder %v6639, 0
      %v6641 = vsel %vm6640, %v6639, 0
      %v6642 = vshrl.u32 %v6641, 5
      %v6643 = vand.u32 %v6641, 31
      %v6644 = vsub.s32 32, %v6643
      %v6645 = vshrl.u32 683565275, %v6644
      %v6646 = vshll.u32 683565275, %v6643
      %v6647 = vshrl.u32 2475754826, %v6644
      %v6648 = vor.u32 %v6646, %v6647
      %v6649 = vshll.u32 2475754826, %v6643
      %v6650 = vshrl.u32 2131351028, %v6644
      %v6651 = vor.u32 %v6649, %v6650
      %v6652 = vshll.u32 2131351028, %v6643
      %v6653 = vshrl.u32 2102212464, %v6644
      %v6654 = vor.u32 %v6652, %v6653
      %v6655 = vshll.u32 2102212464, %v6643
      %v6656 = vshrl.u32 920167782, %v6644
      %v6657 = vor.u32 %v6655, %v6656
      %v6658 = vshll.u32 920167782, %v6643
      %v6659 = vshrl.u32 1326507024, %v6644
      %v6660 = vor.u32 %v6658, %v6659
      %vm6661 = vcmp.lt.s32.totalorder %v6642, 1
      %vm6662 = vcmp.lt.s32.totalorder %v6642, 2
      %vm6663 = vcmp.lt.s32.totalorder %v6642, 3
      %vm6664 = vcmp.lt.s32.totalorder %v6642, 4
      %v6665 = vsel %vm6661, %v6645, %v6648
      %v6666 = vsel %vm6664, %v6654, 2102212464
      %v6667 = vsel %vm6663, %v6651, %v6666
      %v6668 = vsel %vm6662, %v6665, %v6667
      %v6669 = vsel %vm6661, %v6648, %v6651
      %v6670 = vsel %vm6664, %v6657, 920167782
      %v6671 = vsel %vm6663, %v6654, %v6670
      %v6672 = vsel %vm6662, %v6669, %v6671
      %v6673 = vsel %vm6661, %v6651, %v6654
      %v6674 = vsel %vm6664, %v6660, 1326507024
      %v6675 = vsel %vm6663, %v6657, %v6674
      %v6676 = vsel %vm6662, %v6673, %v6675
      %v6677 = vshll.u32 %v6637, 8
      %v6678 = vmul.u32.u64.compose %v6677, %v6676
      %v6679 = vextract.low.u32 %v6678
      %v6680 = vextract.high.u32 %v6678
      %v6681 = vmul.u32.u64.compose %v6677, %v6672
      %v6682 = vextract.low.u32 %v6681
      %v6683 = vextract.high.u32 %v6681
      %v6684 = vmul.u32 %v6677, %v6668
      %v6685 = vadd.s32 %v6680, %v6682
      %vm6686 = vc.u32 %v6680, %v6682
      %v6687 = vadd.s32 %v6683, 1
      %v6688 = vsel %vm6686, %v6687, %v6683
      %v6689 = vadd.s32 %v6684, %v6688
      %v6690 = vadd.s32 %v6689, 536870912
      %v6691 = vshrl.u32 %v6690, 30
      %v6692 = vshll.u32 %v6691, 30
      %v6693 = vsub.s32 %v6689, %v6692
      %vm6694 = vcmp.lt.s32.totalorder %v6693, 0
      %v6695 = vsub.s32 0, %v6693
      %v6696 = vsel %vm6694, %v6695, %v6693
      %v6697 = vclz %v6696
      %v6698 = vsub.s32 %v6697, 2
      %vm6699 = vcmp.gt.s32.totalorder 0, %v6698
      %v6700 = vsel %vm6699, 0, %v6698
      %v6701 = vsub.s32 32, %v6700
      %v6702 = vshll.u32 %v6693, %v6700
      %v6703 = vshrl.u32 %v6685, %v6701
      %v6704 = vor.u32 %v6702, %v6703
      %v6705 = vsub.s32 4294967266, %v6700
      %v6706 = vadd.s32 %v6705, 127
      %v6707 = vshll.u32 %v6706, 23
      %v6708 = vor.u32 4788187, %v6707
      %v6709 = vand.u32 2147483647, %v6708
      %v6711 = vcvt.s32.f32 %v6704
      %v6712 = vmul.f32 %v6711, %v6709
      %v6713 = vxor.u32 %v6712, 2147483648
      %v6714 = vsel %vm6631, %v6713, %v6712
      %v6715 = vsub.s32 4, %v6691
      %v6716 = vsel %vm6631, %v6715, %v6691
      %v6717 = vsel %vm6630, %v866, %v6714
      %v6718 = vsel %vm6630, 0, %v6716
      %v6719 = vcosq.f32.pop %v6717
      %v6720 = vsinq.f32.pop %v6717
      %vm6721 = vweird.f32 %v866
      %v6722 = vadd.s32 %v6718, 3
      %v6723 = vand.u32 %v6722, 3
      %vm6724 = vcmp.lt.s32.totalorder %v6723, 2
      %vm6725 = vcmp.eq.s32.totalorder %v6723, 0
      %v6726 = vxor.u32 %v6720, 2147483648
      %v6727 = vsel %vm6725, %v6719, %v6726
      %vm6728 = vcmp.eq.s32.totalorder %v6723, 2
      %v6729 = vxor.u32 %v6719, 2147483648
      %v6730 = vsel %vm6728, %v6729, %v6720
      %v6731 = vsel %vm6724, %v6727, %v6730
      %v6732 = vsel %vm6721, nan, %v6731
      %v6733 = vand.u32 2147483647, %v871
      %vm6734 = vcmp.le.f32.partialorder %v6733, 0.7853982
      %vm6735 = vcmp.lt.s32.totalorder %v871, 0
      %v6736 = vand.u32 %v871, 2139095040
      %v6737 = vshrl.u32 %v6736, 23
      %v6738 = vsub.s32 %v6737, 127
      %v6739 = vand.u32 2147483647, %v871
      %v6740 = vand.u32 %v6739, 8388607
      %v6741 = vor.u32 %v6740, 8388608
      %v6742 = vsub.s32 0, %v6741
      %v6743 = vadd.s32 %v6738, 1
      %vm6744 = vcmp.gt.s32.totalorder %v6743, 0
      %v6745 = vsel %vm6744, %v6743, 0
      %v6746 = vshrl.u32 %v6745, 5
      %v6747 = vand.u32 %v6745, 31
      %v6748 = vsub.s32 32, %v6747
      %v6749 = vshrl.u32 683565275, %v6748
      %v6750 = vshll.u32 683565275, %v6747
      %v6751 = vshrl.u32 2475754826, %v6748
      %v6752 = vor.u32 %v6750, %v6751
      %v6753 = vshll.u32 2475754826, %v6747
      %v6754 = vshrl.u32 2131351028, %v6748
      %v6755 = vor.u32 %v6753, %v6754
      %v6756 = vshll.u32 2131351028, %v6747
      %v6757 = vshrl.u32 2102212464, %v6748
      %v6758 = vor.u32 %v6756, %v6757
      %v6759 = vshll.u32 2102212464, %v6747
      %v6760 = vshrl.u32 920167782, %v6748
      %v6761 = vor.u32 %v6759, %v6760
      %v6762 = vshll.u32 920167782, %v6747
      %v6763 = vshrl.u32 1326507024, %v6748
      %v6764 = vor.u32 %v6762, %v6763
      %vm6765 = vcmp.lt.s32.totalorder %v6746, 1
      %vm6766 = vcmp.lt.s32.totalorder %v6746, 2
      %vm6767 = vcmp.lt.s32.totalorder %v6746, 3
      %vm6768 = vcmp.lt.s32.totalorder %v6746, 4
      %v6769 = vsel %vm6765, %v6749, %v6752
      %v6770 = vsel %vm6768, %v6758, 2102212464
      %v6771 = vsel %vm6767, %v6755, %v6770
      %v6772 = vsel %vm6766, %v6769, %v6771
      %v6773 = vsel %vm6765, %v6752, %v6755
      %v6774 = vsel %vm6768, %v6761, 920167782
      %v6775 = vsel %vm6767, %v6758, %v6774
      %v6776 = vsel %vm6766, %v6773, %v6775
      %v6777 = vsel %vm6765, %v6755, %v6758
      %v6778 = vsel %vm6768, %v6764, 1326507024
      %v6779 = vsel %vm6767, %v6761, %v6778
      %v6780 = vsel %vm6766, %v6777, %v6779
      %v6781 = vshll.u32 %v6741, 8
      %v6782 = vmul.u32.u64.compose %v6781, %v6780
      %v6783 = vextract.low.u32 %v6782
      %v6784 = vextract.high.u32 %v6782
      %v6785 = vmul.u32.u64.compose %v6781, %v6776
      %v6786 = vextract.low.u32 %v6785
      %v6787 = vextract.high.u32 %v6785
      %v6788 = vmul.u32 %v6781, %v6772
      %v6789 = vadd.s32 %v6784, %v6786
      %vm6790 = vc.u32 %v6784, %v6786
      %v6791 = vadd.s32 %v6787, 1
      %v6792 = vsel %vm6790, %v6791, %v6787
      %v6793 = vadd.s32 %v6788, %v6792
      %v6794 = vadd.s32 %v6793, 536870912
      %v6795 = vshrl.u32 %v6794, 30
      %v6796 = vshll.u32 %v6795, 30
      %v6797 = vsub.s32 %v6793, %v6796
      %vm6798 = vcmp.lt.s32.totalorder %v6797, 0
      %v6799 = vsub.s32 0, %v6797
      %v6800 = vsel %vm6798, %v6799, %v6797
      %v6801 = vclz %v6800
      %v6802 = vsub.s32 %v6801, 2
      %vm6803 = vcmp.gt.s32.totalorder 0, %v6802
      %v6804 = vsel %vm6803, 0, %v6802
      %v6805 = vsub.s32 32, %v6804
      %v6806 = vshll.u32 %v6797, %v6804
      %v6807 = vshrl.u32 %v6789, %v6805
      %v6808 = vor.u32 %v6806, %v6807
      %v6809 = vsub.s32 4294967266, %v6804
      %v6810 = vadd.s32 %v6809, 127
      %v6811 = vshll.u32 %v6810, 23
      %v6812 = vor.u32 4788187, %v6811
      %v6813 = vand.u32 2147483647, %v6812
      %v6815 = vcvt.s32.f32 %v6808
      %v6816 = vmul.f32 %v6815, %v6813
      %v6817 = vxor.u32 %v6816, 2147483648
      %v6818 = vsel %vm6735, %v6817, %v6816
      %v6819 = vsub.s32 4, %v6795
      %v6820 = vsel %vm6735, %v6819, %v6795
      %v6821 = vsel %vm6734, %v871, %v6818
      %v6822 = vsel %vm6734, 0, %v6820
      %v6823 = vcosq.f32.pop %v6821
      %v6824 = vsinq.f32.pop %v6821
      %vm6825 = vweird.f32 %v871
      %v6826 = vadd.s32 %v6822, 3
      %v6827 = vand.u32 %v6826, 3
      %vm6828 = vcmp.lt.s32.totalorder %v6827, 2
      %vm6829 = vcmp.eq.s32.totalorder %v6827, 0
      %v6830 = vxor.u32 %v6824, 2147483648
      %v6831 = vsel %vm6829, %v6823, %v6830
      %vm6832 = vcmp.eq.s32.totalorder %v6827, 2
      %v6833 = vxor.u32 %v6823, 2147483648
      %v6834 = vsel %vm6832, %v6833, %v6824
      %v6835 = vsel %vm6828, %v6831, %v6834
      %v6836 = vsel %vm6825, nan, %v6835
      %v6837 = vand.u32 2147483647, %v876
      %vm6838 = vcmp.le.f32.partialorder %v6837, 0.7853982
      %vm6839 = vcmp.lt.s32.totalorder %v876, 0
      %v6840 = vand.u32 %v876, 2139095040
      %v6841 = vshrl.u32 %v6840, 23
      %v6842 = vsub.s32 %v6841, 127
      %v6843 = vand.u32 2147483647, %v876
      %v6844 = vand.u32 %v6843, 8388607
      %v6845 = vor.u32 %v6844, 8388608
      %v6846 = vsub.s32 0, %v6845
      %v6847 = vadd.s32 %v6842, 1
      %vm6848 = vcmp.gt.s32.totalorder %v6847, 0
      %v6849 = vsel %vm6848, %v6847, 0
      %v6850 = vshrl.u32 %v6849, 5
      %v6851 = vand.u32 %v6849, 31
      %v6852 = vsub.s32 32, %v6851
      %v6853 = vshrl.u32 683565275, %v6852
      %v6854 = vshll.u32 683565275, %v6851
      %v6855 = vshrl.u32 2475754826, %v6852
      %v6856 = vor.u32 %v6854, %v6855
      %v6857 = vshll.u32 2475754826, %v6851
      %v6858 = vshrl.u32 2131351028, %v6852
      %v6859 = vor.u32 %v6857, %v6858
      %v6860 = vshll.u32 2131351028, %v6851
      %v6861 = vshrl.u32 2102212464, %v6852
      %v6862 = vor.u32 %v6860, %v6861
      %v6863 = vshll.u32 2102212464, %v6851
      %v6864 = vshrl.u32 920167782, %v6852
      %v6865 = vor.u32 %v6863, %v6864
      %v6866 = vshll.u32 920167782, %v6851
      %v6867 = vshrl.u32 1326507024, %v6852
      %v6868 = vor.u32 %v6866, %v6867
      %vm6869 = vcmp.lt.s32.totalorder %v6850, 1
      %vm6870 = vcmp.lt.s32.totalorder %v6850, 2
      %vm6871 = vcmp.lt.s32.totalorder %v6850, 3
      %vm6872 = vcmp.lt.s32.totalorder %v6850, 4
      %v6873 = vsel %vm6869, %v6853, %v6856
      %v6874 = vsel %vm6872, %v6862, 2102212464
      %v6875 = vsel %vm6871, %v6859, %v6874
      %v6876 = vsel %vm6870, %v6873, %v6875
      %v6877 = vsel %vm6869, %v6856, %v6859
      %v6878 = vsel %vm6872, %v6865, 920167782
      %v6879 = vsel %vm6871, %v6862, %v6878
      %v6880 = vsel %vm6870, %v6877, %v6879
      %v6881 = vsel %vm6869, %v6859, %v6862
      %v6882 = vsel %vm6872, %v6868, 1326507024
      %v6883 = vsel %vm6871, %v6865, %v6882
      %v6884 = vsel %vm6870, %v6881, %v6883
      %v6885 = vshll.u32 %v6845, 8
      %v6886 = vmul.u32.u64.compose %v6885, %v6884
      %v6887 = vextract.low.u32 %v6886
      %v6888 = vextract.high.u32 %v6886
      %v6889 = vmul.u32.u64.compose %v6885, %v6880
      %v6890 = vextract.low.u32 %v6889
      %v6891 = vextract.high.u32 %v6889
      %v6892 = vmul.u32 %v6885, %v6876
      %v6893 = vadd.s32 %v6888, %v6890
      %vm6894 = vc.u32 %v6888, %v6890
      %v6895 = vadd.s32 %v6891, 1
      %v6896 = vsel %vm6894, %v6895, %v6891
      %v6897 = vadd.s32 %v6892, %v6896
      %v6898 = vadd.s32 %v6897, 536870912
      %v6899 = vshrl.u32 %v6898, 30
      %v6900 = vshll.u32 %v6899, 30
      %v6901 = vsub.s32 %v6897, %v6900
      %vm6902 = vcmp.lt.s32.totalorder %v6901, 0
      %v6903 = vsub.s32 0, %v6901
      %v6904 = vsel %vm6902, %v6903, %v6901
      %v6905 = vclz %v6904
      %v6906 = vsub.s32 %v6905, 2
      %vm6907 = vcmp.gt.s32.totalorder 0, %v6906
      %v6908 = vsel %vm6907, 0, %v6906
      %v6909 = vsub.s32 32, %v6908
      %v6910 = vshll.u32 %v6901, %v6908
      %v6911 = vshrl.u32 %v6893, %v6909
      %v6912 = vor.u32 %v6910, %v6911
      %v6913 = vsub.s32 4294967266, %v6908
      %v6914 = vadd.s32 %v6913, 127
      %v6915 = vshll.u32 %v6914, 23
      %v6916 = vor.u32 4788187, %v6915
      %v6917 = vand.u32 2147483647, %v6916
      %v6919 = vcvt.s32.f32 %v6912
      %v6920 = vmul.f32 %v6919, %v6917
      %v6921 = vxor.u32 %v6920, 2147483648
      %v6922 = vsel %vm6839, %v6921, %v6920
      %v6923 = vsub.s32 4, %v6899
      %v6924 = vsel %vm6839, %v6923, %v6899
      %v6925 = vsel %vm6838, %v876, %v6922
      %v6926 = vsel %vm6838, 0, %v6924
      %v6927 = vcosq.f32.pop %v6925
      %v6928 = vsinq.f32.pop %v6925
      %vm6929 = vweird.f32 %v876
      %v6930 = vadd.s32 %v6926, 3
      %v6931 = vand.u32 %v6930, 3
      %vm6932 = vcmp.lt.s32.totalorder %v6931, 2
      %vm6933 = vcmp.eq.s32.totalorder %v6931, 0
      %v6934 = vxor.u32 %v6928, 2147483648
      %v6935 = vsel %vm6933, %v6927, %v6934
      %vm6936 = vcmp.eq.s32.totalorder %v6931, 2
      %v6937 = vxor.u32 %v6927, 2147483648
      %v6938 = vsel %vm6936, %v6937, %v6928
      %v6939 = vsel %vm6932, %v6935, %v6938
      %v6940 = vsel %vm6929, nan, %v6939
      %v6941 = vand.u32 2147483647, %v881
      %vm6942 = vcmp.le.f32.partialorder %v6941, 0.7853982
      %vm6943 = vcmp.lt.s32.totalorder %v881, 0
      %v6944 = vand.u32 %v881, 2139095040
      %v6945 = vshrl.u32 %v6944, 23
      %v6946 = vsub.s32 %v6945, 127
      %v6947 = vand.u32 2147483647, %v881
      %v6948 = vand.u32 %v6947, 8388607
      %v6949 = vor.u32 %v6948, 8388608
      %v6950 = vsub.s32 0, %v6949
      %v6951 = vadd.s32 %v6946, 1
      %vm6952 = vcmp.gt.s32.totalorder %v6951, 0
      %v6953 = vsel %vm6952, %v6951, 0
      %v6954 = vshrl.u32 %v6953, 5
      %v6955 = vand.u32 %v6953, 31
      %v6956 = vsub.s32 32, %v6955
      %v6957 = vshrl.u32 683565275, %v6956
      %v6958 = vshll.u32 683565275, %v6955
      %v6959 = vshrl.u32 2475754826, %v6956
      %v6960 = vor.u32 %v6958, %v6959
      %v6961 = vshll.u32 2475754826, %v6955
      %v6962 = vshrl.u32 2131351028, %v6956
      %v6963 = vor.u32 %v6961, %v6962
      %v6964 = vshll.u32 2131351028, %v6955
      %v6965 = vshrl.u32 2102212464, %v6956
      %v6966 = vor.u32 %v6964, %v6965
      %v6967 = vshll.u32 2102212464, %v6955
      %v6968 = vshrl.u32 920167782, %v6956
      %v6969 = vor.u32 %v6967, %v6968
      %v6970 = vshll.u32 920167782, %v6955
      %v6971 = vshrl.u32 1326507024, %v6956
      %v6972 = vor.u32 %v6970, %v6971
      %vm6973 = vcmp.lt.s32.totalorder %v6954, 1
      %vm6974 = vcmp.lt.s32.totalorder %v6954, 2
      %vm6975 = vcmp.lt.s32.totalorder %v6954, 3
      %vm6976 = vcmp.lt.s32.totalorder %v6954, 4
      %v6977 = vsel %vm6973, %v6957, %v6960
      %v6978 = vsel %vm6976, %v6966, 2102212464
      %v6979 = vsel %vm6975, %v6963, %v6978
      %v6980 = vsel %vm6974, %v6977, %v6979
      %v6981 = vsel %vm6973, %v6960, %v6963
      %v6982 = vsel %vm6976, %v6969, 920167782
      %v6983 = vsel %vm6975, %v6966, %v6982
      %v6984 = vsel %vm6974, %v6981, %v6983
      %v6985 = vsel %vm6973, %v6963, %v6966
      %v6986 = vsel %vm6976, %v6972, 1326507024
      %v6987 = vsel %vm6975, %v6969, %v6986
      %v6988 = vsel %vm6974, %v6985, %v6987
      %v6989 = vshll.u32 %v6949, 8
      %v6990 = vmul.u32.u64.compose %v6989, %v6988
      %v6991 = vextract.low.u32 %v6990
      %v6992 = vextract.high.u32 %v6990
      %v6993 = vmul.u32.u64.compose %v6989, %v6984
      %v6994 = vextract.low.u32 %v6993
      %v6995 = vextract.high.u32 %v6993
      %v6996 = vmul.u32 %v6989, %v6980
      %v6997 = vadd.s32 %v6992, %v6994
      %vm6998 = vc.u32 %v6992, %v6994
      %v6999 = vadd.s32 %v6995, 1
      %v7000 = vsel %vm6998, %v6999, %v6995
      %v7001 = vadd.s32 %v6996, %v7000
      %v7002 = vadd.s32 %v7001, 536870912
      %v7003 = vshrl.u32 %v7002, 30
      %v7004 = vshll.u32 %v7003, 30
      %v7005 = vsub.s32 %v7001, %v7004
      %vm7006 = vcmp.lt.s32.totalorder %v7005, 0
      %v7007 = vsub.s32 0, %v7005
      %v7008 = vsel %vm7006, %v7007, %v7005
      %v7009 = vclz %v7008
      %v7010 = vsub.s32 %v7009, 2
      %vm7011 = vcmp.gt.s32.totalorder 0, %v7010
      %v7012 = vsel %vm7011, 0, %v7010
      %v7013 = vsub.s32 32, %v7012
      %v7014 = vshll.u32 %v7005, %v7012
      %v7015 = vshrl.u32 %v6997, %v7013
      %v7016 = vor.u32 %v7014, %v7015
      %v7017 = vsub.s32 4294967266, %v7012
      %v7018 = vadd.s32 %v7017, 127
      %v7019 = vshll.u32 %v7018, 23
      %v7020 = vor.u32 4788187, %v7019
      %v7021 = vand.u32 2147483647, %v7020
      %v7023 = vcvt.s32.f32 %v7016
      %v7024 = vmul.f32 %v7023, %v7021
      %v7025 = vxor.u32 %v7024, 2147483648
      %v7026 = vsel %vm6943, %v7025, %v7024
      %v7027 = vsub.s32 4, %v7003
      %v7028 = vsel %vm6943, %v7027, %v7003
      %v7029 = vsel %vm6942, %v881, %v7026
      %v7030 = vsel %vm6942, 0, %v7028
      %v7031 = vcosq.f32.pop %v7029
      %v7032 = vsinq.f32.pop %v7029
      %vm7033 = vweird.f32 %v881
      %v7034 = vadd.s32 %v7030, 3
      %v7035 = vand.u32 %v7034, 3
      %vm7036 = vcmp.lt.s32.totalorder %v7035, 2
      %vm7037 = vcmp.eq.s32.totalorder %v7035, 0
      %v7038 = vxor.u32 %v7032, 2147483648
      %v7039 = vsel %vm7037, %v7031, %v7038
      %vm7040 = vcmp.eq.s32.totalorder %v7035, 2
      %v7041 = vxor.u32 %v7031, 2147483648
      %v7042 = vsel %vm7040, %v7041, %v7032
      %v7043 = vsel %vm7036, %v7039, %v7042
      %v7044 = vsel %vm7033, nan, %v7043
      %v7045 = vand.u32 2147483647, %v886
      %vm7046 = vcmp.le.f32.partialorder %v7045, 0.7853982
      %vm7047 = vcmp.lt.s32.totalorder %v886, 0
      %v7048 = vand.u32 %v886, 2139095040
      %v7049 = vshrl.u32 %v7048, 23
      %v7050 = vsub.s32 %v7049, 127
      %v7051 = vand.u32 2147483647, %v886
      %v7052 = vand.u32 %v7051, 8388607
      %v7053 = vor.u32 %v7052, 8388608
      %v7054 = vsub.s32 0, %v7053
      %v7055 = vadd.s32 %v7050, 1
      %vm7056 = vcmp.gt.s32.totalorder %v7055, 0
      %v7057 = vsel %vm7056, %v7055, 0
      %v7058 = vshrl.u32 %v7057, 5
      %v7059 = vand.u32 %v7057, 31
      %v7060 = vsub.s32 32, %v7059
      %v7061 = vshrl.u32 683565275, %v7060
      %v7062 = vshll.u32 683565275, %v7059
      %v7063 = vshrl.u32 2475754826, %v7060
      %v7064 = vor.u32 %v7062, %v7063
      %v7065 = vshll.u32 2475754826, %v7059
      %v7066 = vshrl.u32 2131351028, %v7060
      %v7067 = vor.u32 %v7065, %v7066
      %v7068 = vshll.u32 2131351028, %v7059
      %v7069 = vshrl.u32 2102212464, %v7060
      %v7070 = vor.u32 %v7068, %v7069
      %v7071 = vshll.u32 2102212464, %v7059
      %v7072 = vshrl.u32 920167782, %v7060
      %v7073 = vor.u32 %v7071, %v7072
      %v7074 = vshll.u32 920167782, %v7059
      %v7075 = vshrl.u32 1326507024, %v7060
      %v7076 = vor.u32 %v7074, %v7075
      %vm7077 = vcmp.lt.s32.totalorder %v7058, 1
      %vm7078 = vcmp.lt.s32.totalorder %v7058, 2
      %vm7079 = vcmp.lt.s32.totalorder %v7058, 3
      %vm7080 = vcmp.lt.s32.totalorder %v7058, 4
      %v7081 = vsel %vm7077, %v7061, %v7064
      %v7082 = vsel %vm7080, %v7070, 2102212464
      %v7083 = vsel %vm7079, %v7067, %v7082
      %v7084 = vsel %vm7078, %v7081, %v7083
      %v7085 = vsel %vm7077, %v7064, %v7067
      %v7086 = vsel %vm7080, %v7073, 920167782
      %v7087 = vsel %vm7079, %v7070, %v7086
      %v7088 = vsel %vm7078, %v7085, %v7087
      %v7089 = vsel %vm7077, %v7067, %v7070
      %v7090 = vsel %vm7080, %v7076, 1326507024
      %v7091 = vsel %vm7079, %v7073, %v7090
      %v7092 = vsel %vm7078, %v7089, %v7091
      %v7093 = vshll.u32 %v7053, 8
      %v7094 = vmul.u32.u64.compose %v7093, %v7092
      %v7095 = vextract.low.u32 %v7094
      %v7096 = vextract.high.u32 %v7094
      %v7097 = vmul.u32.u64.compose %v7093, %v7088
      %v7098 = vextract.low.u32 %v7097
      %v7099 = vextract.high.u32 %v7097
      %v7100 = vmul.u32 %v7093, %v7084
      %v7101 = vadd.s32 %v7096, %v7098
      %vm7102 = vc.u32 %v7096, %v7098
      %v7103 = vadd.s32 %v7099, 1
      %v7104 = vsel %vm7102, %v7103, %v7099
      %v7105 = vadd.s32 %v7100, %v7104
      %v7106 = vadd.s32 %v7105, 536870912
      %v7107 = vshrl.u32 %v7106, 30
      %v7108 = vshll.u32 %v7107, 30
      %v7109 = vsub.s32 %v7105, %v7108
      %vm7110 = vcmp.lt.s32.totalorder %v7109, 0
      %v7111 = vsub.s32 0, %v7109
      %v7112 = vsel %vm7110, %v7111, %v7109
      %v7113 = vclz %v7112
      %v7114 = vsub.s32 %v7113, 2
      %vm7115 = vcmp.gt.s32.totalorder 0, %v7114
      %v7116 = vsel %vm7115, 0, %v7114
      %v7117 = vsub.s32 32, %v7116
      %v7118 = vshll.u32 %v7109, %v7116
      %v7119 = vshrl.u32 %v7101, %v7117
      %v7120 = vor.u32 %v7118, %v7119
      %v7121 = vsub.s32 4294967266, %v7116
      %v7122 = vadd.s32 %v7121, 127
      %v7123 = vshll.u32 %v7122, 23
      %v7124 = vor.u32 4788187, %v7123
      %v7125 = vand.u32 2147483647, %v7124
      %v7127 = vcvt.s32.f32 %v7120
      %v7128 = vmul.f32 %v7127, %v7125
      %v7129 = vxor.u32 %v7128, 2147483648
      %v7130 = vsel %vm7047, %v7129, %v7128
      %v7131 = vsub.s32 4, %v7107
      %v7132 = vsel %vm7047, %v7131, %v7107
      %v7133 = vsel %vm7046, %v886, %v7130
      %v7134 = vsel %vm7046, 0, %v7132
      %v7135 = vcosq.f32.pop %v7133
      %v7136 = vsinq.f32.pop %v7133
      %vm7137 = vweird.f32 %v886
      %v7138 = vadd.s32 %v7134, 3
      %v7139 = vand.u32 %v7138, 3
      %vm7140 = vcmp.lt.s32.totalorder %v7139, 2
      %vm7141 = vcmp.eq.s32.totalorder %v7139, 0
      %v7142 = vxor.u32 %v7136, 2147483648
      %v7143 = vsel %vm7141, %v7135, %v7142
      %vm7144 = vcmp.eq.s32.totalorder %v7139, 2
      %v7145 = vxor.u32 %v7135, 2147483648
      %v7146 = vsel %vm7144, %v7145, %v7136
      %v7147 = vsel %vm7140, %v7143, %v7146
      %v7148 = vsel %vm7137, nan, %v7147
      %v7149 = vand.u32 2147483647, %v891
      %vm7150 = vcmp.le.f32.partialorder %v7149, 0.7853982
      %vm7151 = vcmp.lt.s32.totalorder %v891, 0
      %v7152 = vand.u32 %v891, 2139095040
      %v7153 = vshrl.u32 %v7152, 23
      %v7154 = vsub.s32 %v7153, 127
      %v7155 = vand.u32 2147483647, %v891
      %v7156 = vand.u32 %v7155, 8388607
      %v7157 = vor.u32 %v7156, 8388608
      %v7158 = vsub.s32 0, %v7157
      %v7159 = vadd.s32 %v7154, 1
      %vm7160 = vcmp.gt.s32.totalorder %v7159, 0
      %v7161 = vsel %vm7160, %v7159, 0
      %v7162 = vshrl.u32 %v7161, 5
      %v7163 = vand.u32 %v7161, 31
      %v7164 = vsub.s32 32, %v7163
      %v7165 = vshrl.u32 683565275, %v7164
      %v7166 = vshll.u32 683565275, %v7163
      %v7167 = vshrl.u32 2475754826, %v7164
      %v7168 = vor.u32 %v7166, %v7167
      %v7169 = vshll.u32 2475754826, %v7163
      %v7170 = vshrl.u32 2131351028, %v7164
      %v7171 = vor.u32 %v7169, %v7170
      %v7172 = vshll.u32 2131351028, %v7163
      %v7173 = vshrl.u32 2102212464, %v7164
      %v7174 = vor.u32 %v7172, %v7173
      %v7175 = vshll.u32 2102212464, %v7163
      %v7176 = vshrl.u32 920167782, %v7164
      %v7177 = vor.u32 %v7175, %v7176
      %v7178 = vshll.u32 920167782, %v7163
      %v7179 = vshrl.u32 1326507024, %v7164
      %v7180 = vor.u32 %v7178, %v7179
      %vm7181 = vcmp.lt.s32.totalorder %v7162, 1
      %vm7182 = vcmp.lt.s32.totalorder %v7162, 2
      %vm7183 = vcmp.lt.s32.totalorder %v7162, 3
      %vm7184 = vcmp.lt.s32.totalorder %v7162, 4
      %v7185 = vsel %vm7181, %v7165, %v7168
      %v7186 = vsel %vm7184, %v7174, 2102212464
      %v7187 = vsel %vm7183, %v7171, %v7186
      %v7188 = vsel %vm7182, %v7185, %v7187
      %v7189 = vsel %vm7181, %v7168, %v7171
      %v7190 = vsel %vm7184, %v7177, 920167782
      %v7191 = vsel %vm7183, %v7174, %v7190
      %v7192 = vsel %vm7182, %v7189, %v7191
      %v7193 = vsel %vm7181, %v7171, %v7174
      %v7194 = vsel %vm7184, %v7180, 1326507024
      %v7195 = vsel %vm7183, %v7177, %v7194
      %v7196 = vsel %vm7182, %v7193, %v7195
      %v7197 = vshll.u32 %v7157, 8
      %v7198 = vmul.u32.u64.compose %v7197, %v7196
      %v7199 = vextract.low.u32 %v7198
      %v7200 = vextract.high.u32 %v7198
      %v7201 = vmul.u32.u64.compose %v7197, %v7192
      %v7202 = vextract.low.u32 %v7201
      %v7203 = vextract.high.u32 %v7201
      %v7204 = vmul.u32 %v7197, %v7188
      %v7205 = vadd.s32 %v7200, %v7202
      %vm7206 = vc.u32 %v7200, %v7202
      %v7207 = vadd.s32 %v7203, 1
      %v7208 = vsel %vm7206, %v7207, %v7203
      %v7209 = vadd.s32 %v7204, %v7208
      %v7210 = vadd.s32 %v7209, 536870912
      %v7211 = vshrl.u32 %v7210, 30
      %v7212 = vshll.u32 %v7211, 30
      %v7213 = vsub.s32 %v7209, %v7212
      %vm7214 = vcmp.lt.s32.totalorder %v7213, 0
      %v7215 = vsub.s32 0, %v7213
      %v7216 = vsel %vm7214, %v7215, %v7213
      %v7217 = vclz %v7216
      %v7218 = vsub.s32 %v7217, 2
      %vm7219 = vcmp.gt.s32.totalorder 0, %v7218
      %v7220 = vsel %vm7219, 0, %v7218
      %v7221 = vsub.s32 32, %v7220
      %v7222 = vshll.u32 %v7213, %v7220
      %v7223 = vshrl.u32 %v7205, %v7221
      %v7224 = vor.u32 %v7222, %v7223
      %v7225 = vsub.s32 4294967266, %v7220
      %v7226 = vadd.s32 %v7225, 127
      %v7227 = vshll.u32 %v7226, 23
      %v7228 = vor.u32 4788187, %v7227
      %v7229 = vand.u32 2147483647, %v7228
      %v7231 = vcvt.s32.f32 %v7224
      %v7232 = vmul.f32 %v7231, %v7229
      %v7233 = vxor.u32 %v7232, 2147483648
      %v7234 = vsel %vm7151, %v7233, %v7232
      %v7235 = vsub.s32 4, %v7211
      %v7236 = vsel %vm7151, %v7235, %v7211
      %v7237 = vsel %vm7150, %v891, %v7234
      %v7238 = vsel %vm7150, 0, %v7236
      %v7239 = vcosq.f32.pop %v7237
      %v7240 = vsinq.f32.pop %v7237
      %vm7241 = vweird.f32 %v891
      %v7242 = vadd.s32 %v7238, 3
      %v7243 = vand.u32 %v7242, 3
      %vm7244 = vcmp.lt.s32.totalorder %v7243, 2
      %vm7245 = vcmp.eq.s32.totalorder %v7243, 0
      %v7246 = vxor.u32 %v7240, 2147483648
      %v7247 = vsel %vm7245, %v7239, %v7246
      %vm7248 = vcmp.eq.s32.totalorder %v7243, 2
      %v7249 = vxor.u32 %v7239, 2147483648
      %v7250 = vsel %vm7248, %v7249, %v7240
      %v7251 = vsel %vm7244, %v7247, %v7250
      %v7252 = vsel %vm7241, nan, %v7251
      %v7253 = vand.u32 2147483647, %v896
      %vm7254 = vcmp.le.f32.partialorder %v7253, 0.7853982
      %vm7255 = vcmp.lt.s32.totalorder %v896, 0
      %v7256 = vand.u32 %v896, 2139095040
      %v7257 = vshrl.u32 %v7256, 23
      %v7258 = vsub.s32 %v7257, 127
      %v7259 = vand.u32 2147483647, %v896
      %v7260 = vand.u32 %v7259, 8388607
      %v7261 = vor.u32 %v7260, 8388608
      %v7262 = vsub.s32 0, %v7261
      %v7263 = vadd.s32 %v7258, 1
      %vm7264 = vcmp.gt.s32.totalorder %v7263, 0
      %v7265 = vsel %vm7264, %v7263, 0
      %v7266 = vshrl.u32 %v7265, 5
      %v7267 = vand.u32 %v7265, 31
      %v7268 = vsub.s32 32, %v7267
      %v7269 = vshrl.u32 683565275, %v7268
      %v7270 = vshll.u32 683565275, %v7267
      %v7271 = vshrl.u32 2475754826, %v7268
      %v7272 = vor.u32 %v7270, %v7271
      %v7273 = vshll.u32 2475754826, %v7267
      %v7274 = vshrl.u32 2131351028, %v7268
      %v7275 = vor.u32 %v7273, %v7274
      %v7276 = vshll.u32 2131351028, %v7267
      %v7277 = vshrl.u32 2102212464, %v7268
      %v7278 = vor.u32 %v7276, %v7277
      %v7279 = vshll.u32 2102212464, %v7267
      %v7280 = vshrl.u32 920167782, %v7268
      %v7281 = vor.u32 %v7279, %v7280
      %v7282 = vshll.u32 920167782, %v7267
      %v7283 = vshrl.u32 1326507024, %v7268
      %v7284 = vor.u32 %v7282, %v7283
      %vm7285 = vcmp.lt.s32.totalorder %v7266, 1
      %vm7286 = vcmp.lt.s32.totalorder %v7266, 2
      %vm7287 = vcmp.lt.s32.totalorder %v7266, 3
      %vm7288 = vcmp.lt.s32.totalorder %v7266, 4
      %v7289 = vsel %vm7285, %v7269, %v7272
      %v7290 = vsel %vm7288, %v7278, 2102212464
      %v7291 = vsel %vm7287, %v7275, %v7290
      %v7292 = vsel %vm7286, %v7289, %v7291
      %v7293 = vsel %vm7285, %v7272, %v7275
      %v7294 = vsel %vm7288, %v7281, 920167782
      %v7295 = vsel %vm7287, %v7278, %v7294
      %v7296 = vsel %vm7286, %v7293, %v7295
      %v7297 = vsel %vm7285, %v7275, %v7278
      %v7298 = vsel %vm7288, %v7284, 1326507024
      %v7299 = vsel %vm7287, %v7281, %v7298
      %v7300 = vsel %vm7286, %v7297, %v7299
      %v7301 = vshll.u32 %v7261, 8
      %v7302 = vmul.u32.u64.compose %v7301, %v7300
      %v7303 = vextract.low.u32 %v7302
      %v7304 = vextract.high.u32 %v7302
      %v7305 = vmul.u32.u64.compose %v7301, %v7296
      %v7306 = vextract.low.u32 %v7305
      %v7307 = vextract.high.u32 %v7305
      %v7308 = vmul.u32 %v7301, %v7292
      %v7309 = vadd.s32 %v7304, %v7306
      %vm7310 = vc.u32 %v7304, %v7306
      %v7311 = vadd.s32 %v7307, 1
      %v7312 = vsel %vm7310, %v7311, %v7307
      %v7313 = vadd.s32 %v7308, %v7312
      %v7314 = vadd.s32 %v7313, 536870912
      %v7315 = vshrl.u32 %v7314, 30
      %v7316 = vshll.u32 %v7315, 30
      %v7317 = vsub.s32 %v7313, %v7316
      %vm7318 = vcmp.lt.s32.totalorder %v7317, 0
      %v7319 = vsub.s32 0, %v7317
      %v7320 = vsel %vm7318, %v7319, %v7317
      %v7321 = vclz %v7320
      %v7322 = vsub.s32 %v7321, 2
      %vm7323 = vcmp.gt.s32.totalorder 0, %v7322
      %v7324 = vsel %vm7323, 0, %v7322
      %v7325 = vsub.s32 32, %v7324
      %v7326 = vshll.u32 %v7317, %v7324
      %v7327 = vshrl.u32 %v7309, %v7325
      %v7328 = vor.u32 %v7326, %v7327
      %v7329 = vsub.s32 4294967266, %v7324
      %v7330 = vadd.s32 %v7329, 127
      %v7331 = vshll.u32 %v7330, 23
      %v7332 = vor.u32 4788187, %v7331
      %v7333 = vand.u32 2147483647, %v7332
      %v7335 = vcvt.s32.f32 %v7328
      %v7336 = vmul.f32 %v7335, %v7333
      %v7337 = vxor.u32 %v7336, 2147483648
      %v7338 = vsel %vm7255, %v7337, %v7336
      %v7339 = vsub.s32 4, %v7315
      %v7340 = vsel %vm7255, %v7339, %v7315
      %v7341 = vsel %vm7254, %v896, %v7338
      %v7342 = vsel %vm7254, 0, %v7340
      %v7343 = vcosq.f32.pop %v7341
      %v7344 = vsinq.f32.pop %v7341
      %vm7345 = vweird.f32 %v896
      %v7346 = vadd.s32 %v7342, 3
      %v7347 = vand.u32 %v7346, 3
      %vm7348 = vcmp.lt.s32.totalorder %v7347, 2
      %vm7349 = vcmp.eq.s32.totalorder %v7347, 0
      %v7350 = vxor.u32 %v7344, 2147483648
      %v7351 = vsel %vm7349, %v7343, %v7350
      %vm7352 = vcmp.eq.s32.totalorder %v7347, 2
      %v7353 = vxor.u32 %v7343, 2147483648
      %v7354 = vsel %vm7352, %v7353, %v7344
      %v7355 = vsel %vm7348, %v7351, %v7354
      %v7356 = vsel %vm7345, nan, %v7355
      %v7357 = vand.u32 2147483647, %v901
      %vm7358 = vcmp.le.f32.partialorder %v7357, 0.7853982
      %vm7359 = vcmp.lt.s32.totalorder %v901, 0
      %v7360 = vand.u32 %v901, 2139095040
      %v7361 = vshrl.u32 %v7360, 23
      %v7362 = vsub.s32 %v7361, 127
      %v7363 = vand.u32 2147483647, %v901
      %v7364 = vand.u32 %v7363, 8388607
      %v7365 = vor.u32 %v7364, 8388608
      %v7366 = vsub.s32 0, %v7365
      %v7367 = vadd.s32 %v7362, 1
      %vm7368 = vcmp.gt.s32.totalorder %v7367, 0
      %v7369 = vsel %vm7368, %v7367, 0
      %v7370 = vshrl.u32 %v7369, 5
      %v7371 = vand.u32 %v7369, 31
      %v7372 = vsub.s32 32, %v7371
      %v7373 = vshrl.u32 683565275, %v7372
      %v7374 = vshll.u32 683565275, %v7371
      %v7375 = vshrl.u32 2475754826, %v7372
      %v7376 = vor.u32 %v7374, %v7375
      %v7377 = vshll.u32 2475754826, %v7371
      %v7378 = vshrl.u32 2131351028, %v7372
      %v7379 = vor.u32 %v7377, %v7378
      %v7380 = vshll.u32 2131351028, %v7371
      %v7381 = vshrl.u32 2102212464, %v7372
      %v7382 = vor.u32 %v7380, %v7381
      %v7383 = vshll.u32 2102212464, %v7371
      %v7384 = vshrl.u32 920167782, %v7372
      %v7385 = vor.u32 %v7383, %v7384
      %v7386 = vshll.u32 920167782, %v7371
      %v7387 = vshrl.u32 1326507024, %v7372
      %v7388 = vor.u32 %v7386, %v7387
      %vm7389 = vcmp.lt.s32.totalorder %v7370, 1
      %vm7390 = vcmp.lt.s32.totalorder %v7370, 2
      %vm7391 = vcmp.lt.s32.totalorder %v7370, 3
      %vm7392 = vcmp.lt.s32.totalorder %v7370, 4
      %v7393 = vsel %vm7389, %v7373, %v7376
      %v7394 = vsel %vm7392, %v7382, 2102212464
      %v7395 = vsel %vm7391, %v7379, %v7394
      %v7396 = vsel %vm7390, %v7393, %v7395
      %v7397 = vsel %vm7389, %v7376, %v7379
      %v7398 = vsel %vm7392, %v7385, 920167782
      %v7399 = vsel %vm7391, %v7382, %v7398
      %v7400 = vsel %vm7390, %v7397, %v7399
      %v7401 = vsel %vm7389, %v7379, %v7382
      %v7402 = vsel %vm7392, %v7388, 1326507024
      %v7403 = vsel %vm7391, %v7385, %v7402
      %v7404 = vsel %vm7390, %v7401, %v7403
      %v7405 = vshll.u32 %v7365, 8
      %v7406 = vmul.u32.u64.compose %v7405, %v7404
      %v7407 = vextract.low.u32 %v7406
      %v7408 = vextract.high.u32 %v7406
      %v7409 = vmul.u32.u64.compose %v7405, %v7400
      %v7410 = vextract.low.u32 %v7409
      %v7411 = vextract.high.u32 %v7409
      %v7412 = vmul.u32 %v7405, %v7396
      %v7413 = vadd.s32 %v7408, %v7410
      %vm7414 = vc.u32 %v7408, %v7410
      %v7415 = vadd.s32 %v7411, 1
      %v7416 = vsel %vm7414, %v7415, %v7411
      %v7417 = vadd.s32 %v7412, %v7416
      %v7418 = vadd.s32 %v7417, 536870912
      %v7419 = vshrl.u32 %v7418, 30
      %v7420 = vshll.u32 %v7419, 30
      %v7421 = vsub.s32 %v7417, %v7420
      %vm7422 = vcmp.lt.s32.totalorder %v7421, 0
      %v7423 = vsub.s32 0, %v7421
      %v7424 = vsel %vm7422, %v7423, %v7421
      %v7425 = vclz %v7424
      %v7426 = vsub.s32 %v7425, 2
      %vm7427 = vcmp.gt.s32.totalorder 0, %v7426
      %v7428 = vsel %vm7427, 0, %v7426
      %v7429 = vsub.s32 32, %v7428
      %v7430 = vshll.u32 %v7421, %v7428
      %v7431 = vshrl.u32 %v7413, %v7429
      %v7432 = vor.u32 %v7430, %v7431
      %v7433 = vsub.s32 4294967266, %v7428
      %v7434 = vadd.s32 %v7433, 127
      %v7435 = vshll.u32 %v7434, 23
      %v7436 = vor.u32 4788187, %v7435
      %v7437 = vand.u32 2147483647, %v7436
      %v7439 = vcvt.s32.f32 %v7432
      %v7440 = vmul.f32 %v7439, %v7437
      %v7441 = vxor.u32 %v7440, 2147483648
      %v7442 = vsel %vm7359, %v7441, %v7440
      %v7443 = vsub.s32 4, %v7419
      %v7444 = vsel %vm7359, %v7443, %v7419
      %v7445 = vsel %vm7358, %v901, %v7442
      %v7446 = vsel %vm7358, 0, %v7444
      %v7447 = vcosq.f32.pop %v7445
      %v7448 = vsinq.f32.pop %v7445
      %vm7449 = vweird.f32 %v901
      %v7450 = vadd.s32 %v7446, 3
      %v7451 = vand.u32 %v7450, 3
      %vm7452 = vcmp.lt.s32.totalorder %v7451, 2
      %vm7453 = vcmp.eq.s32.totalorder %v7451, 0
      %v7454 = vxor.u32 %v7448, 2147483648
      %v7455 = vsel %vm7453, %v7447, %v7454
      %vm7456 = vcmp.eq.s32.totalorder %v7451, 2
      %v7457 = vxor.u32 %v7447, 2147483648
      %v7458 = vsel %vm7456, %v7457, %v7448
      %v7459 = vsel %vm7452, %v7455, %v7458
      %v7460 = vsel %vm7449, nan, %v7459
      %v7461 = vand.u32 2147483647, %v906
      %vm7462 = vcmp.le.f32.partialorder %v7461, 0.7853982
      %vm7463 = vcmp.lt.s32.totalorder %v906, 0
      %v7464 = vand.u32 %v906, 2139095040
      %v7465 = vshrl.u32 %v7464, 23
      %v7466 = vsub.s32 %v7465, 127
      %v7467 = vand.u32 2147483647, %v906
      %v7468 = vand.u32 %v7467, 8388607
      %v7469 = vor.u32 %v7468, 8388608
      %v7470 = vsub.s32 0, %v7469
      %v7471 = vadd.s32 %v7466, 1
      %vm7472 = vcmp.gt.s32.totalorder %v7471, 0
      %v7473 = vsel %vm7472, %v7471, 0
      %v7474 = vshrl.u32 %v7473, 5
      %v7475 = vand.u32 %v7473, 31
      %v7476 = vsub.s32 32, %v7475
      %v7477 = vshrl.u32 683565275, %v7476
      %v7478 = vshll.u32 683565275, %v7475
      %v7479 = vshrl.u32 2475754826, %v7476
      %v7480 = vor.u32 %v7478, %v7479
      %v7481 = vshll.u32 2475754826, %v7475
      %v7482 = vshrl.u32 2131351028, %v7476
      %v7483 = vor.u32 %v7481, %v7482
      %v7484 = vshll.u32 2131351028, %v7475
      %v7485 = vshrl.u32 2102212464, %v7476
      %v7486 = vor.u32 %v7484, %v7485
      %v7487 = vshll.u32 2102212464, %v7475
      %v7488 = vshrl.u32 920167782, %v7476
      %v7489 = vor.u32 %v7487, %v7488
      %v7490 = vshll.u32 920167782, %v7475
      %v7491 = vshrl.u32 1326507024, %v7476
      %v7492 = vor.u32 %v7490, %v7491
      %vm7493 = vcmp.lt.s32.totalorder %v7474, 1
      %vm7494 = vcmp.lt.s32.totalorder %v7474, 2
      %vm7495 = vcmp.lt.s32.totalorder %v7474, 3
      %vm7496 = vcmp.lt.s32.totalorder %v7474, 4
      %v7497 = vsel %vm7493, %v7477, %v7480
      %v7498 = vsel %vm7496, %v7486, 2102212464
      %v7499 = vsel %vm7495, %v7483, %v7498
      %v7500 = vsel %vm7494, %v7497, %v7499
      %v7501 = vsel %vm7493, %v7480, %v7483
      %v7502 = vsel %vm7496, %v7489, 920167782
      %v7503 = vsel %vm7495, %v7486, %v7502
      %v7504 = vsel %vm7494, %v7501, %v7503
      %v7505 = vsel %vm7493, %v7483, %v7486
      %v7506 = vsel %vm7496, %v7492, 1326507024
      %v7507 = vsel %vm7495, %v7489, %v7506
      %v7508 = vsel %vm7494, %v7505, %v7507
      %v7509 = vshll.u32 %v7469, 8
      %v7510 = vmul.u32.u64.compose %v7509, %v7508
      %v7511 = vextract.low.u32 %v7510
      %v7512 = vextract.high.u32 %v7510
      %v7513 = vmul.u32.u64.compose %v7509, %v7504
      %v7514 = vextract.low.u32 %v7513
      %v7515 = vextract.high.u32 %v7513
      %v7516 = vmul.u32 %v7509, %v7500
      %v7517 = vadd.s32 %v7512, %v7514
      %vm7518 = vc.u32 %v7512, %v7514
      %v7519 = vadd.s32 %v7515, 1
      %v7520 = vsel %vm7518, %v7519, %v7515
      %v7521 = vadd.s32 %v7516, %v7520
      %v7522 = vadd.s32 %v7521, 536870912
      %v7523 = vshrl.u32 %v7522, 30
      %v7524 = vshll.u32 %v7523, 30
      %v7525 = vsub.s32 %v7521, %v7524
      %vm7526 = vcmp.lt.s32.totalorder %v7525, 0
      %v7527 = vsub.s32 0, %v7525
      %v7528 = vsel %vm7526, %v7527, %v7525
      %v7529 = vclz %v7528
      %v7530 = vsub.s32 %v7529, 2
      %vm7531 = vcmp.gt.s32.totalorder 0, %v7530
      %v7532 = vsel %vm7531, 0, %v7530
      %v7533 = vsub.s32 32, %v7532
      %v7534 = vshll.u32 %v7525, %v7532
      %v7535 = vshrl.u32 %v7517, %v7533
      %v7536 = vor.u32 %v7534, %v7535
      %v7537 = vsub.s32 4294967266, %v7532
      %v7538 = vadd.s32 %v7537, 127
      %v7539 = vshll.u32 %v7538, 23
      %v7540 = vor.u32 4788187, %v7539
      %v7541 = vand.u32 2147483647, %v7540
      %v7543 = vcvt.s32.f32 %v7536
      %v7544 = vmul.f32 %v7543, %v7541
      %v7545 = vxor.u32 %v7544, 2147483648
      %v7546 = vsel %vm7463, %v7545, %v7544
      %v7547 = vsub.s32 4, %v7523
      %v7548 = vsel %vm7463, %v7547, %v7523
      %v7549 = vsel %vm7462, %v906, %v7546
      %v7550 = vsel %vm7462, 0, %v7548
      %v7551 = vcosq.f32.pop %v7549
      %v7552 = vsinq.f32.pop %v7549
      %vm7553 = vweird.f32 %v906
      %v7554 = vadd.s32 %v7550, 3
      %v7555 = vand.u32 %v7554, 3
      %vm7556 = vcmp.lt.s32.totalorder %v7555, 2
      %vm7557 = vcmp.eq.s32.totalorder %v7555, 0
      %v7558 = vxor.u32 %v7552, 2147483648
      %v7559 = vsel %vm7557, %v7551, %v7558
      %vm7560 = vcmp.eq.s32.totalorder %v7555, 2
      %v7561 = vxor.u32 %v7551, 2147483648
      %v7562 = vsel %vm7560, %v7561, %v7552
      %v7563 = vsel %vm7556, %v7559, %v7562
      %v7564 = vsel %vm7553, nan, %v7563
      %v7565 = vld [vmem:[%s3] sm:$0x3f]
      %v7566 = vld [vmem:[%s4] sm:$0xff]
      %v7567 = vld [vmem:[%s4 + $0x8] sm:$0xff]
      %v7568 = vld [vmem:[%s4 + $0x10] sm:$0xff]
      %v7569 = vld [vmem:[%s4 + $0x18] sm:$0xff]
      %vm7570 = vcmask 261120
      %v7572 = vsel %vm7570, %v1012, 0
      %v7575 = vsel %vm7570, %v1116, 0
      %v7578 = vsel %vm7570, %v1220, 0
      %v7581 = vsel %vm7570, %v1324, 0
      %v7584 = vsel %vm7570, %v1428, 0
      %v7587 = vsel %vm7570, %v1532, 0
      %v7590 = vsel %vm7570, %v1636, 0
      %v7593 = vsel %vm7570, %v1740, 0
      %v7596 = vsel %vm7570, %v1844, 0
      %v7599 = vsel %vm7570, %v1948, 0
      %v7602 = vsel %vm7570, %v2052, 0
      %v7605 = vsel %vm7570, %v2156, 0
      %v7608 = vsel %vm7570, %v2260, 0
      %v7611 = vsel %vm7570, %v2364, 0
      %v7614 = vsel %vm7570, %v2468, 0
      %v7617 = vsel %vm7570, %v2572, 0
      %v7620 = vsel %vm7570, %v2676, 0
      %v7623 = vsel %vm7570, %v2780, 0
      %v7626 = vsel %vm7570, %v2884, 0
      %v7629 = vsel %vm7570, %v2988, 0
      %v7632 = vsel %vm7570, %v3092, 0
      %v7635 = vsel %vm7570, %v3196, 0
      %v7638 = vsel %vm7570, %v3300, 0
      %v7641 = vsel %vm7570, %v3404, 0
      %v7644 = vsel %vm7570, %v3508, 0
      %v7647 = vsel %vm7570, %v3612, 0
      %v7650 = vsel %vm7570, %v3716, 0
      %v7653 = vsel %vm7570, %v3820, 0
      %v7656 = vsel %vm7570, %v3924, 0
      %v7659 = vsel %vm7570, %v4028, 0
      %v7662 = vsel %vm7570, %v4132, 0
      %v7665 = vsel %vm7570, %v4236, 0
      %v7668 = vsel %vm7570, %v4340, 0
      %v7671 = vsel %vm7570, %v4444, 0
      %v7674 = vsel %vm7570, %v4548, 0
      %v7677 = vsel %vm7570, %v4652, 0
      %v7680 = vsel %vm7570, %v4756, 0
      %v7683 = vsel %vm7570, %v4860, 0
      %v7686 = vsel %vm7570, %v4964, 0
      %v7689 = vsel %vm7570, %v5068, 0
      %v7692 = vsel %vm7570, %v5172, 0
      %v7695 = vsel %vm7570, %v5276, 0
      %v7698 = vsel %vm7570, %v5380, 0
      %v7701 = vsel %vm7570, %v5484, 0
      %v7704 = vsel %vm7570, %v5588, 0
      %v7707 = vsel %vm7570, %v5692, 0
      %v7710 = vsel %vm7570, %v5796, 0
      %v7713 = vsel %vm7570, %v5900, 0
      %v7716 = vsel %vm7570, %v6004, 0
      %v7719 = vsel %vm7570, %v6108, 0
      %v7722 = vsel %vm7570, %v6212, 0
      %v7725 = vsel %vm7570, %v6316, 0
      %v7728 = vsel %vm7570, %v6420, 0
      %v7731 = vsel %vm7570, %v6524, 0
      %v7734 = vsel %vm7570, %v6628, 0
      %v7737 = vsel %vm7570, %v6732, 0
      %v7740 = vsel %vm7570, %v6836, 0
      %v7743 = vsel %vm7570, %v6940, 0
      %v7746 = vsel %vm7570, %v7044, 0
      %v7749 = vsel %vm7570, %v7148, 0
      %v7752 = vsel %vm7570, %v7252, 0
      %v7755 = vsel %vm7570, %v7356, 0
      %v7758 = vsel %vm7570, %v7460, 0
      %v7761 = vsel %vm7570, %v7564, 0
      %7763 = vmatprep.subr.mxu0 0.0
      %7764 = vmatpush1.msra.mxu0 %v7566
      %7765 = vmatprep.subr.mxu0 0.0
      %7766 = vmatpush1.msra.mxu0 %v7567
      %7767 = vmatprep.subr.mxu0 0.0
      %7768 = vmatpush1.msra.mxu0 %v7568
      %7769 = vmatprep.subr.mxu0 0.0
      %7770 = vmatpush1.msra.mxu0 %v7569
      %7771 = vmatprep.subr.mxu0 0.0
      %7772 = vmatpush1.msra.mxu0 0.0
      %7773 = vmatprep.subr.mxu0 0.0
      %7774 = vmatpush1.msra.mxu0 0.0
      %7775 = vmatprep.subr.mxu0 0.0
      %7776 = vmatpush1.msra.mxu0 0.0
      %7777 = vmatprep.subr.mxu0 0.0
      %7778 = vmatpush1.msra.mxu0 0.0
      %7779 = vmatprep.subr.mxu0 0.0
      %7780 = vmatpush1.msra.mxu0 0.0
      %7781 = vmatprep.subr.mxu0 0.0
      %7782 = vmatpush1.msra.mxu0 0.0
      %7783 = vmatprep.subr.mxu0 0.0
      %7784 = vmatpush1.msra.mxu0 0.0
      %7785 = vmatprep.subr.mxu0 0.0
      %7786 = vmatpush1.msra.mxu0 0.0
      %7787 = vmatprep.subr.mxu0 0.0
      %7788 = vmatpush1.msra.mxu0 0.0
      %7789 = vmatprep.subr.mxu0 0.0
      %7790 = vmatpush1.msra.mxu0 0.0
      %7791 = vmatprep.subr.mxu0 0.0
      %7792 = vmatpush1.msra.mxu0 0.0
      %7793 = vmatprep.subr.mxu0 0.0
      %7794 = vmatpush1.msra.mxu0 0.0
      %7795 = vmatprep.subr.mxu0 0.0
      %7796 = vmatpush1.msra.mxu0 0.0
      %7797 = vmatprep.subr.mxu0 0.0
      %7798 = vmatpush1.msra.mxu0 0.0
      %7799 = vmatprep.subr.mxu0 0.0
      %7800 = vmatpush1.msra.mxu0 0.0
      %7801 = vmatprep.subr.mxu0 0.0
      %7802 = vmatpush1.msra.mxu0 0.0
      %7803 = vmatprep.subr.mxu0 0.0
      %7804 = vmatpush1.msra.mxu0 0.0
      %7805 = vmatprep.subr.mxu0 0.0
      %7806 = vmatpush1.msra.mxu0 0.0
      %7807 = vmatprep.subr.mxu0 0.0
      %7808 = vmatpush1.msra.mxu0 0.0
      %7809 = vmatprep.subr.mxu0 0.0
      %7810 = vmatpush1.msra.mxu0 0.0
      %7811 = vmatprep.subr.mxu0 0.0
      %7812 = vmatpush1.msra.mxu0 0.0
      %7813 = vmatprep.subr.mxu0 0.0
      %7814 = vmatpush1.msra.mxu0 0.0
      %7815 = vmatprep.subr.mxu0 0.0
      %7816 = vmatpush1.msra.mxu0 0.0
      %7817 = vmatprep.subr.mxu0 0.0
      %7818 = vmatpush1.msra.mxu0 0.0
      %7819 = vmatprep.subr.mxu0 0.0
      %7820 = vmatpush1.msra.mxu0 0.0
      %7821 = vmatprep.subr.mxu0 0.0
      %7822 = vmatpush1.msra.mxu0 0.0
      %7823 = vmatprep.subr.mxu0 0.0
      %7824 = vmatpush1.msra.mxu0 0.0
      %7825 = vmatprep.subr.mxu0 0.0
      %7826 = vmatpush1.msra.mxu0 0.0
      %7827 = vmatprep.mubr.f32.mxu0 0.0
      %7828 = vmatmul.mubr.f32.gmra.mrb[0].mxu0 %v7572
      %v7829 = vpop.f32.mrb[0].mxu0
      %v7830 = vadd.f32 0.0, %v7829
      %v7831 = vpop.f32.mrb[0].mxu0
      %7832 = vmatprep.mubr.f32.mxu0 0.0
      %7833 = vmatmul.mubr.f32.gmra.mrb[0].mxu0 %v7575
      %v7834 = vpop.f32.mrb[0].mxu0
      %v7835 = vadd.f32 0.0, %v7834
      %v7836 = vpop.f32.mrb[0].mxu0
      %7837 = vmatprep.mubr.f32.mxu0 0.0
      %7838 = vmatmul.mubr.f32.gmra.mrb[0].mxu0 %v7578
      %v7839 = vpop.f32.mrb[0].mxu0
      %v7840 = vadd.f32 0.0, %v7839
      %v7841 = vpop.f32.mrb[0].mxu0
      %7842 = vmatprep.mubr.f32.mxu0 0.0
      %7843 = vmatmul.mubr.f32.gmra.mrb[0].mxu0 %v7581
      %v7844 = vpop.f32.mrb[0].mxu0
      %v7845 = vadd.f32 0.0, %v7844
      %v7846 = vpop.f32.mrb[0].mxu0
      %7847 = vmatprep.mubr.f32.mxu0 0.0
      %7848 = vmatmul.mubr.f32.gmra.mrb[0].mxu0 %v7584
      %v7849 = vpop.f32.mrb[0].mxu0
      %v7850 = vadd.f32 0.0, %v7849
      %v7851 = vpop.f32.mrb[0].mxu0
      %7852 = vmatprep.mubr.f32.mxu0 0.0
      %7853 = vmatmul.mubr.f32.gmra.mrb[0].mxu0 %v7587
      %v7854 = vpop.f32.mrb[0].mxu0
      %v7855 = vadd.f32 0.0, %v7854
      %v7856 = vpop.f32.mrb[0].mxu0
      %7857 = vmatprep.mubr.f32.mxu0 0.0
      %7858 = vmatmul.mubr.f32.gmra.mrb[0].mxu0 %v7590
      %v7859 = vpop.f32.mrb[0].mxu0
      %v7860 = vadd.f32 0.0, %v7859
      %v7861 = vpop.f32.mrb[0].mxu0
      %7862 = vmatprep.mubr.f32.mxu0 0.0
      %7863 = vmatmul.mubr.f32.gmra.mrb[0].mxu0 %v7593
      %v7864 = vpop.f32.mrb[0].mxu0
      %v7865 = vadd.f32 0.0, %v7864
      %v7866 = vpop.f32.mrb[0].mxu0
      %7867 = vmatprep.mubr.f32.mxu0 0.0
      %7868 = vmatmul.mubr.f32.gmra.mrb[0].mxu0 %v7596
      %v7869 = vpop.f32.mrb[0].mxu0
      %v7870 = vadd.f32 0.0, %v7869
      %v7871 = vpop.f32.mrb[0].mxu0
      %7872 = vmatprep.mubr.f32.mxu0 0.0
      %7873 = vmatmul.mubr.f32.gmra.mrb[0].mxu0 %v7599
      %v7874 = vpop.f32.mrb[0].mxu0
      %v7875 = vadd.f32 0.0, %v7874
      %v7876 = vpop.f32.mrb[0].mxu0
      %7877 = vmatprep.mubr.f32.mxu0 0.0
      %7878 = vmatmul.mubr.f32.gmra.mrb[0].mxu0 %v7602
      %v7879 = vpop.f32.mrb[0].mxu0
      %v7880 = vadd.f32 0.0, %v7879
      %v7881 = vpop.f32.mrb[0].mxu0
      %7882 = vmatprep.mubr.f32.mxu0 0.0
      %7883 = vmatmul.mubr.f32.gmra.mrb[0].mxu0 %v7605
      %v7884 = vpop.f32.mrb[0].mxu0
      %v7885 = vadd.f32 0.0, %v7884
      %v7886 = vpop.f32.mrb[0].mxu0
      %7887 = vmatprep.mubr.f32.mxu0 0.0
      %7888 = vmatmul.mubr.f32.gmra.mrb[0].mxu0 %v7608
      %v7889 = vpop.f32.mrb[0].mxu0
      %v7890 = vadd.f32 0.0, %v7889
      %v7891 = vpop.f32.mrb[0].mxu0
      %7892 = vmatprep.mubr.f32.mxu0 0.0
      %7893 = vmatmul.mubr.f32.gmra.mrb[0].mxu0 %v7611
      %v7894 = vpop.f32.mrb[0].mxu0
      %v7895 = vadd.f32 0.0, %v7894
      %v7896 = vpop.f32.mrb[0].mxu0
      %7897 = vmatprep.mubr.f32.mxu0 0.0
      %7898 = vmatmul.mubr.f32.gmra.mrb[0].mxu0 %v7614
      %v7899 = vpop.f32.mrb[0].mxu0
      %v7900 = vadd.f32 0.0, %v7899
      %v7901 = vpop.f32.mrb[0].mxu0
      %7902 = vmatprep.mubr.f32.mxu0 0.0
      %7903 = vmatmul.mubr.f32.gmra.mrb[0].mxu0 %v7617
      %v7904 = vpop.f32.mrb[0].mxu0
      %v7905 = vadd.f32 0.0, %v7904
      %v7906 = vpop.f32.mrb[0].mxu0
      %7907 = vmatprep.mubr.f32.mxu0 0.0
      %7908 = vmatmul.mubr.f32.gmra.mrb[0].mxu0 %v7620
      %v7909 = vpop.f32.mrb[0].mxu0
      %v7910 = vadd.f32 0.0, %v7909
      %v7911 = vpop.f32.mrb[0].mxu0
      %7912 = vmatprep.mubr.f32.mxu0 0.0
      %7913 = vmatmul.mubr.f32.gmra.mrb[0].mxu0 %v7623
      %v7914 = vpop.f32.mrb[0].mxu0
      %v7915 = vadd.f32 0.0, %v7914
      %v7916 = vpop.f32.mrb[0].mxu0
      %7917 = vmatprep.mubr.f32.mxu0 0.0
      %7918 = vmatmul.mubr.f32.gmra.mrb[0].mxu0 %v7626
      %v7919 = vpop.f32.mrb[0].mxu0
      %v7920 = vadd.f32 0.0, %v7919
      %v7921 = vpop.f32.mrb[0].mxu0
      %7922 = vmatprep.mubr.f32.mxu0 0.0
      %7923 = vmatmul.mubr.f32.gmra.mrb[0].mxu0 %v7629
      %v7924 = vpop.f32.mrb[0].mxu0
      %v7925 = vadd.f32 0.0, %v7924
      %v7926 = vpop.f32.mrb[0].mxu0
      %7927 = vmatprep.mubr.f32.mxu0 0.0
      %7928 = vmatmul.mubr.f32.gmra.mrb[0].mxu0 %v7632
      %v7929 = vpop.f32.mrb[0].mxu0
      %v7930 = vadd.f32 0.0, %v7929
      %v7931 = vpop.f32.mrb[0].mxu0
      %7932 = vmatprep.mubr.f32.mxu0 0.0
      %7933 = vmatmul.mubr.f32.gmra.mrb[0].mxu0 %v7635
      %v7934 = vpop.f32.mrb[0].mxu0
      %v7935 = vadd.f32 0.0, %v7934
      %v7936 = vpop.f32.mrb[0].mxu0
      %7937 = vmatprep.mubr.f32.mxu0 0.0
      %7938 = vmatmul.mubr.f32.gmra.mrb[0].mxu0 %v7638
      %v7939 = vpop.f32.mrb[0].mxu0
      %v7940 = vadd.f32 0.0, %v7939
      %v7941 = vpop.f32.mrb[0].mxu0
      %7942 = vmatprep.mubr.f32.mxu0 0.0
      %7943 = vmatmul.mubr.f32.gmra.mrb[0].mxu0 %v7641
      %v7944 = vpop.f32.mrb[0].mxu0
      %v7945 = vadd.f32 0.0, %v7944
      %v7946 = vpop.f32.mrb[0].mxu0
      %7947 = vmatprep.mubr.f32.mxu0 0.0
      %7948 = vmatmul.mubr.f32.gmra.mrb[0].mxu0 %v7644
      %v7949 = vpop.f32.mrb[0].mxu0
      %v7950 = vadd.f32 0.0, %v7949
      %v7951 = vpop.f32.mrb[0].mxu0
      %7952 = vmatprep.mubr.f32.mxu0 0.0
      %7953 = vmatmul.mubr.f32.gmra.mrb[0].mxu0 %v7647
      %v7954 = vpop.f32.mrb[0].mxu0
      %v7955 = vadd.f32 0.0, %v7954
      %v7956 = vpop.f32.mrb[0].mxu0
      %7957 = vmatprep.mubr.f32.mxu0 0.0
      %7958 = vmatmul.mubr.f32.gmra.mrb[0].mxu0 %v7650
      %v7959 = vpop.f32.mrb[0].mxu0
      %v7960 = vadd.f32 0.0, %v7959
      %v7961 = vpop.f32.mrb[0].mxu0
      %7962 = vmatprep.mubr.f32.mxu0 0.0
      %7963 = vmatmul.mubr.f32.gmra.mrb[0].mxu0 %v7653
      %v7964 = vpop.f32.mrb[0].mxu0
      %v7965 = vadd.f32 0.0, %v7964
      %v7966 = vpop.f32.mrb[0].mxu0
      %7967 = vmatprep.mubr.f32.mxu0 0.0
      %7968 = vmatmul.mubr.f32.gmra.mrb[0].mxu0 %v7656
      %v7969 = vpop.f32.mrb[0].mxu0
      %v7970 = vadd.f32 0.0, %v7969
      %v7971 = vpop.f32.mrb[0].mxu0
      %7972 = vmatprep.mubr.f32.mxu0 0.0
      %7973 = vmatmul.mubr.f32.gmra.mrb[0].mxu0 %v7659
      %v7974 = vpop.f32.mrb[0].mxu0
      %v7975 = vadd.f32 0.0, %v7974
      %v7976 = vpop.f32.mrb[0].mxu0
      %7977 = vmatprep.mubr.f32.mxu0 0.0
      %7978 = vmatmul.mubr.f32.gmra.mrb[0].mxu0 %v7662
      %v7979 = vpop.f32.mrb[0].mxu0
      %v7980 = vadd.f32 0.0, %v7979
      %v7981 = vpop.f32.mrb[0].mxu0
      %7982 = vmatprep.mubr.f32.mxu0 0.0
      %7983 = vmatmul.mubr.f32.gmra.mrb[0].mxu0 %v7665
      %v7984 = vpop.f32.mrb[0].mxu0
      %v7985 = vadd.f32 0.0, %v7984
      %v7986 = vpop.f32.mrb[0].mxu0
      %7987 = vmatprep.mubr.f32.mxu0 0.0
      %7988 = vmatmul.mubr.f32.gmra.mrb[0].mxu0 %v7668
      %v7989 = vpop.f32.mrb[0].mxu0
      %v7990 = vadd.f32 0.0, %v7989
      %v7991 = vpop.f32.mrb[0].mxu0
      %7992 = vmatprep.mubr.f32.mxu0 0.0
      %7993 = vmatmul.mubr.f32.gmra.mrb[0].mxu0 %v7671
      %v7994 = vpop.f32.mrb[0].mxu0
      %v7995 = vadd.f32 0.0, %v7994
      %v7996 = vpop.f32.mrb[0].mxu0
      %7997 = vmatprep.mubr.f32.mxu0 0.0
      %7998 = vmatmul.mubr.f32.gmra.mrb[0].mxu0 %v7674
      %v7999 = vpop.f32.mrb[0].mxu0
      %v8000 = vadd.f32 0.0, %v7999
      %v8001 = vpop.f32.mrb[0].mxu0
      %8002 = vmatprep.mubr.f32.mxu0 0.0
      %8003 = vmatmul.mubr.f32.gmra.mrb[0].mxu0 %v7677
      %v8004 = vpop.f32.mrb[0].mxu0
      %v8005 = vadd.f32 0.0, %v8004
      %v8006 = vpop.f32.mrb[0].mxu0
      %8007 = vmatprep.mubr.f32.mxu0 0.0
      %8008 = vmatmul.mubr.f32.gmra.mrb[0].mxu0 %v7680
      %v8009 = vpop.f32.mrb[0].mxu0
      %v8010 = vadd.f32 0.0, %v8009
      %v8011 = vpop.f32.mrb[0].mxu0
      %8012 = vmatprep.mubr.f32.mxu0 0.0
      %8013 = vmatmul.mubr.f32.gmra.mrb[0].mxu0 %v7683
      %v8014 = vpop.f32.mrb[0].mxu0
      %v8015 = vadd.f32 0.0, %v8014
      %v8016 = vpop.f32.mrb[0].mxu0
      %8017 = vmatprep.mubr.f32.mxu0 0.0
      %8018 = vmatmul.mubr.f32.gmra.mrb[0].mxu0 %v7686
      %v8019 = vpop.f32.mrb[0].mxu0
      %v8020 = vadd.f32 0.0, %v8019
      %v8021 = vpop.f32.mrb[0].mxu0
      %8022 = vmatprep.mubr.f32.mxu0 0.0
      %8023 = vmatmul.mubr.f32.gmra.mrb[0].mxu0 %v7689
      %v8024 = vpop.f32.mrb[0].mxu0
      %v8025 = vadd.f32 0.0, %v8024
      %v8026 = vpop.f32.mrb[0].mxu0
      %8027 = vmatprep.mubr.f32.mxu0 0.0
      %8028 = vmatmul.mubr.f32.gmra.mrb[0].mxu0 %v7692
      %v8029 = vpop.f32.mrb[0].mxu0
      %v8030 = vadd.f32 0.0, %v8029
      %v8031 = vpop.f32.mrb[0].mxu0
      %8032 = vmatprep.mubr.f32.mxu0 0.0
      %8033 = vmatmul.mubr.f32.gmra.mrb[0].mxu0 %v7695
      %v8034 = vpop.f32.mrb[0].mxu0
      %v8035 = vadd.f32 0.0, %v8034
      %v8036 = vpop.f32.mrb[0].mxu0
      %8037 = vmatprep.mubr.f32.mxu0 0.0
      %8038 = vmatmul.mubr.f32.gmra.mrb[0].mxu0 %v7698
      %v8039 = vpop.f32.mrb[0].mxu0
      %v8040 = vadd.f32 0.0, %v8039
      %v8041 = vpop.f32.mrb[0].mxu0
      %8042 = vmatprep.mubr.f32.mxu0 0.0
      %8043 = vmatmul.mubr.f32.gmra.mrb[0].mxu0 %v7701
      %v8044 = vpop.f32.mrb[0].mxu0
      %v8045 = vadd.f32 0.0, %v8044
      %v8046 = vpop.f32.mrb[0].mxu0
      %8047 = vmatprep.mubr.f32.mxu0 0.0
      %8048 = vmatmul.mubr.f32.gmra.mrb[0].mxu0 %v7704
      %v8049 = vpop.f32.mrb[0].mxu0
      %v8050 = vadd.f32 0.0, %v8049
      %v8051 = vpop.f32.mrb[0].mxu0
      %8052 = vmatprep.mubr.f32.mxu0 0.0
      %8053 = vmatmul.mubr.f32.gmra.mrb[0].mxu0 %v7707
      %v8054 = vpop.f32.mrb[0].mxu0
      %v8055 = vadd.f32 0.0, %v8054
      %v8056 = vpop.f32.mrb[0].mxu0
      %8057 = vmatprep.mubr.f32.mxu0 0.0
      %8058 = vmatmul.mubr.f32.gmra.mrb[0].mxu0 %v7710
      %v8059 = vpop.f32.mrb[0].mxu0
      %v8060 = vadd.f32 0.0, %v8059
      %v8061 = vpop.f32.mrb[0].mxu0
      %8062 = vmatprep.mubr.f32.mxu0 0.0
      %8063 = vmatmul.mubr.f32.gmra.mrb[0].mxu0 %v7713
      %v8064 = vpop.f32.mrb[0].mxu0
      %v8065 = vadd.f32 0.0, %v8064
      %v8066 = vpop.f32.mrb[0].mxu0
      %8067 = vmatprep.mubr.f32.mxu0 0.0
      %8068 = vmatmul.mubr.f32.gmra.mrb[0].mxu0 %v7716
      %v8069 = vpop.f32.mrb[0].mxu0
      %v8070 = vadd.f32 0.0, %v8069
      %v8071 = vpop.f32.mrb[0].mxu0
      %8072 = vmatprep.mubr.f32.mxu0 0.0
      %8073 = vmatmul.mubr.f32.gmra.mrb[0].mxu0 %v7719
      %v8074 = vpop.f32.mrb[0].mxu0
      %v8075 = vadd.f32 0.0, %v8074
      %v8076 = vpop.f32.mrb[0].mxu0
      %8077 = vmatprep.mubr.f32.mxu0 0.0
      %8078 = vmatmul.mubr.f32.gmra.mrb[0].mxu0 %v7722
      %v8079 = vpop.f32.mrb[0].mxu0
      %v8080 = vadd.f32 0.0, %v8079
      %v8081 = vpop.f32.mrb[0].mxu0
      %8082 = vmatprep.mubr.f32.mxu0 0.0
      %8083 = vmatmul.mubr.f32.gmra.mrb[0].mxu0 %v7725
      %v8084 = vpop.f32.mrb[0].mxu0
      %v8085 = vadd.f32 0.0, %v8084
      %v8086 = vpop.f32.mrb[0].mxu0
      %8087 = vmatprep.mubr.f32.mxu0 0.0
      %8088 = vmatmul.mubr.f32.gmra.mrb[0].mxu0 %v7728
      %v8089 = vpop.f32.mrb[0].mxu0
      %v8090 = vadd.f32 0.0, %v8089
      %v8091 = vpop.f32.mrb[0].mxu0
      %8092 = vmatprep.mubr.f32.mxu0 0.0
      %8093 = vmatmul.mubr.f32.gmra.mrb[0].mxu0 %v7731
      %v8094 = vpop.f32.mrb[0].mxu0
      %v8095 = vadd.f32 0.0, %v8094
      %v8096 = vpop.f32.mrb[0].mxu0
      %8097 = vmatprep.mubr.f32.mxu0 0.0
      %8098 = vmatmul.mubr.f32.gmra.mrb[0].mxu0 %v7734
      %v8099 = vpop.f32.mrb[0].mxu0
      %v8100 = vadd.f32 0.0, %v8099
      %v8101 = vpop.f32.mrb[0].mxu0
      %8102 = vmatprep.mubr.f32.mxu0 0.0
      %8103 = vmatmul.mubr.f32.gmra.mrb[0].mxu0 %v7737
      %v8104 = vpop.f32.mrb[0].mxu0
      %v8105 = vadd.f32 0.0, %v8104
      %v8106 = vpop.f32.mrb[0].mxu0
      %8107 = vmatprep.mubr.f32.mxu0 0.0
      %8108 = vmatmul.mubr.f32.gmra.mrb[0].mxu0 %v7740
      %v8109 = vpop.f32.mrb[0].mxu0
      %v8110 = vadd.f32 0.0, %v8109
      %v8111 = vpop.f32.mrb[0].mxu0
      %8112 = vmatprep.mubr.f32.mxu0 0.0
      %8113 = vmatmul.mubr.f32.gmra.mrb[0].mxu0 %v7743
      %v8114 = vpop.f32.mrb[0].mxu0
      %v8115 = vadd.f32 0.0, %v8114
      %v8116 = vpop.f32.mrb[0].mxu0
      %8117 = vmatprep.mubr.f32.mxu0 0.0
      %8118 = vmatmul.mubr.f32.gmra.mrb[0].mxu0 %v7746
      %v8119 = vpop.f32.mrb[0].mxu0
      %v8120 = vadd.f32 0.0, %v8119
      %v8121 = vpop.f32.mrb[0].mxu0
      %8122 = vmatprep.mubr.f32.mxu0 0.0
      %8123 = vmatmul.mubr.f32.gmra.mrb[0].mxu0 %v7749
      %v8124 = vpop.f32.mrb[0].mxu0
      %v8125 = vadd.f32 0.0, %v8124
      %v8126 = vpop.f32.mrb[0].mxu0
      %8127 = vmatprep.mubr.f32.mxu0 0.0
      %8128 = vmatmul.mubr.f32.gmra.mrb[0].mxu0 %v7752
      %v8129 = vpop.f32.mrb[0].mxu0
      %v8130 = vadd.f32 0.0, %v8129
      %v8131 = vpop.f32.mrb[0].mxu0
      %8132 = vmatprep.mubr.f32.mxu0 0.0
      %8133 = vmatmul.mubr.f32.gmra.mrb[0].mxu0 %v7755
      %v8134 = vpop.f32.mrb[0].mxu0
      %v8135 = vadd.f32 0.0, %v8134
      %v8136 = vpop.f32.mrb[0].mxu0
      %8137 = vmatprep.mubr.f32.mxu0 0.0
      %8138 = vmatmul.mubr.f32.gmra.mrb[0].mxu0 %v7758
      %v8139 = vpop.f32.mrb[0].mxu0
      %v8140 = vadd.f32 0.0, %v8139
      %v8141 = vpop.f32.mrb[0].mxu0
      %8142 = vmatprep.mubr.f32.mxu0 0.0
      %8143 = vmatmul.mubr.f32.gmra.mrb[0].mxu0 %v7761
      %v8144 = vpop.f32.mrb[0].mxu0
      %v8145 = vadd.f32 0.0, %v8144
      %v8146 = vpop.f32.mrb[0].mxu0
      %8147 = vdwg.mxu0
      %v8149 = vsel %vm520, %v7565, 0
      %8151 = vmatprep.subr.mxu0 0.0
      %8152 = vmatpush1.msra.mxu0 %v8149
      %8153 = vmatprep.subr.mxu0 0.0
      %8154 = vmatpush1.msra.mxu0 0.0
      %8155 = vmatprep.subr.mxu0 0.0
      %8156 = vmatpush1.msra.mxu0 0.0
      %8157 = vmatprep.subr.mxu0 0.0
      %8158 = vmatpush1.msra.mxu0 0.0
      %8159 = vmatprep.subr.mxu0 0.0
      %8160 = vmatpush1.msra.mxu0 0.0
      %8161 = vmatprep.subr.mxu0 0.0
      %8162 = vmatpush1.msra.mxu0 0.0
      %8163 = vmatprep.subr.mxu0 0.0
      %8164 = vmatpush1.msra.mxu0 0.0
      %8165 = vmatprep.subr.mxu0 0.0
      %8166 = vmatpush1.msra.mxu0 0.0
      %8167 = vmatprep.subr.mxu0 0.0
      %8168 = vmatpush1.msra.mxu0 0.0
      %8169 = vmatprep.subr.mxu0 0.0
      %8170 = vmatpush1.msra.mxu0 0.0
      %8171 = vmatprep.subr.mxu0 0.0
      %8172 = vmatpush1.msra.mxu0 0.0
      %8173 = vmatprep.subr.mxu0 0.0
      %8174 = vmatpush1.msra.mxu0 0.0
      %8175 = vmatprep.subr.mxu0 0.0
      %8176 = vmatpush1.msra.mxu0 0.0
      %8177 = vmatprep.subr.mxu0 0.0
      %8178 = vmatpush1.msra.mxu0 0.0
      %8179 = vmatprep.subr.mxu0 0.0
      %8180 = vmatpush1.msra.mxu0 0.0
      %8181 = vmatprep.subr.mxu0 0.0
      %8182 = vmatpush1.msra.mxu0 0.0
      %8183 = vmatprep.subr.mxu0 0.0
      %8184 = vmatpush1.msra.mxu0 0.0
      %8185 = vmatprep.subr.mxu0 0.0
      %8186 = vmatpush1.msra.mxu0 0.0
      %8187 = vmatprep.subr.mxu0 0.0
      %8188 = vmatpush1.msra.mxu0 0.0
      %8189 = vmatprep.subr.mxu0 0.0
      %8190 = vmatpush1.msra.mxu0 0.0
      %8191 = vmatprep.subr.mxu0 0.0
      %8192 = vmatpush1.msra.mxu0 0.0
      %8193 = vmatprep.subr.mxu0 0.0
      %8194 = vmatpush1.msra.mxu0 0.0
      %8195 = vmatprep.subr.mxu0 0.0
      %8196 = vmatpush1.msra.mxu0 0.0
      %8197 = vmatprep.subr.mxu0 0.0
      %8198 = vmatpush1.msra.mxu0 0.0
      %8199 = vmatprep.subr.mxu0 0.0
      %8200 = vmatpush1.msra.mxu0 0.0
      %8201 = vmatprep.subr.mxu0 0.0
      %8202 = vmatpush1.msra.mxu0 0.0
      %8203 = vmatprep.subr.mxu0 0.0
      %8204 = vmatpush1.msra.mxu0 0.0
      %8205 = vmatprep.subr.mxu0 0.0
      %8206 = vmatpush1.msra.mxu0 0.0
      %8207 = vmatprep.subr.mxu0 0.0
      %8208 = vmatpush1.msra.mxu0 0.0
      %8209 = vmatprep.subr.mxu0 0.0
      %8210 = vmatpush1.msra.mxu0 0.0
      %8211 = vmatprep.subr.mxu0 0.0
      %8212 = vmatpush1.msra.mxu0 0.0
      %8213 = vmatprep.subr.mxu0 0.0
      %8214 = vmatpush1.msra.mxu0 0.0
      %8215 = vmatprep.mubr.f32.mxu0 0.0
      %8216 = vmatmul.mubr.f32.gmra.mrb[0].mxu0 %v329
      %v8217 = vpop.f32.mrb[0].mxu0
      %v8218 = vadd.f32 %v7830, %v8217
      %v8219 = vpop.f32.mrb[0].mxu0
      %8220 = vmatprep.mubr.f32.mxu0 0.0
      %8221 = vmatmul.mubr.f32.gmra.mrb[0].mxu0 %v332
      %v8222 = vpop.f32.mrb[0].mxu0
      %v8223 = vadd.f32 %v7835, %v8222
      %v8224 = vpop.f32.mrb[0].mxu0
      %8225 = vmatprep.mubr.f32.mxu0 0.0
      %8226 = vmatmul.mubr.f32.gmra.mrb[0].mxu0 %v335
      %v8227 = vpop.f32.mrb[0].mxu0
      %v8228 = vadd.f32 %v7840, %v8227
      %v8229 = vpop.f32.mrb[0].mxu0
      %8230 = vmatprep.mubr.f32.mxu0 0.0
      %8231 = vmatmul.mubr.f32.gmra.mrb[0].mxu0 %v338
      %v8232 = vpop.f32.mrb[0].mxu0
      %v8233 = vadd.f32 %v7845, %v8232
      %v8234 = vpop.f32.mrb[0].mxu0
      %8235 = vmatprep.mubr.f32.mxu0 0.0
      %8236 = vmatmul.mubr.f32.gmra.mrb[0].mxu0 %v341
      %v8237 = vpop.f32.mrb[0].mxu0
      %v8238 = vadd.f32 %v7850, %v8237
      %v8239 = vpop.f32.mrb[0].mxu0
      %8240 = vmatprep.mubr.f32.mxu0 0.0
      %8241 = vmatmul.mubr.f32.gmra.mrb[0].mxu0 %v344
      %v8242 = vpop.f32.mrb[0].mxu0
      %v8243 = vadd.f32 %v7855, %v8242
      %v8244 = vpop.f32.mrb[0].mxu0
      %8245 = vmatprep.mubr.f32.mxu0 0.0
      %8246 = vmatmul.mubr.f32.gmra.mrb[0].mxu0 %v347
      %v8247 = vpop.f32.mrb[0].mxu0
      %v8248 = vadd.f32 %v7860, %v8247
      %v8249 = vpop.f32.mrb[0].mxu0
      %8250 = vmatprep.mubr.f32.mxu0 0.0
      %8251 = vmatmul.mubr.f32.gmra.mrb[0].mxu0 %v350
      %v8252 = vpop.f32.mrb[0].mxu0
      %v8253 = vadd.f32 %v7865, %v8252
      %v8254 = vpop.f32.mrb[0].mxu0
      %8255 = vmatprep.mubr.f32.mxu0 0.0
      %8256 = vmatmul.mubr.f32.gmra.mrb[0].mxu0 %v353
      %v8257 = vpop.f32.mrb[0].mxu0
      %v8258 = vadd.f32 %v7870, %v8257
      %v8259 = vpop.f32.mrb[0].mxu0
      %8260 = vmatprep.mubr.f32.mxu0 0.0
      %8261 = vmatmul.mubr.f32.gmra.mrb[0].mxu0 %v356
      %v8262 = vpop.f32.mrb[0].mxu0
      %v8263 = vadd.f32 %v7875, %v8262
      %v8264 = vpop.f32.mrb[0].mxu0
      %8265 = vmatprep.mubr.f32.mxu0 0.0
      %8266 = vmatmul.mubr.f32.gmra.mrb[0].mxu0 %v359
      %v8267 = vpop.f32.mrb[0].mxu0
      %v8268 = vadd.f32 %v7880, %v8267
      %v8269 = vpop.f32.mrb[0].mxu0
      %8270 = vmatprep.mubr.f32.mxu0 0.0
      %8271 = vmatmul.mubr.f32.gmra.mrb[0].mxu0 %v362
      %v8272 = vpop.f32.mrb[0].mxu0
      %v8273 = vadd.f32 %v7885, %v8272
      %v8274 = vpop.f32.mrb[0].mxu0
      %8275 = vmatprep.mubr.f32.mxu0 0.0
      %8276 = vmatmul.mubr.f32.gmra.mrb[0].mxu0 %v365
      %v8277 = vpop.f32.mrb[0].mxu0
      %v8278 = vadd.f32 %v7890, %v8277
      %v8279 = vpop.f32.mrb[0].mxu0
      %8280 = vmatprep.mubr.f32.mxu0 0.0
      %8281 = vmatmul.mubr.f32.gmra.mrb[0].mxu0 %v368
      %v8282 = vpop.f32.mrb[0].mxu0
      %v8283 = vadd.f32 %v7895, %v8282
      %v8284 = vpop.f32.mrb[0].mxu0
      %8285 = vmatprep.mubr.f32.mxu0 0.0
      %8286 = vmatmul.mubr.f32.gmra.mrb[0].mxu0 %v371
      %v8287 = vpop.f32.mrb[0].mxu0
      %v8288 = vadd.f32 %v7900, %v8287
      %v8289 = vpop.f32.mrb[0].mxu0
      %8290 = vmatprep.mubr.f32.mxu0 0.0
      %8291 = vmatmul.mubr.f32.gmra.mrb[0].mxu0 %v374
      %v8292 = vpop.f32.mrb[0].mxu0
      %v8293 = vadd.f32 %v7905, %v8292
      %v8294 = vpop.f32.mrb[0].mxu0
      %8295 = vmatprep.mubr.f32.mxu0 0.0
      %8296 = vmatmul.mubr.f32.gmra.mrb[0].mxu0 %v377
      %v8297 = vpop.f32.mrb[0].mxu0
      %v8298 = vadd.f32 %v7910, %v8297
      %v8299 = vpop.f32.mrb[0].mxu0
      %8300 = vmatprep.mubr.f32.mxu0 0.0
      %8301 = vmatmul.mubr.f32.gmra.mrb[0].mxu0 %v380
      %v8302 = vpop.f32.mrb[0].mxu0
      %v8303 = vadd.f32 %v7915, %v8302
      %v8304 = vpop.f32.mrb[0].mxu0
      %8305 = vmatprep.mubr.f32.mxu0 0.0
      %8306 = vmatmul.mubr.f32.gmra.mrb[0].mxu0 %v383
      %v8307 = vpop.f32.mrb[0].mxu0
      %v8308 = vadd.f32 %v7920, %v8307
      %v8309 = vpop.f32.mrb[0].mxu0
      %8310 = vmatprep.mubr.f32.mxu0 0.0
      %8311 = vmatmul.mubr.f32.gmra.mrb[0].mxu0 %v386
      %v8312 = vpop.f32.mrb[0].mxu0
      %v8313 = vadd.f32 %v7925, %v8312
      %v8314 = vpop.f32.mrb[0].mxu0
      %8315 = vmatprep.mubr.f32.mxu0 0.0
      %8316 = vmatmul.mubr.f32.gmra.mrb[0].mxu0 %v389
      %v8317 = vpop.f32.mrb[0].mxu0
      %v8318 = vadd.f32 %v7930, %v8317
      %v8319 = vpop.f32.mrb[0].mxu0
      %8320 = vmatprep.mubr.f32.mxu0 0.0
      %8321 = vmatmul.mubr.f32.gmra.mrb[0].mxu0 %v392
      %v8322 = vpop.f32.mrb[0].mxu0
      %v8323 = vadd.f32 %v7935, %v8322
      %v8324 = vpop.f32.mrb[0].mxu0
      %8325 = vmatprep.mubr.f32.mxu0 0.0
      %8326 = vmatmul.mubr.f32.gmra.mrb[0].mxu0 %v395
      %v8327 = vpop.f32.mrb[0].mxu0
      %v8328 = vadd.f32 %v7940, %v8327
      %v8329 = vpop.f32.mrb[0].mxu0
      %8330 = vmatprep.mubr.f32.mxu0 0.0
      %8331 = vmatmul.mubr.f32.gmra.mrb[0].mxu0 %v398
      %v8332 = vpop.f32.mrb[0].mxu0
      %v8333 = vadd.f32 %v7945, %v8332
      %v8334 = vpop.f32.mrb[0].mxu0
      %8335 = vmatprep.mubr.f32.mxu0 0.0
      %8336 = vmatmul.mubr.f32.gmra.mrb[0].mxu0 %v401
      %v8337 = vpop.f32.mrb[0].mxu0
      %v8338 = vadd.f32 %v7950, %v8337
      %v8339 = vpop.f32.mrb[0].mxu0
      %8340 = vmatprep.mubr.f32.mxu0 0.0
      %8341 = vmatmul.mubr.f32.gmra.mrb[0].mxu0 %v404
      %v8342 = vpop.f32.mrb[0].mxu0
      %v8343 = vadd.f32 %v7955, %v8342
      %v8344 = vpop.f32.mrb[0].mxu0
      %8345 = vmatprep.mubr.f32.mxu0 0.0
      %8346 = vmatmul.mubr.f32.gmra.mrb[0].mxu0 %v407
      %v8347 = vpop.f32.mrb[0].mxu0
      %v8348 = vadd.f32 %v7960, %v8347
      %v8349 = vpop.f32.mrb[0].mxu0
      %8350 = vmatprep.mubr.f32.mxu0 0.0
      %8351 = vmatmul.mubr.f32.gmra.mrb[0].mxu0 %v410
      %v8352 = vpop.f32.mrb[0].mxu0
      %v8353 = vadd.f32 %v7965, %v8352
      %v8354 = vpop.f32.mrb[0].mxu0
      %8355 = vmatprep.mubr.f32.mxu0 0.0
      %8356 = vmatmul.mubr.f32.gmra.mrb[0].mxu0 %v413
      %v8357 = vpop.f32.mrb[0].mxu0
      %v8358 = vadd.f32 %v7970, %v8357
      %v8359 = vpop.f32.mrb[0].mxu0
      %8360 = vmatprep.mubr.f32.mxu0 0.0
      %8361 = vmatmul.mubr.f32.gmra.mrb[0].mxu0 %v416
      %v8362 = vpop.f32.mrb[0].mxu0
      %v8363 = vadd.f32 %v7975, %v8362
      %v8364 = vpop.f32.mrb[0].mxu0
      %8365 = vmatprep.mubr.f32.mxu0 0.0
      %8366 = vmatmul.mubr.f32.gmra.mrb[0].mxu0 %v419
      %v8367 = vpop.f32.mrb[0].mxu0
      %v8368 = vadd.f32 %v7980, %v8367
      %v8369 = vpop.f32.mrb[0].mxu0
      %8370 = vmatprep.mubr.f32.mxu0 0.0
      %8371 = vmatmul.mubr.f32.gmra.mrb[0].mxu0 %v422
      %v8372 = vpop.f32.mrb[0].mxu0
      %v8373 = vadd.f32 %v7985, %v8372
      %v8374 = vpop.f32.mrb[0].mxu0
      %8375 = vmatprep.mubr.f32.mxu0 0.0
      %8376 = vmatmul.mubr.f32.gmra.mrb[0].mxu0 %v425
      %v8377 = vpop.f32.mrb[0].mxu0
      %v8378 = vadd.f32 %v7990, %v8377
      %v8379 = vpop.f32.mrb[0].mxu0
      %8380 = vmatprep.mubr.f32.mxu0 0.0
      %8381 = vmatmul.mubr.f32.gmra.mrb[0].mxu0 %v428
      %v8382 = vpop.f32.mrb[0].mxu0
      %v8383 = vadd.f32 %v7995, %v8382
      %v8384 = vpop.f32.mrb[0].mxu0
      %8385 = vmatprep.mubr.f32.mxu0 0.0
      %8386 = vmatmul.mubr.f32.gmra.mrb[0].mxu0 %v431
      %v8387 = vpop.f32.mrb[0].mxu0
      %v8388 = vadd.f32 %v8000, %v8387
      %v8389 = vpop.f32.mrb[0].mxu0
      %8390 = vmatprep.mubr.f32.mxu0 0.0
      %8391 = vmatmul.mubr.f32.gmra.mrb[0].mxu0 %v434
      %v8392 = vpop.f32.mrb[0].mxu0
      %v8393 = vadd.f32 %v8005, %v8392
      %v8394 = vpop.f32.mrb[0].mxu0
      %8395 = vmatprep.mubr.f32.mxu0 0.0
      %8396 = vmatmul.mubr.f32.gmra.mrb[0].mxu0 %v437
      %v8397 = vpop.f32.mrb[0].mxu0
      %v8398 = vadd.f32 %v8010, %v8397
      %v8399 = vpop.f32.mrb[0].mxu0
      %8400 = vmatprep.mubr.f32.mxu0 0.0
      %8401 = vmatmul.mubr.f32.gmra.mrb[0].mxu0 %v440
      %v8402 = vpop.f32.mrb[0].mxu0
      %v8403 = vadd.f32 %v8015, %v8402
      %v8404 = vpop.f32.mrb[0].mxu0
      %8405 = vmatprep.mubr.f32.mxu0 0.0
      %8406 = vmatmul.mubr.f32.gmra.mrb[0].mxu0 %v443
      %v8407 = vpop.f32.mrb[0].mxu0
      %v8408 = vadd.f32 %v8020, %v8407
      %v8409 = vpop.f32.mrb[0].mxu0
      %8410 = vmatprep.mubr.f32.mxu0 0.0
      %8411 = vmatmul.mubr.f32.gmra.mrb[0].mxu0 %v446
      %v8412 = vpop.f32.mrb[0].mxu0
      %v8413 = vadd.f32 %v8025, %v8412
      %v8414 = vpop.f32.mrb[0].mxu0
      %8415 = vmatprep.mubr.f32.mxu0 0.0
      %8416 = vmatmul.mubr.f32.gmra.mrb[0].mxu0 %v449
      %v8417 = vpop.f32.mrb[0].mxu0
      %v8418 = vadd.f32 %v8030, %v8417
      %v8419 = vpop.f32.mrb[0].mxu0
      %8420 = vmatprep.mubr.f32.mxu0 0.0
      %8421 = vmatmul.mubr.f32.gmra.mrb[0].mxu0 %v452
      %v8422 = vpop.f32.mrb[0].mxu0
      %v8423 = vadd.f32 %v8035, %v8422
      %v8424 = vpop.f32.mrb[0].mxu0
      %8425 = vmatprep.mubr.f32.mxu0 0.0
      %8426 = vmatmul.mubr.f32.gmra.mrb[0].mxu0 %v455
      %v8427 = vpop.f32.mrb[0].mxu0
      %v8428 = vadd.f32 %v8040, %v8427
      %v8429 = vpop.f32.mrb[0].mxu0
      %8430 = vmatprep.mubr.f32.mxu0 0.0
      %8431 = vmatmul.mubr.f32.gmra.mrb[0].mxu0 %v458
      %v8432 = vpop.f32.mrb[0].mxu0
      %v8433 = vadd.f32 %v8045, %v8432
      %v8434 = vpop.f32.mrb[0].mxu0
      %8435 = vmatprep.mubr.f32.mxu0 0.0
      %8436 = vmatmul.mubr.f32.gmra.mrb[0].mxu0 %v461
      %v8437 = vpop.f32.mrb[0].mxu0
      %v8438 = vadd.f32 %v8050, %v8437
      %v8439 = vpop.f32.mrb[0].mxu0
      %8440 = vmatprep.mubr.f32.mxu0 0.0
      %8441 = vmatmul.mubr.f32.gmra.mrb[0].mxu0 %v464
      %v8442 = vpop.f32.mrb[0].mxu0
      %v8443 = vadd.f32 %v8055, %v8442
      %v8444 = vpop.f32.mrb[0].mxu0
      %8445 = vmatprep.mubr.f32.mxu0 0.0
      %8446 = vmatmul.mubr.f32.gmra.mrb[0].mxu0 %v467
      %v8447 = vpop.f32.mrb[0].mxu0
      %v8448 = vadd.f32 %v8060, %v8447
      %v8449 = vpop.f32.mrb[0].mxu0
      %8450 = vmatprep.mubr.f32.mxu0 0.0
      %8451 = vmatmul.mubr.f32.gmra.mrb[0].mxu0 %v470
      %v8452 = vpop.f32.mrb[0].mxu0
      %v8453 = vadd.f32 %v8065, %v8452
      %v8454 = vpop.f32.mrb[0].mxu0
      %8455 = vmatprep.mubr.f32.mxu0 0.0
      %8456 = vmatmul.mubr.f32.gmra.mrb[0].mxu0 %v473
      %v8457 = vpop.f32.mrb[0].mxu0
      %v8458 = vadd.f32 %v8070, %v8457
      %v8459 = vpop.f32.mrb[0].mxu0
      %8460 = vmatprep.mubr.f32.mxu0 0.0
      %8461 = vmatmul.mubr.f32.gmra.mrb[0].mxu0 %v476
      %v8462 = vpop.f32.mrb[0].mxu0
      %v8463 = vadd.f32 %v8075, %v8462
      %v8464 = vpop.f32.mrb[0].mxu0
      %8465 = vmatprep.mubr.f32.mxu0 0.0
      %8466 = vmatmul.mubr.f32.gmra.mrb[0].mxu0 %v479
      %v8467 = vpop.f32.mrb[0].mxu0
      %v8468 = vadd.f32 %v8080, %v8467
      %v8469 = vpop.f32.mrb[0].mxu0
      %8470 = vmatprep.mubr.f32.mxu0 0.0
      %8471 = vmatmul.mubr.f32.gmra.mrb[0].mxu0 %v482
      %v8472 = vpop.f32.mrb[0].mxu0
      %v8473 = vadd.f32 %v8085, %v8472
      %v8474 = vpop.f32.mrb[0].mxu0
      %8475 = vmatprep.mubr.f32.mxu0 0.0
      %8476 = vmatmul.mubr.f32.gmra.mrb[0].mxu0 %v485
      %v8477 = vpop.f32.mrb[0].mxu0
      %v8478 = vadd.f32 %v8090, %v8477
      %v8479 = vpop.f32.mrb[0].mxu0
      %8480 = vmatprep.mubr.f32.mxu0 0.0
      %8481 = vmatmul.mubr.f32.gmra.mrb[0].mxu0 %v488
      %v8482 = vpop.f32.mrb[0].mxu0
      %v8483 = vadd.f32 %v8095, %v8482
      %v8484 = vpop.f32.mrb[0].mxu0
      %8485 = vmatprep.mubr.f32.mxu0 0.0
      %8486 = vmatmul.mubr.f32.gmra.mrb[0].mxu0 %v491
      %v8487 = vpop.f32.mrb[0].mxu0
      %v8488 = vadd.f32 %v8100, %v8487
      %v8489 = vpop.f32.mrb[0].mxu0
      %8490 = vmatprep.mubr.f32.mxu0 0.0
      %8491 = vmatmul.mubr.f32.gmra.mrb[0].mxu0 %v494
      %v8492 = vpop.f32.mrb[0].mxu0
      %v8493 = vadd.f32 %v8105, %v8492
      %v8494 = vpop.f32.mrb[0].mxu0
      %8495 = vmatprep.mubr.f32.mxu0 0.0
      %8496 = vmatmul.mubr.f32.gmra.mrb[0].mxu0 %v497
      %v8497 = vpop.f32.mrb[0].mxu0
      %v8498 = vadd.f32 %v8110, %v8497
      %v8499 = vpop.f32.mrb[0].mxu0
      %8500 = vmatprep.mubr.f32.mxu0 0.0
      %8501 = vmatmul.mubr.f32.gmra.mrb[0].mxu0 %v500
      %v8502 = vpop.f32.mrb[0].mxu0
      %v8503 = vadd.f32 %v8115, %v8502
      %v8504 = vpop.f32.mrb[0].mxu0
      %8505 = vmatprep.mubr.f32.mxu0 0.0
      %8506 = vmatmul.mubr.f32.gmra.mrb[0].mxu0 %v503
      %v8507 = vpop.f32.mrb[0].mxu0
      %v8508 = vadd.f32 %v8120, %v8507
      %v8509 = vpop.f32.mrb[0].mxu0
      %8510 = vmatprep.mubr.f32.mxu0 0.0
      %8511 = vmatmul.mubr.f32.gmra.mrb[0].mxu0 %v506
      %v8512 = vpop.f32.mrb[0].mxu0
      %v8513 = vadd.f32 %v8125, %v8512
      %v8514 = vpop.f32.mrb[0].mxu0
      %8515 = vmatprep.mubr.f32.mxu0 0.0
      %8516 = vmatmul.mubr.f32.gmra.mrb[0].mxu0 %v509
      %v8517 = vpop.f32.mrb[0].mxu0
      %v8518 = vadd.f32 %v8130, %v8517
      %v8519 = vpop.f32.mrb[0].mxu0
      %8520 = vmatprep.mubr.f32.mxu0 0.0
      %8521 = vmatmul.mubr.f32.gmra.mrb[0].mxu0 %v512
      %v8522 = vpop.f32.mrb[0].mxu0
      %v8523 = vadd.f32 %v8135, %v8522
      %v8524 = vpop.f32.mrb[0].mxu0
      %8525 = vmatprep.mubr.f32.mxu0 0.0
      %8526 = vmatmul.mubr.f32.gmra.mrb[0].mxu0 %v515
      %v8527 = vpop.f32.mrb[0].mxu0
      %v8528 = vadd.f32 %v8140, %v8527
      %v8529 = vpop.f32.mrb[0].mxu0
      %8530 = vmatprep.mubr.f32.mxu0 0.0
      %8531 = vmatmul.mubr.f32.gmra.mrb[0].mxu0 %v518
      %v8532 = vpop.f32.mrb[0].mxu0
      %v8533 = vadd.f32 %v8145, %v8532
      %v8534 = vpop.f32.mrb[0].mxu0
      %8535 = vdwg.mxu0
      %v8536 = vld [vmem:[%s5] sm:$0x1]
      %v8538 = vlaneseq
      %v8539 = vshrl.u32 %v8538, 7
      %v8540 = vsub.s32 0, %v8539
      %v8541 = vrot.slane %v8536, %v8540
      %v8543 = vadd.f32 %v8218, %v8541
      %v8544 = vadd.f32 %v8223, %v8541
      %v8545 = vadd.f32 %v8228, %v8541
      %v8546 = vadd.f32 %v8233, %v8541
      %v8547 = vadd.f32 %v8238, %v8541
      %v8548 = vadd.f32 %v8243, %v8541
      %v8549 = vadd.f32 %v8248, %v8541
      %v8550 = vadd.f32 %v8253, %v8541
      %v8551 = vadd.f32 %v8258, %v8541
      %v8552 = vadd.f32 %v8263, %v8541
      %v8553 = vadd.f32 %v8268, %v8541
      %v8554 = vadd.f32 %v8273, %v8541
      %v8555 = vadd.f32 %v8278, %v8541
      %v8556 = vadd.f32 %v8283, %v8541
      %v8557 = vadd.f32 %v8288, %v8541
      %v8558 = vadd.f32 %v8293, %v8541
      %v8559 = vadd.f32 %v8298, %v8541
      %v8560 = vadd.f32 %v8303, %v8541
      %v8561 = vadd.f32 %v8308, %v8541
      %v8562 = vadd.f32 %v8313, %v8541
      %v8563 = vadd.f32 %v8318, %v8541
      %v8564 = vadd.f32 %v8323, %v8541
      %v8565 = vadd.f32 %v8328, %v8541
      %v8566 = vadd.f32 %v8333, %v8541
      %v8567 = vadd.f32 %v8338, %v8541
      %v8568 = vadd.f32 %v8343, %v8541
      %v8569 = vadd.f32 %v8348, %v8541
      %v8570 = vadd.f32 %v8353, %v8541
      %v8571 = vadd.f32 %v8358, %v8541
      %v8572 = vadd.f32 %v8363, %v8541
      %v8573 = vadd.f32 %v8368, %v8541
      %v8574 = vadd.f32 %v8373, %v8541
      %v8575 = vadd.f32 %v8378, %v8541
      %v8576 = vadd.f32 %v8383, %v8541
      %v8577 = vadd.f32 %v8388, %v8541
      %v8578 = vadd.f32 %v8393, %v8541
      %v8579 = vadd.f32 %v8398, %v8541
      %v8580 = vadd.f32 %v8403, %v8541
      %v8581 = vadd.f32 %v8408, %v8541
      %v8582 = vadd.f32 %v8413, %v8541
      %v8583 = vadd.f32 %v8418, %v8541
      %v8584 = vadd.f32 %v8423, %v8541
      %v8585 = vadd.f32 %v8428, %v8541
      %v8586 = vadd.f32 %v8433, %v8541
      %v8587 = vadd.f32 %v8438, %v8541
      %v8588 = vadd.f32 %v8443, %v8541
      %v8589 = vadd.f32 %v8448, %v8541
      %v8590 = vadd.f32 %v8453, %v8541
      %v8591 = vadd.f32 %v8458, %v8541
      %v8592 = vadd.f32 %v8463, %v8541
      %v8593 = vadd.f32 %v8468, %v8541
      %v8594 = vadd.f32 %v8473, %v8541
      %v8595 = vadd.f32 %v8478, %v8541
      %v8596 = vadd.f32 %v8483, %v8541
      %v8597 = vadd.f32 %v8488, %v8541
      %v8598 = vadd.f32 %v8493, %v8541
      %v8599 = vadd.f32 %v8498, %v8541
      %v8600 = vadd.f32 %v8503, %v8541
      %v8601 = vadd.f32 %v8508, %v8541
      %v8602 = vadd.f32 %v8513, %v8541
      %v8603 = vadd.f32 %v8518, %v8541
      %v8604 = vadd.f32 %v8523, %v8541
      %v8605 = vadd.f32 %v8528, %v8541
      %v8606 = vadd.f32 %v8533, %v8541
      %8607 = vst.msk [vmem:[%s253] sm:$0xff] %vm327, %v8543
      %8608 = vst.msk [vmem:[%s253 + $0x8] sm:$0xff] %vm327, %v8544
      %8609 = vst.msk [vmem:[%s253 + $0x10] sm:$0xff] %vm327, %v8545
      %8610 = vst.msk [vmem:[%s253 + $0x18] sm:$0xff] %vm327, %v8546
      %8611 = vst.msk [vmem:[%s253 + $0x20] sm:$0xff] %vm327, %v8547
      %8612 = vst.msk [vmem:[%s253 + $0x28] sm:$0xff] %vm327, %v8548
      %8613 = vst.msk [vmem:[%s253 + $0x30] sm:$0xff] %vm327, %v8549
      %8614 = vst.msk [vmem:[%s253 + $0x38] sm:$0xff] %vm327, %v8550
      %8615 = vst.msk [vmem:[%s253 + $0x40] sm:$0xff] %vm327, %v8551
      %8616 = vst.msk [vmem:[%s253 + $0x48] sm:$0xff] %vm327, %v8552
      %8617 = vst.msk [vmem:[%s253 + $0x50] sm:$0xff] %vm327, %v8553
      %8618 = vst.msk [vmem:[%s253 + $0x58] sm:$0xff] %vm327, %v8554
      %8619 = vst.msk [vmem:[%s253 + $0x60] sm:$0xff] %vm327, %v8555
      %8620 = vst.msk [vmem:[%s253 + $0x68] sm:$0xff] %vm327, %v8556
      %8621 = vst.msk [vmem:[%s253 + $0x70] sm:$0xff] %vm327, %v8557
      %8622 = vst.msk [vmem:[%s253 + $0x78] sm:$0xff] %vm327, %v8558
      %8623 = vst.msk [vmem:[%s253 + $0x80] sm:$0xff] %vm327, %v8559
      %8624 = vst.msk [vmem:[%s253 + $0x88] sm:$0xff] %vm327, %v8560
      %8625 = vst.msk [vmem:[%s253 + $0x90] sm:$0xff] %vm327, %v8561
      %8626 = vst.msk [vmem:[%s253 + $0x98] sm:$0xff] %vm327, %v8562
      %8627 = vst.msk [vmem:[%s253 + $0xa0] sm:$0xff] %vm327, %v8563
      %8628 = vst.msk [vmem:[%s253 + $0xa8] sm:$0xff] %vm327, %v8564
      %8629 = vst.msk [vmem:[%s253 + $0xb0] sm:$0xff] %vm327, %v8565
      %8630 = vst.msk [vmem:[%s253 + $0xb8] sm:$0xff] %vm327, %v8566
      %8631 = vst.msk [vmem:[%s253 + $0xc0] sm:$0xff] %vm327, %v8567
      %8632 = vst.msk [vmem:[%s253 + $0xc8] sm:$0xff] %vm327, %v8568
      %8633 = vst.msk [vmem:[%s253 + $0xd0] sm:$0xff] %vm327, %v8569
      %8634 = vst.msk [vmem:[%s253 + $0xd8] sm:$0xff] %vm327, %v8570
      %8635 = vst.msk [vmem:[%s253 + $0xe0] sm:$0xff] %vm327, %v8571
      %8636 = vst.msk [vmem:[%s253 + $0xe8] sm:$0xff] %vm327, %v8572
      %8637 = vst.msk [vmem:[%s253 + $0xf0] sm:$0xff] %vm327, %v8573
      %8638 = vst.msk [vmem:[%s253 + $0xf8] sm:$0xff] %vm327, %v8574
      %8639 = vst.msk [vmem:[%s253 + $0x100] sm:$0xff] %vm327, %v8575
      %8640 = vst.msk [vmem:[%s253 + $0x108] sm:$0xff] %vm327, %v8576
      %8641 = vst.msk [vmem:[%s253 + $0x110] sm:$0xff] %vm327, %v8577
      %8642 = vst.msk [vmem:[%s253 + $0x118] sm:$0xff] %vm327, %v8578
      %8643 = vst.msk [vmem:[%s253 + $0x120] sm:$0xff] %vm327, %v8579
      %8644 = vst.msk [vmem:[%s253 + $0x128] sm:$0xff] %vm327, %v8580
      %8645 = vst.msk [vmem:[%s253 + $0x130] sm:$0xff] %vm327, %v8581
      %8646 = vst.msk [vmem:[%s253 + $0x138] sm:$0xff] %vm327, %v8582
      %8647 = vst.msk [vmem:[%s253 + $0x140] sm:$0xff] %vm327, %v8583
      %8648 = vst.msk [vmem:[%s253 + $0x148] sm:$0xff] %vm327, %v8584
      %8649 = vst.msk [vmem:[%s253 + $0x150] sm:$0xff] %vm327, %v8585
      %8650 = vst.msk [vmem:[%s253 + $0x158] sm:$0xff] %vm327, %v8586
      %8651 = vst.msk [vmem:[%s253 + $0x160] sm:$0xff] %vm327, %v8587
      %8652 = vst.msk [vmem:[%s253 + $0x168] sm:$0xff] %vm327, %v8588
      %8653 = vst.msk [vmem:[%s253 + $0x170] sm:$0xff] %vm327, %v8589
      %8654 = vst.msk [vmem:[%s253 + $0x178] sm:$0xff] %vm327, %v8590
      %8655 = vst.msk [vmem:[%s253 + $0x180] sm:$0xff] %vm327, %v8591
      %8656 = vst.msk [vmem:[%s253 + $0x188] sm:$0xff] %vm327, %v8592
      %8657 = vst.msk [vmem:[%s253 + $0x190] sm:$0xff] %vm327, %v8593
      %8658 = vst.msk [vmem:[%s253 + $0x198] sm:$0xff] %vm327, %v8594
      %8659 = vst.msk [vmem:[%s253 + $0x1a0] sm:$0xff] %vm327, %v8595
      %8660 = vst.msk [vmem:[%s253 + $0x1a8] sm:$0xff] %vm327, %v8596
      %8661 = vst.msk [vmem:[%s253 + $0x1b0] sm:$0xff] %vm327, %v8597
      %8662 = vst.msk [vmem:[%s253 + $0x1b8] sm:$0xff] %vm327, %v8598
      %8663 = vst.msk [vmem:[%s253 + $0x1c0] sm:$0xff] %vm327, %v8599
      %8664 = vst.msk [vmem:[%s253 + $0x1c8] sm:$0xff] %vm327, %v8600
      %8665 = vst.msk [vmem:[%s253 + $0x1d0] sm:$0xff] %vm327, %v8601
      %8666 = vst.msk [vmem:[%s253 + $0x1d8] sm:$0xff] %vm327, %v8602
      %8667 = vst.msk [vmem:[%s253 + $0x1e0] sm:$0xff] %vm327, %v8603
      %8668 = vst.msk [vmem:[%s253 + $0x1e8] sm:$0xff] %vm327, %v8604
      %8669 = vst.msk [vmem:[%s253 + $0x1f0] sm:$0xff] %vm327, %v8605
      %8670 = vst.msk [vmem:[%s253 + $0x1f8] sm:$0xff] %vm327, %v8606
      %s8671 = smul.u32 64, %s17
      %p8672 = scmp.lt.s32.totalorder %s8671, 127
      %s8673 = scalar_select %p8672, %s8671, 127
      %s8674 = smul.addr %s8673, 8
      %s8675 = scalar_lea.vmem %s6, %s8674
      // Predicated region
      $region45: #{tpu_custom_call.1} parent=43 // pred_check
        %p8676 = pneg %p166
      $region46: #{tpu_custom_call.1} parent=43 // pred_check_branch
        %8678 = sbr.rel (%p8676) target = $region48
      $region47: #{tpu_custom_call.1} parent=43 // pred_region
        %s8679 = smul.u32 64, %s17
      $region48: #{tpu_custom_call.1} parent=43 // pred_fallthru
        _
    $region44: #{tpu_custom_call.1} parent=5 // pred_fallthru
      _
    %p8680 = scmp.le.s32.totalorder 2, %s12
    // Predicated region
    $region49: #{tpu_custom_call.1} parent=5 // pred_check
      %p8681 = pneg %p8680
    $region50: #{tpu_custom_call.1} parent=5 // pred_check_branch
      %8683 = sbr.rel (%p8681) target = $region52
    $region51: #{tpu_custom_call.1} parent=5 // pred_region
      %s8684 = ssub.s32 %s12, 2
      // Predicated region
      $region53: #{tpu_custom_call.1} parent=51 // pred_check
        %p8685 = pneg %p172
      $region54: #{tpu_custom_call.1} parent=51 // pred_check_branch
        %8687 = sbr.rel (%p8685) target = $region56
      $region55: #{tpu_custom_call.1} parent=51 // pred_region
        %s8688 = smul.u32 64, %s18
        %p8689 = scmp.lt.s32.totalorder %s8688, 127
        %s8690 = scalar_select %p8689, %s8688, 127
        %s8691 = smul.addr %s8690, 8
        %s8692 = scalar_lea.vmem %s6, %s8691
      $region56: #{tpu_custom_call.1} parent=51 // pred_fallthru
        _
    $region52: #{tpu_custom_call.1} parent=5 // pred_fallthru
      _
  $region6: #{tpu_custom_call.1} parent=0 // loop_footer
    %s16 = sadd.s32 1, %s12
  $region7: #{tpu_custom_call.1} parent=0 // loop_footer_branch
    %11 = sbr.rel target = $region3
  $region8: #{tpu_custom_call.1} parent=0 // loop_exit
    _

</llo_original>
